<compile_context>
chip_gen: v7x
topology: tpu7x:2x2x1
jax: 0.10.0
libtpu: 0.0.40
codegen_flags: <defaults>
</compile_context>

<pallas_src>
import math

import jax
import jax.numpy as jnp
from jax.experimental import pallas as pl
from jax.experimental.pallas import tpu as pltpu


# ----------------------------------------------------------------------------
# Fused LeNet5 kernel.
# ----------------------------------------------------------------------------
def _lenet5_kernel(x_ref, w1_ref, b1_ref, w2_ref, b2_ref,
                   fc1w_ref, fc1b_ref, fc2w_ref, fc2b_ref,
                   fc3w_ref, fc3b_ref, out_ref):
    TB = x_ref.shape[-1]
    f32 = jnp.float32
    bf16 = jnp.bfloat16

    w1 = w1_ref[...]            # (192, 160) bf16  row = w*8 + oc,  col = ki*32 + kj_abs
    b1 = b1_ref[...]            # (192, 1)   f32
    w2 = w2_ref[...]            # (128, 480) bf16  row = w*16 + oc, col = ki*96 + kj_abs*8 + c
    b2 = b2_ref[...]            # (128, 1)   f32

    # ---------------- conv1 (1->6, 5x5 valid) + ReLU, one MXU matmul per row
    def conv1_row(h):
        # (5,32,TB) slab -> (160,TB): 32 is tile-aligned, so a free sublane merge.
        patch = x_ref[h:h + 5, :, :].reshape(5 * 32, TB)              # bf16
        r = jnp.dot(w1, patch, preferred_element_type=f32) + b1       # (192, TB)
        return jnp.maximum(r, 0.0)

    # ---------------- pool1 (2x2 / 2), fused per pooled row -----------------
    p1_rows = []
    for hp in range(12):
        r = jnp.maximum(conv1_row(2 * hp), conv1_row(2 * hp + 1))     # h-pool
        r = r.reshape(12, 2, 8, TB)                                   # (wp, wlsb, c, TB)
        r = jnp.maximum(r[:, 0], r[:, 1])                             # w-pool
        p1_rows.append(r.reshape(96, TB).astype(bf16))                # row = wp*8 + c
    p1 = jnp.concatenate(p1_rows, axis=0)                             # (1152, TB) bf16

    # ---------------- conv2 (6->16, 5x5 valid) + ReLU on the MXU ------------
    def conv2_row(h):
        patch = p1[96 * h: 96 * h + 480]                              # (480, TB) bf16
        r = jnp.dot(w2, patch, preferred_element_type=f32) + b2       # (128, TB)
        return jnp.maximum(r, 0.0)

    # ---------------- pool2 (2x2 / 2), fused per pooled row -----------------
    p2_rows = []
    for hp in range(4):
        r = jnp.maximum(conv2_row(2 * hp), conv2_row(2 * hp + 1))     # h-pool
        r = r.reshape(4, 2, 16, TB)                                   # (wp, wlsb, oc, TB)
        r = jnp.maximum(r[:, 0], r[:, 1])                             # w-pool
        p2_rows.append(r.reshape(64, TB))                             # row = wp*16 + oc
    # flatten order f = h*64 + w*16 + c (fc1 columns were permuted to match)
    p2 = jnp.concatenate(p2_rows, axis=0).astype(bf16)                # (256, TB)

    # ---------------- fc1 / fc2 / fc3 (padded to 128 rows) on the MXU -------
    h1 = jnp.dot(fc1w_ref[...], p2, preferred_element_type=f32) + fc1b_ref[...]
    h1 = jnp.maximum(h1, 0.0).astype(bf16)
    h2 = jnp.dot(fc2w_ref[...], h1, preferred_element_type=f32) + fc2b_ref[...]
    h2 = jnp.maximum(h2, 0.0).astype(bf16)
    h3 = jnp.dot(fc3w_ref[...], h2, preferred_element_type=f32) + fc3b_ref[...]
    out_ref[...] = h3.astype(out_ref.dtype)


# ----------------------------------------------------------------------------
# Host-side parameter repacking (pure layout; done under jit, no math change).
# ----------------------------------------------------------------------------
def _prepare_params(p):
    f32, bf16 = jnp.float32, jnp.bfloat16

    w1 = p["conv1_w"].astype(f32)                  # (6, 1, 5, 5)
    b1 = p["conv1_b"].astype(f32)                  # (6,)
    w2 = p["conv2_w"].astype(f32)                  # (16, 6, 5, 5)
    b2 = p["conv2_b"].astype(f32)                  # (16,)

    # conv1 row-matmul weight: row = w*8 + oc (oc padded 6->8),
    #                          col = ki*32 + (w + kj)  [absolute input column]
    W, OC, KI, KJ = jnp.meshgrid(jnp.arange(24), jnp.arange(6),
                                 jnp.arange(5), jnp.arange(5), indexing="ij")
    rows = (W * 8 + OC).reshape(-1)
    cols = (KI * 32 + W + KJ).reshape(-1)
    vals = w1[OC.reshape(-1), 0, KI.reshape(-1), KJ.reshape(-1)]
    w1_row = jnp.zeros((192, 160), f32).at[rows, cols].set(vals).astype(bf16)
    b1_row = jnp.tile(jnp.pad(b1, (0, 2)), 24).reshape(192, 1)

    # conv2 row-matmul weight: row = w*16 + oc,
    #                          col = ki*96 + (w + kj)*8 + c  [c padded 6->8]
    W, OC, C, KI, KJ = jnp.meshgrid(jnp.arange(8), jnp.arange(16), jnp.arange(6),
                                    jnp.arange(5), jnp.arange(5), indexing="ij")
    rows = (W * 16 + OC).reshape(-1)
    cols = (KI * 96 + (W + KJ) * 8 + C).reshape(-1)
    vals = w2[OC.reshape(-1), C.reshape(-1), KI.reshape(-1), KJ.reshape(-1)]
    w2_row = jnp.zeros((128, 480), f32).at[rows, cols].set(vals).astype(bf16)
    b2_row = jnp.tile(b2, 8).reshape(128, 1)

    # fc1: kernel flatten order f = h*64 + w*16 + c vs PyTorch x.view(-1,256)
    # order t = c*16 + h*4 + w.  Permute fc1's input columns once.
    f = jnp.arange(256)
    h, w, c = f // 64, (f // 16) % 4, f % 16
    perm = c * 16 + h * 4 + w
    fc1 = p["fc1_w"][:, perm]                                         # (120, 256)

    fc1w = jnp.zeros((128, 256), f32).at[:120].set(fc1).astype(bf16)
    fc1b = jnp.zeros((128, 1), f32).at[:120, 0].set(p["fc1_b"])
    fc2w = jnp.zeros((128, 128), f32).at[:84, :120].set(p["fc2_w"]).astype(bf16)
    fc2b = jnp.zeros((128, 1), f32).at[:84, 0].set(p["fc2_b"])
    fc3w = jnp.zeros((128, 128), f32).at[:10, :84].set(p["fc3_w"]).astype(bf16)
    fc3b = jnp.zeros((128, 1), f32).at[:10, 0].set(p["fc3_b"])
    return (w1_row, b1_row, w2_row, b2_row,
            fc1w, fc1b, fc2w, fc2b, fc3w, fc3b)


# ----------------------------------------------------------------------------
# Forward
# ----------------------------------------------------------------------------
def lenet5_forward(params, x):
    """x: (B, 1, 28, 28) float32 -> logits (B, 10) float32."""
    B = x.shape[0]
    assert x.shape[1:] == (1, 28, 28), x.shape

    TB = 128                                   # batch tile (lane axis), always padded
    Bp = ((B + TB - 1) // TB) * TB

    # Input layout (H=28, Wpad=32, Bp): width on sublanes (dense), batch on lanes.
    xs = x.reshape(B, 28, 28).astype(jnp.float32)
    xs = jnp.transpose(xs, (1, 2, 0))                          # (28, 28, B)
    xs = jnp.pad(xs, ((0, 0), (0, 4), (0, Bp - B)))            # (28, 32, Bp)
    xs = xs.astype(jnp.bfloat16)

    (w1_row, b1_row, w2_row, b2_row,
     fc1w, fc1b, fc2w, fc2b, fc3w, fc3b) = _prepare_params(params)

    def full(shape):
        return pl.BlockSpec(shape, lambda i, _n=len(shape): (0,) * _n)

    out = pl.pallas_call(
        _lenet5_kernel,
        grid=(Bp // TB,),
        in_specs=[
            pl.BlockSpec((28, 32, TB), lambda i: (0, 0, i)),
            full((192, 160)), full((192, 1)),
            full((128, 480)), full((128, 1)),
            full((128, 256)), full((128, 1)),
            full((128, 128)), full((128, 1)),
            full((128, 128)), full((128, 1)),
        ],
        out_specs=pl.BlockSpec((128, TB), lambda i: (0, i)),
        out_shape=jax.ShapeDtypeStruct((128, Bp), jnp.float32),
        compiler_params=pltpu.CompilerParams(
            dimension_semantics=("parallel",)),
    )(xs, w1_row, b1_row, w2_row, b2_row,
      fc1w, fc1b, fc2w, fc2b, fc3w, fc3b)

    return out[:10, :B].T                      # (B, 10)


# ----------------------------------------------------------------------------
# Parameter init (deterministic, PyTorch-default-style uniform)
# ----------------------------------------------------------------------------
def _uniform(key, shape, fan_in):
    bound = 1.0 / math.sqrt(fan_in)
    return jax.random.uniform(key, shape, jnp.float32, -bound, bound)


def init_lenet5_params(key):
    ks = jax.random.split(key, 10)
    return {
        "conv1_w": _uniform(ks[0], (6, 1, 5, 5), 25),
        "conv1_b": _uniform(ks[1], (6,), 25),
        "conv2_w": _uniform(ks[2], (16, 6, 5, 5), 150),
        "conv2_b": _uniform(ks[3], (16,), 150),
        "fc1_w": _uniform(ks[4], (120, 256), 256),
        "fc1_b": _uniform(ks[5], (120,), 256),
        "fc2_w": _uniform(ks[6], (84, 120), 120),
        "fc2_b": _uniform(ks[7], (84,), 120),
        "fc3_w": _uniform(ks[8], (10, 84), 84),
        "fc3_b": _uniform(ks[9], (10,), 84),
    }


# ----------------------------------------------------------------------------
# Pure-JAX f32 reference (PyTorch LeNet5 semantics) for a sanity check.
# ----------------------------------------------------------------------------
def _reference_forward(params, x):
    def conv_relu(x, w, b):
        y = jax.lax.conv_general_dilated(
            x, w, window_strides=(1, 1), padding="VALID",
            dimension_numbers=("NCHW", "OIHW", "NCHW"))
        return jax.nn.relu(y + b[None, :, None, None])

    def pool(x):
        B, C, H, W = x.shape
        return x.reshape(B, C, H // 2, 2, W // 2, 2).max(axis=(3, 5))

    x = pool(conv_relu(x, params["conv1_w"], params["conv1_b"]))
    x = pool(conv_relu(x, params["conv2_w"], params["conv2_b"]))
    x = x.reshape(x.shape[0], 256)
    x = jax.nn.relu(x @ params["fc1_w"].T + params["fc1_b"])
    x = jax.nn.relu(x @ params["fc2_w"].T + params["fc2_b"])
    return x @ params["fc3_w"].T + params["fc3_b"]


if __name__ == "__main__":
    key = jax.random.PRNGKey(0)
    k_x, k_p = jax.random.split(key)
    params = init_lenet5_params(k_p)

    fwd = jax.jit(lenet5_forward)

    # 28x28 input is required so that 16*4*4 == 256 feeds fc1.
    x = jax.random.normal(k_x, (2, 1, 28, 28), dtype=jnp.float32)
    out = jax.block_until_ready(fwd(params, x))
    assert out.shape == (2, 10), out.shape
    assert out.dtype == jnp.float32
    ref = _reference_forward(params, x)
    err = float(jnp.max(jnp.abs(out - ref)))
    assert err < 5e-2, f"max abs error vs reference: {err}"

    # Multi-tile batch path (2 grid steps, padded final tile).
    x2 = jax.random.normal(jax.random.PRNGKey(1), (130, 1, 28, 28),
                           dtype=jnp.float32)
    out2 = jax.block_until_ready(fwd(params, x2))
    assert out2.shape == (130, 10), out2.shape
    ref2 = _reference_forward(params, x2)
    err2 = float(jnp.max(jnp.abs(out2 - ref2)))
    assert err2 < 5e-2, f"max abs error vs reference (multi-tile): {err2}"

    print("KERNEL_OK")
</pallas_src>

<mosaic_0001>
module attributes {stable_mosaic.version = 11 : i64} {
  func.func @_lenet5_kernel(%arg0: i32, %arg1: memref<28x32x128xbf16, #tpu.memory_space<vmem>>, %arg2: memref<192x160xbf16, #tpu.memory_space<vmem>>, %arg3: memref<192x1xf32, #tpu.memory_space<vmem>>, %arg4: memref<128x480xbf16, #tpu.memory_space<vmem>>, %arg5: memref<128x1xf32, #tpu.memory_space<vmem>>, %arg6: memref<128x256xbf16, #tpu.memory_space<vmem>>, %arg7: memref<128x1xf32, #tpu.memory_space<vmem>>, %arg8: memref<128x128xbf16, #tpu.memory_space<vmem>>, %arg9: memref<128x1xf32, #tpu.memory_space<vmem>>, %arg10: memref<128x128xbf16, #tpu.memory_space<vmem>>, %arg11: memref<128x1xf32, #tpu.memory_space<vmem>>, %arg12: memref<128x128xf32, #tpu.memory_space<vmem>>) attributes {dimension_semantics = [#tpu.dimension_semantics<parallel>], iteration_bounds = array<i64: 1>, scalar_prefetch = 0 : i64, scratch_operands = 0 : i64, tpu.core_type = #tpu.core_type<tc>, window_params = [{transform_indices = @transform_0, window_bounds = array<i64: 28, 32, 128>}, {pipeline_mode = #tpu.pipeline_mode<synchronous>, transform_indices = @transform_1, window_bounds = array<i64: 192, 160>}, {pipeline_mode = #tpu.pipeline_mode<synchronous>, transform_indices = @transform_2, window_bounds = array<i64: 192, 1>}, {pipeline_mode = #tpu.pipeline_mode<synchronous>, transform_indices = @transform_3, window_bounds = array<i64: 128, 480>}, {pipeline_mode = #tpu.pipeline_mode<synchronous>, transform_indices = @transform_4, window_bounds = array<i64: 128, 1>}, {pipeline_mode = #tpu.pipeline_mode<synchronous>, transform_indices = @transform_5, window_bounds = array<i64: 128, 256>}, {pipeline_mode = #tpu.pipeline_mode<synchronous>, transform_indices = @transform_6, window_bounds = array<i64: 128, 1>}, {pipeline_mode = #tpu.pipeline_mode<synchronous>, transform_indices = @transform_7, window_bounds = array<i64: 128, 128>}, {pipeline_mode = #tpu.pipeline_mode<synchronous>, transform_indices = @transform_8, window_bounds = array<i64: 128, 1>}, {pipeline_mode = #tpu.pipeline_mode<synchronous>, transform_indices = @transform_9, window_bounds = array<i64: 128, 128>}, {pipeline_mode = #tpu.pipeline_mode<synchronous>, transform_indices = @transform_10, window_bounds = array<i64: 128, 1>}, {transform_indices = @transform_11, window_bounds = array<i64: 128, 128>}]} {
    %c0 = arith.constant 0 : index
    %c0_0 = arith.constant 0 : index
    %0 = vector.load %arg2[%c0, %c0_0] : memref<192x160xbf16, #tpu.memory_space<vmem>>, vector<192x160xbf16>
    %c0_1 = arith.constant 0 : index
    %c0_2 = arith.constant 0 : index
    %1 = vector.load %arg3[%c0_1, %c0_2] : memref<192x1xf32, #tpu.memory_space<vmem>>, vector<192x1xf32>
    %c0_3 = arith.constant 0 : index
    %c0_4 = arith.constant 0 : index
    %2 = vector.load %arg4[%c0_3, %c0_4] : memref<128x480xbf16, #tpu.memory_space<vmem>>, vector<128x480xbf16>
    %c0_5 = arith.constant 0 : index
    %c0_6 = arith.constant 0 : index
    %3 = vector.load %arg5[%c0_5, %c0_6] : memref<128x1xf32, #tpu.memory_space<vmem>>, vector<128x1xf32>
    %c0_7 = arith.constant 0 : index
    %c0_8 = arith.constant 0 : index
    %c0_9 = arith.constant 0 : index
    %4 = vector.load %arg1[%c0_7, %c0_8, %c0_9] : memref<28x32x128xbf16, #tpu.memory_space<vmem>>, vector<5x32x128xbf16>
    %5 = vector.shape_cast %4 : vector<5x32x128xbf16> to vector<160x128xbf16>
    %cst = arith.constant dense<0.000000e+00> : vector<192x128xf32>
    %6 = tpu.matmul %0, %5, %cst {dimension_numbers = #tpu.dot_dimension_numbers<[1], [0], [0], [1], [0, 0, 1, 1], [], []>} : vector<192x160xbf16>, vector<160x128xbf16>, vector<192x128xf32> -> vector<192x128xf32>
    %7 = vector.broadcast %1 : vector<192x1xf32> to vector<192x128xf32>
    %8 = arith.addf %6, %7 : vector<192x128xf32>
    %cst_10 = arith.constant 0.000000e+00 : f32
    %9 = vector.broadcast %cst_10 : f32 to vector<192x128xf32>
    %10 = arith.maximumf %8, %9 : vector<192x128xf32>
    %c1 = arith.constant 1 : index
    %c0_11 = arith.constant 0 : index
    %c0_12 = arith.constant 0 : index
    %11 = vector.load %arg1[%c1, %c0_11, %c0_12] : memref<28x32x128xbf16, #tpu.memory_space<vmem>>, vector<5x32x128xbf16>
    %12 = vector.shape_cast %11 : vector<5x32x128xbf16> to vector<160x128xbf16>
    %cst_13 = arith.constant dense<0.000000e+00> : vector<192x128xf32>
    %13 = tpu.matmul %0, %12, %cst_13 {dimension_numbers = #tpu.dot_dimension_numbers<[1], [0], [0], [1], [0, 0, 1, 1], [], []>} : vector<192x160xbf16>, vector<160x128xbf16>, vector<192x128xf32> -> vector<192x128xf32>
    %14 = vector.broadcast %1 : vector<192x1xf32> to vector<192x128xf32>
    %15 = arith.addf %13, %14 : vector<192x128xf32>
    %cst_14 = arith.constant 0.000000e+00 : f32
    %16 = vector.broadcast %cst_14 : f32 to vector<192x128xf32>
    %17 = arith.maximumf %15, %16 : vector<192x128xf32>
    %18 = arith.maximumf %10, %17 : vector<192x128xf32>
    %19 = vector.shape_cast %18 : vector<192x128xf32> to vector<12x2x8x128xf32>
    %20 = vector.extract_strided_slice %19 {offsets = [0, 0, 0, 0], sizes = [12, 1, 8, 128], strides = [1, 1, 1, 1]} : vector<12x2x8x128xf32> to vector<12x1x8x128xf32>
    %21 = vector.shape_cast %20 : vector<12x1x8x128xf32> to vector<12x8x128xf32>
    %22 = vector.extract_strided_slice %19 {offsets = [0, 1, 0, 0], sizes = [12, 1, 8, 128], strides = [1, 1, 1, 1]} : vector<12x2x8x128xf32> to vector<12x1x8x128xf32>
    %23 = vector.shape_cast %22 : vector<12x1x8x128xf32> to vector<12x8x128xf32>
    %24 = arith.maximumf %21, %23 : vector<12x8x128xf32>
    %25 = vector.shape_cast %24 : vector<12x8x128xf32> to vector<96x128xf32>
    %26 = arith.truncf %25 : vector<96x128xf32> to vector<96x128xbf16>
    %c2 = arith.constant 2 : index
    %c0_15 = arith.constant 0 : index
    %c0_16 = arith.constant 0 : index
    %27 = vector.load %arg1[%c2, %c0_15, %c0_16] : memref<28x32x128xbf16, #tpu.memory_space<vmem>>, vector<5x32x128xbf16>
    %28 = vector.shape_cast %27 : vector<5x32x128xbf16> to vector<160x128xbf16>
    %cst_17 = arith.constant dense<0.000000e+00> : vector<192x128xf32>
    %29 = tpu.matmul %0, %28, %cst_17 {dimension_numbers = #tpu.dot_dimension_numbers<[1], [0], [0], [1], [0, 0, 1, 1], [], []>} : vector<192x160xbf16>, vector<160x128xbf16>, vector<192x128xf32> -> vector<192x128xf32>
    %30 = vector.broadcast %1 : vector<192x1xf32> to vector<192x128xf32>
    %31 = arith.addf %29, %30 : vector<192x128xf32>
    %cst_18 = arith.constant 0.000000e+00 : f32
    %32 = vector.broadcast %cst_18 : f32 to vector<192x128xf32>
    %33 = arith.maximumf %31, %32 : vector<192x128xf32>
    %c3 = arith.constant 3 : index
    %c0_19 = arith.constant 0 : index
    %c0_20 = arith.constant 0 : index
    %34 = vector.load %arg1[%c3, %c0_19, %c0_20] : memref<28x32x128xbf16, #tpu.memory_space<vmem>>, vector<5x32x128xbf16>
    %35 = vector.shape_cast %34 : vector<5x32x128xbf16> to vector<160x128xbf16>
    %cst_21 = arith.constant dense<0.000000e+00> : vector<192x128xf32>
    %36 = tpu.matmul %0, %35, %cst_21 {dimension_numbers = #tpu.dot_dimension_numbers<[1], [0], [0], [1], [0, 0, 1, 1], [], []>} : vector<192x160xbf16>, vector<160x128xbf16>, vector<192x128xf32> -> vector<192x128xf32>
    %37 = vector.broadcast %1 : vector<192x1xf32> to vector<192x128xf32>
    %38 = arith.addf %36, %37 : vector<192x128xf32>
    %cst_22 = arith.constant 0.000000e+00 : f32
    %39 = vector.broadcast %cst_22 : f32 to vector<192x128xf32>
    %40 = arith.maximumf %38, %39 : vector<192x128xf32>
    %41 = arith.maximumf %33, %40 : vector<192x128xf32>
    %42 = vector.shape_cast %41 : vector<192x128xf32> to vector<12x2x8x128xf32>
    %43 = vector.extract_strided_slice %42 {offsets = [0, 0, 0, 0], sizes = [12, 1, 8, 128], strides = [1, 1, 1, 1]} : vector<12x2x8x128xf32> to vector<12x1x8x128xf32>
    %44 = vector.shape_cast %43 : vector<12x1x8x128xf32> to vector<12x8x128xf32>
    %45 = vector.extract_strided_slice %42 {offsets = [0, 1, 0, 0], sizes = [12, 1, 8, 128], strides = [1, 1, 1, 1]} : vector<12x2x8x128xf32> to vector<12x1x8x128xf32>
    %46 = vector.shape_cast %45 : vector<12x1x8x128xf32> to vector<12x8x128xf32>
    %47 = arith.maximumf %44, %46 : vector<12x8x128xf32>
    %48 = vector.shape_cast %47 : vector<12x8x128xf32> to vector<96x128xf32>
    %49 = arith.truncf %48 : vector<96x128xf32> to vector<96x128xbf16>
    %c4 = arith.constant 4 : index
    %c0_23 = arith.constant 0 : index
    %c0_24 = arith.constant 0 : index
    %50 = vector.load %arg1[%c4, %c0_23, %c0_24] : memref<28x32x128xbf16, #tpu.memory_space<vmem>>, vector<5x32x128xbf16>
    %51 = vector.shape_cast %50 : vector<5x32x128xbf16> to vector<160x128xbf16>
    %cst_25 = arith.constant dense<0.000000e+00> : vector<192x128xf32>
    %52 = tpu.matmul %0, %51, %cst_25 {dimension_numbers = #tpu.dot_dimension_numbers<[1], [0], [0], [1], [0, 0, 1, 1], [], []>} : vector<192x160xbf16>, vector<160x128xbf16>, vector<192x128xf32> -> vector<192x128xf32>
    %53 = vector.broadcast %1 : vector<192x1xf32> to vector<192x128xf32>
    %54 = arith.addf %52, %53 : vector<192x128xf32>
    %cst_26 = arith.constant 0.000000e+00 : f32
    %55 = vector.broadcast %cst_26 : f32 to vector<192x128xf32>
    %56 = arith.maximumf %54, %55 : vector<192x128xf32>
    %c5 = arith.constant 5 : index
    %c0_27 = arith.constant 0 : index
    %c0_28 = arith.constant 0 : index
    %57 = vector.load %arg1[%c5, %c0_27, %c0_28] : memref<28x32x128xbf16, #tpu.memory_space<vmem>>, vector<5x32x128xbf16>
    %58 = vector.shape_cast %57 : vector<5x32x128xbf16> to vector<160x128xbf16>
    %cst_29 = arith.constant dense<0.000000e+00> : vector<192x128xf32>
    %59 = tpu.matmul %0, %58, %cst_29 {dimension_numbers = #tpu.dot_dimension_numbers<[1], [0], [0], [1], [0, 0, 1, 1], [], []>} : vector<192x160xbf16>, vector<160x128xbf16>, vector<192x128xf32> -> vector<192x128xf32>
    %60 = vector.broadcast %1 : vector<192x1xf32> to vector<192x128xf32>
    %61 = arith.addf %59, %60 : vector<192x128xf32>
    %cst_30 = arith.constant 0.000000e+00 : f32
    %62 = vector.broadcast %cst_30 : f32 to vector<192x128xf32>
    %63 = arith.maximumf %61, %62 : vector<192x128xf32>
    %64 = arith.maximumf %56, %63 : vector<192x128xf32>
    %65 = vector.shape_cast %64 : vector<192x128xf32> to vector<12x2x8x128xf32>
    %66 = vector.extract_strided_slice %65 {offsets = [0, 0, 0, 0], sizes = [12, 1, 8, 128], strides = [1, 1, 1, 1]} : vector<12x2x8x128xf32> to vector<12x1x8x128xf32>
    %67 = vector.shape_cast %66 : vector<12x1x8x128xf32> to vector<12x8x128xf32>
    %68 = vector.extract_strided_slice %65 {offsets = [0, 1, 0, 0], sizes = [12, 1, 8, 128], strides = [1, 1, 1, 1]} : vector<12x2x8x128xf32> to vector<12x1x8x128xf32>
    %69 = vector.shape_cast %68 : vector<12x1x8x128xf32> to vector<12x8x128xf32>
    %70 = arith.maximumf %67, %69 : vector<12x8x128xf32>
    %71 = vector.shape_cast %70 : vector<12x8x128xf32> to vector<96x128xf32>
    %72 = arith.truncf %71 : vector<96x128xf32> to vector<96x128xbf16>
    %c6 = arith.constant 6 : index
    %c0_31 = arith.constant 0 : index
    %c0_32 = arith.constant 0 : index
    %73 = vector.load %arg1[%c6, %c0_31, %c0_32] : memref<28x32x128xbf16, #tpu.memory_space<vmem>>, vector<5x32x128xbf16>
    %74 = vector.shape_cast %73 : vector<5x32x128xbf16> to vector<160x128xbf16>
    %cst_33 = arith.constant dense<0.000000e+00> : vector<192x128xf32>
    %75 = tpu.matmul %0, %74, %cst_33 {dimension_numbers = #tpu.dot_dimension_numbers<[1], [0], [0], [1], [0, 0, 1, 1], [], []>} : vector<192x160xbf16>, vector<160x128xbf16>, vector<192x128xf32> -> vector<192x128xf32>
    %76 = vector.broadcast %1 : vector<192x1xf32> to vector<192x128xf32>
    %77 = arith.addf %75, %76 : vector<192x128xf32>
    %cst_34 = arith.constant 0.000000e+00 : f32
    %78 = vector.broadcast %cst_34 : f32 to vector<192x128xf32>
    %79 = arith.maximumf %77, %78 : vector<192x128xf32>
    %c7 = arith.constant 7 : index
    %c0_35 = arith.constant 0 : index
    %c0_36 = arith.constant 0 : index
    %80 = vector.load %arg1[%c7, %c0_35, %c0_36] : memref<28x32x128xbf16, #tpu.memory_space<vmem>>, vector<5x32x128xbf16>
    %81 = vector.shape_cast %80 : vector<5x32x128xbf16> to vector<160x128xbf16>
    %cst_37 = arith.constant dense<0.000000e+00> : vector<192x128xf32>
    %82 = tpu.matmul %0, %81, %cst_37 {dimension_numbers = #tpu.dot_dimension_numbers<[1], [0], [0], [1], [0, 0, 1, 1], [], []>} : vector<192x160xbf16>, vector<160x128xbf16>, vector<192x128xf32> -> vector<192x128xf32>
    %83 = vector.broadcast %1 : vector<192x1xf32> to vector<192x128xf32>
    %84 = arith.addf %82, %83 : vector<192x128xf32>
    %cst_38 = arith.constant 0.000000e+00 : f32
    %85 = vector.broadcast %cst_38 : f32 to vector<192x128xf32>
    %86 = arith.maximumf %84, %85 : vector<192x128xf32>
    %87 = arith.maximumf %79, %86 : vector<192x128xf32>
    %88 = vector.shape_cast %87 : vector<192x128xf32> to vector<12x2x8x128xf32>
    %89 = vector.extract_strided_slice %88 {offsets = [0, 0, 0, 0], sizes = [12, 1, 8, 128], strides = [1, 1, 1, 1]} : vector<12x2x8x128xf32> to vector<12x1x8x128xf32>
    %90 = vector.shape_cast %89 : vector<12x1x8x128xf32> to vector<12x8x128xf32>
    %91 = vector.extract_strided_slice %88 {offsets = [0, 1, 0, 0], sizes = [12, 1, 8, 128], strides = [1, 1, 1, 1]} : vector<12x2x8x128xf32> to vector<12x1x8x128xf32>
    %92 = vector.shape_cast %91 : vector<12x1x8x128xf32> to vector<12x8x128xf32>
    %93 = arith.maximumf %90, %92 : vector<12x8x128xf32>
    %94 = vector.shape_cast %93 : vector<12x8x128xf32> to vector<96x128xf32>
    %95 = arith.truncf %94 : vector<96x128xf32> to vector<96x128xbf16>
    %c8 = arith.constant 8 : index
    %c0_39 = arith.constant 0 : index
    %c0_40 = arith.constant 0 : index
    %96 = vector.load %arg1[%c8, %c0_39, %c0_40] : memref<28x32x128xbf16, #tpu.memory_space<vmem>>, vector<5x32x128xbf16>
    %97 = vector.shape_cast %96 : vector<5x32x128xbf16> to vector<160x128xbf16>
    %cst_41 = arith.constant dense<0.000000e+00> : vector<192x128xf32>
    %98 = tpu.matmul %0, %97, %cst_41 {dimension_numbers = #tpu.dot_dimension_numbers<[1], [0], [0], [1], [0, 0, 1, 1], [], []>} : vector<192x160xbf16>, vector<160x128xbf16>, vector<192x128xf32> -> vector<192x128xf32>
    %99 = vector.broadcast %1 : vector<192x1xf32> to vector<192x128xf32>
    %100 = arith.addf %98, %99 : vector<192x128xf32>
    %cst_42 = arith.constant 0.000000e+00 : f32
    %101 = vector.broadcast %cst_42 : f32 to vector<192x128xf32>
    %102 = arith.maximumf %100, %101 : vector<192x128xf32>
    %c9 = arith.constant 9 : index
    %c0_43 = arith.constant 0 : index
    %c0_44 = arith.constant 0 : index
    %103 = vector.load %arg1[%c9, %c0_43, %c0_44] : memref<28x32x128xbf16, #tpu.memory_space<vmem>>, vector<5x32x128xbf16>
    %104 = vector.shape_cast %103 : vector<5x32x128xbf16> to vector<160x128xbf16>
    %cst_45 = arith.constant dense<0.000000e+00> : vector<192x128xf32>
    %105 = tpu.matmul %0, %104, %cst_45 {dimension_numbers = #tpu.dot_dimension_numbers<[1], [0], [0], [1], [0, 0, 1, 1], [], []>} : vector<192x160xbf16>, vector<160x128xbf16>, vector<192x128xf32> -> vector<192x128xf32>
    %106 = vector.broadcast %1 : vector<192x1xf32> to vector<192x128xf32>
    %107 = arith.addf %105, %106 : vector<192x128xf32>
    %cst_46 = arith.constant 0.000000e+00 : f32
    %108 = vector.broadcast %cst_46 : f32 to vector<192x128xf32>
    %109 = arith.maximumf %107, %108 : vector<192x128xf32>
    %110 = arith.maximumf %102, %109 : vector<192x128xf32>
    %111 = vector.shape_cast %110 : vector<192x128xf32> to vector<12x2x8x128xf32>
    %112 = vector.extract_strided_slice %111 {offsets = [0, 0, 0, 0], sizes = [12, 1, 8, 128], strides = [1, 1, 1, 1]} : vector<12x2x8x128xf32> to vector<12x1x8x128xf32>
    %113 = vector.shape_cast %112 : vector<12x1x8x128xf32> to vector<12x8x128xf32>
    %114 = vector.extract_strided_slice %111 {offsets = [0, 1, 0, 0], sizes = [12, 1, 8, 128], strides = [1, 1, 1, 1]} : vector<12x2x8x128xf32> to vector<12x1x8x128xf32>
    %115 = vector.shape_cast %114 : vector<12x1x8x128xf32> to vector<12x8x128xf32>
    %116 = arith.maximumf %113, %115 : vector<12x8x128xf32>
    %117 = vector.shape_cast %116 : vector<12x8x128xf32> to vector<96x128xf32>
    %118 = arith.truncf %117 : vector<96x128xf32> to vector<96x128xbf16>
    %c10 = arith.constant 10 : index
    %c0_47 = arith.constant 0 : index
    %c0_48 = arith.constant 0 : index
    %119 = vector.load %arg1[%c10, %c0_47, %c0_48] : memref<28x32x128xbf16, #tpu.memory_space<vmem>>, vector<5x32x128xbf16>
    %120 = vector.shape_cast %119 : vector<5x32x128xbf16> to vector<160x128xbf16>
    %cst_49 = arith.constant dense<0.000000e+00> : vector<192x128xf32>
    %121 = tpu.matmul %0, %120, %cst_49 {dimension_numbers = #tpu.dot_dimension_numbers<[1], [0], [0], [1], [0, 0, 1, 1], [], []>} : vector<192x160xbf16>, vector<160x128xbf16>, vector<192x128xf32> -> vector<192x128xf32>
    %122 = vector.broadcast %1 : vector<192x1xf32> to vector<192x128xf32>
    %123 = arith.addf %121, %122 : vector<192x128xf32>
    %cst_50 = arith.constant 0.000000e+00 : f32
    %124 = vector.broadcast %cst_50 : f32 to vector<192x128xf32>
    %125 = arith.maximumf %123, %124 : vector<192x128xf32>
    %c11 = arith.constant 11 : index
    %c0_51 = arith.constant 0 : index
    %c0_52 = arith.constant 0 : index
    %126 = vector.load %arg1[%c11, %c0_51, %c0_52] : memref<28x32x128xbf16, #tpu.memory_space<vmem>>, vector<5x32x128xbf16>
    %127 = vector.shape_cast %126 : vector<5x32x128xbf16> to vector<160x128xbf16>
    %cst_53 = arith.constant dense<0.000000e+00> : vector<192x128xf32>
    %128 = tpu.matmul %0, %127, %cst_53 {dimension_numbers = #tpu.dot_dimension_numbers<[1], [0], [0], [1], [0, 0, 1, 1], [], []>} : vector<192x160xbf16>, vector<160x128xbf16>, vector<192x128xf32> -> vector<192x128xf32>
    %129 = vector.broadcast %1 : vector<192x1xf32> to vector<192x128xf32>
    %130 = arith.addf %128, %129 : vector<192x128xf32>
    %cst_54 = arith.constant 0.000000e+00 : f32
    %131 = vector.broadcast %cst_54 : f32 to vector<192x128xf32>
    %132 = arith.maximumf %130, %131 : vector<192x128xf32>
    %133 = arith.maximumf %125, %132 : vector<192x128xf32>
    %134 = vector.shape_cast %133 : vector<192x128xf32> to vector<12x2x8x128xf32>
    %135 = vector.extract_strided_slice %134 {offsets = [0, 0, 0, 0], sizes = [12, 1, 8, 128], strides = [1, 1, 1, 1]} : vector<12x2x8x128xf32> to vector<12x1x8x128xf32>
    %136 = vector.shape_cast %135 : vector<12x1x8x128xf32> to vector<12x8x128xf32>
    %137 = vector.extract_strided_slice %134 {offsets = [0, 1, 0, 0], sizes = [12, 1, 8, 128], strides = [1, 1, 1, 1]} : vector<12x2x8x128xf32> to vector<12x1x8x128xf32>
    %138 = vector.shape_cast %137 : vector<12x1x8x128xf32> to vector<12x8x128xf32>
    %139 = arith.maximumf %136, %138 : vector<12x8x128xf32>
    %140 = vector.shape_cast %139 : vector<12x8x128xf32> to vector<96x128xf32>
    %141 = arith.truncf %140 : vector<96x128xf32> to vector<96x128xbf16>
    %c12 = arith.constant 12 : index
    %c0_55 = arith.constant 0 : index
    %c0_56 = arith.constant 0 : index
    %142 = vector.load %arg1[%c12, %c0_55, %c0_56] : memref<28x32x128xbf16, #tpu.memory_space<vmem>>, vector<5x32x128xbf16>
    %143 = vector.shape_cast %142 : vector<5x32x128xbf16> to vector<160x128xbf16>
    %cst_57 = arith.constant dense<0.000000e+00> : vector<192x128xf32>
    %144 = tpu.matmul %0, %143, %cst_57 {dimension_numbers = #tpu.dot_dimension_numbers<[1], [0], [0], [1], [0, 0, 1, 1], [], []>} : vector<192x160xbf16>, vector<160x128xbf16>, vector<192x128xf32> -> vector<192x128xf32>
    %145 = vector.broadcast %1 : vector<192x1xf32> to vector<192x128xf32>
    %146 = arith.addf %144, %145 : vector<192x128xf32>
    %cst_58 = arith.constant 0.000000e+00 : f32
    %147 = vector.broadcast %cst_58 : f32 to vector<192x128xf32>
    %148 = arith.maximumf %146, %147 : vector<192x128xf32>
    %c13 = arith.constant 13 : index
    %c0_59 = arith.constant 0 : index
    %c0_60 = arith.constant 0 : index
    %149 = vector.load %arg1[%c13, %c0_59, %c0_60] : memref<28x32x128xbf16, #tpu.memory_space<vmem>>, vector<5x32x128xbf16>
    %150 = vector.shape_cast %149 : vector<5x32x128xbf16> to vector<160x128xbf16>
    %cst_61 = arith.constant dense<0.000000e+00> : vector<192x128xf32>
    %151 = tpu.matmul %0, %150, %cst_61 {dimension_numbers = #tpu.dot_dimension_numbers<[1], [0], [0], [1], [0, 0, 1, 1], [], []>} : vector<192x160xbf16>, vector<160x128xbf16>, vector<192x128xf32> -> vector<192x128xf32>
    %152 = vector.broadcast %1 : vector<192x1xf32> to vector<192x128xf32>
    %153 = arith.addf %151, %152 : vector<192x128xf32>
    %cst_62 = arith.constant 0.000000e+00 : f32
    %154 = vector.broadcast %cst_62 : f32 to vector<192x128xf32>
    %155 = arith.maximumf %153, %154 : vector<192x128xf32>
    %156 = arith.maximumf %148, %155 : vector<192x128xf32>
    %157 = vector.shape_cast %156 : vector<192x128xf32> to vector<12x2x8x128xf32>
    %158 = vector.extract_strided_slice %157 {offsets = [0, 0, 0, 0], sizes = [12, 1, 8, 128], strides = [1, 1, 1, 1]} : vector<12x2x8x128xf32> to vector<12x1x8x128xf32>
    %159 = vector.shape_cast %158 : vector<12x1x8x128xf32> to vector<12x8x128xf32>
    %160 = vector.extract_strided_slice %157 {offsets = [0, 1, 0, 0], sizes = [12, 1, 8, 128], strides = [1, 1, 1, 1]} : vector<12x2x8x128xf32> to vector<12x1x8x128xf32>
    %161 = vector.shape_cast %160 : vector<12x1x8x128xf32> to vector<12x8x128xf32>
    %162 = arith.maximumf %159, %161 : vector<12x8x128xf32>
    %163 = vector.shape_cast %162 : vector<12x8x128xf32> to vector<96x128xf32>
    %164 = arith.truncf %163 : vector<96x128xf32> to vector<96x128xbf16>
    %c14 = arith.constant 14 : index
    %c0_63 = arith.constant 0 : index
    %c0_64 = arith.constant 0 : index
    %165 = vector.load %arg1[%c14, %c0_63, %c0_64] : memref<28x32x128xbf16, #tpu.memory_space<vmem>>, vector<5x32x128xbf16>
    %166 = vector.shape_cast %165 : vector<5x32x128xbf16> to vector<160x128xbf16>
    %cst_65 = arith.constant dense<0.000000e+00> : vector<192x128xf32>
    %167 = tpu.matmul %0, %166, %cst_65 {dimension_numbers = #tpu.dot_dimension_numbers<[1], [0], [0], [1], [0, 0, 1, 1], [], []>} : vector<192x160xbf16>, vector<160x128xbf16>, vector<192x128xf32> -> vector<192x128xf32>
    %168 = vector.broadcast %1 : vector<192x1xf32> to vector<192x128xf32>
    %169 = arith.addf %167, %168 : vector<192x128xf32>
    %cst_66 = arith.constant 0.000000e+00 : f32
    %170 = vector.broadcast %cst_66 : f32 to vector<192x128xf32>
    %171 = arith.maximumf %169, %170 : vector<192x128xf32>
    %c15 = arith.constant 15 : index
    %c0_67 = arith.constant 0 : index
    %c0_68 = arith.constant 0 : index
    %172 = vector.load %arg1[%c15, %c0_67, %c0_68] : memref<28x32x128xbf16, #tpu.memory_space<vmem>>, vector<5x32x128xbf16>
    %173 = vector.shape_cast %172 : vector<5x32x128xbf16> to vector<160x128xbf16>
    %cst_69 = arith.constant dense<0.000000e+00> : vector<192x128xf32>
    %174 = tpu.matmul %0, %173, %cst_69 {dimension_numbers = #tpu.dot_dimension_numbers<[1], [0], [0], [1], [0, 0, 1, 1], [], []>} : vector<192x160xbf16>, vector<160x128xbf16>, vector<192x128xf32> -> vector<192x128xf32>
    %175 = vector.broadcast %1 : vector<192x1xf32> to vector<192x128xf32>
    %176 = arith.addf %174, %175 : vector<192x128xf32>
    %cst_70 = arith.constant 0.000000e+00 : f32
    %177 = vector.broadcast %cst_70 : f32 to vector<192x128xf32>
    %178 = arith.maximumf %176, %177 : vector<192x128xf32>
    %179 = arith.maximumf %171, %178 : vector<192x128xf32>
    %180 = vector.shape_cast %179 : vector<192x128xf32> to vector<12x2x8x128xf32>
    %181 = vector.extract_strided_slice %180 {offsets = [0, 0, 0, 0], sizes = [12, 1, 8, 128], strides = [1, 1, 1, 1]} : vector<12x2x8x128xf32> to vector<12x1x8x128xf32>
    %182 = vector.shape_cast %181 : vector<12x1x8x128xf32> to vector<12x8x128xf32>
    %183 = vector.extract_strided_slice %180 {offsets = [0, 1, 0, 0], sizes = [12, 1, 8, 128], strides = [1, 1, 1, 1]} : vector<12x2x8x128xf32> to vector<12x1x8x128xf32>
    %184 = vector.shape_cast %183 : vector<12x1x8x128xf32> to vector<12x8x128xf32>
    %185 = arith.maximumf %182, %184 : vector<12x8x128xf32>
    %186 = vector.shape_cast %185 : vector<12x8x128xf32> to vector<96x128xf32>
    %187 = arith.truncf %186 : vector<96x128xf32> to vector<96x128xbf16>
    %c16 = arith.constant 16 : index
    %c0_71 = arith.constant 0 : index
    %c0_72 = arith.constant 0 : index
    %188 = vector.load %arg1[%c16, %c0_71, %c0_72] : memref<28x32x128xbf16, #tpu.memory_space<vmem>>, vector<5x32x128xbf16>
    %189 = vector.shape_cast %188 : vector<5x32x128xbf16> to vector<160x128xbf16>
    %cst_73 = arith.constant dense<0.000000e+00> : vector<192x128xf32>
    %190 = tpu.matmul %0, %189, %cst_73 {dimension_numbers = #tpu.dot_dimension_numbers<[1], [0], [0], [1], [0, 0, 1, 1], [], []>} : vector<192x160xbf16>, vector<160x128xbf16>, vector<192x128xf32> -> vector<192x128xf32>
    %191 = vector.broadcast %1 : vector<192x1xf32> to vector<192x128xf32>
    %192 = arith.addf %190, %191 : vector<192x128xf32>
    %cst_74 = arith.constant 0.000000e+00 : f32
    %193 = vector.broadcast %cst_74 : f32 to vector<192x128xf32>
    %194 = arith.maximumf %192, %193 : vector<192x128xf32>
    %c17 = arith.constant 17 : index
    %c0_75 = arith.constant 0 : index
    %c0_76 = arith.constant 0 : index
    %195 = vector.load %arg1[%c17, %c0_75, %c0_76] : memref<28x32x128xbf16, #tpu.memory_space<vmem>>, vector<5x32x128xbf16>
    %196 = vector.shape_cast %195 : vector<5x32x128xbf16> to vector<160x128xbf16>
    %cst_77 = arith.constant dense<0.000000e+00> : vector<192x128xf32>
    %197 = tpu.matmul %0, %196, %cst_77 {dimension_numbers = #tpu.dot_dimension_numbers<[1], [0], [0], [1], [0, 0, 1, 1], [], []>} : vector<192x160xbf16>, vector<160x128xbf16>, vector<192x128xf32> -> vector<192x128xf32>
    %198 = vector.broadcast %1 : vector<192x1xf32> to vector<192x128xf32>
    %199 = arith.addf %197, %198 : vector<192x128xf32>
    %cst_78 = arith.constant 0.000000e+00 : f32
    %200 = vector.broadcast %cst_78 : f32 to vector<192x128xf32>
    %201 = arith.maximumf %199, %200 : vector<192x128xf32>
    %202 = arith.maximumf %194, %201 : vector<192x128xf32>
    %203 = vector.shape_cast %202 : vector<192x128xf32> to vector<12x2x8x128xf32>
    %204 = vector.extract_strided_slice %203 {offsets = [0, 0, 0, 0], sizes = [12, 1, 8, 128], strides = [1, 1, 1, 1]} : vector<12x2x8x128xf32> to vector<12x1x8x128xf32>
    %205 = vector.shape_cast %204 : vector<12x1x8x128xf32> to vector<12x8x128xf32>
    %206 = vector.extract_strided_slice %203 {offsets = [0, 1, 0, 0], sizes = [12, 1, 8, 128], strides = [1, 1, 1, 1]} : vector<12x2x8x128xf32> to vector<12x1x8x128xf32>
    %207 = vector.shape_cast %206 : vector<12x1x8x128xf32> to vector<12x8x128xf32>
    %208 = arith.maximumf %205, %207 : vector<12x8x128xf32>
    %209 = vector.shape_cast %208 : vector<12x8x128xf32> to vector<96x128xf32>
    %210 = arith.truncf %209 : vector<96x128xf32> to vector<96x128xbf16>
    %c18 = arith.constant 18 : index
    %c0_79 = arith.constant 0 : index
    %c0_80 = arith.constant 0 : index
    %211 = vector.load %arg1[%c18, %c0_79, %c0_80] : memref<28x32x128xbf16, #tpu.memory_space<vmem>>, vector<5x32x128xbf16>
    %212 = vector.shape_cast %211 : vector<5x32x128xbf16> to vector<160x128xbf16>
    %cst_81 = arith.constant dense<0.000000e+00> : vector<192x128xf32>
    %213 = tpu.matmul %0, %212, %cst_81 {dimension_numbers = #tpu.dot_dimension_numbers<[1], [0], [0], [1], [0, 0, 1, 1], [], []>} : vector<192x160xbf16>, vector<160x128xbf16>, vector<192x128xf32> -> vector<192x128xf32>
    %214 = vector.broadcast %1 : vector<192x1xf32> to vector<192x128xf32>
    %215 = arith.addf %213, %214 : vector<192x128xf32>
    %cst_82 = arith.constant 0.000000e+00 : f32
    %216 = vector.broadcast %cst_82 : f32 to vector<192x128xf32>
    %217 = arith.maximumf %215, %216 : vector<192x128xf32>
    %c19 = arith.constant 19 : index
    %c0_83 = arith.constant 0 : index
    %c0_84 = arith.constant 0 : index
    %218 = vector.load %arg1[%c19, %c0_83, %c0_84] : memref<28x32x128xbf16, #tpu.memory_space<vmem>>, vector<5x32x128xbf16>
    %219 = vector.shape_cast %218 : vector<5x32x128xbf16> to vector<160x128xbf16>
    %cst_85 = arith.constant dense<0.000000e+00> : vector<192x128xf32>
    %220 = tpu.matmul %0, %219, %cst_85 {dimension_numbers = #tpu.dot_dimension_numbers<[1], [0], [0], [1], [0, 0, 1, 1], [], []>} : vector<192x160xbf16>, vector<160x128xbf16>, vector<192x128xf32> -> vector<192x128xf32>
    %221 = vector.broadcast %1 : vector<192x1xf32> to vector<192x128xf32>
    %222 = arith.addf %220, %221 : vector<192x128xf32>
    %cst_86 = arith.constant 0.000000e+00 : f32
    %223 = vector.broadcast %cst_86 : f32 to vector<192x128xf32>
    %224 = arith.maximumf %222, %223 : vector<192x128xf32>
    %225 = arith.maximumf %217, %224 : vector<192x128xf32>
    %226 = vector.shape_cast %225 : vector<192x128xf32> to vector<12x2x8x128xf32>
    %227 = vector.extract_strided_slice %226 {offsets = [0, 0, 0, 0], sizes = [12, 1, 8, 128], strides = [1, 1, 1, 1]} : vector<12x2x8x128xf32> to vector<12x1x8x128xf32>
    %228 = vector.shape_cast %227 : vector<12x1x8x128xf32> to vector<12x8x128xf32>
    %229 = vector.extract_strided_slice %226 {offsets = [0, 1, 0, 0], sizes = [12, 1, 8, 128], strides = [1, 1, 1, 1]} : vector<12x2x8x128xf32> to vector<12x1x8x128xf32>
    %230 = vector.shape_cast %229 : vector<12x1x8x128xf32> to vector<12x8x128xf32>
    %231 = arith.maximumf %228, %230 : vector<12x8x128xf32>
    %232 = vector.shape_cast %231 : vector<12x8x128xf32> to vector<96x128xf32>
    %233 = arith.truncf %232 : vector<96x128xf32> to vector<96x128xbf16>
    %c20 = arith.constant 20 : index
    %c0_87 = arith.constant 0 : index
    %c0_88 = arith.constant 0 : index
    %234 = vector.load %arg1[%c20, %c0_87, %c0_88] : memref<28x32x128xbf16, #tpu.memory_space<vmem>>, vector<5x32x128xbf16>
    %235 = vector.shape_cast %234 : vector<5x32x128xbf16> to vector<160x128xbf16>
    %cst_89 = arith.constant dense<0.000000e+00> : vector<192x128xf32>
    %236 = tpu.matmul %0, %235, %cst_89 {dimension_numbers = #tpu.dot_dimension_numbers<[1], [0], [0], [1], [0, 0, 1, 1], [], []>} : vector<192x160xbf16>, vector<160x128xbf16>, vector<192x128xf32> -> vector<192x128xf32>
    %237 = vector.broadcast %1 : vector<192x1xf32> to vector<192x128xf32>
    %238 = arith.addf %236, %237 : vector<192x128xf32>
    %cst_90 = arith.constant 0.000000e+00 : f32
    %239 = vector.broadcast %cst_90 : f32 to vector<192x128xf32>
    %240 = arith.maximumf %238, %239 : vector<192x128xf32>
    %c21 = arith.constant 21 : index
    %c0_91 = arith.constant 0 : index
    %c0_92 = arith.constant 0 : index
    %241 = vector.load %arg1[%c21, %c0_91, %c0_92] : memref<28x32x128xbf16, #tpu.memory_space<vmem>>, vector<5x32x128xbf16>
    %242 = vector.shape_cast %241 : vector<5x32x128xbf16> to vector<160x128xbf16>
    %cst_93 = arith.constant dense<0.000000e+00> : vector<192x128xf32>
    %243 = tpu.matmul %0, %242, %cst_93 {dimension_numbers = #tpu.dot_dimension_numbers<[1], [0], [0], [1], [0, 0, 1, 1], [], []>} : vector<192x160xbf16>, vector<160x128xbf16>, vector<192x128xf32> -> vector<192x128xf32>
    %244 = vector.broadcast %1 : vector<192x1xf32> to vector<192x128xf32>
    %245 = arith.addf %243, %244 : vector<192x128xf32>
    %cst_94 = arith.constant 0.000000e+00 : f32
    %246 = vector.broadcast %cst_94 : f32 to vector<192x128xf32>
    %247 = arith.maximumf %245, %246 : vector<192x128xf32>
    %248 = arith.maximumf %240, %247 : vector<192x128xf32>
    %249 = vector.shape_cast %248 : vector<192x128xf32> to vector<12x2x8x128xf32>
    %250 = vector.extract_strided_slice %249 {offsets = [0, 0, 0, 0], sizes = [12, 1, 8, 128], strides = [1, 1, 1, 1]} : vector<12x2x8x128xf32> to vector<12x1x8x128xf32>
    %251 = vector.shape_cast %250 : vector<12x1x8x128xf32> to vector<12x8x128xf32>
    %252 = vector.extract_strided_slice %249 {offsets = [0, 1, 0, 0], sizes = [12, 1, 8, 128], strides = [1, 1, 1, 1]} : vector<12x2x8x128xf32> to vector<12x1x8x128xf32>
    %253 = vector.shape_cast %252 : vector<12x1x8x128xf32> to vector<12x8x128xf32>
    %254 = arith.maximumf %251, %253 : vector<12x8x128xf32>
    %255 = vector.shape_cast %254 : vector<12x8x128xf32> to vector<96x128xf32>
    %256 = arith.truncf %255 : vector<96x128xf32> to vector<96x128xbf16>
    %c22 = arith.constant 22 : index
    %c0_95 = arith.constant 0 : index
    %c0_96 = arith.constant 0 : index
    %257 = vector.load %arg1[%c22, %c0_95, %c0_96] : memref<28x32x128xbf16, #tpu.memory_space<vmem>>, vector<5x32x128xbf16>
    %258 = vector.shape_cast %257 : vector<5x32x128xbf16> to vector<160x128xbf16>
    %cst_97 = arith.constant dense<0.000000e+00> : vector<192x128xf32>
    %259 = tpu.matmul %0, %258, %cst_97 {dimension_numbers = #tpu.dot_dimension_numbers<[1], [0], [0], [1], [0, 0, 1, 1], [], []>} : vector<192x160xbf16>, vector<160x128xbf16>, vector<192x128xf32> -> vector<192x128xf32>
    %260 = vector.broadcast %1 : vector<192x1xf32> to vector<192x128xf32>
    %261 = arith.addf %259, %260 : vector<192x128xf32>
    %cst_98 = arith.constant 0.000000e+00 : f32
    %262 = vector.broadcast %cst_98 : f32 to vector<192x128xf32>
    %263 = arith.maximumf %261, %262 : vector<192x128xf32>
    %c23 = arith.constant 23 : index
    %c0_99 = arith.constant 0 : index
    %c0_100 = arith.constant 0 : index
    %264 = vector.load %arg1[%c23, %c0_99, %c0_100] : memref<28x32x128xbf16, #tpu.memory_space<vmem>>, vector<5x32x128xbf16>
    %265 = vector.shape_cast %264 : vector<5x32x128xbf16> to vector<160x128xbf16>
    %cst_101 = arith.constant dense<0.000000e+00> : vector<192x128xf32>
    %266 = tpu.matmul %0, %265, %cst_101 {dimension_numbers = #tpu.dot_dimension_numbers<[1], [0], [0], [1], [0, 0, 1, 1], [], []>} : vector<192x160xbf16>, vector<160x128xbf16>, vector<192x128xf32> -> vector<192x128xf32>
    %267 = vector.broadcast %1 : vector<192x1xf32> to vector<192x128xf32>
    %268 = arith.addf %266, %267 : vector<192x128xf32>
    %cst_102 = arith.constant 0.000000e+00 : f32
    %269 = vector.broadcast %cst_102 : f32 to vector<192x128xf32>
    %270 = arith.maximumf %268, %269 : vector<192x128xf32>
    %271 = arith.maximumf %263, %270 : vector<192x128xf32>
    %272 = vector.shape_cast %271 : vector<192x128xf32> to vector<12x2x8x128xf32>
    %273 = vector.extract_strided_slice %272 {offsets = [0, 0, 0, 0], sizes = [12, 1, 8, 128], strides = [1, 1, 1, 1]} : vector<12x2x8x128xf32> to vector<12x1x8x128xf32>
    %274 = vector.shape_cast %273 : vector<12x1x8x128xf32> to vector<12x8x128xf32>
    %275 = vector.extract_strided_slice %272 {offsets = [0, 1, 0, 0], sizes = [12, 1, 8, 128], strides = [1, 1, 1, 1]} : vector<12x2x8x128xf32> to vector<12x1x8x128xf32>
    %276 = vector.shape_cast %275 : vector<12x1x8x128xf32> to vector<12x8x128xf32>
    %277 = arith.maximumf %274, %276 : vector<12x8x128xf32>
    %278 = vector.shape_cast %277 : vector<12x8x128xf32> to vector<96x128xf32>
    %279 = arith.truncf %278 : vector<96x128xf32> to vector<96x128xbf16>
    %280 = tpu.concatenate %26, %49, %72, %95, %118, %141, %164, %187, %210, %233, %256, %279 in 0 : vector<96x128xbf16>, vector<96x128xbf16>, vector<96x128xbf16>, vector<96x128xbf16>, vector<96x128xbf16>, vector<96x128xbf16>, vector<96x128xbf16>, vector<96x128xbf16>, vector<96x128xbf16>, vector<96x128xbf16>, vector<96x128xbf16>, vector<96x128xbf16> -> vector<1152x128xbf16>
    %281 = vector.extract_strided_slice %280 {offsets = [0, 0], sizes = [480, 128], strides = [1, 1]} : vector<1152x128xbf16> to vector<480x128xbf16>
    %cst_103 = arith.constant dense<0.000000e+00> : vector<128x128xf32>
    %282 = tpu.matmul %2, %281, %cst_103 {dimension_numbers = #tpu.dot_dimension_numbers<[1], [0], [0], [1], [0, 0, 1, 1], [], []>} : vector<128x480xbf16>, vector<480x128xbf16>, vector<128x128xf32> -> vector<128x128xf32>
    %283 = vector.broadcast %3 : vector<128x1xf32> to vector<128x128xf32>
    %284 = arith.addf %282, %283 : vector<128x128xf32>
    %cst_104 = arith.constant 0.000000e+00 : f32
    %285 = vector.broadcast %cst_104 : f32 to vector<128x128xf32>
    %286 = arith.maximumf %284, %285 : vector<128x128xf32>
    %287 = vector.extract_strided_slice %280 {offsets = [96, 0], sizes = [480, 128], strides = [1, 1]} : vector<1152x128xbf16> to vector<480x128xbf16>
    %cst_105 = arith.constant dense<0.000000e+00> : vector<128x128xf32>
    %288 = tpu.matmul %2, %287, %cst_105 {dimension_numbers = #tpu.dot_dimension_numbers<[1], [0], [0], [1], [0, 0, 1, 1], [], []>} : vector<128x480xbf16>, vector<480x128xbf16>, vector<128x128xf32> -> vector<128x128xf32>
    %289 = vector.broadcast %3 : vector<128x1xf32> to vector<128x128xf32>
    %290 = arith.addf %288, %289 : vector<128x128xf32>
    %cst_106 = arith.constant 0.000000e+00 : f32
    %291 = vector.broadcast %cst_106 : f32 to vector<128x128xf32>
    %292 = arith.maximumf %290, %291 : vector<128x128xf32>
    %293 = arith.maximumf %286, %292 : vector<128x128xf32>
    %294 = vector.shape_cast %293 : vector<128x128xf32> to vector<4x2x16x128xf32>
    %295 = vector.extract_strided_slice %294 {offsets = [0, 0, 0, 0], sizes = [4, 1, 16, 128], strides = [1, 1, 1, 1]} : vector<4x2x16x128xf32> to vector<4x1x16x128xf32>
    %296 = vector.shape_cast %295 : vector<4x1x16x128xf32> to vector<4x16x128xf32>
    %297 = vector.extract_strided_slice %294 {offsets = [0, 1, 0, 0], sizes = [4, 1, 16, 128], strides = [1, 1, 1, 1]} : vector<4x2x16x128xf32> to vector<4x1x16x128xf32>
    %298 = vector.shape_cast %297 : vector<4x1x16x128xf32> to vector<4x16x128xf32>
    %299 = arith.maximumf %296, %298 : vector<4x16x128xf32>
    %300 = vector.shape_cast %299 : vector<4x16x128xf32> to vector<64x128xf32>
    %301 = vector.extract_strided_slice %280 {offsets = [192, 0], sizes = [480, 128], strides = [1, 1]} : vector<1152x128xbf16> to vector<480x128xbf16>
    %cst_107 = arith.constant dense<0.000000e+00> : vector<128x128xf32>
    %302 = tpu.matmul %2, %301, %cst_107 {dimension_numbers = #tpu.dot_dimension_numbers<[1], [0], [0], [1], [0, 0, 1, 1], [], []>} : vector<128x480xbf16>, vector<480x128xbf16>, vector<128x128xf32> -> vector<128x128xf32>
    %303 = vector.broadcast %3 : vector<128x1xf32> to vector<128x128xf32>
    %304 = arith.addf %302, %303 : vector<128x128xf32>
    %cst_108 = arith.constant 0.000000e+00 : f32
    %305 = vector.broadcast %cst_108 : f32 to vector<128x128xf32>
    %306 = arith.maximumf %304, %305 : vector<128x128xf32>
    %307 = vector.extract_strided_slice %280 {offsets = [288, 0], sizes = [480, 128], strides = [1, 1]} : vector<1152x128xbf16> to vector<480x128xbf16>
    %cst_109 = arith.constant dense<0.000000e+00> : vector<128x128xf32>
    %308 = tpu.matmul %2, %307, %cst_109 {dimension_numbers = #tpu.dot_dimension_numbers<[1], [0], [0], [1], [0, 0, 1, 1], [], []>} : vector<128x480xbf16>, vector<480x128xbf16>, vector<128x128xf32> -> vector<128x128xf32>
    %309 = vector.broadcast %3 : vector<128x1xf32> to vector<128x128xf32>
    %310 = arith.addf %308, %309 : vector<128x128xf32>
    %cst_110 = arith.constant 0.000000e+00 : f32
    %311 = vector.broadcast %cst_110 : f32 to vector<128x128xf32>
    %312 = arith.maximumf %310, %311 : vector<128x128xf32>
    %313 = arith.maximumf %306, %312 : vector<128x128xf32>
    %314 = vector.shape_cast %313 : vector<128x128xf32> to vector<4x2x16x128xf32>
    %315 = vector.extract_strided_slice %314 {offsets = [0, 0, 0, 0], sizes = [4, 1, 16, 128], strides = [1, 1, 1, 1]} : vector<4x2x16x128xf32> to vector<4x1x16x128xf32>
    %316 = vector.shape_cast %315 : vector<4x1x16x128xf32> to vector<4x16x128xf32>
    %317 = vector.extract_strided_slice %314 {offsets = [0, 1, 0, 0], sizes = [4, 1, 16, 128], strides = [1, 1, 1, 1]} : vector<4x2x16x128xf32> to vector<4x1x16x128xf32>
    %318 = vector.shape_cast %317 : vector<4x1x16x128xf32> to vector<4x16x128xf32>
    %319 = arith.maximumf %316, %318 : vector<4x16x128xf32>
    %320 = vector.shape_cast %319 : vector<4x16x128xf32> to vector<64x128xf32>
    %321 = vector.extract_strided_slice %280 {offsets = [384, 0], sizes = [480, 128], strides = [1, 1]} : vector<1152x128xbf16> to vector<480x128xbf16>
    %cst_111 = arith.constant dense<0.000000e+00> : vector<128x128xf32>
    %322 = tpu.matmul %2, %321, %cst_111 {dimension_numbers = #tpu.dot_dimension_numbers<[1], [0], [0], [1], [0, 0, 1, 1], [], []>} : vector<128x480xbf16>, vector<480x128xbf16>, vector<128x128xf32> -> vector<128x128xf32>
    %323 = vector.broadcast %3 : vector<128x1xf32> to vector<128x128xf32>
    %324 = arith.addf %322, %323 : vector<128x128xf32>
    %cst_112 = arith.constant 0.000000e+00 : f32
    %325 = vector.broadcast %cst_112 : f32 to vector<128x128xf32>
    %326 = arith.maximumf %324, %325 : vector<128x128xf32>
    %327 = vector.extract_strided_slice %280 {offsets = [480, 0], sizes = [480, 128], strides = [1, 1]} : vector<1152x128xbf16> to vector<480x128xbf16>
    %cst_113 = arith.constant dense<0.000000e+00> : vector<128x128xf32>
    %328 = tpu.matmul %2, %327, %cst_113 {dimension_numbers = #tpu.dot_dimension_numbers<[1], [0], [0], [1], [0, 0, 1, 1], [], []>} : vector<128x480xbf16>, vector<480x128xbf16>, vector<128x128xf32> -> vector<128x128xf32>
    %329 = vector.broadcast %3 : vector<128x1xf32> to vector<128x128xf32>
    %330 = arith.addf %328, %329 : vector<128x128xf32>
    %cst_114 = arith.constant 0.000000e+00 : f32
    %331 = vector.broadcast %cst_114 : f32 to vector<128x128xf32>
    %332 = arith.maximumf %330, %331 : vector<128x128xf32>
    %333 = arith.maximumf %326, %332 : vector<128x128xf32>
    %334 = vector.shape_cast %333 : vector<128x128xf32> to vector<4x2x16x128xf32>
    %335 = vector.extract_strided_slice %334 {offsets = [0, 0, 0, 0], sizes = [4, 1, 16, 128], strides = [1, 1, 1, 1]} : vector<4x2x16x128xf32> to vector<4x1x16x128xf32>
    %336 = vector.shape_cast %335 : vector<4x1x16x128xf32> to vector<4x16x128xf32>
    %337 = vector.extract_strided_slice %334 {offsets = [0, 1, 0, 0], sizes = [4, 1, 16, 128], strides = [1, 1, 1, 1]} : vector<4x2x16x128xf32> to vector<4x1x16x128xf32>
    %338 = vector.shape_cast %337 : vector<4x1x16x128xf32> to vector<4x16x128xf32>
    %339 = arith.maximumf %336, %338 : vector<4x16x128xf32>
    %340 = vector.shape_cast %339 : vector<4x16x128xf32> to vector<64x128xf32>
    %341 = vector.extract_strided_slice %280 {offsets = [576, 0], sizes = [480, 128], strides = [1, 1]} : vector<1152x128xbf16> to vector<480x128xbf16>
    %cst_115 = arith.constant dense<0.000000e+00> : vector<128x128xf32>
    %342 = tpu.matmul %2, %341, %cst_115 {dimension_numbers = #tpu.dot_dimension_numbers<[1], [0], [0], [1], [0, 0, 1, 1], [], []>} : vector<128x480xbf16>, vector<480x128xbf16>, vector<128x128xf32> -> vector<128x128xf32>
    %343 = vector.broadcast %3 : vector<128x1xf32> to vector<128x128xf32>
    %344 = arith.addf %342, %343 : vector<128x128xf32>
    %cst_116 = arith.constant 0.000000e+00 : f32
    %345 = vector.broadcast %cst_116 : f32 to vector<128x128xf32>
    %346 = arith.maximumf %344, %345 : vector<128x128xf32>
    %347 = vector.extract_strided_slice %280 {offsets = [672, 0], sizes = [480, 128], strides = [1, 1]} : vector<1152x128xbf16> to vector<480x128xbf16>
    %cst_117 = arith.constant dense<0.000000e+00> : vector<128x128xf32>
    %348 = tpu.matmul %2, %347, %cst_117 {dimension_numbers = #tpu.dot_dimension_numbers<[1], [0], [0], [1], [0, 0, 1, 1], [], []>} : vector<128x480xbf16>, vector<480x128xbf16>, vector<128x128xf32> -> vector<128x128xf32>
    %349 = vector.broadcast %3 : vector<128x1xf32> to vector<128x128xf32>
    %350 = arith.addf %348, %349 : vector<128x128xf32>
    %cst_118 = arith.constant 0.000000e+00 : f32
    %351 = vector.broadcast %cst_118 : f32 to vector<128x128xf32>
    %352 = arith.maximumf %350, %351 : vector<128x128xf32>
    %353 = arith.maximumf %346, %352 : vector<128x128xf32>
    %354 = vector.shape_cast %353 : vector<128x128xf32> to vector<4x2x16x128xf32>
    %355 = vector.extract_strided_slice %354 {offsets = [0, 0, 0, 0], sizes = [4, 1, 16, 128], strides = [1, 1, 1, 1]} : vector<4x2x16x128xf32> to vector<4x1x16x128xf32>
    %356 = vector.shape_cast %355 : vector<4x1x16x128xf32> to vector<4x16x128xf32>
    %357 = vector.extract_strided_slice %354 {offsets = [0, 1, 0, 0], sizes = [4, 1, 16, 128], strides = [1, 1, 1, 1]} : vector<4x2x16x128xf32> to vector<4x1x16x128xf32>
    %358 = vector.shape_cast %357 : vector<4x1x16x128xf32> to vector<4x16x128xf32>
    %359 = arith.maximumf %356, %358 : vector<4x16x128xf32>
    %360 = vector.shape_cast %359 : vector<4x16x128xf32> to vector<64x128xf32>
    %361 = tpu.concatenate %300, %320, %340, %360 in 0 : vector<64x128xf32>, vector<64x128xf32>, vector<64x128xf32>, vector<64x128xf32> -> vector<256x128xf32>
    %362 = arith.truncf %361 : vector<256x128xf32> to vector<256x128xbf16>
    %c0_119 = arith.constant 0 : index
    %c0_120 = arith.constant 0 : index
    %363 = vector.load %arg6[%c0_119, %c0_120] : memref<128x256xbf16, #tpu.memory_space<vmem>>, vector<128x256xbf16>
    %cst_121 = arith.constant dense<0.000000e+00> : vector<128x128xf32>
    %364 = tpu.matmul %363, %362, %cst_121 {dimension_numbers = #tpu.dot_dimension_numbers<[1], [0], [0], [1], [0, 0, 1, 1], [], []>} : vector<128x256xbf16>, vector<256x128xbf16>, vector<128x128xf32> -> vector<128x128xf32>
    %c0_122 = arith.constant 0 : index
    %c0_123 = arith.constant 0 : index
    %365 = vector.load %arg7[%c0_122, %c0_123] : memref<128x1xf32, #tpu.memory_space<vmem>>, vector<128x1xf32>
    %366 = vector.broadcast %365 : vector<128x1xf32> to vector<128x128xf32>
    %367 = arith.addf %364, %366 : vector<128x128xf32>
    %cst_124 = arith.constant 0.000000e+00 : f32
    %368 = vector.broadcast %cst_124 : f32 to vector<128x128xf32>
    %369 = arith.maximumf %367, %368 : vector<128x128xf32>
    %370 = arith.truncf %369 : vector<128x128xf32> to vector<128x128xbf16>
    %c0_125 = arith.constant 0 : index
    %c0_126 = arith.constant 0 : index
    %371 = vector.load %arg8[%c0_125, %c0_126] : memref<128x128xbf16, #tpu.memory_space<vmem>>, vector<128x128xbf16>
    %cst_127 = arith.constant dense<0.000000e+00> : vector<128x128xf32>
    %372 = tpu.matmul %371, %370, %cst_127 {dimension_numbers = #tpu.dot_dimension_numbers<[1], [0], [0], [1], [0, 0, 1, 1], [], []>} : vector<128x128xbf16>, vector<128x128xbf16>, vector<128x128xf32> -> vector<128x128xf32>
    %c0_128 = arith.constant 0 : index
    %c0_129 = arith.constant 0 : index
    %373 = vector.load %arg9[%c0_128, %c0_129] : memref<128x1xf32, #tpu.memory_space<vmem>>, vector<128x1xf32>
    %374 = vector.broadcast %373 : vector<128x1xf32> to vector<128x128xf32>
    %375 = arith.addf %372, %374 : vector<128x128xf32>
    %cst_130 = arith.constant 0.000000e+00 : f32
    %376 = vector.broadcast %cst_130 : f32 to vector<128x128xf32>
    %377 = arith.maximumf %375, %376 : vector<128x128xf32>
    %378 = arith.truncf %377 : vector<128x128xf32> to vector<128x128xbf16>
    %c0_131 = arith.constant 0 : index
    %c0_132 = arith.constant 0 : index
    %379 = vector.load %arg10[%c0_131, %c0_132] : memref<128x128xbf16, #tpu.memory_space<vmem>>, vector<128x128xbf16>
    %cst_133 = arith.constant dense<0.000000e+00> : vector<128x128xf32>
    %380 = tpu.matmul %379, %378, %cst_133 {dimension_numbers = #tpu.dot_dimension_numbers<[1], [0], [0], [1], [0, 0, 1, 1], [], []>} : vector<128x128xbf16>, vector<128x128xbf16>, vector<128x128xf32> -> vector<128x128xf32>
    %c0_134 = arith.constant 0 : index
    %c0_135 = arith.constant 0 : index
    %381 = vector.load %arg11[%c0_134, %c0_135] : memref<128x1xf32, #tpu.memory_space<vmem>>, vector<128x1xf32>
    %382 = vector.broadcast %381 : vector<128x1xf32> to vector<128x128xf32>
    %383 = arith.addf %380, %382 : vector<128x128xf32>
    %c0_136 = arith.constant 0 : index
    %c0_137 = arith.constant 0 : index
    %384 = vector.load %arg12[%c0_136, %c0_137] : memref<128x128xf32, #tpu.memory_space<vmem>>, vector<128x128xf32>
    tpu.vector_store %arg12[%c0_136, %c0_137], %383 {strides = array<i32>} : memref<128x128xf32, #tpu.memory_space<vmem>>, vector<128x128xf32>,
    return
  }
  func.func @transform_0(%arg0: i32) -> (i32, i32, i32) {
    %c0_i32 = arith.constant 0 : i32
    %c0_i32_0 = arith.constant 0 : i32
    %c0_i32_1 = arith.constant 0 : i32
    return %c0_i32, %c0_i32_0, %arg0 : i32, i32, i32
  }
  func.func @transform_1(%arg0: i32) -> (i32, i32) {
    %c0_i32 = arith.constant 0 : i32
    %c0_i32_0 = arith.constant 0 : i32
    %c0_i32_1 = arith.constant 0 : i32
    return %c0_i32, %c0_i32_0 : i32, i32
  }
  func.func @transform_2(%arg0: i32) -> (i32, i32) {
    %c0_i32 = arith.constant 0 : i32
    %c0_i32_0 = arith.constant 0 : i32
    %c0_i32_1 = arith.constant 0 : i32
    return %c0_i32, %c0_i32_0 : i32, i32
  }
  func.func @transform_3(%arg0: i32) -> (i32, i32) {
    %c0_i32 = arith.constant 0 : i32
    %c0_i32_0 = arith.constant 0 : i32
    %c0_i32_1 = arith.constant 0 : i32
    return %c0_i32, %c0_i32_0 : i32, i32
  }
  func.func @transform_4(%arg0: i32) -> (i32, i32) {
    %c0_i32 = arith.constant 0 : i32
    %c0_i32_0 = arith.constant 0 : i32
    %c0_i32_1 = arith.constant 0 : i32
    return %c0_i32, %c0_i32_0 : i32, i32
  }
  func.func @transform_5(%arg0: i32) -> (i32, i32) {
    %c0_i32 = arith.constant 0 : i32
    %c0_i32_0 = arith.constant 0 : i32
    %c0_i32_1 = arith.constant 0 : i32
    return %c0_i32, %c0_i32_0 : i32, i32
  }
  func.func @transform_6(%arg0: i32) -> (i32, i32) {
    %c0_i32 = arith.constant 0 : i32
    %c0_i32_0 = arith.constant 0 : i32
    %c0_i32_1 = arith.constant 0 : i32
    return %c0_i32, %c0_i32_0 : i32, i32
  }
  func.func @transform_7(%arg0: i32) -> (i32, i32) {
    %c0_i32 = arith.constant 0 : i32
    %c0_i32_0 = arith.constant 0 : i32
    %c0_i32_1 = arith.constant 0 : i32
    return %c0_i32, %c0_i32_0 : i32, i32
  }
  func.func @transform_8(%arg0: i32) -> (i32, i32) {
    %c0_i32 = arith.constant 0 : i32
    %c0_i32_0 = arith.constant 0 : i32
    %c0_i32_1 = arith.constant 0 : i32
    return %c0_i32, %c0_i32_0 : i32, i32
  }
  func.func @transform_9(%arg0: i32) -> (i32, i32) {
    %c0_i32 = arith.constant 0 : i32
    %c0_i32_0 = arith.constant 0 : i32
    %c0_i32_1 = arith.constant 0 : i32
    return %c0_i32, %c0_i32_0 : i32, i32
  }
  func.func @transform_10(%arg0: i32) -> (i32, i32) {
    %c0_i32 = arith.constant 0 : i32
    %c0_i32_0 = arith.constant 0 : i32
    %c0_i32_1 = arith.constant 0 : i32
    return %c0_i32, %c0_i32_0 : i32, i32
  }
  func.func @transform_11(%arg0: i32) -> (i32, i32) {
    %c0_i32 = arith.constant 0 : i32
    %c0_i32_0 = arith.constant 0 : i32
    return %c0_i32, %arg0 : i32, i32
  }
}

</mosaic_0001>

<llo_original>
// kernel: tile.13
$region0: #{tile.13}
  #allocation0 [shape = 's32[1]{0}', space=sflag, size = 0x4, scoped, tag = 'scoped memory for tile.13']
  %s0 = inlined_call_operand.vmem [shape: f32[8], index: 0, kind: input, shape index: {}]
  %s1 = inlined_call_operand.vmem [shape: f32[24,8], index: 1, kind: output, shape index: {}]
  // Predicated region
  $region2: #{tile.13} parent=0 // pred_check
    _
  $region3: #{tile.13} parent=0 // pred_check_branch
    %3 = sbr.rel (0) target = $region5
  $region4: #{tile.13} parent=0 // pred_region
    _
  $region5: #{tile.13} parent=0 // pred_fallthru
    _
  %v4 = vld [vmem:[%s0] ss:$0 sm:$0xff]
  %5 = vst [vmem:[%s1] sm:$0xff] %v4
  %s6 = scalar_lea.vmem %s1, 8
  %7 = vst [vmem:[%s6] sm:$0xff] %v4
  %s8 = scalar_lea.vmem %s1, 16
  %9 = vst [vmem:[%s8] sm:$0xff] %v4

// kernel: tile.0
$region0: #{tile.0}
  %s0 = inlined_call_operand.vmem [shape: f32[24,8], index: 0, kind: input, shape index: {}]
  %s1 = inlined_call_operand.vmem [shape: f32[192,1], index: 1, kind: output, shape index: {}]
  %v2 = vld [vmem:[%s0] sm:$0xff]
  %vm3 = vcmask 7168
  %4 = vst.msk [vmem:[%s1] ss:$8 sm:$0xf] %vm3, %v2
  %5 = vst.msk [vmem:[%s1] ss:$8 sm:$0xf0] %vm3, %v2
  %s6 = scalar_lea.vmem %s0, 8
  %v7 = vld [vmem:[%s6] sm:$0xff]
  %vm8 = vcmask 7168
  %s9 = scalar_lea.vmem %s1, 64
  %10 = vst.msk [vmem:[%s9] ss:$8 sm:$0xf] %vm8, %v7
  %s11 = scalar_lea.vmem %s1, 64
  %12 = vst.msk [vmem:[%s11] ss:$8 sm:$0xf0] %vm8, %v7
  %s13 = scalar_lea.vmem %s0, 16
  %v14 = vld [vmem:[%s13] sm:$0xff]
  %vm15 = vcmask 7168
  %s16 = scalar_lea.vmem %s1, 128
  %17 = vst.msk [vmem:[%s16] ss:$8 sm:$0xf] %vm15, %v14
  %s18 = scalar_lea.vmem %s1, 128
  %19 = vst.msk [vmem:[%s18] ss:$8 sm:$0xf0] %vm15, %v14
  %v20 = vld [vmem:[%s0] sm:$0xff]
  %21 = vrot.lane.b32.xlu0 %v20, 127
  %v22 = vpop.permute.xlu0 %21
  %vm23 = vcmask 7168
  %s24 = scalar_lea.vmem %s1, 1
  %25 = vst.msk [vmem:[%s24] ss:$8 sm:$0xf] %vm23, %v22
  %s26 = scalar_lea.vmem %s1, 1
  %27 = vst.msk [vmem:[%s26] ss:$8 sm:$0xf0] %vm23, %v22
  %s28 = scalar_lea.vmem %s0, 8
  %v29 = vld [vmem:[%s28] sm:$0xff]
  %30 = vrot.lane.b32.xlu0 %v29, 127
  %v31 = vpop.permute.xlu0 %30
  %vm32 = vcmask 7168
  %s33 = scalar_lea.vmem %s1, 65
  %34 = vst.msk [vmem:[%s33] ss:$8 sm:$0xf] %vm32, %v31
  %s35 = scalar_lea.vmem %s1, 65
  %36 = vst.msk [vmem:[%s35] ss:$8 sm:$0xf0] %vm32, %v31
  %s37 = scalar_lea.vmem %s0, 16
  %v38 = vld [vmem:[%s37] sm:$0xff]
  %39 = vrot.lane.b32.xlu0 %v38, 127
  %v40 = vpop.permute.xlu0 %39
  %vm41 = vcmask 7168
  %s42 = scalar_lea.vmem %s1, 129
  %43 = vst.msk [vmem:[%s42] ss:$8 sm:$0xf] %vm41, %v40
  %s44 = scalar_lea.vmem %s1, 129
  %45 = vst.msk [vmem:[%s44] ss:$8 sm:$0xf0] %vm41, %v40
  %v46 = vld [vmem:[%s0] sm:$0xff]
  %47 = vrot.lane.b32.xlu0 %v46, 126
  %v48 = vpop.permute.xlu0 %47
  %vm49 = vcmask 7168
  %s50 = scalar_lea.vmem %s1, 2
  %51 = vst.msk [vmem:[%s50] ss:$8 sm:$0xf] %vm49, %v48
  %s52 = scalar_lea.vmem %s1, 2
  %53 = vst.msk [vmem:[%s52] ss:$8 sm:$0xf0] %vm49, %v48
  %s54 = scalar_lea.vmem %s0, 8
  %v55 = vld [vmem:[%s54] sm:$0xff]
  %56 = vrot.lane.b32.xlu0 %v55, 126
  %v57 = vpop.permute.xlu0 %56
  %vm58 = vcmask 7168
  %s59 = scalar_lea.vmem %s1, 66
  %60 = vst.msk [vmem:[%s59] ss:$8 sm:$0xf] %vm58, %v57
  %s61 = scalar_lea.vmem %s1, 66
  %62 = vst.msk [vmem:[%s61] ss:$8 sm:$0xf0] %vm58, %v57
  %s63 = scalar_lea.vmem %s0, 16
  %v64 = vld [vmem:[%s63] sm:$0xff]
  %65 = vrot.lane.b32.xlu0 %v64, 126
  %v66 = vpop.permute.xlu0 %65
  %vm67 = vcmask 7168
  %s68 = scalar_lea.vmem %s1, 130
  %69 = vst.msk [vmem:[%s68] ss:$8 sm:$0xf] %vm67, %v66
  %s70 = scalar_lea.vmem %s1, 130
  %71 = vst.msk [vmem:[%s70] ss:$8 sm:$0xf0] %vm67, %v66
  %v72 = vld [vmem:[%s0] sm:$0xff]
  %73 = vrot.lane.b32.xlu0 %v72, 125
  %v74 = vpop.permute.xlu0 %73
  %vm75 = vcmask 7168
  %s76 = scalar_lea.vmem %s1, 3
  %77 = vst.msk [vmem:[%s76] ss:$8 sm:$0xf] %vm75, %v74
  %s78 = scalar_lea.vmem %s1, 3
  %79 = vst.msk [vmem:[%s78] ss:$8 sm:$0xf0] %vm75, %v74
  %s80 = scalar_lea.vmem %s0, 8
  %v81 = vld [vmem:[%s80] sm:$0xff]
  %82 = vrot.lane.b32.xlu0 %v81, 125
  %v83 = vpop.permute.xlu0 %82
  %vm84 = vcmask 7168
  %s85 = scalar_lea.vmem %s1, 67
  %86 = vst.msk [vmem:[%s85] ss:$8 sm:$0xf] %vm84, %v83
  %s87 = scalar_lea.vmem %s1, 67
  %88 = vst.msk [vmem:[%s87] ss:$8 sm:$0xf0] %vm84, %v83
  %s89 = scalar_lea.vmem %s0, 16
  %v90 = vld [vmem:[%s89] sm:$0xff]
  %91 = vrot.lane.b32.xlu0 %v90, 125
  %v92 = vpop.permute.xlu0 %91
  %vm93 = vcmask 7168
  %s94 = scalar_lea.vmem %s1, 131
  %95 = vst.msk [vmem:[%s94] ss:$8 sm:$0xf] %vm93, %v92
  %s96 = scalar_lea.vmem %s1, 131
  %97 = vst.msk [vmem:[%s96] ss:$8 sm:$0xf0] %vm93, %v92
  %v98 = vld [vmem:[%s0] sm:$0xff]
  %99 = vrot.lane.b32.xlu0 %v98, 124
  %v100 = vpop.permute.xlu0 %99
  %vm101 = vcmask 7168
  %s102 = scalar_lea.vmem %s1, 4
  %103 = vst.msk [vmem:[%s102] ss:$8 sm:$0xf] %vm101, %v100
  %s104 = scalar_lea.vmem %s1, 4
  %105 = vst.msk [vmem:[%s104] ss:$8 sm:$0xf0] %vm101, %v100
  %s106 = scalar_lea.vmem %s0, 8
  %v107 = vld [vmem:[%s106] sm:$0xff]
  %108 = vrot.lane.b32.xlu0 %v107, 124
  %v109 = vpop.permute.xlu0 %108
  %vm110 = vcmask 7168
  %s111 = scalar_lea.vmem %s1, 68
  %112 = vst.msk [vmem:[%s111] ss:$8 sm:$0xf] %vm110, %v109
  %s113 = scalar_lea.vmem %s1, 68
  %114 = vst.msk [vmem:[%s113] ss:$8 sm:$0xf0] %vm110, %v109
  %s115 = scalar_lea.vmem %s0, 16
  %v116 = vld [vmem:[%s115] sm:$0xff]
  %117 = vrot.lane.b32.xlu0 %v116, 124
  %v118 = vpop.permute.xlu0 %117
  %vm119 = vcmask 7168
  %s120 = scalar_lea.vmem %s1, 132
  %121 = vst.msk [vmem:[%s120] ss:$8 sm:$0xf] %vm119, %v118
  %s122 = scalar_lea.vmem %s1, 132
  %123 = vst.msk [vmem:[%s122] ss:$8 sm:$0xf0] %vm119, %v118
  %v124 = vld [vmem:[%s0] sm:$0xff]
  %125 = vrot.lane.b32.xlu0 %v124, 123
  %v126 = vpop.permute.xlu0 %125
  %vm127 = vcmask 7168
  %s128 = scalar_lea.vmem %s1, 5
  %129 = vst.msk [vmem:[%s128] ss:$8 sm:$0xf] %vm127, %v126
  %s130 = scalar_lea.vmem %s1, 5
  %131 = vst.msk [vmem:[%s130] ss:$8 sm:$0xf0] %vm127, %v126
  %s132 = scalar_lea.vmem %s0, 8
  %v133 = vld [vmem:[%s132] sm:$0xff]
  %134 = vrot.lane.b32.xlu0 %v133, 123
  %v135 = vpop.permute.xlu0 %134
  %vm136 = vcmask 7168
  %s137 = scalar_lea.vmem %s1, 69
  %138 = vst.msk [vmem:[%s137] ss:$8 sm:$0xf] %vm136, %v135
  %s139 = scalar_lea.vmem %s1, 69
  %140 = vst.msk [vmem:[%s139] ss:$8 sm:$0xf0] %vm136, %v135
  %s141 = scalar_lea.vmem %s0, 16
  %v142 = vld [vmem:[%s141] sm:$0xff]
  %143 = vrot.lane.b32.xlu0 %v142, 123
  %v144 = vpop.permute.xlu0 %143
  %vm145 = vcmask 7168
  %s146 = scalar_lea.vmem %s1, 133
  %147 = vst.msk [vmem:[%s146] ss:$8 sm:$0xf] %vm145, %v144
  %s148 = scalar_lea.vmem %s1, 133
  %149 = vst.msk [vmem:[%s148] ss:$8 sm:$0xf0] %vm145, %v144
  %v150 = vld [vmem:[%s0] sm:$0xff]
  %151 = vrot.lane.b32.xlu0 %v150, 122
  %v152 = vpop.permute.xlu0 %151
  %vm153 = vcmask 7168
  %s154 = scalar_lea.vmem %s1, 6
  %155 = vst.msk [vmem:[%s154] ss:$8 sm:$0xf] %vm153, %v152
  %s156 = scalar_lea.vmem %s1, 6
  %157 = vst.msk [vmem:[%s156] ss:$8 sm:$0xf0] %vm153, %v152
  %s158 = scalar_lea.vmem %s0, 8
  %v159 = vld [vmem:[%s158] sm:$0xff]
  %160 = vrot.lane.b32.xlu0 %v159, 122
  %v161 = vpop.permute.xlu0 %160
  %vm162 = vcmask 7168
  %s163 = scalar_lea.vmem %s1, 70
  %164 = vst.msk [vmem:[%s163] ss:$8 sm:$0xf] %vm162, %v161
  %s165 = scalar_lea.vmem %s1, 70
  %166 = vst.msk [vmem:[%s165] ss:$8 sm:$0xf0] %vm162, %v161
  %s167 = scalar_lea.vmem %s0, 16
  %v168 = vld [vmem:[%s167] sm:$0xff]
  %169 = vrot.lane.b32.xlu0 %v168, 122
  %v170 = vpop.permute.xlu0 %169
  %vm171 = vcmask 7168
  %s172 = scalar_lea.vmem %s1, 134
  %173 = vst.msk [vmem:[%s172] ss:$8 sm:$0xf] %vm171, %v170
  %s174 = scalar_lea.vmem %s1, 134
  %175 = vst.msk [vmem:[%s174] ss:$8 sm:$0xf0] %vm171, %v170
  %v176 = vld [vmem:[%s0] sm:$0xff]
  %177 = vrot.lane.b32.xlu0 %v176, 121
  %v178 = vpop.permute.xlu0 %177
  %vm179 = vcmask 7168
  %s180 = scalar_lea.vmem %s1, 7
  %181 = vst.msk [vmem:[%s180] ss:$8 sm:$0xf] %vm179, %v178
  %s182 = scalar_lea.vmem %s1, 7
  %183 = vst.msk [vmem:[%s182] ss:$8 sm:$0xf0] %vm179, %v178
  %s184 = scalar_lea.vmem %s0, 8
  %v185 = vld [vmem:[%s184] sm:$0xff]
  %186 = vrot.lane.b32.xlu0 %v185, 121
  %v187 = vpop.permute.xlu0 %186
  %vm188 = vcmask 7168
  %s189 = scalar_lea.vmem %s1, 71
  %190 = vst.msk [vmem:[%s189] ss:$8 sm:$0xf] %vm188, %v187
  %s191 = scalar_lea.vmem %s1, 71
  %192 = vst.msk [vmem:[%s191] ss:$8 sm:$0xf0] %vm188, %v187
  %s193 = scalar_lea.vmem %s0, 16
  %v194 = vld [vmem:[%s193] sm:$0xff]
  %195 = vrot.lane.b32.xlu0 %v194, 121
  %v196 = vpop.permute.xlu0 %195
  %vm197 = vcmask 7168
  %s198 = scalar_lea.vmem %s1, 135
  %199 = vst.msk [vmem:[%s198] ss:$8 sm:$0xf] %vm197, %v196
  %s200 = scalar_lea.vmem %s1, 135
  %201 = vst.msk [vmem:[%s200] ss:$8 sm:$0xf0] %vm197, %v196

// kernel: tile.18
$region0: #{tile.18}
  #allocation0 [shape = 's32[1]{0}', space=sflag, size = 0x4, scoped, tag = 'scoped memory for tile.18']
  %s0 = inlined_call_operand.vmem [shape: f32[16], index: 0, kind: input, shape index: {}]
  %s1 = inlined_call_operand.vmem [shape: f32[8,16], index: 1, kind: output, shape index: {}]
  // Predicated region
  $region2: #{tile.18} parent=0 // pred_check
    _
  $region3: #{tile.18} parent=0 // pred_check_branch
    %3 = sbr.rel (0) target = $region5
  $region4: #{tile.18} parent=0 // pred_region
    _
  $region5: #{tile.18} parent=0 // pred_fallthru
    _
  %v4 = vld [vmem:[%s0] ss:$0 sm:$0xff]
  %5 = vst [vmem:[%s1] sm:$0xff] %v4

// kernel: tile.1
$region0: #{tile.1}
  %s0 = inlined_call_operand.vmem [shape: f32[8,16], index: 0, kind: input, shape index: {}]
  %s1 = inlined_call_operand.vmem [shape: f32[128,1], index: 1, kind: output, shape index: {}]
  %v2 = vld [vmem:[%s0] sm:$0xff]
  %vm3 = vcmask 7168
  %4 = vst.msk [vmem:[%s1] ss:$16 sm:$0x3] %vm3, %v2
  %5 = vst.msk [vmem:[%s1] ss:$16 sm:$0xc] %vm3, %v2
  %6 = vst.msk [vmem:[%s1] ss:$16 sm:$0x30] %vm3, %v2
  %7 = vst.msk [vmem:[%s1] ss:$16 sm:$0xc0] %vm3, %v2
  %v8 = vld [vmem:[%s0] sm:$0xff]
  %9 = vrot.lane.b32.xlu0 %v8, 127
  %v10 = vpop.permute.xlu0 %9
  %vm11 = vcmask 7168
  %s12 = scalar_lea.vmem %s1, 1
  %13 = vst.msk [vmem:[%s12] ss:$16 sm:$0x3] %vm11, %v10
  %s14 = scalar_lea.vmem %s1, 1
  %15 = vst.msk [vmem:[%s14] ss:$16 sm:$0xc] %vm11, %v10
  %s16 = scalar_lea.vmem %s1, 1
  %17 = vst.msk [vmem:[%s16] ss:$16 sm:$0x30] %vm11, %v10
  %s18 = scalar_lea.vmem %s1, 1
  %19 = vst.msk [vmem:[%s18] ss:$16 sm:$0xc0] %vm11, %v10
  %v20 = vld [vmem:[%s0] sm:$0xff]
  %21 = vrot.lane.b32.xlu0 %v20, 126
  %v22 = vpop.permute.xlu0 %21
  %vm23 = vcmask 7168
  %s24 = scalar_lea.vmem %s1, 2
  %25 = vst.msk [vmem:[%s24] ss:$16 sm:$0x3] %vm23, %v22
  %s26 = scalar_lea.vmem %s1, 2
  %27 = vst.msk [vmem:[%s26] ss:$16 sm:$0xc] %vm23, %v22
  %s28 = scalar_lea.vmem %s1, 2
  %29 = vst.msk [vmem:[%s28] ss:$16 sm:$0x30] %vm23, %v22
  %s30 = scalar_lea.vmem %s1, 2
  %31 = vst.msk [vmem:[%s30] ss:$16 sm:$0xc0] %vm23, %v22
  %v32 = vld [vmem:[%s0] sm:$0xff]
  %33 = vrot.lane.b32.xlu0 %v32, 125
  %v34 = vpop.permute.xlu0 %33
  %vm35 = vcmask 7168
  %s36 = scalar_lea.vmem %s1, 3
  %37 = vst.msk [vmem:[%s36] ss:$16 sm:$0x3] %vm35, %v34
  %s38 = scalar_lea.vmem %s1, 3
  %39 = vst.msk [vmem:[%s38] ss:$16 sm:$0xc] %vm35, %v34
  %s40 = scalar_lea.vmem %s1, 3
  %41 = vst.msk [vmem:[%s40] ss:$16 sm:$0x30] %vm35, %v34
  %s42 = scalar_lea.vmem %s1, 3
  %43 = vst.msk [vmem:[%s42] ss:$16 sm:$0xc0] %vm35, %v34
  %v44 = vld [vmem:[%s0] sm:$0xff]
  %45 = vrot.lane.b32.xlu0 %v44, 124
  %v46 = vpop.permute.xlu0 %45
  %vm47 = vcmask 7168
  %s48 = scalar_lea.vmem %s1, 4
  %49 = vst.msk [vmem:[%s48] ss:$16 sm:$0x3] %vm47, %v46
  %s50 = scalar_lea.vmem %s1, 4
  %51 = vst.msk [vmem:[%s50] ss:$16 sm:$0xc] %vm47, %v46
  %s52 = scalar_lea.vmem %s1, 4
  %53 = vst.msk [vmem:[%s52] ss:$16 sm:$0x30] %vm47, %v46
  %s54 = scalar_lea.vmem %s1, 4
  %55 = vst.msk [vmem:[%s54] ss:$16 sm:$0xc0] %vm47, %v46
  %v56 = vld [vmem:[%s0] sm:$0xff]
  %57 = vrot.lane.b32.xlu0 %v56, 123
  %v58 = vpop.permute.xlu0 %57
  %vm59 = vcmask 7168
  %s60 = scalar_lea.vmem %s1, 5
  %61 = vst.msk [vmem:[%s60] ss:$16 sm:$0x3] %vm59, %v58
  %s62 = scalar_lea.vmem %s1, 5
  %63 = vst.msk [vmem:[%s62] ss:$16 sm:$0xc] %vm59, %v58
  %s64 = scalar_lea.vmem %s1, 5
  %65 = vst.msk [vmem:[%s64] ss:$16 sm:$0x30] %vm59, %v58
  %s66 = scalar_lea.vmem %s1, 5
  %67 = vst.msk [vmem:[%s66] ss:$16 sm:$0xc0] %vm59, %v58
  %v68 = vld [vmem:[%s0] sm:$0xff]
  %69 = vrot.lane.b32.xlu0 %v68, 122
  %v70 = vpop.permute.xlu0 %69
  %vm71 = vcmask 7168
  %s72 = scalar_lea.vmem %s1, 6
  %73 = vst.msk [vmem:[%s72] ss:$16 sm:$0x3] %vm71, %v70
  %s74 = scalar_lea.vmem %s1, 6
  %75 = vst.msk [vmem:[%s74] ss:$16 sm:$0xc] %vm71, %v70
  %s76 = scalar_lea.vmem %s1, 6
  %77 = vst.msk [vmem:[%s76] ss:$16 sm:$0x30] %vm71, %v70
  %s78 = scalar_lea.vmem %s1, 6
  %79 = vst.msk [vmem:[%s78] ss:$16 sm:$0xc0] %vm71, %v70
  %v80 = vld [vmem:[%s0] sm:$0xff]
  %81 = vrot.lane.b32.xlu0 %v80, 121
  %v82 = vpop.permute.xlu0 %81
  %vm83 = vcmask 7168
  %s84 = scalar_lea.vmem %s1, 7
  %85 = vst.msk [vmem:[%s84] ss:$16 sm:$0x3] %vm83, %v82
  %s86 = scalar_lea.vmem %s1, 7
  %87 = vst.msk [vmem:[%s86] ss:$16 sm:$0xc] %vm83, %v82
  %s88 = scalar_lea.vmem %s1, 7
  %89 = vst.msk [vmem:[%s88] ss:$16 sm:$0x30] %vm83, %v82
  %s90 = scalar_lea.vmem %s1, 7
  %91 = vst.msk [vmem:[%s90] ss:$16 sm:$0xc0] %vm83, %v82
  %v92 = vld [vmem:[%s0] sm:$0xff]
  %93 = vrot.lane.b32.xlu0 %v92, 120
  %v94 = vpop.permute.xlu0 %93
  %vm95 = vcmask 7168
  %s96 = scalar_lea.vmem %s1, 8
  %97 = vst.msk [vmem:[%s96] ss:$16 sm:$0x3] %vm95, %v94
  %s98 = scalar_lea.vmem %s1, 8
  %99 = vst.msk [vmem:[%s98] ss:$16 sm:$0xc] %vm95, %v94
  %s100 = scalar_lea.vmem %s1, 8
  %101 = vst.msk [vmem:[%s100] ss:$16 sm:$0x30] %vm95, %v94
  %s102 = scalar_lea.vmem %s1, 8
  %103 = vst.msk [vmem:[%s102] ss:$16 sm:$0xc0] %vm95, %v94
  %v104 = vld [vmem:[%s0] sm:$0xff]
  %105 = vrot.lane.b32.xlu0 %v104, 119
  %v106 = vpop.permute.xlu0 %105
  %vm107 = vcmask 7168
  %s108 = scalar_lea.vmem %s1, 9
  %109 = vst.msk [vmem:[%s108] ss:$16 sm:$0x3] %vm107, %v106
  %s110 = scalar_lea.vmem %s1, 9
  %111 = vst.msk [vmem:[%s110] ss:$16 sm:$0xc] %vm107, %v106
  %s112 = scalar_lea.vmem %s1, 9
  %113 = vst.msk [vmem:[%s112] ss:$16 sm:$0x30] %vm107, %v106
  %s114 = scalar_lea.vmem %s1, 9
  %115 = vst.msk [vmem:[%s114] ss:$16 sm:$0xc0] %vm107, %v106
  %v116 = vld [vmem:[%s0] sm:$0xff]
  %117 = vrot.lane.b32.xlu0 %v116, 118
  %v118 = vpop.permute.xlu0 %117
  %vm119 = vcmask 7168
  %s120 = scalar_lea.vmem %s1, 10
  %121 = vst.msk [vmem:[%s120] ss:$16 sm:$0x3] %vm119, %v118
  %s122 = scalar_lea.vmem %s1, 10
  %123 = vst.msk [vmem:[%s122] ss:$16 sm:$0xc] %vm119, %v118
  %s124 = scalar_lea.vmem %s1, 10
  %125 = vst.msk [vmem:[%s124] ss:$16 sm:$0x30] %vm119, %v118
  %s126 = scalar_lea.vmem %s1, 10
  %127 = vst.msk [vmem:[%s126] ss:$16 sm:$0xc0] %vm119, %v118
  %v128 = vld [vmem:[%s0] sm:$0xff]
  %129 = vrot.lane.b32.xlu0 %v128, 117
  %v130 = vpop.permute.xlu0 %129
  %vm131 = vcmask 7168
  %s132 = scalar_lea.vmem %s1, 11
  %133 = vst.msk [vmem:[%s132] ss:$16 sm:$0x3] %vm131, %v130
  %s134 = scalar_lea.vmem %s1, 11
  %135 = vst.msk [vmem:[%s134] ss:$16 sm:$0xc] %vm131, %v130
  %s136 = scalar_lea.vmem %s1, 11
  %137 = vst.msk [vmem:[%s136] ss:$16 sm:$0x30] %vm131, %v130
  %s138 = scalar_lea.vmem %s1, 11
  %139 = vst.msk [vmem:[%s138] ss:$16 sm:$0xc0] %vm131, %v130
  %v140 = vld [vmem:[%s0] sm:$0xff]
  %141 = vrot.lane.b32.xlu0 %v140, 116
  %v142 = vpop.permute.xlu0 %141
  %vm143 = vcmask 7168
  %s144 = scalar_lea.vmem %s1, 12
  %145 = vst.msk [vmem:[%s144] ss:$16 sm:$0x3] %vm143, %v142
  %s146 = scalar_lea.vmem %s1, 12
  %147 = vst.msk [vmem:[%s146] ss:$16 sm:$0xc] %vm143, %v142
  %s148 = scalar_lea.vmem %s1, 12
  %149 = vst.msk [vmem:[%s148] ss:$16 sm:$0x30] %vm143, %v142
  %s150 = scalar_lea.vmem %s1, 12
  %151 = vst.msk [vmem:[%s150] ss:$16 sm:$0xc0] %vm143, %v142
  %v152 = vld [vmem:[%s0] sm:$0xff]
  %153 = vrot.lane.b32.xlu0 %v152, 115
  %v154 = vpop.permute.xlu0 %153
  %vm155 = vcmask 7168
  %s156 = scalar_lea.vmem %s1, 13
  %157 = vst.msk [vmem:[%s156] ss:$16 sm:$0x3] %vm155, %v154
  %s158 = scalar_lea.vmem %s1, 13
  %159 = vst.msk [vmem:[%s158] ss:$16 sm:$0xc] %vm155, %v154
  %s160 = scalar_lea.vmem %s1, 13
  %161 = vst.msk [vmem:[%s160] ss:$16 sm:$0x30] %vm155, %v154
  %s162 = scalar_lea.vmem %s1, 13
  %163 = vst.msk [vmem:[%s162] ss:$16 sm:$0xc0] %vm155, %v154
  %v164 = vld [vmem:[%s0] sm:$0xff]
  %165 = vrot.lane.b32.xlu0 %v164, 114
  %v166 = vpop.permute.xlu0 %165
  %vm167 = vcmask 7168
  %s168 = scalar_lea.vmem %s1, 14
  %169 = vst.msk [vmem:[%s168] ss:$16 sm:$0x3] %vm167, %v166
  %s170 = scalar_lea.vmem %s1, 14
  %171 = vst.msk [vmem:[%s170] ss:$16 sm:$0xc] %vm167, %v166
  %s172 = scalar_lea.vmem %s1, 14
  %173 = vst.msk [vmem:[%s172] ss:$16 sm:$0x30] %vm167, %v166
  %s174 = scalar_lea.vmem %s1, 14
  %175 = vst.msk [vmem:[%s174] ss:$16 sm:$0xc0] %vm167, %v166
  %v176 = vld [vmem:[%s0] sm:$0xff]
  %177 = vrot.lane.b32.xlu0 %v176, 113
  %v178 = vpop.permute.xlu0 %177
  %vm179 = vcmask 7168
  %s180 = scalar_lea.vmem %s1, 15
  %181 = vst.msk [vmem:[%s180] ss:$16 sm:$0x3] %vm179, %v178
  %s182 = scalar_lea.vmem %s1, 15
  %183 = vst.msk [vmem:[%s182] ss:$16 sm:$0xc] %vm179, %v178
  %s184 = scalar_lea.vmem %s1, 15
  %185 = vst.msk [vmem:[%s184] ss:$16 sm:$0x30] %vm179, %v178
  %s186 = scalar_lea.vmem %s1, 15
  %187 = vst.msk [vmem:[%s186] ss:$16 sm:$0xc0] %vm179, %v178

// kernel: lenet5_forward.1
$region0: #{lenet5_forward.1}
  #allocation0 [shape = 'u32[]', space=smem, size = 0x4, offset = 0x4, fixed_abs, tag = 'smem constant byte address 0x4 - core index']
  #allocation1 [shape = 'u32[144,128]{1,0:T(1,128)}', space=vmem, size = 0x12000, scoped, tag = 'internal scratch']
  %s0 = inlined_call_operand.vmem [shape: bf16[28,32,128], index: 0, kind: input, shape index: {}]
  %s1 = inlined_call_operand.vmem [shape: bf16[192,160], index: 1, kind: input, shape index: {}]
  %s2 = inlined_call_operand.vmem [shape: f32[192,1], index: 2, kind: input, shape index: {}]
  %s3 = inlined_call_operand.vmem [shape: bf16[128,480], index: 3, kind: input, shape index: {}]
  %s4 = inlined_call_operand.vmem [shape: f32[128,1], index: 4, kind: input, shape index: {}]
  %s5 = inlined_call_operand.vmem [shape: bf16[128,256], index: 5, kind: input, shape index: {}]
  %s6 = inlined_call_operand.vmem [shape: f32[128,1], index: 6, kind: input, shape index: {}]
  %s7 = inlined_call_operand.vmem [shape: bf16[128,128], index: 7, kind: input, shape index: {}]
  %s8 = inlined_call_operand.vmem [shape: f32[128,1], index: 8, kind: input, shape index: {}]
  %s9 = inlined_call_operand.vmem [shape: bf16[128,128], index: 9, kind: input, shape index: {}]
  %s10 = inlined_call_operand.vmem [shape: f32[128,1], index: 10, kind: input, shape index: {}]
  %s11 = inlined_call_operand.vmem [shape: f32[128,128], index: 11, kind: output, shape index: {}]
  %s12 = sld [smem:[#allocation0]]
  $region54: #{lenet5_forward.1} parent=0
    _
  %s14 = ssub.s32 1, %s12
  %s15 = scalar_select 0, %s14, %s12
  // Predicated region
  $region2: #{lenet5_forward.1} parent=0 // pred_check
    _
  $region3: #{lenet5_forward.1} parent=0 // pred_check_branch
    %17 = sbr.rel (0) target = $region5
  $region4: #{lenet5_forward.1} parent=0 // pred_region
    _
  $region5: #{lenet5_forward.1} parent=0 // pred_fallthru
    _
  // Predicated region
  $region6: #{lenet5_forward.1} parent=0 // pred_check
    _
  $region7: #{lenet5_forward.1} parent=0 // pred_check_branch
    %19 = sbr.rel (0) target = $region9
  $region8: #{lenet5_forward.1} parent=0 // pred_region
    _
  $region9: #{lenet5_forward.1} parent=0 // pred_fallthru
    _
  // Predicated region
  $region10: #{lenet5_forward.1} parent=0 // pred_check
    _
  $region11: #{lenet5_forward.1} parent=0 // pred_check_branch
    %21 = sbr.rel (0) target = $region13
  $region12: #{lenet5_forward.1} parent=0 // pred_region
    _
  $region13: #{lenet5_forward.1} parent=0 // pred_fallthru
    _
  // Predicated region
  $region14: #{lenet5_forward.1} parent=0 // pred_check
    _
  $region15: #{lenet5_forward.1} parent=0 // pred_check_branch
    %23 = sbr.rel (0) target = $region17
  $region16: #{lenet5_forward.1} parent=0 // pred_region
    _
  $region17: #{lenet5_forward.1} parent=0 // pred_fallthru
    _
  // Predicated region
  $region18: #{lenet5_forward.1} parent=0 // pred_check
    _
  $region19: #{lenet5_forward.1} parent=0 // pred_check_branch
    %25 = sbr.rel (0) target = $region21
  $region20: #{lenet5_forward.1} parent=0 // pred_region
    _
  $region21: #{lenet5_forward.1} parent=0 // pred_fallthru
    _
  // Predicated region
  $region22: #{lenet5_forward.1} parent=0 // pred_check
    _
  $region23: #{lenet5_forward.1} parent=0 // pred_check_branch
    %27 = sbr.rel (0) target = $region25
  $region24: #{lenet5_forward.1} parent=0 // pred_region
    _
  $region25: #{lenet5_forward.1} parent=0 // pred_fallthru
    _
  // Predicated region
  $region26: #{lenet5_forward.1} parent=0 // pred_check
    _
  $region27: #{lenet5_forward.1} parent=0 // pred_check_branch
    %29 = sbr.rel (0) target = $region29
  $region28: #{lenet5_forward.1} parent=0 // pred_region
    _
  $region29: #{lenet5_forward.1} parent=0 // pred_fallthru
    _
  // Predicated region
  $region30: #{lenet5_forward.1} parent=0 // pred_check
    _
  $region31: #{lenet5_forward.1} parent=0 // pred_check_branch
    %31 = sbr.rel (0) target = $region33
  $region32: #{lenet5_forward.1} parent=0 // pred_region
    _
  $region33: #{lenet5_forward.1} parent=0 // pred_fallthru
    _
  // Predicated region
  $region34: #{lenet5_forward.1} parent=0 // pred_check
    _
  $region35: #{lenet5_forward.1} parent=0 // pred_check_branch
    %33 = sbr.rel (0) target = $region37
  $region36: #{lenet5_forward.1} parent=0 // pred_region
    _
  $region37: #{lenet5_forward.1} parent=0 // pred_fallthru
    _
  // Predicated region
  $region38: #{lenet5_forward.1} parent=0 // pred_check
    _
  $region39: #{lenet5_forward.1} parent=0 // pred_check_branch
    %35 = sbr.rel (0) target = $region41
  $region40: #{lenet5_forward.1} parent=0 // pred_region
    _
  $region41: #{lenet5_forward.1} parent=0 // pred_fallthru
    _
  // Predicated region
  $region42: #{lenet5_forward.1} parent=0 // pred_check
    _
  $region43: #{lenet5_forward.1} parent=0 // pred_check_branch
    %37 = sbr.rel (0) target = $region45
  $region44: #{lenet5_forward.1} parent=0 // pred_region
    _
  $region45: #{lenet5_forward.1} parent=0 // pred_fallthru
    _
  %v39 = vld [vmem:[%s1] sm:$0xff]
  %v40 = vld [vmem:[%s1 + $0x8] sm:$0xff]
  %v41 = vld [vmem:[%s1 + $0x10] sm:$0xff]
  %v42 = vld [vmem:[%s1 + $0x18] sm:$0xff]
  %v43 = vld [vmem:[%s1 + $0x20] sm:$0xff]
  %v44 = vld [vmem:[%s1 + $0x28] sm:$0xff]
  %v45 = vld [vmem:[%s1 + $0x30] sm:$0xff]
  %v46 = vld [vmem:[%s1 + $0x38] sm:$0xff]
  %v47 = vld [vmem:[%s1 + $0x40] sm:$0xff]
  %v48 = vld [vmem:[%s1 + $0x48] sm:$0xff]
  %v49 = vld [vmem:[%s1 + $0x50] sm:$0xff]
  %v50 = vld [vmem:[%s1 + $0x58] sm:$0xff]
  %v51 = vld [vmem:[%s1 + $0x60] sm:$0xff]
  %v52 = vld [vmem:[%s1 + $0x68] sm:$0xff]
  %v53 = vld [vmem:[%s1 + $0x70] sm:$0xff]
  %v54 = vld [vmem:[%s1 + $0x78] sm:$0xff]
  %v55 = vld [vmem:[%s1 + $0x80] sm:$0xff]
  %v56 = vld [vmem:[%s1 + $0x88] sm:$0xff]
  %v57 = vld [vmem:[%s1 + $0x90] sm:$0xff]
  %v58 = vld [vmem:[%s1 + $0x98] sm:$0xff]
  %v59 = vld [vmem:[%s1 + $0xa0] sm:$0xff]
  %v60 = vld [vmem:[%s1 + $0xa8] sm:$0xff]
  %v61 = vld [vmem:[%s1 + $0xb0] sm:$0xff]
  %v62 = vld [vmem:[%s1 + $0xb8] sm:$0xff]
  %v63 = vld [vmem:[%s2] sm:$0xff]
  %v64 = vld [vmem:[%s2 + $0x8] sm:$0xff]
  %v65 = vld [vmem:[%s2 + $0x10] sm:$0xff]
  %v66 = vld [vmem:[%s2 + $0x18] sm:$0xff]
  %v67 = vld [vmem:[%s2 + $0x20] sm:$0xff]
  %v68 = vld [vmem:[%s2 + $0x28] sm:$0xff]
  %v69 = vld [vmem:[%s2 + $0x30] sm:$0xff]
  %v70 = vld [vmem:[%s2 + $0x38] sm:$0xff]
  %v71 = vld [vmem:[%s2 + $0x40] sm:$0xff]
  %v72 = vld [vmem:[%s2 + $0x48] sm:$0xff]
  %v73 = vld [vmem:[%s2 + $0x50] sm:$0xff]
  %v74 = vld [vmem:[%s2 + $0x58] sm:$0xff]
  %v75 = vld [vmem:[%s2 + $0x60] sm:$0xff]
  %v76 = vld [vmem:[%s2 + $0x68] sm:$0xff]
  %v77 = vld [vmem:[%s2 + $0x70] sm:$0xff]
  %v78 = vld [vmem:[%s2 + $0x78] sm:$0xff]
  %v79 = vld [vmem:[%s2 + $0x80] sm:$0xff]
  %v80 = vld [vmem:[%s2 + $0x88] sm:$0xff]
  %v81 = vld [vmem:[%s2 + $0x90] sm:$0xff]
  %v82 = vld [vmem:[%s2 + $0x98] sm:$0xff]
  %v83 = vld [vmem:[%s2 + $0xa0] sm:$0xff]
  %v84 = vld [vmem:[%s2 + $0xa8] sm:$0xff]
  %v85 = vld [vmem:[%s2 + $0xb0] sm:$0xff]
  %v86 = vld [vmem:[%s2 + $0xb8] sm:$0xff]
  %v87 = vld [vmem:[%s3] sm:$0xff]
  %v88 = vld [vmem:[%s3 + $0x8] sm:$0xff]
  %v89 = vld [vmem:[%s3 + $0x10] sm:$0xff]
  %v90 = vld [vmem:[%s3 + $0x18] sm:$0xff]
  %v91 = vld [vmem:[%s3 + $0x20] sm:$0xff]
  %v92 = vld [vmem:[%s3 + $0x28] sm:$0xff]
  %v93 = vld [vmem:[%s3 + $0x30] sm:$0xff]
  %v94 = vld [vmem:[%s3 + $0x38] sm:$0xff]
  %v95 = vld [vmem:[%s3 + $0x40] sm:$0xff]
  %v96 = vld [vmem:[%s3 + $0x48] sm:$0xff]
  %v97 = vld [vmem:[%s3 + $0x50] sm:$0xff]
  %v98 = vld [vmem:[%s3 + $0x58] sm:$0xff]
  %v99 = vld [vmem:[%s3 + $0x60] sm:$0xff]
  %v100 = vld [vmem:[%s3 + $0x68] sm:$0xff]
  %v101 = vld [vmem:[%s3 + $0x70] sm:$0xff]
  %v102 = vld [vmem:[%s3 + $0x78] sm:$0xff]
  %v103 = vld [vmem:[%s3 + $0x80] sm:$0xff]
  %v104 = vld [vmem:[%s3 + $0x88] sm:$0xff]
  %v105 = vld [vmem:[%s3 + $0x90] sm:$0xff]
  %v106 = vld [vmem:[%s3 + $0x98] sm:$0xff]
  %v107 = vld [vmem:[%s3 + $0xa0] sm:$0xff]
  %v108 = vld [vmem:[%s3 + $0xa8] sm:$0xff]
  %v109 = vld [vmem:[%s3 + $0xb0] sm:$0xff]
  %v110 = vld [vmem:[%s3 + $0xb8] sm:$0xff]
  %v111 = vld [vmem:[%s3 + $0xc0] sm:$0xff]
  %v112 = vld [vmem:[%s3 + $0xc8] sm:$0xff]
  %v113 = vld [vmem:[%s3 + $0xd0] sm:$0xff]
  %v114 = vld [vmem:[%s3 + $0xd8] sm:$0xff]
  %v115 = vld [vmem:[%s3 + $0xe0] sm:$0xff]
  %v116 = vld [vmem:[%s3 + $0xe8] sm:$0xff]
  %v117 = vld [vmem:[%s3 + $0xf0] sm:$0xff]
  %v118 = vld [vmem:[%s3 + $0xf8] sm:$0xff]
  %v119 = vld [vmem:[%s4] sm:$0xff]
  %v120 = vld [vmem:[%s4 + $0x8] sm:$0xff]
  %v121 = vld [vmem:[%s4 + $0x10] sm:$0xff]
  %v122 = vld [vmem:[%s4 + $0x18] sm:$0xff]
  %v123 = vld [vmem:[%s4 + $0x20] sm:$0xff]
  %v124 = vld [vmem:[%s4 + $0x28] sm:$0xff]
  %v125 = vld [vmem:[%s4 + $0x30] sm:$0xff]
  %v126 = vld [vmem:[%s4 + $0x38] sm:$0xff]
  %v127 = vld [vmem:[%s4 + $0x40] sm:$0xff]
  %v128 = vld [vmem:[%s4 + $0x48] sm:$0xff]
  %v129 = vld [vmem:[%s4 + $0x50] sm:$0xff]
  %v130 = vld [vmem:[%s4 + $0x58] sm:$0xff]
  %v131 = vld [vmem:[%s4 + $0x60] sm:$0xff]
  %v132 = vld [vmem:[%s4 + $0x68] sm:$0xff]
  %v133 = vld [vmem:[%s4 + $0x70] sm:$0xff]
  %v134 = vld [vmem:[%s4 + $0x78] sm:$0xff]
  %v135 = vld [vmem:[%s0] sm:$0xf]
  %v136 = vld [vmem:[%s0 + $0x4] sm:$0xf]
  %v137 = vld [vmem:[%s0 + $0x8] sm:$0xf]
  %v138 = vld [vmem:[%s0 + $0xc] sm:$0xf]
  %v139 = vld [vmem:[%s0 + $0x10] sm:$0xf]
  %v140 = vld [vmem:[%s0 + $0x14] sm:$0xf]
  %v141 = vld [vmem:[%s0 + $0x18] sm:$0xf]
  %v142 = vld [vmem:[%s0 + $0x1c] sm:$0xf]
  %v143 = vld [vmem:[%s0 + $0x20] sm:$0xf]
  %v144 = vld [vmem:[%s0 + $0x24] sm:$0xf]
  %v145 = vld [vmem:[%s0 + $0x28] sm:$0xf]
  %v146 = vld [vmem:[%s0 + $0x2c] sm:$0xf]
  %v147 = vld [vmem:[%s0 + $0x30] sm:$0xf]
  %v148 = vld [vmem:[%s0 + $0x34] sm:$0xf]
  %v149 = vld [vmem:[%s0 + $0x38] sm:$0xf]
  %v150 = vld [vmem:[%s0 + $0x3c] sm:$0xf]
  %v151 = vld [vmem:[%s0 + $0x40] sm:$0xf]
  %v152 = vld [vmem:[%s0 + $0x44] sm:$0xf]
  %v153 = vld [vmem:[%s0 + $0x48] sm:$0xf]
  %v154 = vld [vmem:[%s0 + $0x4c] sm:$0xf]
  %156 = vset.pattern.permute.xlu0 0
  %157 = vperm.xlu0 %156, %v63
  %v158 = vpop.permute.xlu0 %157
  %161 = vset.pattern.permute.xlu0 0
  %162 = vperm.xlu0 %161, %v64
  %v163 = vpop.permute.xlu0 %162
  %166 = vset.pattern.permute.xlu0 0
  %167 = vperm.xlu0 %166, %v65
  %v168 = vpop.permute.xlu0 %167
  %171 = vset.pattern.permute.xlu0 0
  %172 = vperm.xlu0 %171, %v66
  %v173 = vpop.permute.xlu0 %172
  %176 = vset.pattern.permute.xlu0 0
  %177 = vperm.xlu0 %176, %v67
  %v178 = vpop.permute.xlu0 %177
  %181 = vset.pattern.permute.xlu0 0
  %182 = vperm.xlu0 %181, %v68
  %v183 = vpop.permute.xlu0 %182
  %186 = vset.pattern.permute.xlu0 0
  %187 = vperm.xlu0 %186, %v69
  %v188 = vpop.permute.xlu0 %187
  %191 = vset.pattern.permute.xlu0 0
  %192 = vperm.xlu0 %191, %v70
  %v193 = vpop.permute.xlu0 %192
  %196 = vset.pattern.permute.xlu0 0
  %197 = vperm.xlu0 %196, %v71
  %v198 = vpop.permute.xlu0 %197
  %201 = vset.pattern.permute.xlu0 0
  %202 = vperm.xlu0 %201, %v72
  %v203 = vpop.permute.xlu0 %202
  %206 = vset.pattern.permute.xlu0 0
  %207 = vperm.xlu0 %206, %v73
  %v208 = vpop.permute.xlu0 %207
  %211 = vset.pattern.permute.xlu0 0
  %212 = vperm.xlu0 %211, %v74
  %v213 = vpop.permute.xlu0 %212
  %216 = vset.pattern.permute.xlu0 0
  %217 = vperm.xlu0 %216, %v75
  %v218 = vpop.permute.xlu0 %217
  %221 = vset.pattern.permute.xlu0 0
  %222 = vperm.xlu0 %221, %v76
  %v223 = vpop.permute.xlu0 %222
  %226 = vset.pattern.permute.xlu0 0
  %227 = vperm.xlu0 %226, %v77
  %v228 = vpop.permute.xlu0 %227
  %231 = vset.pattern.permute.xlu0 0
  %232 = vperm.xlu0 %231, %v78
  %v233 = vpop.permute.xlu0 %232
  %236 = vset.pattern.permute.xlu0 0
  %237 = vperm.xlu0 %236, %v79
  %v238 = vpop.permute.xlu0 %237
  %241 = vset.pattern.permute.xlu0 0
  %242 = vperm.xlu0 %241, %v80
  %v243 = vpop.permute.xlu0 %242
  %246 = vset.pattern.permute.xlu0 0
  %247 = vperm.xlu0 %246, %v81
  %v248 = vpop.permute.xlu0 %247
  %251 = vset.pattern.permute.xlu0 0
  %252 = vperm.xlu0 %251, %v82
  %v253 = vpop.permute.xlu0 %252
  %256 = vset.pattern.permute.xlu0 0
  %257 = vperm.xlu0 %256, %v83
  %v258 = vpop.permute.xlu0 %257
  %261 = vset.pattern.permute.xlu0 0
  %262 = vperm.xlu0 %261, %v84
  %v263 = vpop.permute.xlu0 %262
  %266 = vset.pattern.permute.xlu0 0
  %267 = vperm.xlu0 %266, %v85
  %v268 = vpop.permute.xlu0 %267
  %271 = vset.pattern.permute.xlu0 0
  %272 = vperm.xlu0 %271, %v86
  %v273 = vpop.permute.xlu0 %272
  %v299 = vunpack.c.l.b16 %v39
  %v300 = vunpack.c.h.b16 %v39
  %v301 = vunpack.c.l.b16 %v40
  %v302 = vunpack.c.h.b16 %v40
  %v303 = vunpack.c.l.b16 %v41
  %v304 = vunpack.c.h.b16 %v41
  %v305 = vunpack.c.l.b16 %v42
  %v306 = vunpack.c.h.b16 %v42
  %v307 = vunpack.c.l.b16 %v43
  %v308 = vunpack.c.h.b16 %v43
  %v309 = vunpack.c.l.b16 %v44
  %v310 = vunpack.c.h.b16 %v44
  %v311 = vunpack.c.l.b16 %v45
  %v312 = vunpack.c.h.b16 %v45
  %v313 = vunpack.c.l.b16 %v46
  %v314 = vunpack.c.h.b16 %v46
  %v315 = vunpack.c.l.b16 %v47
  %v316 = vunpack.c.h.b16 %v47
  %v317 = vunpack.c.l.b16 %v48
  %v318 = vunpack.c.h.b16 %v48
  %v319 = vunpack.c.l.b16 %v49
  %v320 = vunpack.c.h.b16 %v49
  %v321 = vunpack.c.l.b16 %v50
  %v322 = vunpack.c.h.b16 %v50
  %v323 = vunpack.c.l.b16 %v51
  %v324 = vunpack.c.h.b16 %v51
  %v325 = vunpack.c.l.b16 %v52
  %v326 = vunpack.c.h.b16 %v52
  %v327 = vunpack.c.l.b16 %v53
  %v328 = vunpack.c.h.b16 %v53
  %v329 = vunpack.c.l.b16 %v54
  %v330 = vunpack.c.h.b16 %v54
  %v331 = vunpack.c.l.b16 %v55
  %v332 = vunpack.c.h.b16 %v55
  %v333 = vunpack.c.l.b16 %v56
  %v334 = vunpack.c.h.b16 %v56
  %v335 = vunpack.c.l.b16 %v57
  %v336 = vunpack.c.h.b16 %v57
  %v337 = vunpack.c.l.b16 %v58
  %v338 = vunpack.c.h.b16 %v58
  %v339 = vunpack.c.l.b16 %v59
  %v340 = vunpack.c.h.b16 %v59
  %v341 = vunpack.c.l.b16 %v60
  %v342 = vunpack.c.h.b16 %v60
  %v343 = vunpack.c.l.b16 %v61
  %v344 = vunpack.c.h.b16 %v61
  %v345 = vunpack.c.l.b16 %v62
  %v346 = vunpack.c.h.b16 %v62
  %v347 = vpack.c.b16 %v301, %v299
  %v348 = vpack.c.b16 %v302, %v300
  %v349 = vpack.c.b16 %v305, %v303
  %v350 = vpack.c.b16 %v306, %v304
  %v351 = vpack.c.b16 %v309, %v307
  %v352 = vpack.c.b16 %v310, %v308
  %v353 = vpack.c.b16 %v313, %v311
  %v354 = vpack.c.b16 %v314, %v312
  %v355 = vpack.c.b16 %v317, %v315
  %v356 = vpack.c.b16 %v318, %v316
  %v357 = vpack.c.b16 %v321, %v319
  %v358 = vpack.c.b16 %v322, %v320
  %v359 = vpack.c.b16 %v325, %v323
  %v360 = vpack.c.b16 %v326, %v324
  %v361 = vpack.c.b16 %v329, %v327
  %v362 = vpack.c.b16 %v330, %v328
  %v363 = vpack.c.b16 %v333, %v331
  %v364 = vpack.c.b16 %v334, %v332
  %v365 = vpack.c.b16 %v337, %v335
  %v366 = vpack.c.b16 %v338, %v336
  %v367 = vpack.c.b16 %v341, %v339
  %v368 = vpack.c.b16 %v342, %v340
  %v369 = vpack.c.b16 %v345, %v343
  %v370 = vpack.c.b16 %v346, %v344
  %v403 = vunpack.c.l.b16 %v135
  %v404 = vunpack.c.l.b16 %v136
  %v405 = vunpack.c.l.b16 %v137
  %v406 = vunpack.c.l.b16 %v138
  %v407 = vunpack.c.l.b16 %v139
  %v408 = vunpack.c.l.b16 %v140
  %v409 = vunpack.c.l.b16 %v141
  %v410 = vunpack.c.l.b16 %v142
  %v411 = vunpack.c.l.b16 %v143
  %v412 = vunpack.c.l.b16 %v144
  %v413 = vunpack.c.l.b16 %v145
  %v414 = vunpack.c.l.b16 %v146
  %v415 = vunpack.c.l.b16 %v147
  %v416 = vunpack.c.l.b16 %v148
  %v417 = vunpack.c.l.b16 %v149
  %v418 = vunpack.c.l.b16 %v150
  %v419 = vunpack.c.l.b16 %v151
  %v420 = vunpack.c.l.b16 %v152
  %v421 = vunpack.c.l.b16 %v153
  %v422 = vunpack.c.l.b16 %v154
  %v423 = vpack.c.b16 %v404, %v403
  %v424 = vpack.c.b16 %v406, %v405
  %v425 = vpack.c.b16 %v408, %v407
  %v426 = vpack.c.b16 %v410, %v409
  %v427 = vpack.c.b16 %v412, %v411
  %v428 = vpack.c.b16 %v414, %v413
  %v429 = vpack.c.b16 %v416, %v415
  %v430 = vpack.c.b16 %v418, %v417
  %v431 = vpack.c.b16 %v420, %v419
  %v432 = vpack.c.b16 %v422, %v421
  %vm443 = vcmask 261120
  %v445 = vsel %vm443, %v348, 0
  %v448 = vsel %vm443, %v350, 0
  %v451 = vsel %vm443, %v352, 0
  %v454 = vsel %vm443, %v354, 0
  %v457 = vsel %vm443, %v356, 0
  %v460 = vsel %vm443, %v358, 0
  %v463 = vsel %vm443, %v360, 0
  %v466 = vsel %vm443, %v362, 0
  %v469 = vsel %vm443, %v364, 0
  %v472 = vsel %vm443, %v366, 0
  %v475 = vsel %vm443, %v368, 0
  %v478 = vsel %vm443, %v370, 0
  %480 = vmatprep.subr.bf16.mxu0 0
  %481 = vmatpush1.bf16.msra.mxu0 %v423
  %482 = vmatprep.subr.bf16.mxu0 0
  %483 = vmatpush1.bf16.msra.mxu0 %v424
  %484 = vmatprep.subr.bf16.mxu0 0
  %485 = vmatpush1.bf16.msra.mxu0 %v425
  %486 = vmatprep.subr.bf16.mxu0 0
  %487 = vmatpush1.bf16.msra.mxu0 %v426
  %488 = vmatprep.subr.bf16.mxu0 0
  %489 = vmatpush1.bf16.msra.mxu0 %v427
  %490 = vmatprep.subr.bf16.mxu0 0
  %491 = vmatpush1.bf16.msra.mxu0 %v428
  %492 = vmatprep.subr.bf16.mxu0 0
  %493 = vmatpush1.bf16.msra.mxu0 %v429
  %494 = vmatprep.subr.bf16.mxu0 0
  %495 = vmatpush1.bf16.msra.mxu0 %v430
  %496 = vmatprep.subr.bf16.mxu0 0
  %497 = vmatpush1.bf16.msra.mxu0 %v431
  %498 = vmatprep.subr.bf16.mxu0 0
  %499 = vmatpush1.bf16.msra.mxu0 %v432
  %500 = vmatprep.subr.bf16.mxu0 0
  %501 = vmatpush1.bf16.msra.mxu0 0
  %502 = vmatprep.subr.bf16.mxu0 0
  %503 = vmatpush1.bf16.msra.mxu0 0
  %504 = vmatprep.subr.bf16.mxu0 0
  %505 = vmatpush1.bf16.msra.mxu0 0
  %506 = vmatprep.subr.bf16.mxu0 0
  %507 = vmatpush1.bf16.msra.mxu0 0
  %508 = vmatprep.subr.bf16.mxu0 0
  %509 = vmatpush1.bf16.msra.mxu0 0
  %510 = vmatprep.subr.bf16.mxu0 0
  %511 = vmatpush1.bf16.msra.mxu0 0
  %512 = vmatprep.mubr.bf16.mxu0 %v445
  %513 = vmatmul.mubr.bf16.gmra.mrb[0].mxu0 %v347
  %v514 = vpop.f32.mrb[0].mxu0
  %v515 = vadd.f32 %v158, %v514
  %v516 = vpop.f32.mrb[0].mxu0
  %v517 = vpop.f32.mrb[0].mxu0
  %v518 = vadd.f32 %v163, %v517
  %v519 = vpop.f32.mrb[0].mxu0
  %520 = vmatprep.mubr.bf16.mxu0 %v448
  %521 = vmatmul.mubr.bf16.gmra.mrb[0].mxu0 %v349
  %v522 = vpop.f32.mrb[0].mxu0
  %v523 = vadd.f32 %v168, %v522
  %v524 = vpop.f32.mrb[0].mxu0
  %v525 = vpop.f32.mrb[0].mxu0
  %v526 = vadd.f32 %v173, %v525
  %v527 = vpop.f32.mrb[0].mxu0
  %528 = vmatprep.mubr.bf16.mxu0 %v451
  %529 = vmatmul.mubr.bf16.gmra.mrb[0].mxu0 %v351
  %v530 = vpop.f32.mrb[0].mxu0
  %v531 = vadd.f32 %v178, %v530
  %v532 = vpop.f32.mrb[0].mxu0
  %v533 = vpop.f32.mrb[0].mxu0
  %v534 = vadd.f32 %v183, %v533
  %v535 = vpop.f32.mrb[0].mxu0
  %536 = vmatprep.mubr.bf16.mxu0 %v454
  %537 = vmatmul.mubr.bf16.gmra.mrb[0].mxu0 %v353
  %v538 = vpop.f32.mrb[0].mxu0
  %v539 = vadd.f32 %v188, %v538
  %v540 = vpop.f32.mrb[0].mxu0
  %v541 = vpop.f32.mrb[0].mxu0
  %v542 = vadd.f32 %v193, %v541
  %v543 = vpop.f32.mrb[0].mxu0
  %544 = vmatprep.mubr.bf16.mxu0 %v457
  %545 = vmatmul.mubr.bf16.gmra.mrb[0].mxu0 %v355
  %v546 = vpop.f32.mrb[0].mxu0
  %v547 = vadd.f32 %v198, %v546
  %v548 = vpop.f32.mrb[0].mxu0
  %v549 = vpop.f32.mrb[0].mxu0
  %v550 = vadd.f32 %v203, %v549
  %v551 = vpop.f32.mrb[0].mxu0
  %552 = vmatprep.mubr.bf16.mxu0 %v460
  %553 = vmatmul.mubr.bf16.gmra.mrb[0].mxu0 %v357
  %v554 = vpop.f32.mrb[0].mxu0
  %v555 = vadd.f32 %v208, %v554
  %v556 = vpop.f32.mrb[0].mxu0
  %v557 = vpop.f32.mrb[0].mxu0
  %v558 = vadd.f32 %v213, %v557
  %v559 = vpop.f32.mrb[0].mxu0
  %560 = vmatprep.mubr.bf16.mxu0 %v463
  %561 = vmatmul.mubr.bf16.gmra.mrb[0].mxu0 %v359
  %v562 = vpop.f32.mrb[0].mxu0
  %v563 = vadd.f32 %v218, %v562
  %v564 = vpop.f32.mrb[0].mxu0
  %v565 = vpop.f32.mrb[0].mxu0
  %v566 = vadd.f32 %v223, %v565
  %v567 = vpop.f32.mrb[0].mxu0
  %568 = vmatprep.mubr.bf16.mxu0 %v466
  %569 = vmatmul.mubr.bf16.gmra.mrb[0].mxu0 %v361
  %v570 = vpop.f32.mrb[0].mxu0
  %v571 = vadd.f32 %v228, %v570
  %v572 = vpop.f32.mrb[0].mxu0
  %v573 = vpop.f32.mrb[0].mxu0
  %v574 = vadd.f32 %v233, %v573
  %v575 = vpop.f32.mrb[0].mxu0
  %576 = vmatprep.mubr.bf16.mxu0 %v469
  %577 = vmatmul.mubr.bf16.gmra.mrb[0].mxu0 %v363
  %v578 = vpop.f32.mrb[0].mxu0
  %v579 = vadd.f32 %v238, %v578
  %v580 = vpop.f32.mrb[0].mxu0
  %v581 = vpop.f32.mrb[0].mxu0
  %v582 = vadd.f32 %v243, %v581
  %v583 = vpop.f32.mrb[0].mxu0
  %584 = vmatprep.mubr.bf16.mxu0 %v472
  %585 = vmatmul.mubr.bf16.gmra.mrb[0].mxu0 %v365
  %v586 = vpop.f32.mrb[0].mxu0
  %v587 = vadd.f32 %v248, %v586
  %v588 = vpop.f32.mrb[0].mxu0
  %v589 = vpop.f32.mrb[0].mxu0
  %v590 = vadd.f32 %v253, %v589
  %v591 = vpop.f32.mrb[0].mxu0
  %592 = vmatprep.mubr.bf16.mxu0 %v475
  %593 = vmatmul.mubr.bf16.gmra.mrb[0].mxu0 %v367
  %v594 = vpop.f32.mrb[0].mxu0
  %v595 = vadd.f32 %v258, %v594
  %v596 = vpop.f32.mrb[0].mxu0
  %v597 = vpop.f32.mrb[0].mxu0
  %v598 = vadd.f32 %v263, %v597
  %v599 = vpop.f32.mrb[0].mxu0
  %600 = vmatprep.mubr.bf16.mxu0 %v478
  %601 = vmatmul.mubr.bf16.gmra.mrb[0].mxu0 %v369
  %v602 = vpop.f32.mrb[0].mxu0
  %v603 = vadd.f32 %v268, %v602
  %v604 = vpop.f32.mrb[0].mxu0
  %v605 = vpop.f32.mrb[0].mxu0
  %v606 = vadd.f32 %v273, %v605
  %v607 = vpop.f32.mrb[0].mxu0
  %608 = vdwg.mxu0
  %v609 = vmax.f32 %v515, 0.0
  %v610 = vmax.f32 %v518, 0.0
  %v611 = vmax.f32 %v523, 0.0
  %v612 = vmax.f32 %v526, 0.0
  %v613 = vmax.f32 %v531, 0.0
  %v614 = vmax.f32 %v534, 0.0
  %v615 = vmax.f32 %v539, 0.0
  %v616 = vmax.f32 %v542, 0.0
  %v617 = vmax.f32 %v547, 0.0
  %v618 = vmax.f32 %v550, 0.0
  %v619 = vmax.f32 %v555, 0.0
  %v620 = vmax.f32 %v558, 0.0
  %v621 = vmax.f32 %v563, 0.0
  %v622 = vmax.f32 %v566, 0.0
  %v623 = vmax.f32 %v571, 0.0
  %v624 = vmax.f32 %v574, 0.0
  %v625 = vmax.f32 %v579, 0.0
  %v626 = vmax.f32 %v582, 0.0
  %v627 = vmax.f32 %v587, 0.0
  %v628 = vmax.f32 %v590, 0.0
  %v629 = vmax.f32 %v595, 0.0
  %v630 = vmax.f32 %v598, 0.0
  %v631 = vmax.f32 %v603, 0.0
  %v632 = vmax.f32 %v606, 0.0
  %s633 = scalar_lea.vmem %s0, 16
  %v634 = vld [vmem:[%s633] sm:$0xf]
  %v635 = vld [vmem:[%s633 + $0x4] sm:$0xf]
  %v636 = vld [vmem:[%s633 + $0x8] sm:$0xf]
  %v637 = vld [vmem:[%s633 + $0xc] sm:$0xf]
  %v638 = vld [vmem:[%s633 + $0x10] sm:$0xf]
  %v639 = vld [vmem:[%s633 + $0x14] sm:$0xf]
  %v640 = vld [vmem:[%s633 + $0x18] sm:$0xf]
  %v641 = vld [vmem:[%s633 + $0x1c] sm:$0xf]
  %v642 = vld [vmem:[%s633 + $0x20] sm:$0xf]
  %v643 = vld [vmem:[%s633 + $0x24] sm:$0xf]
  %v644 = vld [vmem:[%s633 + $0x28] sm:$0xf]
  %v645 = vld [vmem:[%s633 + $0x2c] sm:$0xf]
  %v646 = vld [vmem:[%s633 + $0x30] sm:$0xf]
  %v647 = vld [vmem:[%s633 + $0x34] sm:$0xf]
  %v648 = vld [vmem:[%s633 + $0x38] sm:$0xf]
  %v649 = vld [vmem:[%s633 + $0x3c] sm:$0xf]
  %v650 = vld [vmem:[%s633 + $0x40] sm:$0xf]
  %v651 = vld [vmem:[%s633 + $0x44] sm:$0xf]
  %v652 = vld [vmem:[%s633 + $0x48] sm:$0xf]
  %v653 = vld [vmem:[%s633 + $0x4c] sm:$0xf]
  %v674 = vunpack.c.l.b16 %v634
  %v675 = vunpack.c.l.b16 %v635
  %v676 = vunpack.c.l.b16 %v636
  %v677 = vunpack.c.l.b16 %v637
  %v678 = vunpack.c.l.b16 %v638
  %v679 = vunpack.c.l.b16 %v639
  %v680 = vunpack.c.l.b16 %v640
  %v681 = vunpack.c.l.b16 %v641
  %v682 = vunpack.c.l.b16 %v642
  %v683 = vunpack.c.l.b16 %v643
  %v684 = vunpack.c.l.b16 %v644
  %v685 = vunpack.c.l.b16 %v645
  %v686 = vunpack.c.l.b16 %v646
  %v687 = vunpack.c.l.b16 %v647
  %v688 = vunpack.c.l.b16 %v648
  %v689 = vunpack.c.l.b16 %v649
  %v690 = vunpack.c.l.b16 %v650
  %v691 = vunpack.c.l.b16 %v651
  %v692 = vunpack.c.l.b16 %v652
  %v693 = vunpack.c.l.b16 %v653
  %v694 = vpack.c.b16 %v675, %v674
  %v695 = vpack.c.b16 %v677, %v676
  %v696 = vpack.c.b16 %v679, %v678
  %v697 = vpack.c.b16 %v681, %v680
  %v698 = vpack.c.b16 %v683, %v682
  %v699 = vpack.c.b16 %v685, %v684
  %v700 = vpack.c.b16 %v687, %v686
  %v701 = vpack.c.b16 %v689, %v688
  %v702 = vpack.c.b16 %v691, %v690
  %v703 = vpack.c.b16 %v693, %v692
  %714 = vmatprep.subr.bf16.mxu0 0
  %715 = vmatpush1.bf16.msra.mxu0 %v694
  %716 = vmatprep.subr.bf16.mxu0 0
  %717 = vmatpush1.bf16.msra.mxu0 %v695
  %718 = vmatprep.subr.bf16.mxu0 0
  %719 = vmatpush1.bf16.msra.mxu0 %v696
  %720 = vmatprep.subr.bf16.mxu0 0
  %721 = vmatpush1.bf16.msra.mxu0 %v697
  %722 = vmatprep.subr.bf16.mxu0 0
  %723 = vmatpush1.bf16.msra.mxu0 %v698
  %724 = vmatprep.subr.bf16.mxu0 0
  %725 = vmatpush1.bf16.msra.mxu0 %v699
  %726 = vmatprep.subr.bf16.mxu0 0
  %727 = vmatpush1.bf16.msra.mxu0 %v700
  %728 = vmatprep.subr.bf16.mxu0 0
  %729 = vmatpush1.bf16.msra.mxu0 %v701
  %730 = vmatprep.subr.bf16.mxu0 0
  %731 = vmatpush1.bf16.msra.mxu0 %v702
  %732 = vmatprep.subr.bf16.mxu0 0
  %733 = vmatpush1.bf16.msra.mxu0 %v703
  %734 = vmatprep.subr.bf16.mxu0 0
  %735 = vmatpush1.bf16.msra.mxu0 0
  %736 = vmatprep.subr.bf16.mxu0 0
  %737 = vmatpush1.bf16.msra.mxu0 0
  %738 = vmatprep.subr.bf16.mxu0 0
  %739 = vmatpush1.bf16.msra.mxu0 0
  %740 = vmatprep.subr.bf16.mxu0 0
  %741 = vmatpush1.bf16.msra.mxu0 0
  %742 = vmatprep.subr.bf16.mxu0 0
  %743 = vmatpush1.bf16.msra.mxu0 0
  %744 = vmatprep.subr.bf16.mxu0 0
  %745 = vmatpush1.bf16.msra.mxu0 0
  %746 = vmatprep.mubr.bf16.mxu0 %v445
  %747 = vmatmul.mubr.bf16.gmra.mrb[0].mxu0 %v347
  %v748 = vpop.f32.mrb[0].mxu0
  %v749 = vadd.f32 %v158, %v748
  %v750 = vpop.f32.mrb[0].mxu0
  %v751 = vpop.f32.mrb[0].mxu0
  %v752 = vadd.f32 %v163, %v751
  %v753 = vpop.f32.mrb[0].mxu0
  %754 = vmatprep.mubr.bf16.mxu0 %v448
  %755 = vmatmul.mubr.bf16.gmra.mrb[0].mxu0 %v349
  %v756 = vpop.f32.mrb[0].mxu0
  %v757 = vadd.f32 %v168, %v756
  %v758 = vpop.f32.mrb[0].mxu0
  %v759 = vpop.f32.mrb[0].mxu0
  %v760 = vadd.f32 %v173, %v759
  %v761 = vpop.f32.mrb[0].mxu0
  %762 = vmatprep.mubr.bf16.mxu0 %v451
  %763 = vmatmul.mubr.bf16.gmra.mrb[0].mxu0 %v351
  %v764 = vpop.f32.mrb[0].mxu0
  %v765 = vadd.f32 %v178, %v764
  %v766 = vpop.f32.mrb[0].mxu0
  %v767 = vpop.f32.mrb[0].mxu0
  %v768 = vadd.f32 %v183, %v767
  %v769 = vpop.f32.mrb[0].mxu0
  %770 = vmatprep.mubr.bf16.mxu0 %v454
  %771 = vmatmul.mubr.bf16.gmra.mrb[0].mxu0 %v353
  %v772 = vpop.f32.mrb[0].mxu0
  %v773 = vadd.f32 %v188, %v772
  %v774 = vpop.f32.mrb[0].mxu0
  %v775 = vpop.f32.mrb[0].mxu0
  %v776 = vadd.f32 %v193, %v775
  %v777 = vpop.f32.mrb[0].mxu0
  %778 = vmatprep.mubr.bf16.mxu0 %v457
  %779 = vmatmul.mubr.bf16.gmra.mrb[0].mxu0 %v355
  %v780 = vpop.f32.mrb[0].mxu0
  %v781 = vadd.f32 %v198, %v780
  %v782 = vpop.f32.mrb[0].mxu0
  %v783 = vpop.f32.mrb[0].mxu0
  %v784 = vadd.f32 %v203, %v783
  %v785 = vpop.f32.mrb[0].mxu0
  %786 = vmatprep.mubr.bf16.mxu0 %v460
  %787 = vmatmul.mubr.bf16.gmra.mrb[0].mxu0 %v357
  %v788 = vpop.f32.mrb[0].mxu0
  %v789 = vadd.f32 %v208, %v788
  %v790 = vpop.f32.mrb[0].mxu0
  %v791 = vpop.f32.mrb[0].mxu0
  %v792 = vadd.f32 %v213, %v791
  %v793 = vpop.f32.mrb[0].mxu0
  %794 = vmatprep.mubr.bf16.mxu0 %v463
  %795 = vmatmul.mubr.bf16.gmra.mrb[0].mxu0 %v359
  %v796 = vpop.f32.mrb[0].mxu0
  %v797 = vadd.f32 %v218, %v796
  %v798 = vpop.f32.mrb[0].mxu0
  %v799 = vpop.f32.mrb[0].mxu0
  %v800 = vadd.f32 %v223, %v799
  %v801 = vpop.f32.mrb[0].mxu0
  %802 = vmatprep.mubr.bf16.mxu0 %v466
  %803 = vmatmul.mubr.bf16.gmra.mrb[0].mxu0 %v361
  %v804 = vpop.f32.mrb[0].mxu0
  %v805 = vadd.f32 %v228, %v804
  %v806 = vpop.f32.mrb[0].mxu0
  %v807 = vpop.f32.mrb[0].mxu0
  %v808 = vadd.f32 %v233, %v807
  %v809 = vpop.f32.mrb[0].mxu0
  %810 = vmatprep.mubr.bf16.mxu0 %v469
  %811 = vmatmul.mubr.bf16.gmra.mrb[0].mxu0 %v363
  %v812 = vpop.f32.mrb[0].mxu0
  %v813 = vadd.f32 %v238, %v812
  %v814 = vpop.f32.mrb[0].mxu0
  %v815 = vpop.f32.mrb[0].mxu0
  %v816 = vadd.f32 %v243, %v815
  %v817 = vpop.f32.mrb[0].mxu0
  %818 = vmatprep.mubr.bf16.mxu0 %v472
  %819 = vmatmul.mubr.bf16.gmra.mrb[0].mxu0 %v365
  %v820 = vpop.f32.mrb[0].mxu0
  %v821 = vadd.f32 %v248, %v820
  %v822 = vpop.f32.mrb[0].mxu0
  %v823 = vpop.f32.mrb[0].mxu0
  %v824 = vadd.f32 %v253, %v823
  %v825 = vpop.f32.mrb[0].mxu0
  %826 = vmatprep.mubr.bf16.mxu0 %v475
  %827 = vmatmul.mubr.bf16.gmra.mrb[0].mxu0 %v367
  %v828 = vpop.f32.mrb[0].mxu0
  %v829 = vadd.f32 %v258, %v828
  %v830 = vpop.f32.mrb[0].mxu0
  %v831 = vpop.f32.mrb[0].mxu0
  %v832 = vadd.f32 %v263, %v831
  %v833 = vpop.f32.mrb[0].mxu0
  %834 = vmatprep.mubr.bf16.mxu0 %v478
  %835 = vmatmul.mubr.bf16.gmra.mrb[0].mxu0 %v369
  %v836 = vpop.f32.mrb[0].mxu0
  %v837 = vadd.f32 %v268, %v836
  %v838 = vpop.f32.mrb[0].mxu0
  %v839 = vpop.f32.mrb[0].mxu0
  %v840 = vadd.f32 %v273, %v839
  %v841 = vpop.f32.mrb[0].mxu0
  %842 = vdwg.mxu0
  %v843 = vmax.f32 %v749, 0.0
  %v844 = vmax.f32 %v752, 0.0
  %v845 = vmax.f32 %v757, 0.0
  %v846 = vmax.f32 %v760, 0.0
  %v847 = vmax.f32 %v765, 0.0
  %v848 = vmax.f32 %v768, 0.0
  %v849 = vmax.f32 %v773, 0.0
  %v850 = vmax.f32 %v776, 0.0
  %v851 = vmax.f32 %v781, 0.0
  %v852 = vmax.f32 %v784, 0.0
  %v853 = vmax.f32 %v789, 0.0
  %v854 = vmax.f32 %v792, 0.0
  %v855 = vmax.f32 %v797, 0.0
  %v856 = vmax.f32 %v800, 0.0
  %v857 = vmax.f32 %v805, 0.0
  %v858 = vmax.f32 %v808, 0.0
  %v859 = vmax.f32 %v813, 0.0
  %v860 = vmax.f32 %v816, 0.0
  %v861 = vmax.f32 %v821, 0.0
  %v862 = vmax.f32 %v824, 0.0
  %v863 = vmax.f32 %v829, 0.0
  %v864 = vmax.f32 %v832, 0.0
  %v865 = vmax.f32 %v837, 0.0
  %v866 = vmax.f32 %v840, 0.0
  %v867 = vmax.f32 %v609, %v843
  %v868 = vmax.f32 %v610, %v844
  %v869 = vmax.f32 %v611, %v845
  %v870 = vmax.f32 %v612, %v846
  %v871 = vmax.f32 %v613, %v847
  %v872 = vmax.f32 %v614, %v848
  %v873 = vmax.f32 %v615, %v849
  %v874 = vmax.f32 %v616, %v850
  %v875 = vmax.f32 %v617, %v851
  %v876 = vmax.f32 %v618, %v852
  %v877 = vmax.f32 %v619, %v853
  %v878 = vmax.f32 %v620, %v854
  %v879 = vmax.f32 %v621, %v855
  %v880 = vmax.f32 %v622, %v856
  %v881 = vmax.f32 %v623, %v857
  %v882 = vmax.f32 %v624, %v858
  %v883 = vmax.f32 %v625, %v859
  %v884 = vmax.f32 %v626, %v860
  %v885 = vmax.f32 %v627, %v861
  %v886 = vmax.f32 %v628, %v862
  %v887 = vmax.f32 %v629, %v863
  %v888 = vmax.f32 %v630, %v864
  %v889 = vmax.f32 %v631, %v865
  %v890 = vmax.f32 %v632, %v866
  %v891 = vmax.f32 %v867, %v868
  %v892 = vmax.f32 %v869, %v870
  %v893 = vmax.f32 %v871, %v872
  %v894 = vmax.f32 %v873, %v874
  %v895 = vmax.f32 %v875, %v876
  %v896 = vmax.f32 %v877, %v878
  %v897 = vmax.f32 %v879, %v880
  %v898 = vmax.f32 %v881, %v882
  %v899 = vmax.f32 %v883, %v884
  %v900 = vmax.f32 %v885, %v886
  %v901 = vmax.f32 %v887, %v888
  %v902 = vmax.f32 %v889, %v890
  %v903 = vpack.c.bf16 %v892, %v891
  %v904 = vpack.c.bf16 %v894, %v893
  %v905 = vpack.c.bf16 %v896, %v895
  %v906 = vpack.c.bf16 %v898, %v897
  %v907 = vpack.c.bf16 %v900, %v899
  %v908 = vpack.c.bf16 %v902, %v901
  %s909 = scalar_lea.vmem %s0, 32
  %v910 = vld [vmem:[%s909] sm:$0xf]
  %v911 = vld [vmem:[%s909 + $0x4] sm:$0xf]
  %v912 = vld [vmem:[%s909 + $0x8] sm:$0xf]
  %v913 = vld [vmem:[%s909 + $0xc] sm:$0xf]
  %v914 = vld [vmem:[%s909 + $0x10] sm:$0xf]
  %v915 = vld [vmem:[%s909 + $0x14] sm:$0xf]
  %v916 = vld [vmem:[%s909 + $0x18] sm:$0xf]
  %v917 = vld [vmem:[%s909 + $0x1c] sm:$0xf]
  %v918 = vld [vmem:[%s909 + $0x20] sm:$0xf]
  %v919 = vld [vmem:[%s909 + $0x24] sm:$0xf]
  %v920 = vld [vmem:[%s909 + $0x28] sm:$0xf]
  %v921 = vld [vmem:[%s909 + $0x2c] sm:$0xf]
  %v922 = vld [vmem:[%s909 + $0x30] sm:$0xf]
  %v923 = vld [vmem:[%s909 + $0x34] sm:$0xf]
  %v924 = vld [vmem:[%s909 + $0x38] sm:$0xf]
  %v925 = vld [vmem:[%s909 + $0x3c] sm:$0xf]
  %v926 = vld [vmem:[%s909 + $0x40] sm:$0xf]
  %v927 = vld [vmem:[%s909 + $0x44] sm:$0xf]
  %v928 = vld [vmem:[%s909 + $0x48] sm:$0xf]
  %v929 = vld [vmem:[%s909 + $0x4c] sm:$0xf]
  %v950 = vunpack.c.l.b16 %v910
  %v951 = vunpack.c.l.b16 %v911
  %v952 = vunpack.c.l.b16 %v912
  %v953 = vunpack.c.l.b16 %v913
  %v954 = vunpack.c.l.b16 %v914
  %v955 = vunpack.c.l.b16 %v915
  %v956 = vunpack.c.l.b16 %v916
  %v957 = vunpack.c.l.b16 %v917
  %v958 = vunpack.c.l.b16 %v918
  %v959 = vunpack.c.l.b16 %v919
  %v960 = vunpack.c.l.b16 %v920
  %v961 = vunpack.c.l.b16 %v921
  %v962 = vunpack.c.l.b16 %v922
  %v963 = vunpack.c.l.b16 %v923
  %v964 = vunpack.c.l.b16 %v924
  %v965 = vunpack.c.l.b16 %v925
  %v966 = vunpack.c.l.b16 %v926
  %v967 = vunpack.c.l.b16 %v927
  %v968 = vunpack.c.l.b16 %v928
  %v969 = vunpack.c.l.b16 %v929
  %v970 = vpack.c.b16 %v951, %v950
  %v971 = vpack.c.b16 %v953, %v952
  %v972 = vpack.c.b16 %v955, %v954
  %v973 = vpack.c.b16 %v957, %v956
  %v974 = vpack.c.b16 %v959, %v958
  %v975 = vpack.c.b16 %v961, %v960
  %v976 = vpack.c.b16 %v963, %v962
  %v977 = vpack.c.b16 %v965, %v964
  %v978 = vpack.c.b16 %v967, %v966
  %v979 = vpack.c.b16 %v969, %v968
  %990 = vmatprep.subr.bf16.mxu0 0
  %991 = vmatpush1.bf16.msra.mxu0 %v970
  %992 = vmatprep.subr.bf16.mxu0 0
  %993 = vmatpush1.bf16.msra.mxu0 %v971
  %994 = vmatprep.subr.bf16.mxu0 0
  %995 = vmatpush1.bf16.msra.mxu0 %v972
  %996 = vmatprep.subr.bf16.mxu0 0
  %997 = vmatpush1.bf16.msra.mxu0 %v973
  %998 = vmatprep.subr.bf16.mxu0 0
  %999 = vmatpush1.bf16.msra.mxu0 %v974
  %1000 = vmatprep.subr.bf16.mxu0 0
  %1001 = vmatpush1.bf16.msra.mxu0 %v975
  %1002 = vmatprep.subr.bf16.mxu0 0
  %1003 = vmatpush1.bf16.msra.mxu0 %v976
  %1004 = vmatprep.subr.bf16.mxu0 0
  %1005 = vmatpush1.bf16.msra.mxu0 %v977
  %1006 = vmatprep.subr.bf16.mxu0 0
  %1007 = vmatpush1.bf16.msra.mxu0 %v978
  %1008 = vmatprep.subr.bf16.mxu0 0
  %1009 = vmatpush1.bf16.msra.mxu0 %v979
  %1010 = vmatprep.subr.bf16.mxu0 0
  %1011 = vmatpush1.bf16.msra.mxu0 0
  %1012 = vmatprep.subr.bf16.mxu0 0
  %1013 = vmatpush1.bf16.msra.mxu0 0
  %1014 = vmatprep.subr.bf16.mxu0 0
  %1015 = vmatpush1.bf16.msra.mxu0 0
  %1016 = vmatprep.subr.bf16.mxu0 0
  %1017 = vmatpush1.bf16.msra.mxu0 0
  %1018 = vmatprep.subr.bf16.mxu0 0
  %1019 = vmatpush1.bf16.msra.mxu0 0
  %1020 = vmatprep.subr.bf16.mxu0 0
  %1021 = vmatpush1.bf16.msra.mxu0 0
  %1022 = vmatprep.mubr.bf16.mxu0 %v445
  %1023 = vmatmul.mubr.bf16.gmra.mrb[0].mxu0 %v347
  %v1024 = vpop.f32.mrb[0].mxu0
  %v1025 = vadd.f32 %v158, %v1024
  %v1026 = vpop.f32.mrb[0].mxu0
  %v1027 = vpop.f32.mrb[0].mxu0
  %v1028 = vadd.f32 %v163, %v1027
  %v1029 = vpop.f32.mrb[0].mxu0
  %1030 = vmatprep.mubr.bf16.mxu0 %v448
  %1031 = vmatmul.mubr.bf16.gmra.mrb[0].mxu0 %v349
  %v1032 = vpop.f32.mrb[0].mxu0
  %v1033 = vadd.f32 %v168, %v1032
  %v1034 = vpop.f32.mrb[0].mxu0
  %v1035 = vpop.f32.mrb[0].mxu0
  %v1036 = vadd.f32 %v173, %v1035
  %v1037 = vpop.f32.mrb[0].mxu0
  %1038 = vmatprep.mubr.bf16.mxu0 %v451
  %1039 = vmatmul.mubr.bf16.gmra.mrb[0].mxu0 %v351
  %v1040 = vpop.f32.mrb[0].mxu0
  %v1041 = vadd.f32 %v178, %v1040
  %v1042 = vpop.f32.mrb[0].mxu0
  %v1043 = vpop.f32.mrb[0].mxu0
  %v1044 = vadd.f32 %v183, %v1043
  %v1045 = vpop.f32.mrb[0].mxu0
  %1046 = vmatprep.mubr.bf16.mxu0 %v454
  %1047 = vmatmul.mubr.bf16.gmra.mrb[0].mxu0 %v353
  %v1048 = vpop.f32.mrb[0].mxu0
  %v1049 = vadd.f32 %v188, %v1048
  %v1050 = vpop.f32.mrb[0].mxu0
  %v1051 = vpop.f32.mrb[0].mxu0
  %v1052 = vadd.f32 %v193, %v1051
  %v1053 = vpop.f32.mrb[0].mxu0
  %1054 = vmatprep.mubr.bf16.mxu0 %v457
  %1055 = vmatmul.mubr.bf16.gmra.mrb[0].mxu0 %v355
  %v1056 = vpop.f32.mrb[0].mxu0
  %v1057 = vadd.f32 %v198, %v1056
  %v1058 = vpop.f32.mrb[0].mxu0
  %v1059 = vpop.f32.mrb[0].mxu0
  %v1060 = vadd.f32 %v203, %v1059
  %v1061 = vpop.f32.mrb[0].mxu0
  %1062 = vmatprep.mubr.bf16.mxu0 %v460
  %1063 = vmatmul.mubr.bf16.gmra.mrb[0].mxu0 %v357
  %v1064 = vpop.f32.mrb[0].mxu0
  %v1065 = vadd.f32 %v208, %v1064
  %v1066 = vpop.f32.mrb[0].mxu0
  %v1067 = vpop.f32.mrb[0].mxu0
  %v1068 = vadd.f32 %v213, %v1067
  %v1069 = vpop.f32.mrb[0].mxu0
  %1070 = vmatprep.mubr.bf16.mxu0 %v463
  %1071 = vmatmul.mubr.bf16.gmra.mrb[0].mxu0 %v359
  %v1072 = vpop.f32.mrb[0].mxu0
  %v1073 = vadd.f32 %v218, %v1072
  %v1074 = vpop.f32.mrb[0].mxu0
  %v1075 = vpop.f32.mrb[0].mxu0
  %v1076 = vadd.f32 %v223, %v1075
  %v1077 = vpop.f32.mrb[0].mxu0
  %1078 = vmatprep.mubr.bf16.mxu0 %v466
  %1079 = vmatmul.mubr.bf16.gmra.mrb[0].mxu0 %v361
  %v1080 = vpop.f32.mrb[0].mxu0
  %v1081 = vadd.f32 %v228, %v1080
  %v1082 = vpop.f32.mrb[0].mxu0
  %v1083 = vpop.f32.mrb[0].mxu0
  %v1084 = vadd.f32 %v233, %v1083
  %v1085 = vpop.f32.mrb[0].mxu0
  %1086 = vmatprep.mubr.bf16.mxu0 %v469
  %1087 = vmatmul.mubr.bf16.gmra.mrb[0].mxu0 %v363
  %v1088 = vpop.f32.mrb[0].mxu0
  %v1089 = vadd.f32 %v238, %v1088
  %v1090 = vpop.f32.mrb[0].mxu0
  %v1091 = vpop.f32.mrb[0].mxu0
  %v1092 = vadd.f32 %v243, %v1091
  %v1093 = vpop.f32.mrb[0].mxu0
  %1094 = vmatprep.mubr.bf16.mxu0 %v472
  %1095 = vmatmul.mubr.bf16.gmra.mrb[0].mxu0 %v365
  %v1096 = vpop.f32.mrb[0].mxu0
  %v1097 = vadd.f32 %v248, %v1096
  %v1098 = vpop.f32.mrb[0].mxu0
  %v1099 = vpop.f32.mrb[0].mxu0
  %v1100 = vadd.f32 %v253, %v1099
  %v1101 = vpop.f32.mrb[0].mxu0
  %1102 = vmatprep.mubr.bf16.mxu0 %v475
  %1103 = vmatmul.mubr.bf16.gmra.mrb[0].mxu0 %v367
  %v1104 = vpop.f32.mrb[0].mxu0
  %v1105 = vadd.f32 %v258, %v1104
  %v1106 = vpop.f32.mrb[0].mxu0
  %v1107 = vpop.f32.mrb[0].mxu0
  %v1108 = vadd.f32 %v263, %v1107
  %v1109 = vpop.f32.mrb[0].mxu0
  %1110 = vmatprep.mubr.bf16.mxu0 %v478
  %1111 = vmatmul.mubr.bf16.gmra.mrb[0].mxu0 %v369
  %v1112 = vpop.f32.mrb[0].mxu0
  %v1113 = vadd.f32 %v268, %v1112
  %v1114 = vpop.f32.mrb[0].mxu0
  %v1115 = vpop.f32.mrb[0].mxu0
  %v1116 = vadd.f32 %v273, %v1115
  %v1117 = vpop.f32.mrb[0].mxu0
  %1118 = vdwg.mxu0
  %v1119 = vmax.f32 %v1025, 0.0
  %v1120 = vmax.f32 %v1028, 0.0
  %v1121 = vmax.f32 %v1033, 0.0
  %v1122 = vmax.f32 %v1036, 0.0
  %v1123 = vmax.f32 %v1041, 0.0
  %v1124 = vmax.f32 %v1044, 0.0
  %v1125 = vmax.f32 %v1049, 0.0
  %v1126 = vmax.f32 %v1052, 0.0
  %v1127 = vmax.f32 %v1057, 0.0
  %v1128 = vmax.f32 %v1060, 0.0
  %v1129 = vmax.f32 %v1065, 0.0
  %v1130 = vmax.f32 %v1068, 0.0
  %v1131 = vmax.f32 %v1073, 0.0
  %v1132 = vmax.f32 %v1076, 0.0
  %v1133 = vmax.f32 %v1081, 0.0
  %v1134 = vmax.f32 %v1084, 0.0
  %v1135 = vmax.f32 %v1089, 0.0
  %v1136 = vmax.f32 %v1092, 0.0
  %v1137 = vmax.f32 %v1097, 0.0
  %v1138 = vmax.f32 %v1100, 0.0
  %v1139 = vmax.f32 %v1105, 0.0
  %v1140 = vmax.f32 %v1108, 0.0
  %v1141 = vmax.f32 %v1113, 0.0
  %v1142 = vmax.f32 %v1116, 0.0
  %s1143 = scalar_lea.vmem %s0, 48
  %v1144 = vld [vmem:[%s1143] sm:$0xf]
  %v1145 = vld [vmem:[%s1143 + $0x4] sm:$0xf]
  %v1146 = vld [vmem:[%s1143 + $0x8] sm:$0xf]
  %v1147 = vld [vmem:[%s1143 + $0xc] sm:$0xf]
  %v1148 = vld [vmem:[%s1143 + $0x10] sm:$0xf]
  %v1149 = vld [vmem:[%s1143 + $0x14] sm:$0xf]
  %v1150 = vld [vmem:[%s1143 + $0x18] sm:$0xf]
  %v1151 = vld [vmem:[%s1143 + $0x1c] sm:$0xf]
  %v1152 = vld [vmem:[%s1143 + $0x20] sm:$0xf]
  %v1153 = vld [vmem:[%s1143 + $0x24] sm:$0xf]
  %v1154 = vld [vmem:[%s1143 + $0x28] sm:$0xf]
  %v1155 = vld [vmem:[%s1143 + $0x2c] sm:$0xf]
  %v1156 = vld [vmem:[%s1143 + $0x30] sm:$0xf]
  %v1157 = vld [vmem:[%s1143 + $0x34] sm:$0xf]
  %v1158 = vld [vmem:[%s1143 + $0x38] sm:$0xf]
  %v1159 = vld [vmem:[%s1143 + $0x3c] sm:$0xf]
  %v1160 = vld [vmem:[%s1143 + $0x40] sm:$0xf]
  %v1161 = vld [vmem:[%s1143 + $0x44] sm:$0xf]
  %v1162 = vld [vmem:[%s1143 + $0x48] sm:$0xf]
  %v1163 = vld [vmem:[%s1143 + $0x4c] sm:$0xf]
  %v1184 = vunpack.c.l.b16 %v1144
  %v1185 = vunpack.c.l.b16 %v1145
  %v1186 = vunpack.c.l.b16 %v1146
  %v1187 = vunpack.c.l.b16 %v1147
  %v1188 = vunpack.c.l.b16 %v1148
  %v1189 = vunpack.c.l.b16 %v1149
  %v1190 = vunpack.c.l.b16 %v1150
  %v1191 = vunpack.c.l.b16 %v1151
  %v1192 = vunpack.c.l.b16 %v1152
  %v1193 = vunpack.c.l.b16 %v1153
  %v1194 = vunpack.c.l.b16 %v1154
  %v1195 = vunpack.c.l.b16 %v1155
  %v1196 = vunpack.c.l.b16 %v1156
  %v1197 = vunpack.c.l.b16 %v1157
  %v1198 = vunpack.c.l.b16 %v1158
  %v1199 = vunpack.c.l.b16 %v1159
  %v1200 = vunpack.c.l.b16 %v1160
  %v1201 = vunpack.c.l.b16 %v1161
  %v1202 = vunpack.c.l.b16 %v1162
  %v1203 = vunpack.c.l.b16 %v1163
  %v1204 = vpack.c.b16 %v1185, %v1184
  %v1205 = vpack.c.b16 %v1187, %v1186
  %v1206 = vpack.c.b16 %v1189, %v1188
  %v1207 = vpack.c.b16 %v1191, %v1190
  %v1208 = vpack.c.b16 %v1193, %v1192
  %v1209 = vpack.c.b16 %v1195, %v1194
  %v1210 = vpack.c.b16 %v1197, %v1196
  %v1211 = vpack.c.b16 %v1199, %v1198
  %v1212 = vpack.c.b16 %v1201, %v1200
  %v1213 = vpack.c.b16 %v1203, %v1202
  %1224 = vmatprep.subr.bf16.mxu0 0
  %1225 = vmatpush1.bf16.msra.mxu0 %v1204
  %1226 = vmatprep.subr.bf16.mxu0 0
  %1227 = vmatpush1.bf16.msra.mxu0 %v1205
  %1228 = vmatprep.subr.bf16.mxu0 0
  %1229 = vmatpush1.bf16.msra.mxu0 %v1206
  %1230 = vmatprep.subr.bf16.mxu0 0
  %1231 = vmatpush1.bf16.msra.mxu0 %v1207
  %1232 = vmatprep.subr.bf16.mxu0 0
  %1233 = vmatpush1.bf16.msra.mxu0 %v1208
  %1234 = vmatprep.subr.bf16.mxu0 0
  %1235 = vmatpush1.bf16.msra.mxu0 %v1209
  %1236 = vmatprep.subr.bf16.mxu0 0
  %1237 = vmatpush1.bf16.msra.mxu0 %v1210
  %1238 = vmatprep.subr.bf16.mxu0 0
  %1239 = vmatpush1.bf16.msra.mxu0 %v1211
  %1240 = vmatprep.subr.bf16.mxu0 0
  %1241 = vmatpush1.bf16.msra.mxu0 %v1212
  %1242 = vmatprep.subr.bf16.mxu0 0
  %1243 = vmatpush1.bf16.msra.mxu0 %v1213
  %1244 = vmatprep.subr.bf16.mxu0 0
  %1245 = vmatpush1.bf16.msra.mxu0 0
  %1246 = vmatprep.subr.bf16.mxu0 0
  %1247 = vmatpush1.bf16.msra.mxu0 0
  %1248 = vmatprep.subr.bf16.mxu0 0
  %1249 = vmatpush1.bf16.msra.mxu0 0
  %1250 = vmatprep.subr.bf16.mxu0 0
  %1251 = vmatpush1.bf16.msra.mxu0 0
  %1252 = vmatprep.subr.bf16.mxu0 0
  %1253 = vmatpush1.bf16.msra.mxu0 0
  %1254 = vmatprep.subr.bf16.mxu0 0
  %1255 = vmatpush1.bf16.msra.mxu0 0
  %1256 = vmatprep.mubr.bf16.mxu0 %v445
  %1257 = vmatmul.mubr.bf16.gmra.mrb[0].mxu0 %v347
  %v1258 = vpop.f32.mrb[0].mxu0
  %v1259 = vadd.f32 %v158, %v1258
  %v1260 = vpop.f32.mrb[0].mxu0
  %v1261 = vpop.f32.mrb[0].mxu0
  %v1262 = vadd.f32 %v163, %v1261
  %v1263 = vpop.f32.mrb[0].mxu0
  %1264 = vmatprep.mubr.bf16.mxu0 %v448
  %1265 = vmatmul.mubr.bf16.gmra.mrb[0].mxu0 %v349
  %v1266 = vpop.f32.mrb[0].mxu0
  %v1267 = vadd.f32 %v168, %v1266
  %v1268 = vpop.f32.mrb[0].mxu0
  %v1269 = vpop.f32.mrb[0].mxu0
  %v1270 = vadd.f32 %v173, %v1269
  %v1271 = vpop.f32.mrb[0].mxu0
  %1272 = vmatprep.mubr.bf16.mxu0 %v451
  %1273 = vmatmul.mubr.bf16.gmra.mrb[0].mxu0 %v351
  %v1274 = vpop.f32.mrb[0].mxu0
  %v1275 = vadd.f32 %v178, %v1274
  %v1276 = vpop.f32.mrb[0].mxu0
  %v1277 = vpop.f32.mrb[0].mxu0
  %v1278 = vadd.f32 %v183, %v1277
  %v1279 = vpop.f32.mrb[0].mxu0
  %1280 = vmatprep.mubr.bf16.mxu0 %v454
  %1281 = vmatmul.mubr.bf16.gmra.mrb[0].mxu0 %v353
  %v1282 = vpop.f32.mrb[0].mxu0
  %v1283 = vadd.f32 %v188, %v1282
  %v1284 = vpop.f32.mrb[0].mxu0
  %v1285 = vpop.f32.mrb[0].mxu0
  %v1286 = vadd.f32 %v193, %v1285
  %v1287 = vpop.f32.mrb[0].mxu0
  %1288 = vmatprep.mubr.bf16.mxu0 %v457
  %1289 = vmatmul.mubr.bf16.gmra.mrb[0].mxu0 %v355
  %v1290 = vpop.f32.mrb[0].mxu0
  %v1291 = vadd.f32 %v198, %v1290
  %v1292 = vpop.f32.mrb[0].mxu0
  %v1293 = vpop.f32.mrb[0].mxu0
  %v1294 = vadd.f32 %v203, %v1293
  %v1295 = vpop.f32.mrb[0].mxu0
  %1296 = vmatprep.mubr.bf16.mxu0 %v460
  %1297 = vmatmul.mubr.bf16.gmra.mrb[0].mxu0 %v357
  %v1298 = vpop.f32.mrb[0].mxu0
  %v1299 = vadd.f32 %v208, %v1298
  %v1300 = vpop.f32.mrb[0].mxu0
  %v1301 = vpop.f32.mrb[0].mxu0
  %v1302 = vadd.f32 %v213, %v1301
  %v1303 = vpop.f32.mrb[0].mxu0
  %1304 = vmatprep.mubr.bf16.mxu0 %v463
  %1305 = vmatmul.mubr.bf16.gmra.mrb[0].mxu0 %v359
  %v1306 = vpop.f32.mrb[0].mxu0
  %v1307 = vadd.f32 %v218, %v1306
  %v1308 = vpop.f32.mrb[0].mxu0
  %v1309 = vpop.f32.mrb[0].mxu0
  %v1310 = vadd.f32 %v223, %v1309
  %v1311 = vpop.f32.mrb[0].mxu0
  %1312 = vmatprep.mubr.bf16.mxu0 %v466
  %1313 = vmatmul.mubr.bf16.gmra.mrb[0].mxu0 %v361
  %v1314 = vpop.f32.mrb[0].mxu0
  %v1315 = vadd.f32 %v228, %v1314
  %v1316 = vpop.f32.mrb[0].mxu0
  %v1317 = vpop.f32.mrb[0].mxu0
  %v1318 = vadd.f32 %v233, %v1317
  %v1319 = vpop.f32.mrb[0].mxu0
  %1320 = vmatprep.mubr.bf16.mxu0 %v469
  %1321 = vmatmul.mubr.bf16.gmra.mrb[0].mxu0 %v363
  %v1322 = vpop.f32.mrb[0].mxu0
  %v1323 = vadd.f32 %v238, %v1322
  %v1324 = vpop.f32.mrb[0].mxu0
  %v1325 = vpop.f32.mrb[0].mxu0
  %v1326 = vadd.f32 %v243, %v1325
  %v1327 = vpop.f32.mrb[0].mxu0
  %1328 = vmatprep.mubr.bf16.mxu0 %v472
  %1329 = vmatmul.mubr.bf16.gmra.mrb[0].mxu0 %v365
  %v1330 = vpop.f32.mrb[0].mxu0
  %v1331 = vadd.f32 %v248, %v1330
  %v1332 = vpop.f32.mrb[0].mxu0
  %v1333 = vpop.f32.mrb[0].mxu0
  %v1334 = vadd.f32 %v253, %v1333
  %v1335 = vpop.f32.mrb[0].mxu0
  %1336 = vmatprep.mubr.bf16.mxu0 %v475
  %1337 = vmatmul.mubr.bf16.gmra.mrb[0].mxu0 %v367
  %v1338 = vpop.f32.mrb[0].mxu0
  %v1339 = vadd.f32 %v258, %v1338
  %v1340 = vpop.f32.mrb[0].mxu0
  %v1341 = vpop.f32.mrb[0].mxu0
  %v1342 = vadd.f32 %v263, %v1341
  %v1343 = vpop.f32.mrb[0].mxu0
  %1344 = vmatprep.mubr.bf16.mxu0 %v478
  %1345 = vmatmul.mubr.bf16.gmra.mrb[0].mxu0 %v369
  %v1346 = vpop.f32.mrb[0].mxu0
  %v1347 = vadd.f32 %v268, %v1346
  %v1348 = vpop.f32.mrb[0].mxu0
  %v1349 = vpop.f32.mrb[0].mxu0
  %v1350 = vadd.f32 %v273, %v1349
  %v1351 = vpop.f32.mrb[0].mxu0
  %1352 = vdwg.mxu0
  %v1353 = vmax.f32 %v1259, 0.0
  %v1354 = vmax.f32 %v1262, 0.0
  %v1355 = vmax.f32 %v1267, 0.0
  %v1356 = vmax.f32 %v1270, 0.0
  %v1357 = vmax.f32 %v1275, 0.0
  %v1358 = vmax.f32 %v1278, 0.0
  %v1359 = vmax.f32 %v1283, 0.0
  %v1360 = vmax.f32 %v1286, 0.0
  %v1361 = vmax.f32 %v1291, 0.0
  %v1362 = vmax.f32 %v1294, 0.0
  %v1363 = vmax.f32 %v1299, 0.0
  %v1364 = vmax.f32 %v1302, 0.0
  %v1365 = vmax.f32 %v1307, 0.0
  %v1366 = vmax.f32 %v1310, 0.0
  %v1367 = vmax.f32 %v1315, 0.0
  %v1368 = vmax.f32 %v1318, 0.0
  %v1369 = vmax.f32 %v1323, 0.0
  %v1370 = vmax.f32 %v1326, 0.0
  %v1371 = vmax.f32 %v1331, 0.0
  %v1372 = vmax.f32 %v1334, 0.0
  %v1373 = vmax.f32 %v1339, 0.0
  %v1374 = vmax.f32 %v1342, 0.0
  %v1375 = vmax.f32 %v1347, 0.0
  %v1376 = vmax.f32 %v1350, 0.0
  %v1377 = vmax.f32 %v1119, %v1353
  %v1378 = vmax.f32 %v1120, %v1354
  %v1379 = vmax.f32 %v1121, %v1355
  %v1380 = vmax.f32 %v1122, %v1356
  %v1381 = vmax.f32 %v1123, %v1357
  %v1382 = vmax.f32 %v1124, %v1358
  %v1383 = vmax.f32 %v1125, %v1359
  %v1384 = vmax.f32 %v1126, %v1360
  %v1385 = vmax.f32 %v1127, %v1361
  %v1386 = vmax.f32 %v1128, %v1362
  %v1387 = vmax.f32 %v1129, %v1363
  %v1388 = vmax.f32 %v1130, %v1364
  %v1389 = vmax.f32 %v1131, %v1365
  %v1390 = vmax.f32 %v1132, %v1366
  %v1391 = vmax.f32 %v1133, %v1367
  %v1392 = vmax.f32 %v1134, %v1368
  %v1393 = vmax.f32 %v1135, %v1369
  %v1394 = vmax.f32 %v1136, %v1370
  %v1395 = vmax.f32 %v1137, %v1371
  %v1396 = vmax.f32 %v1138, %v1372
  %v1397 = vmax.f32 %v1139, %v1373
  %v1398 = vmax.f32 %v1140, %v1374
  %v1399 = vmax.f32 %v1141, %v1375
  %v1400 = vmax.f32 %v1142, %v1376
  %v1401 = vmax.f32 %v1377, %v1378
  %v1402 = vmax.f32 %v1379, %v1380
  %v1403 = vmax.f32 %v1381, %v1382
  %v1404 = vmax.f32 %v1383, %v1384
  %v1405 = vmax.f32 %v1385, %v1386
  %v1406 = vmax.f32 %v1387, %v1388
  %v1407 = vmax.f32 %v1389, %v1390
  %v1408 = vmax.f32 %v1391, %v1392
  %v1409 = vmax.f32 %v1393, %v1394
  %v1410 = vmax.f32 %v1395, %v1396
  %v1411 = vmax.f32 %v1397, %v1398
  %v1412 = vmax.f32 %v1399, %v1400
  %v1413 = vpack.c.bf16 %v1402, %v1401
  %v1414 = vpack.c.bf16 %v1404, %v1403
  %v1415 = vpack.c.bf16 %v1406, %v1405
  %v1416 = vpack.c.bf16 %v1408, %v1407
  %v1417 = vpack.c.bf16 %v1410, %v1409
  %v1418 = vpack.c.bf16 %v1412, %v1411
  %s1419 = scalar_lea.vmem %s0, 64
  %v1420 = vld [vmem:[%s1419] sm:$0xf]
  %v1421 = vld [vmem:[%s1419 + $0x4] sm:$0xf]
  %v1422 = vld [vmem:[%s1419 + $0x8] sm:$0xf]
  %v1423 = vld [vmem:[%s1419 + $0xc] sm:$0xf]
  %v1424 = vld [vmem:[%s1419 + $0x10] sm:$0xf]
  %v1425 = vld [vmem:[%s1419 + $0x14] sm:$0xf]
  %v1426 = vld [vmem:[%s1419 + $0x18] sm:$0xf]
  %v1427 = vld [vmem:[%s1419 + $0x1c] sm:$0xf]
  %v1428 = vld [vmem:[%s1419 + $0x20] sm:$0xf]
  %v1429 = vld [vmem:[%s1419 + $0x24] sm:$0xf]
  %v1430 = vld [vmem:[%s1419 + $0x28] sm:$0xf]
  %v1431 = vld [vmem:[%s1419 + $0x2c] sm:$0xf]
  %v1432 = vld [vmem:[%s1419 + $0x30] sm:$0xf]
  %v1433 = vld [vmem:[%s1419 + $0x34] sm:$0xf]
  %v1434 = vld [vmem:[%s1419 + $0x38] sm:$0xf]
  %v1435 = vld [vmem:[%s1419 + $0x3c] sm:$0xf]
  %v1436 = vld [vmem:[%s1419 + $0x40] sm:$0xf]
  %v1437 = vld [vmem:[%s1419 + $0x44] sm:$0xf]
  %v1438 = vld [vmem:[%s1419 + $0x48] sm:$0xf]
  %v1439 = vld [vmem:[%s1419 + $0x4c] sm:$0xf]
  %v1460 = vunpack.c.l.b16 %v1420
  %v1461 = vunpack.c.l.b16 %v1421
  %v1462 = vunpack.c.l.b16 %v1422
  %v1463 = vunpack.c.l.b16 %v1423
  %v1464 = vunpack.c.l.b16 %v1424
  %v1465 = vunpack.c.l.b16 %v1425
  %v1466 = vunpack.c.l.b16 %v1426
  %v1467 = vunpack.c.l.b16 %v1427
  %v1468 = vunpack.c.l.b16 %v1428
  %v1469 = vunpack.c.l.b16 %v1429
  %v1470 = vunpack.c.l.b16 %v1430
  %v1471 = vunpack.c.l.b16 %v1431
  %v1472 = vunpack.c.l.b16 %v1432
  %v1473 = vunpack.c.l.b16 %v1433
  %v1474 = vunpack.c.l.b16 %v1434
  %v1475 = vunpack.c.l.b16 %v1435
  %v1476 = vunpack.c.l.b16 %v1436
  %v1477 = vunpack.c.l.b16 %v1437
  %v1478 = vunpack.c.l.b16 %v1438
  %v1479 = vunpack.c.l.b16 %v1439
  %v1480 = vpack.c.b16 %v1461, %v1460
  %v1481 = vpack.c.b16 %v1463, %v1462
  %v1482 = vpack.c.b16 %v1465, %v1464
  %v1483 = vpack.c.b16 %v1467, %v1466
  %v1484 = vpack.c.b16 %v1469, %v1468
  %v1485 = vpack.c.b16 %v1471, %v1470
  %v1486 = vpack.c.b16 %v1473, %v1472
  %v1487 = vpack.c.b16 %v1475, %v1474
  %v1488 = vpack.c.b16 %v1477, %v1476
  %v1489 = vpack.c.b16 %v1479, %v1478
  %1500 = vmatprep.subr.bf16.mxu0 0
  %1501 = vmatpush1.bf16.msra.mxu0 %v1480
  %1502 = vmatprep.subr.bf16.mxu0 0
  %1503 = vmatpush1.bf16.msra.mxu0 %v1481
  %1504 = vmatprep.subr.bf16.mxu0 0
  %1505 = vmatpush1.bf16.msra.mxu0 %v1482
  %1506 = vmatprep.subr.bf16.mxu0 0
  %1507 = vmatpush1.bf16.msra.mxu0 %v1483
  %1508 = vmatprep.subr.bf16.mxu0 0
  %1509 = vmatpush1.bf16.msra.mxu0 %v1484
  %1510 = vmatprep.subr.bf16.mxu0 0
  %1511 = vmatpush1.bf16.msra.mxu0 %v1485
  %1512 = vmatprep.subr.bf16.mxu0 0
  %1513 = vmatpush1.bf16.msra.mxu0 %v1486
  %1514 = vmatprep.subr.bf16.mxu0 0
  %1515 = vmatpush1.bf16.msra.mxu0 %v1487
  %1516 = vmatprep.subr.bf16.mxu0 0
  %1517 = vmatpush1.bf16.msra.mxu0 %v1488
  %1518 = vmatprep.subr.bf16.mxu0 0
  %1519 = vmatpush1.bf16.msra.mxu0 %v1489
  %1520 = vmatprep.subr.bf16.mxu0 0
  %1521 = vmatpush1.bf16.msra.mxu0 0
  %1522 = vmatprep.subr.bf16.mxu0 0
  %1523 = vmatpush1.bf16.msra.mxu0 0
  %1524 = vmatprep.subr.bf16.mxu0 0
  %1525 = vmatpush1.bf16.msra.mxu0 0
  %1526 = vmatprep.subr.bf16.mxu0 0
  %1527 = vmatpush1.bf16.msra.mxu0 0
  %1528 = vmatprep.subr.bf16.mxu0 0
  %1529 = vmatpush1.bf16.msra.mxu0 0
  %1530 = vmatprep.subr.bf16.mxu0 0
  %1531 = vmatpush1.bf16.msra.mxu0 0
  %1532 = vmatprep.mubr.bf16.mxu0 %v445
  %1533 = vmatmul.mubr.bf16.gmra.mrb[0].mxu0 %v347
  %v1534 = vpop.f32.mrb[0].mxu0
  %v1535 = vadd.f32 %v158, %v1534
  %v1536 = vpop.f32.mrb[0].mxu0
  %v1537 = vpop.f32.mrb[0].mxu0
  %v1538 = vadd.f32 %v163, %v1537
  %v1539 = vpop.f32.mrb[0].mxu0
  %1540 = vmatprep.mubr.bf16.mxu0 %v448
  %1541 = vmatmul.mubr.bf16.gmra.mrb[0].mxu0 %v349
  %v1542 = vpop.f32.mrb[0].mxu0
  %v1543 = vadd.f32 %v168, %v1542
  %v1544 = vpop.f32.mrb[0].mxu0
  %v1545 = vpop.f32.mrb[0].mxu0
  %v1546 = vadd.f32 %v173, %v1545
  %v1547 = vpop.f32.mrb[0].mxu0
  %1548 = vmatprep.mubr.bf16.mxu0 %v451
  %1549 = vmatmul.mubr.bf16.gmra.mrb[0].mxu0 %v351
  %v1550 = vpop.f32.mrb[0].mxu0
  %v1551 = vadd.f32 %v178, %v1550
  %v1552 = vpop.f32.mrb[0].mxu0
  %v1553 = vpop.f32.mrb[0].mxu0
  %v1554 = vadd.f32 %v183, %v1553
  %v1555 = vpop.f32.mrb[0].mxu0
  %1556 = vmatprep.mubr.bf16.mxu0 %v454
  %1557 = vmatmul.mubr.bf16.gmra.mrb[0].mxu0 %v353
  %v1558 = vpop.f32.mrb[0].mxu0
  %v1559 = vadd.f32 %v188, %v1558
  %v1560 = vpop.f32.mrb[0].mxu0
  %v1561 = vpop.f32.mrb[0].mxu0
  %v1562 = vadd.f32 %v193, %v1561
  %v1563 = vpop.f32.mrb[0].mxu0
  %1564 = vmatprep.mubr.bf16.mxu0 %v457
  %1565 = vmatmul.mubr.bf16.gmra.mrb[0].mxu0 %v355
  %v1566 = vpop.f32.mrb[0].mxu0
  %v1567 = vadd.f32 %v198, %v1566
  %v1568 = vpop.f32.mrb[0].mxu0
  %v1569 = vpop.f32.mrb[0].mxu0
  %v1570 = vadd.f32 %v203, %v1569
  %v1571 = vpop.f32.mrb[0].mxu0
  %1572 = vmatprep.mubr.bf16.mxu0 %v460
  %1573 = vmatmul.mubr.bf16.gmra.mrb[0].mxu0 %v357
  %v1574 = vpop.f32.mrb[0].mxu0
  %v1575 = vadd.f32 %v208, %v1574
  %v1576 = vpop.f32.mrb[0].mxu0
  %v1577 = vpop.f32.mrb[0].mxu0
  %v1578 = vadd.f32 %v213, %v1577
  %v1579 = vpop.f32.mrb[0].mxu0
  %1580 = vmatprep.mubr.bf16.mxu0 %v463
  %1581 = vmatmul.mubr.bf16.gmra.mrb[0].mxu0 %v359
  %v1582 = vpop.f32.mrb[0].mxu0
  %v1583 = vadd.f32 %v218, %v1582
  %v1584 = vpop.f32.mrb[0].mxu0
  %v1585 = vpop.f32.mrb[0].mxu0
  %v1586 = vadd.f32 %v223, %v1585
  %v1587 = vpop.f32.mrb[0].mxu0
  %1588 = vmatprep.mubr.bf16.mxu0 %v466
  %1589 = vmatmul.mubr.bf16.gmra.mrb[0].mxu0 %v361
  %v1590 = vpop.f32.mrb[0].mxu0
  %v1591 = vadd.f32 %v228, %v1590
  %v1592 = vpop.f32.mrb[0].mxu0
  %v1593 = vpop.f32.mrb[0].mxu0
  %v1594 = vadd.f32 %v233, %v1593
  %v1595 = vpop.f32.mrb[0].mxu0
  %1596 = vmatprep.mubr.bf16.mxu0 %v469
  %1597 = vmatmul.mubr.bf16.gmra.mrb[0].mxu0 %v363
  %v1598 = vpop.f32.mrb[0].mxu0
  %v1599 = vadd.f32 %v238, %v1598
  %v1600 = vpop.f32.mrb[0].mxu0
  %v1601 = vpop.f32.mrb[0].mxu0
  %v1602 = vadd.f32 %v243, %v1601
  %v1603 = vpop.f32.mrb[0].mxu0
  %1604 = vmatprep.mubr.bf16.mxu0 %v472
  %1605 = vmatmul.mubr.bf16.gmra.mrb[0].mxu0 %v365
  %v1606 = vpop.f32.mrb[0].mxu0
  %v1607 = vadd.f32 %v248, %v1606
  %v1608 = vpop.f32.mrb[0].mxu0
  %v1609 = vpop.f32.mrb[0].mxu0
  %v1610 = vadd.f32 %v253, %v1609
  %v1611 = vpop.f32.mrb[0].mxu0
  %1612 = vmatprep.mubr.bf16.mxu0 %v475
  %1613 = vmatmul.mubr.bf16.gmra.mrb[0].mxu0 %v367
  %v1614 = vpop.f32.mrb[0].mxu0
  %v1615 = vadd.f32 %v258, %v1614
  %v1616 = vpop.f32.mrb[0].mxu0
  %v1617 = vpop.f32.mrb[0].mxu0
  %v1618 = vadd.f32 %v263, %v1617
  %v1619 = vpop.f32.mrb[0].mxu0
  %1620 = vmatprep.mubr.bf16.mxu0 %v478
  %1621 = vmatmul.mubr.bf16.gmra.mrb[0].mxu0 %v369
  %v1622 = vpop.f32.mrb[0].mxu0
  %v1623 = vadd.f32 %v268, %v1622
  %v1624 = vpop.f32.mrb[0].mxu0
  %v1625 = vpop.f32.mrb[0].mxu0
  %v1626 = vadd.f32 %v273, %v1625
  %v1627 = vpop.f32.mrb[0].mxu0
  %1628 = vdwg.mxu0
  %v1629 = vmax.f32 %v1535, 0.0
  %v1630 = vmax.f32 %v1538, 0.0
  %v1631 = vmax.f32 %v1543, 0.0
  %v1632 = vmax.f32 %v1546, 0.0
  %v1633 = vmax.f32 %v1551, 0.0
  %v1634 = vmax.f32 %v1554, 0.0
  %v1635 = vmax.f32 %v1559, 0.0
  %v1636 = vmax.f32 %v1562, 0.0
  %v1637 = vmax.f32 %v1567, 0.0
  %v1638 = vmax.f32 %v1570, 0.0
  %v1639 = vmax.f32 %v1575, 0.0
  %v1640 = vmax.f32 %v1578, 0.0
  %v1641 = vmax.f32 %v1583, 0.0
  %v1642 = vmax.f32 %v1586, 0.0
  %v1643 = vmax.f32 %v1591, 0.0
  %v1644 = vmax.f32 %v1594, 0.0
  %v1645 = vmax.f32 %v1599, 0.0
  %v1646 = vmax.f32 %v1602, 0.0
  %v1647 = vmax.f32 %v1607, 0.0
  %v1648 = vmax.f32 %v1610, 0.0
  %v1649 = vmax.f32 %v1615, 0.0
  %v1650 = vmax.f32 %v1618, 0.0
  %v1651 = vmax.f32 %v1623, 0.0
  %v1652 = vmax.f32 %v1626, 0.0
  %s1653 = scalar_lea.vmem %s0, 80
  %v1654 = vld [vmem:[%s1653] sm:$0xf]
  %v1655 = vld [vmem:[%s1653 + $0x4] sm:$0xf]
  %v1656 = vld [vmem:[%s1653 + $0x8] sm:$0xf]
  %v1657 = vld [vmem:[%s1653 + $0xc] sm:$0xf]
  %v1658 = vld [vmem:[%s1653 + $0x10] sm:$0xf]
  %v1659 = vld [vmem:[%s1653 + $0x14] sm:$0xf]
  %v1660 = vld [vmem:[%s1653 + $0x18] sm:$0xf]
  %v1661 = vld [vmem:[%s1653 + $0x1c] sm:$0xf]
  %v1662 = vld [vmem:[%s1653 + $0x20] sm:$0xf]
  %v1663 = vld [vmem:[%s1653 + $0x24] sm:$0xf]
  %v1664 = vld [vmem:[%s1653 + $0x28] sm:$0xf]
  %v1665 = vld [vmem:[%s1653 + $0x2c] sm:$0xf]
  %v1666 = vld [vmem:[%s1653 + $0x30] sm:$0xf]
  %v1667 = vld [vmem:[%s1653 + $0x34] sm:$0xf]
  %v1668 = vld [vmem:[%s1653 + $0x38] sm:$0xf]
  %v1669 = vld [vmem:[%s1653 + $0x3c] sm:$0xf]
  %v1670 = vld [vmem:[%s1653 + $0x40] sm:$0xf]
  %v1671 = vld [vmem:[%s1653 + $0x44] sm:$0xf]
  %v1672 = vld [vmem:[%s1653 + $0x48] sm:$0xf]
  %v1673 = vld [vmem:[%s1653 + $0x4c] sm:$0xf]
  %v1694 = vunpack.c.l.b16 %v1654
  %v1695 = vunpack.c.l.b16 %v1655
  %v1696 = vunpack.c.l.b16 %v1656
  %v1697 = vunpack.c.l.b16 %v1657
  %v1698 = vunpack.c.l.b16 %v1658
  %v1699 = vunpack.c.l.b16 %v1659
  %v1700 = vunpack.c.l.b16 %v1660
  %v1701 = vunpack.c.l.b16 %v1661
  %v1702 = vunpack.c.l.b16 %v1662
  %v1703 = vunpack.c.l.b16 %v1663
  %v1704 = vunpack.c.l.b16 %v1664
  %v1705 = vunpack.c.l.b16 %v1665
  %v1706 = vunpack.c.l.b16 %v1666
  %v1707 = vunpack.c.l.b16 %v1667
  %v1708 = vunpack.c.l.b16 %v1668
  %v1709 = vunpack.c.l.b16 %v1669
  %v1710 = vunpack.c.l.b16 %v1670
  %v1711 = vunpack.c.l.b16 %v1671
  %v1712 = vunpack.c.l.b16 %v1672
  %v1713 = vunpack.c.l.b16 %v1673
  %v1714 = vpack.c.b16 %v1695, %v1694
  %v1715 = vpack.c.b16 %v1697, %v1696
  %v1716 = vpack.c.b16 %v1699, %v1698
  %v1717 = vpack.c.b16 %v1701, %v1700
  %v1718 = vpack.c.b16 %v1703, %v1702
  %v1719 = vpack.c.b16 %v1705, %v1704
  %v1720 = vpack.c.b16 %v1707, %v1706
  %v1721 = vpack.c.b16 %v1709, %v1708
  %v1722 = vpack.c.b16 %v1711, %v1710
  %v1723 = vpack.c.b16 %v1713, %v1712
  %1734 = vmatprep.subr.bf16.mxu0 0
  %1735 = vmatpush1.bf16.msra.mxu0 %v1714
  %1736 = vmatprep.subr.bf16.mxu0 0
  %1737 = vmatpush1.bf16.msra.mxu0 %v1715
  %1738 = vmatprep.subr.bf16.mxu0 0
  %1739 = vmatpush1.bf16.msra.mxu0 %v1716
  %1740 = vmatprep.subr.bf16.mxu0 0
  %1741 = vmatpush1.bf16.msra.mxu0 %v1717
  %1742 = vmatprep.subr.bf16.mxu0 0
  %1743 = vmatpush1.bf16.msra.mxu0 %v1718
  %1744 = vmatprep.subr.bf16.mxu0 0
  %1745 = vmatpush1.bf16.msra.mxu0 %v1719
  %1746 = vmatprep.subr.bf16.mxu0 0
  %1747 = vmatpush1.bf16.msra.mxu0 %v1720
  %1748 = vmatprep.subr.bf16.mxu0 0
  %1749 = vmatpush1.bf16.msra.mxu0 %v1721
  %1750 = vmatprep.subr.bf16.mxu0 0
  %1751 = vmatpush1.bf16.msra.mxu0 %v1722
  %1752 = vmatprep.subr.bf16.mxu0 0
  %1753 = vmatpush1.bf16.msra.mxu0 %v1723
  %1754 = vmatprep.subr.bf16.mxu0 0
  %1755 = vmatpush1.bf16.msra.mxu0 0
  %1756 = vmatprep.subr.bf16.mxu0 0
  %1757 = vmatpush1.bf16.msra.mxu0 0
  %1758 = vmatprep.subr.bf16.mxu0 0
  %1759 = vmatpush1.bf16.msra.mxu0 0
  %1760 = vmatprep.subr.bf16.mxu0 0
  %1761 = vmatpush1.bf16.msra.mxu0 0
  %1762 = vmatprep.subr.bf16.mxu0 0
  %1763 = vmatpush1.bf16.msra.mxu0 0
  %1764 = vmatprep.subr.bf16.mxu0 0
  %1765 = vmatpush1.bf16.msra.mxu0 0
  %1766 = vmatprep.mubr.bf16.mxu0 %v445
  %1767 = vmatmul.mubr.bf16.gmra.mrb[0].mxu0 %v347
  %v1768 = vpop.f32.mrb[0].mxu0
  %v1769 = vadd.f32 %v158, %v1768
  %v1770 = vpop.f32.mrb[0].mxu0
  %v1771 = vpop.f32.mrb[0].mxu0
  %v1772 = vadd.f32 %v163, %v1771
  %v1773 = vpop.f32.mrb[0].mxu0
  %1774 = vmatprep.mubr.bf16.mxu0 %v448
  %1775 = vmatmul.mubr.bf16.gmra.mrb[0].mxu0 %v349
  %v1776 = vpop.f32.mrb[0].mxu0
  %v1777 = vadd.f32 %v168, %v1776
  %v1778 = vpop.f32.mrb[0].mxu0
  %v1779 = vpop.f32.mrb[0].mxu0
  %v1780 = vadd.f32 %v173, %v1779
  %v1781 = vpop.f32.mrb[0].mxu0
  %1782 = vmatprep.mubr.bf16.mxu0 %v451
  %1783 = vmatmul.mubr.bf16.gmra.mrb[0].mxu0 %v351
  %v1784 = vpop.f32.mrb[0].mxu0
  %v1785 = vadd.f32 %v178, %v1784
  %v1786 = vpop.f32.mrb[0].mxu0
  %v1787 = vpop.f32.mrb[0].mxu0
  %v1788 = vadd.f32 %v183, %v1787
  %v1789 = vpop.f32.mrb[0].mxu0
  %1790 = vmatprep.mubr.bf16.mxu0 %v454
  %1791 = vmatmul.mubr.bf16.gmra.mrb[0].mxu0 %v353
  %v1792 = vpop.f32.mrb[0].mxu0
  %v1793 = vadd.f32 %v188, %v1792
  %v1794 = vpop.f32.mrb[0].mxu0
  %v1795 = vpop.f32.mrb[0].mxu0
  %v1796 = vadd.f32 %v193, %v1795
  %v1797 = vpop.f32.mrb[0].mxu0
  %1798 = vmatprep.mubr.bf16.mxu0 %v457
  %1799 = vmatmul.mubr.bf16.gmra.mrb[0].mxu0 %v355
  %v1800 = vpop.f32.mrb[0].mxu0
  %v1801 = vadd.f32 %v198, %v1800
  %v1802 = vpop.f32.mrb[0].mxu0
  %v1803 = vpop.f32.mrb[0].mxu0
  %v1804 = vadd.f32 %v203, %v1803
  %v1805 = vpop.f32.mrb[0].mxu0
  %1806 = vmatprep.mubr.bf16.mxu0 %v460
  %1807 = vmatmul.mubr.bf16.gmra.mrb[0].mxu0 %v357
  %v1808 = vpop.f32.mrb[0].mxu0
  %v1809 = vadd.f32 %v208, %v1808
  %v1810 = vpop.f32.mrb[0].mxu0
  %v1811 = vpop.f32.mrb[0].mxu0
  %v1812 = vadd.f32 %v213, %v1811
  %v1813 = vpop.f32.mrb[0].mxu0
  %1814 = vmatprep.mubr.bf16.mxu0 %v463
  %1815 = vmatmul.mubr.bf16.gmra.mrb[0].mxu0 %v359
  %v1816 = vpop.f32.mrb[0].mxu0
  %v1817 = vadd.f32 %v218, %v1816
  %v1818 = vpop.f32.mrb[0].mxu0
  %v1819 = vpop.f32.mrb[0].mxu0
  %v1820 = vadd.f32 %v223, %v1819
  %v1821 = vpop.f32.mrb[0].mxu0
  %1822 = vmatprep.mubr.bf16.mxu0 %v466
  %1823 = vmatmul.mubr.bf16.gmra.mrb[0].mxu0 %v361
  %v1824 = vpop.f32.mrb[0].mxu0
  %v1825 = vadd.f32 %v228, %v1824
  %v1826 = vpop.f32.mrb[0].mxu0
  %v1827 = vpop.f32.mrb[0].mxu0
  %v1828 = vadd.f32 %v233, %v1827
  %v1829 = vpop.f32.mrb[0].mxu0
  %1830 = vmatprep.mubr.bf16.mxu0 %v469
  %1831 = vmatmul.mubr.bf16.gmra.mrb[0].mxu0 %v363
  %v1832 = vpop.f32.mrb[0].mxu0
  %v1833 = vadd.f32 %v238, %v1832
  %v1834 = vpop.f32.mrb[0].mxu0
  %v1835 = vpop.f32.mrb[0].mxu0
  %v1836 = vadd.f32 %v243, %v1835
  %v1837 = vpop.f32.mrb[0].mxu0
  %1838 = vmatprep.mubr.bf16.mxu0 %v472
  %1839 = vmatmul.mubr.bf16.gmra.mrb[0].mxu0 %v365
  %v1840 = vpop.f32.mrb[0].mxu0
  %v1841 = vadd.f32 %v248, %v1840
  %v1842 = vpop.f32.mrb[0].mxu0
  %v1843 = vpop.f32.mrb[0].mxu0
  %v1844 = vadd.f32 %v253, %v1843
  %v1845 = vpop.f32.mrb[0].mxu0
  %1846 = vmatprep.mubr.bf16.mxu0 %v475
  %1847 = vmatmul.mubr.bf16.gmra.mrb[0].mxu0 %v367
  %v1848 = vpop.f32.mrb[0].mxu0
  %v1849 = vadd.f32 %v258, %v1848
  %v1850 = vpop.f32.mrb[0].mxu0
  %v1851 = vpop.f32.mrb[0].mxu0
  %v1852 = vadd.f32 %v263, %v1851
  %v1853 = vpop.f32.mrb[0].mxu0
  %1854 = vmatprep.mubr.bf16.mxu0 %v478
  %1855 = vmatmul.mubr.bf16.gmra.mrb[0].mxu0 %v369
  %v1856 = vpop.f32.mrb[0].mxu0
  %v1857 = vadd.f32 %v268, %v1856
  %v1858 = vpop.f32.mrb[0].mxu0
  %v1859 = vpop.f32.mrb[0].mxu0
  %v1860 = vadd.f32 %v273, %v1859
  %v1861 = vpop.f32.mrb[0].mxu0
  %1862 = vdwg.mxu0
  %v1863 = vmax.f32 %v1769, 0.0
  %v1864 = vmax.f32 %v1772, 0.0
  %v1865 = vmax.f32 %v1777, 0.0
  %v1866 = vmax.f32 %v1780, 0.0
  %v1867 = vmax.f32 %v1785, 0.0
  %v1868 = vmax.f32 %v1788, 0.0
  %v1869 = vmax.f32 %v1793, 0.0
  %v1870 = vmax.f32 %v1796, 0.0
  %v1871 = vmax.f32 %v1801, 0.0
  %v1872 = vmax.f32 %v1804, 0.0
  %v1873 = vmax.f32 %v1809, 0.0
  %v1874 = vmax.f32 %v1812, 0.0
  %v1875 = vmax.f32 %v1817, 0.0
  %v1876 = vmax.f32 %v1820, 0.0
  %v1877 = vmax.f32 %v1825, 0.0
  %v1878 = vmax.f32 %v1828, 0.0
  %v1879 = vmax.f32 %v1833, 0.0
  %v1880 = vmax.f32 %v1836, 0.0
  %v1881 = vmax.f32 %v1841, 0.0
  %v1882 = vmax.f32 %v1844, 0.0
  %v1883 = vmax.f32 %v1849, 0.0
  %v1884 = vmax.f32 %v1852, 0.0
  %v1885 = vmax.f32 %v1857, 0.0
  %v1886 = vmax.f32 %v1860, 0.0
  %v1887 = vmax.f32 %v1629, %v1863
  %v1888 = vmax.f32 %v1630, %v1864
  %v1889 = vmax.f32 %v1631, %v1865
  %v1890 = vmax.f32 %v1632, %v1866
  %v1891 = vmax.f32 %v1633, %v1867
  %v1892 = vmax.f32 %v1634, %v1868
  %v1893 = vmax.f32 %v1635, %v1869
  %v1894 = vmax.f32 %v1636, %v1870
  %v1895 = vmax.f32 %v1637, %v1871
  %v1896 = vmax.f32 %v1638, %v1872
  %v1897 = vmax.f32 %v1639, %v1873
  %v1898 = vmax.f32 %v1640, %v1874
  %v1899 = vmax.f32 %v1641, %v1875
  %v1900 = vmax.f32 %v1642, %v1876
  %v1901 = vmax.f32 %v1643, %v1877
  %v1902 = vmax.f32 %v1644, %v1878
  %v1903 = vmax.f32 %v1645, %v1879
  %v1904 = vmax.f32 %v1646, %v1880
  %v1905 = vmax.f32 %v1647, %v1881
  %v1906 = vmax.f32 %v1648, %v1882
  %v1907 = vmax.f32 %v1649, %v1883
  %v1908 = vmax.f32 %v1650, %v1884
  %v1909 = vmax.f32 %v1651, %v1885
  %v1910 = vmax.f32 %v1652, %v1886
  %v1911 = vmax.f32 %v1887, %v1888
  %v1912 = vmax.f32 %v1889, %v1890
  %v1913 = vmax.f32 %v1891, %v1892
  %v1914 = vmax.f32 %v1893, %v1894
  %v1915 = vmax.f32 %v1895, %v1896
  %v1916 = vmax.f32 %v1897, %v1898
  %v1917 = vmax.f32 %v1899, %v1900
  %v1918 = vmax.f32 %v1901, %v1902
  %v1919 = vmax.f32 %v1903, %v1904
  %v1920 = vmax.f32 %v1905, %v1906
  %v1921 = vmax.f32 %v1907, %v1908
  %v1922 = vmax.f32 %v1909, %v1910
  %v1923 = vpack.c.bf16 %v1912, %v1911
  %v1924 = vpack.c.bf16 %v1914, %v1913
  %v1925 = vpack.c.bf16 %v1916, %v1915
  %v1926 = vpack.c.bf16 %v1918, %v1917
  %v1927 = vpack.c.bf16 %v1920, %v1919
  %v1928 = vpack.c.bf16 %v1922, %v1921
  %s1929 = scalar_lea.vmem %s0, 96
  %v1930 = vld [vmem:[%s1929] sm:$0xf]
  %v1931 = vld [vmem:[%s1929 + $0x4] sm:$0xf]
  %v1932 = vld [vmem:[%s1929 + $0x8] sm:$0xf]
  %v1933 = vld [vmem:[%s1929 + $0xc] sm:$0xf]
  %v1934 = vld [vmem:[%s1929 + $0x10] sm:$0xf]
  %v1935 = vld [vmem:[%s1929 + $0x14] sm:$0xf]
  %v1936 = vld [vmem:[%s1929 + $0x18] sm:$0xf]
  %v1937 = vld [vmem:[%s1929 + $0x1c] sm:$0xf]
  %v1938 = vld [vmem:[%s1929 + $0x20] sm:$0xf]
  %v1939 = vld [vmem:[%s1929 + $0x24] sm:$0xf]
  %v1940 = vld [vmem:[%s1929 + $0x28] sm:$0xf]
  %v1941 = vld [vmem:[%s1929 + $0x2c] sm:$0xf]
  %v1942 = vld [vmem:[%s1929 + $0x30] sm:$0xf]
  %v1943 = vld [vmem:[%s1929 + $0x34] sm:$0xf]
  %v1944 = vld [vmem:[%s1929 + $0x38] sm:$0xf]
  %v1945 = vld [vmem:[%s1929 + $0x3c] sm:$0xf]
  %v1946 = vld [vmem:[%s1929 + $0x40] sm:$0xf]
  %v1947 = vld [vmem:[%s1929 + $0x44] sm:$0xf]
  %v1948 = vld [vmem:[%s1929 + $0x48] sm:$0xf]
  %v1949 = vld [vmem:[%s1929 + $0x4c] sm:$0xf]
  %v1970 = vunpack.c.l.b16 %v1930
  %v1971 = vunpack.c.l.b16 %v1931
  %v1972 = vunpack.c.l.b16 %v1932
  %v1973 = vunpack.c.l.b16 %v1933
  %v1974 = vunpack.c.l.b16 %v1934
  %v1975 = vunpack.c.l.b16 %v1935
  %v1976 = vunpack.c.l.b16 %v1936
  %v1977 = vunpack.c.l.b16 %v1937
  %v1978 = vunpack.c.l.b16 %v1938
  %v1979 = vunpack.c.l.b16 %v1939
  %v1980 = vunpack.c.l.b16 %v1940
  %v1981 = vunpack.c.l.b16 %v1941
  %v1982 = vunpack.c.l.b16 %v1942
  %v1983 = vunpack.c.l.b16 %v1943
  %v1984 = vunpack.c.l.b16 %v1944
  %v1985 = vunpack.c.l.b16 %v1945
  %v1986 = vunpack.c.l.b16 %v1946
  %v1987 = vunpack.c.l.b16 %v1947
  %v1988 = vunpack.c.l.b16 %v1948
  %v1989 = vunpack.c.l.b16 %v1949
  %v1990 = vpack.c.b16 %v1971, %v1970
  %v1991 = vpack.c.b16 %v1973, %v1972
  %v1992 = vpack.c.b16 %v1975, %v1974
  %v1993 = vpack.c.b16 %v1977, %v1976
  %v1994 = vpack.c.b16 %v1979, %v1978
  %v1995 = vpack.c.b16 %v1981, %v1980
  %v1996 = vpack.c.b16 %v1983, %v1982
  %v1997 = vpack.c.b16 %v1985, %v1984
  %v1998 = vpack.c.b16 %v1987, %v1986
  %v1999 = vpack.c.b16 %v1989, %v1988
  %2010 = vmatprep.subr.bf16.mxu0 0
  %2011 = vmatpush1.bf16.msra.mxu0 %v1990
  %2012 = vmatprep.subr.bf16.mxu0 0
  %2013 = vmatpush1.bf16.msra.mxu0 %v1991
  %2014 = vmatprep.subr.bf16.mxu0 0
  %2015 = vmatpush1.bf16.msra.mxu0 %v1992
  %2016 = vmatprep.subr.bf16.mxu0 0
  %2017 = vmatpush1.bf16.msra.mxu0 %v1993
  %2018 = vmatprep.subr.bf16.mxu0 0
  %2019 = vmatpush1.bf16.msra.mxu0 %v1994
  %2020 = vmatprep.subr.bf16.mxu0 0
  %2021 = vmatpush1.bf16.msra.mxu0 %v1995
  %2022 = vmatprep.subr.bf16.mxu0 0
  %2023 = vmatpush1.bf16.msra.mxu0 %v1996
  %2024 = vmatprep.subr.bf16.mxu0 0
  %2025 = vmatpush1.bf16.msra.mxu0 %v1997
  %2026 = vmatprep.subr.bf16.mxu0 0
  %2027 = vmatpush1.bf16.msra.mxu0 %v1998
  %2028 = vmatprep.subr.bf16.mxu0 0
  %2029 = vmatpush1.bf16.msra.mxu0 %v1999
  %2030 = vmatprep.subr.bf16.mxu0 0
  %2031 = vmatpush1.bf16.msra.mxu0 0
  %2032 = vmatprep.subr.bf16.mxu0 0
  %2033 = vmatpush1.bf16.msra.mxu0 0
  %2034 = vmatprep.subr.bf16.mxu0 0
  %2035 = vmatpush1.bf16.msra.mxu0 0
  %2036 = vmatprep.subr.bf16.mxu0 0
  %2037 = vmatpush1.bf16.msra.mxu0 0
  %2038 = vmatprep.subr.bf16.mxu0 0
  %2039 = vmatpush1.bf16.msra.mxu0 0
  %2040 = vmatprep.subr.bf16.mxu0 0
  %2041 = vmatpush1.bf16.msra.mxu0 0
  %2042 = vmatprep.mubr.bf16.mxu0 %v445
  %2043 = vmatmul.mubr.bf16.gmra.mrb[0].mxu0 %v347
  %v2044 = vpop.f32.mrb[0].mxu0
  %v2045 = vadd.f32 %v158, %v2044
  %v2046 = vpop.f32.mrb[0].mxu0
  %v2047 = vpop.f32.mrb[0].mxu0
  %v2048 = vadd.f32 %v163, %v2047
  %v2049 = vpop.f32.mrb[0].mxu0
  %2050 = vmatprep.mubr.bf16.mxu0 %v448
  %2051 = vmatmul.mubr.bf16.gmra.mrb[0].mxu0 %v349
  %v2052 = vpop.f32.mrb[0].mxu0
  %v2053 = vadd.f32 %v168, %v2052
  %v2054 = vpop.f32.mrb[0].mxu0
  %v2055 = vpop.f32.mrb[0].mxu0
  %v2056 = vadd.f32 %v173, %v2055
  %v2057 = vpop.f32.mrb[0].mxu0
  %2058 = vmatprep.mubr.bf16.mxu0 %v451
  %2059 = vmatmul.mubr.bf16.gmra.mrb[0].mxu0 %v351
  %v2060 = vpop.f32.mrb[0].mxu0
  %v2061 = vadd.f32 %v178, %v2060
  %v2062 = vpop.f32.mrb[0].mxu0
  %v2063 = vpop.f32.mrb[0].mxu0
  %v2064 = vadd.f32 %v183, %v2063
  %v2065 = vpop.f32.mrb[0].mxu0
  %2066 = vmatprep.mubr.bf16.mxu0 %v454
  %2067 = vmatmul.mubr.bf16.gmra.mrb[0].mxu0 %v353
  %v2068 = vpop.f32.mrb[0].mxu0
  %v2069 = vadd.f32 %v188, %v2068
  %v2070 = vpop.f32.mrb[0].mxu0
  %v2071 = vpop.f32.mrb[0].mxu0
  %v2072 = vadd.f32 %v193, %v2071
  %v2073 = vpop.f32.mrb[0].mxu0
  %2074 = vmatprep.mubr.bf16.mxu0 %v457
  %2075 = vmatmul.mubr.bf16.gmra.mrb[0].mxu0 %v355
  %v2076 = vpop.f32.mrb[0].mxu0
  %v2077 = vadd.f32 %v198, %v2076
  %v2078 = vpop.f32.mrb[0].mxu0
  %v2079 = vpop.f32.mrb[0].mxu0
  %v2080 = vadd.f32 %v203, %v2079
  %v2081 = vpop.f32.mrb[0].mxu0
  %2082 = vmatprep.mubr.bf16.mxu0 %v460
  %2083 = vmatmul.mubr.bf16.gmra.mrb[0].mxu0 %v357
  %v2084 = vpop.f32.mrb[0].mxu0
  %v2085 = vadd.f32 %v208, %v2084
  %v2086 = vpop.f32.mrb[0].mxu0
  %v2087 = vpop.f32.mrb[0].mxu0
  %v2088 = vadd.f32 %v213, %v2087
  %v2089 = vpop.f32.mrb[0].mxu0
  %2090 = vmatprep.mubr.bf16.mxu0 %v463
  %2091 = vmatmul.mubr.bf16.gmra.mrb[0].mxu0 %v359
  %v2092 = vpop.f32.mrb[0].mxu0
  %v2093 = vadd.f32 %v218, %v2092
  %v2094 = vpop.f32.mrb[0].mxu0
  %v2095 = vpop.f32.mrb[0].mxu0
  %v2096 = vadd.f32 %v223, %v2095
  %v2097 = vpop.f32.mrb[0].mxu0
  %2098 = vmatprep.mubr.bf16.mxu0 %v466
  %2099 = vmatmul.mubr.bf16.gmra.mrb[0].mxu0 %v361
  %v2100 = vpop.f32.mrb[0].mxu0
  %v2101 = vadd.f32 %v228, %v2100
  %v2102 = vpop.f32.mrb[0].mxu0
  %v2103 = vpop.f32.mrb[0].mxu0
  %v2104 = vadd.f32 %v233, %v2103
  %v2105 = vpop.f32.mrb[0].mxu0
  %2106 = vmatprep.mubr.bf16.mxu0 %v469
  %2107 = vmatmul.mubr.bf16.gmra.mrb[0].mxu0 %v363
  %v2108 = vpop.f32.mrb[0].mxu0
  %v2109 = vadd.f32 %v238, %v2108
  %v2110 = vpop.f32.mrb[0].mxu0
  %v2111 = vpop.f32.mrb[0].mxu0
  %v2112 = vadd.f32 %v243, %v2111
  %v2113 = vpop.f32.mrb[0].mxu0
  %2114 = vmatprep.mubr.bf16.mxu0 %v472
  %2115 = vmatmul.mubr.bf16.gmra.mrb[0].mxu0 %v365
  %v2116 = vpop.f32.mrb[0].mxu0
  %v2117 = vadd.f32 %v248, %v2116
  %v2118 = vpop.f32.mrb[0].mxu0
  %v2119 = vpop.f32.mrb[0].mxu0
  %v2120 = vadd.f32 %v253, %v2119
  %v2121 = vpop.f32.mrb[0].mxu0
  %2122 = vmatprep.mubr.bf16.mxu0 %v475
  %2123 = vmatmul.mubr.bf16.gmra.mrb[0].mxu0 %v367
  %v2124 = vpop.f32.mrb[0].mxu0
  %v2125 = vadd.f32 %v258, %v2124
  %v2126 = vpop.f32.mrb[0].mxu0
  %v2127 = vpop.f32.mrb[0].mxu0
  %v2128 = vadd.f32 %v263, %v2127
  %v2129 = vpop.f32.mrb[0].mxu0
  %2130 = vmatprep.mubr.bf16.mxu0 %v478
  %2131 = vmatmul.mubr.bf16.gmra.mrb[0].mxu0 %v369
  %v2132 = vpop.f32.mrb[0].mxu0
  %v2133 = vadd.f32 %v268, %v2132
  %v2134 = vpop.f32.mrb[0].mxu0
  %v2135 = vpop.f32.mrb[0].mxu0
  %v2136 = vadd.f32 %v273, %v2135
  %v2137 = vpop.f32.mrb[0].mxu0
  %2138 = vdwg.mxu0
  %v2139 = vmax.f32 %v2045, 0.0
  %v2140 = vmax.f32 %v2048, 0.0
  %v2141 = vmax.f32 %v2053, 0.0
  %v2142 = vmax.f32 %v2056, 0.0
  %v2143 = vmax.f32 %v2061, 0.0
  %v2144 = vmax.f32 %v2064, 0.0
  %v2145 = vmax.f32 %v2069, 0.0
  %v2146 = vmax.f32 %v2072, 0.0
  %v2147 = vmax.f32 %v2077, 0.0
  %v2148 = vmax.f32 %v2080, 0.0
  %v2149 = vmax.f32 %v2085, 0.0
  %v2150 = vmax.f32 %v2088, 0.0
  %v2151 = vmax.f32 %v2093, 0.0
  %v2152 = vmax.f32 %v2096, 0.0
  %v2153 = vmax.f32 %v2101, 0.0
  %v2154 = vmax.f32 %v2104, 0.0
  %v2155 = vmax.f32 %v2109, 0.0
  %v2156 = vmax.f32 %v2112, 0.0
  %v2157 = vmax.f32 %v2117, 0.0
  %v2158 = vmax.f32 %v2120, 0.0
  %v2159 = vmax.f32 %v2125, 0.0
  %v2160 = vmax.f32 %v2128, 0.0
  %v2161 = vmax.f32 %v2133, 0.0
  %v2162 = vmax.f32 %v2136, 0.0
  %s2163 = scalar_lea.vmem %s0, 112
  %v2164 = vld [vmem:[%s2163] sm:$0xf]
  %v2165 = vld [vmem:[%s2163 + $0x4] sm:$0xf]
  %v2166 = vld [vmem:[%s2163 + $0x8] sm:$0xf]
  %v2167 = vld [vmem:[%s2163 + $0xc] sm:$0xf]
  %v2168 = vld [vmem:[%s2163 + $0x10] sm:$0xf]
  %v2169 = vld [vmem:[%s2163 + $0x14] sm:$0xf]
  %v2170 = vld [vmem:[%s2163 + $0x18] sm:$0xf]
  %v2171 = vld [vmem:[%s2163 + $0x1c] sm:$0xf]
  %v2172 = vld [vmem:[%s2163 + $0x20] sm:$0xf]
  %v2173 = vld [vmem:[%s2163 + $0x24] sm:$0xf]
  %v2174 = vld [vmem:[%s2163 + $0x28] sm:$0xf]
  %v2175 = vld [vmem:[%s2163 + $0x2c] sm:$0xf]
  %v2176 = vld [vmem:[%s2163 + $0x30] sm:$0xf]
  %v2177 = vld [vmem:[%s2163 + $0x34] sm:$0xf]
  %v2178 = vld [vmem:[%s2163 + $0x38] sm:$0xf]
  %v2179 = vld [vmem:[%s2163 + $0x3c] sm:$0xf]
  %v2180 = vld [vmem:[%s2163 + $0x40] sm:$0xf]
  %v2181 = vld [vmem:[%s2163 + $0x44] sm:$0xf]
  %v2182 = vld [vmem:[%s2163 + $0x48] sm:$0xf]
  %v2183 = vld [vmem:[%s2163 + $0x4c] sm:$0xf]
  %v2204 = vunpack.c.l.b16 %v2164
  %v2205 = vunpack.c.l.b16 %v2165
  %v2206 = vunpack.c.l.b16 %v2166
  %v2207 = vunpack.c.l.b16 %v2167
  %v2208 = vunpack.c.l.b16 %v2168
  %v2209 = vunpack.c.l.b16 %v2169
  %v2210 = vunpack.c.l.b16 %v2170
  %v2211 = vunpack.c.l.b16 %v2171
  %v2212 = vunpack.c.l.b16 %v2172
  %v2213 = vunpack.c.l.b16 %v2173
  %v2214 = vunpack.c.l.b16 %v2174
  %v2215 = vunpack.c.l.b16 %v2175
  %v2216 = vunpack.c.l.b16 %v2176
  %v2217 = vunpack.c.l.b16 %v2177
  %v2218 = vunpack.c.l.b16 %v2178
  %v2219 = vunpack.c.l.b16 %v2179
  %v2220 = vunpack.c.l.b16 %v2180
  %v2221 = vunpack.c.l.b16 %v2181
  %v2222 = vunpack.c.l.b16 %v2182
  %v2223 = vunpack.c.l.b16 %v2183
  %v2224 = vpack.c.b16 %v2205, %v2204
  %v2225 = vpack.c.b16 %v2207, %v2206
  %v2226 = vpack.c.b16 %v2209, %v2208
  %v2227 = vpack.c.b16 %v2211, %v2210
  %v2228 = vpack.c.b16 %v2213, %v2212
  %v2229 = vpack.c.b16 %v2215, %v2214
  %v2230 = vpack.c.b16 %v2217, %v2216
  %v2231 = vpack.c.b16 %v2219, %v2218
  %v2232 = vpack.c.b16 %v2221, %v2220
  %v2233 = vpack.c.b16 %v2223, %v2222
  %2244 = vmatprep.subr.bf16.mxu0 0
  %2245 = vmatpush1.bf16.msra.mxu0 %v2224
  %2246 = vmatprep.subr.bf16.mxu0 0
  %2247 = vmatpush1.bf16.msra.mxu0 %v2225
  %2248 = vmatprep.subr.bf16.mxu0 0
  %2249 = vmatpush1.bf16.msra.mxu0 %v2226
  %2250 = vmatprep.subr.bf16.mxu0 0
  %2251 = vmatpush1.bf16.msra.mxu0 %v2227
  %2252 = vmatprep.subr.bf16.mxu0 0
  %2253 = vmatpush1.bf16.msra.mxu0 %v2228
  %2254 = vmatprep.subr.bf16.mxu0 0
  %2255 = vmatpush1.bf16.msra.mxu0 %v2229
  %2256 = vmatprep.subr.bf16.mxu0 0
  %2257 = vmatpush1.bf16.msra.mxu0 %v2230
  %2258 = vmatprep.subr.bf16.mxu0 0
  %2259 = vmatpush1.bf16.msra.mxu0 %v2231
  %2260 = vmatprep.subr.bf16.mxu0 0
  %2261 = vmatpush1.bf16.msra.mxu0 %v2232
  %2262 = vmatprep.subr.bf16.mxu0 0
  %2263 = vmatpush1.bf16.msra.mxu0 %v2233
  %2264 = vmatprep.subr.bf16.mxu0 0
  %2265 = vmatpush1.bf16.msra.mxu0 0
  %2266 = vmatprep.subr.bf16.mxu0 0
  %2267 = vmatpush1.bf16.msra.mxu0 0
  %2268 = vmatprep.subr.bf16.mxu0 0
  %2269 = vmatpush1.bf16.msra.mxu0 0
  %2270 = vmatprep.subr.bf16.mxu0 0
  %2271 = vmatpush1.bf16.msra.mxu0 0
  %2272 = vmatprep.subr.bf16.mxu0 0
  %2273 = vmatpush1.bf16.msra.mxu0 0
  %2274 = vmatprep.subr.bf16.mxu0 0
  %2275 = vmatpush1.bf16.msra.mxu0 0
  %2276 = vmatprep.mubr.bf16.mxu0 %v445
  %2277 = vmatmul.mubr.bf16.gmra.mrb[0].mxu0 %v347
  %v2278 = vpop.f32.mrb[0].mxu0
  %v2279 = vadd.f32 %v158, %v2278
  %v2280 = vpop.f32.mrb[0].mxu0
  %v2281 = vpop.f32.mrb[0].mxu0
  %v2282 = vadd.f32 %v163, %v2281
  %v2283 = vpop.f32.mrb[0].mxu0
  %2284 = vmatprep.mubr.bf16.mxu0 %v448
  %2285 = vmatmul.mubr.bf16.gmra.mrb[0].mxu0 %v349
  %v2286 = vpop.f32.mrb[0].mxu0
  %v2287 = vadd.f32 %v168, %v2286
  %v2288 = vpop.f32.mrb[0].mxu0
  %v2289 = vpop.f32.mrb[0].mxu0
  %v2290 = vadd.f32 %v173, %v2289
  %v2291 = vpop.f32.mrb[0].mxu0
  %2292 = vmatprep.mubr.bf16.mxu0 %v451
  %2293 = vmatmul.mubr.bf16.gmra.mrb[0].mxu0 %v351
  %v2294 = vpop.f32.mrb[0].mxu0
  %v2295 = vadd.f32 %v178, %v2294
  %v2296 = vpop.f32.mrb[0].mxu0
  %v2297 = vpop.f32.mrb[0].mxu0
  %v2298 = vadd.f32 %v183, %v2297
  %v2299 = vpop.f32.mrb[0].mxu0
  %2300 = vmatprep.mubr.bf16.mxu0 %v454
  %2301 = vmatmul.mubr.bf16.gmra.mrb[0].mxu0 %v353
  %v2302 = vpop.f32.mrb[0].mxu0
  %v2303 = vadd.f32 %v188, %v2302
  %v2304 = vpop.f32.mrb[0].mxu0
  %v2305 = vpop.f32.mrb[0].mxu0
  %v2306 = vadd.f32 %v193, %v2305
  %v2307 = vpop.f32.mrb[0].mxu0
  %2308 = vmatprep.mubr.bf16.mxu0 %v457
  %2309 = vmatmul.mubr.bf16.gmra.mrb[0].mxu0 %v355
  %v2310 = vpop.f32.mrb[0].mxu0
  %v2311 = vadd.f32 %v198, %v2310
  %v2312 = vpop.f32.mrb[0].mxu0
  %v2313 = vpop.f32.mrb[0].mxu0
  %v2314 = vadd.f32 %v203, %v2313
  %v2315 = vpop.f32.mrb[0].mxu0
  %2316 = vmatprep.mubr.bf16.mxu0 %v460
  %2317 = vmatmul.mubr.bf16.gmra.mrb[0].mxu0 %v357
  %v2318 = vpop.f32.mrb[0].mxu0
  %v2319 = vadd.f32 %v208, %v2318
  %v2320 = vpop.f32.mrb[0].mxu0
  %v2321 = vpop.f32.mrb[0].mxu0
  %v2322 = vadd.f32 %v213, %v2321
  %v2323 = vpop.f32.mrb[0].mxu0
  %2324 = vmatprep.mubr.bf16.mxu0 %v463
  %2325 = vmatmul.mubr.bf16.gmra.mrb[0].mxu0 %v359
  %v2326 = vpop.f32.mrb[0].mxu0
  %v2327 = vadd.f32 %v218, %v2326
  %v2328 = vpop.f32.mrb[0].mxu0
  %v2329 = vpop.f32.mrb[0].mxu0
  %v2330 = vadd.f32 %v223, %v2329
  %v2331 = vpop.f32.mrb[0].mxu0
  %2332 = vmatprep.mubr.bf16.mxu0 %v466
  %2333 = vmatmul.mubr.bf16.gmra.mrb[0].mxu0 %v361
  %v2334 = vpop.f32.mrb[0].mxu0
  %v2335 = vadd.f32 %v228, %v2334
  %v2336 = vpop.f32.mrb[0].mxu0
  %v2337 = vpop.f32.mrb[0].mxu0
  %v2338 = vadd.f32 %v233, %v2337
  %v2339 = vpop.f32.mrb[0].mxu0
  %2340 = vmatprep.mubr.bf16.mxu0 %v469
  %2341 = vmatmul.mubr.bf16.gmra.mrb[0].mxu0 %v363
  %v2342 = vpop.f32.mrb[0].mxu0
  %v2343 = vadd.f32 %v238, %v2342
  %v2344 = vpop.f32.mrb[0].mxu0
  %v2345 = vpop.f32.mrb[0].mxu0
  %v2346 = vadd.f32 %v243, %v2345
  %v2347 = vpop.f32.mrb[0].mxu0
  %2348 = vmatprep.mubr.bf16.mxu0 %v472
  %2349 = vmatmul.mubr.bf16.gmra.mrb[0].mxu0 %v365
  %v2350 = vpop.f32.mrb[0].mxu0
  %v2351 = vadd.f32 %v248, %v2350
  %v2352 = vpop.f32.mrb[0].mxu0
  %v2353 = vpop.f32.mrb[0].mxu0
  %v2354 = vadd.f32 %v253, %v2353
  %v2355 = vpop.f32.mrb[0].mxu0
  %2356 = vmatprep.mubr.bf16.mxu0 %v475
  %2357 = vmatmul.mubr.bf16.gmra.mrb[0].mxu0 %v367
  %v2358 = vpop.f32.mrb[0].mxu0
  %v2359 = vadd.f32 %v258, %v2358
  %v2360 = vpop.f32.mrb[0].mxu0
  %v2361 = vpop.f32.mrb[0].mxu0
  %v2362 = vadd.f32 %v263, %v2361
  %v2363 = vpop.f32.mrb[0].mxu0
  %2364 = vmatprep.mubr.bf16.mxu0 %v478
  %2365 = vmatmul.mubr.bf16.gmra.mrb[0].mxu0 %v369
  %v2366 = vpop.f32.mrb[0].mxu0
  %v2367 = vadd.f32 %v268, %v2366
  %v2368 = vpop.f32.mrb[0].mxu0
  %v2369 = vpop.f32.mrb[0].mxu0
  %v2370 = vadd.f32 %v273, %v2369
  %v2371 = vpop.f32.mrb[0].mxu0
  %2372 = vdwg.mxu0
  %v2373 = vmax.f32 %v2279, 0.0
  %v2374 = vmax.f32 %v2282, 0.0
  %v2375 = vmax.f32 %v2287, 0.0
  %v2376 = vmax.f32 %v2290, 0.0
  %v2377 = vmax.f32 %v2295, 0.0
  %v2378 = vmax.f32 %v2298, 0.0
  %v2379 = vmax.f32 %v2303, 0.0
  %v2380 = vmax.f32 %v2306, 0.0
  %v2381 = vmax.f32 %v2311, 0.0
  %v2382 = vmax.f32 %v2314, 0.0
  %v2383 = vmax.f32 %v2319, 0.0
  %v2384 = vmax.f32 %v2322, 0.0
  %v2385 = vmax.f32 %v2327, 0.0
  %v2386 = vmax.f32 %v2330, 0.0
  %v2387 = vmax.f32 %v2335, 0.0
  %v2388 = vmax.f32 %v2338, 0.0
  %v2389 = vmax.f32 %v2343, 0.0
  %v2390 = vmax.f32 %v2346, 0.0
  %v2391 = vmax.f32 %v2351, 0.0
  %v2392 = vmax.f32 %v2354, 0.0
  %v2393 = vmax.f32 %v2359, 0.0
  %v2394 = vmax.f32 %v2362, 0.0
  %v2395 = vmax.f32 %v2367, 0.0
  %v2396 = vmax.f32 %v2370, 0.0
  %v2397 = vmax.f32 %v2139, %v2373
  %v2398 = vmax.f32 %v2140, %v2374
  %v2399 = vmax.f32 %v2141, %v2375
  %v2400 = vmax.f32 %v2142, %v2376
  %v2401 = vmax.f32 %v2143, %v2377
  %v2402 = vmax.f32 %v2144, %v2378
  %v2403 = vmax.f32 %v2145, %v2379
  %v2404 = vmax.f32 %v2146, %v2380
  %v2405 = vmax.f32 %v2147, %v2381
  %v2406 = vmax.f32 %v2148, %v2382
  %v2407 = vmax.f32 %v2149, %v2383
  %v2408 = vmax.f32 %v2150, %v2384
  %v2409 = vmax.f32 %v2151, %v2385
  %v2410 = vmax.f32 %v2152, %v2386
  %v2411 = vmax.f32 %v2153, %v2387
  %v2412 = vmax.f32 %v2154, %v2388
  %v2413 = vmax.f32 %v2155, %v2389
  %v2414 = vmax.f32 %v2156, %v2390
  %v2415 = vmax.f32 %v2157, %v2391
  %v2416 = vmax.f32 %v2158, %v2392
  %v2417 = vmax.f32 %v2159, %v2393
  %v2418 = vmax.f32 %v2160, %v2394
  %v2419 = vmax.f32 %v2161, %v2395
  %v2420 = vmax.f32 %v2162, %v2396
  %v2421 = vmax.f32 %v2397, %v2398
  %v2422 = vmax.f32 %v2399, %v2400
  %v2423 = vmax.f32 %v2401, %v2402
  %v2424 = vmax.f32 %v2403, %v2404
  %v2425 = vmax.f32 %v2405, %v2406
  %v2426 = vmax.f32 %v2407, %v2408
  %v2427 = vmax.f32 %v2409, %v2410
  %v2428 = vmax.f32 %v2411, %v2412
  %v2429 = vmax.f32 %v2413, %v2414
  %v2430 = vmax.f32 %v2415, %v2416
  %v2431 = vmax.f32 %v2417, %v2418
  %v2432 = vmax.f32 %v2419, %v2420
  %v2433 = vpack.c.bf16 %v2422, %v2421
  %v2434 = vpack.c.bf16 %v2424, %v2423
  %v2435 = vpack.c.bf16 %v2426, %v2425
  %v2436 = vpack.c.bf16 %v2428, %v2427
  %v2437 = vpack.c.bf16 %v2430, %v2429
  %v2438 = vpack.c.bf16 %v2432, %v2431
  %s2439 = scalar_lea.vmem %s0, 128
  %v2440 = vld [vmem:[%s2439] sm:$0xf]
  %v2441 = vld [vmem:[%s2439 + $0x4] sm:$0xf]
  %v2442 = vld [vmem:[%s2439 + $0x8] sm:$0xf]
  %v2443 = vld [vmem:[%s2439 + $0xc] sm:$0xf]
  %v2444 = vld [vmem:[%s2439 + $0x10] sm:$0xf]
  %v2445 = vld [vmem:[%s2439 + $0x14] sm:$0xf]
  %v2446 = vld [vmem:[%s2439 + $0x18] sm:$0xf]
  %v2447 = vld [vmem:[%s2439 + $0x1c] sm:$0xf]
  %v2448 = vld [vmem:[%s2439 + $0x20] sm:$0xf]
  %v2449 = vld [vmem:[%s2439 + $0x24] sm:$0xf]
  %v2450 = vld [vmem:[%s2439 + $0x28] sm:$0xf]
  %v2451 = vld [vmem:[%s2439 + $0x2c] sm:$0xf]
  %v2452 = vld [vmem:[%s2439 + $0x30] sm:$0xf]
  %v2453 = vld [vmem:[%s2439 + $0x34] sm:$0xf]
  %v2454 = vld [vmem:[%s2439 + $0x38] sm:$0xf]
  %v2455 = vld [vmem:[%s2439 + $0x3c] sm:$0xf]
  %v2456 = vld [vmem:[%s2439 + $0x40] sm:$0xf]
  %v2457 = vld [vmem:[%s2439 + $0x44] sm:$0xf]
  %v2458 = vld [vmem:[%s2439 + $0x48] sm:$0xf]
  %v2459 = vld [vmem:[%s2439 + $0x4c] sm:$0xf]
  %v2480 = vunpack.c.l.b16 %v2440
  %v2481 = vunpack.c.l.b16 %v2441
  %v2482 = vunpack.c.l.b16 %v2442
  %v2483 = vunpack.c.l.b16 %v2443
  %v2484 = vunpack.c.l.b16 %v2444
  %v2485 = vunpack.c.l.b16 %v2445
  %v2486 = vunpack.c.l.b16 %v2446
  %v2487 = vunpack.c.l.b16 %v2447
  %v2488 = vunpack.c.l.b16 %v2448
  %v2489 = vunpack.c.l.b16 %v2449
  %v2490 = vunpack.c.l.b16 %v2450
  %v2491 = vunpack.c.l.b16 %v2451
  %v2492 = vunpack.c.l.b16 %v2452
  %v2493 = vunpack.c.l.b16 %v2453
  %v2494 = vunpack.c.l.b16 %v2454
  %v2495 = vunpack.c.l.b16 %v2455
  %v2496 = vunpack.c.l.b16 %v2456
  %v2497 = vunpack.c.l.b16 %v2457
  %v2498 = vunpack.c.l.b16 %v2458
  %v2499 = vunpack.c.l.b16 %v2459
  %v2500 = vpack.c.b16 %v2481, %v2480
  %v2501 = vpack.c.b16 %v2483, %v2482
  %v2502 = vpack.c.b16 %v2485, %v2484
  %v2503 = vpack.c.b16 %v2487, %v2486
  %v2504 = vpack.c.b16 %v2489, %v2488
  %v2505 = vpack.c.b16 %v2491, %v2490
  %v2506 = vpack.c.b16 %v2493, %v2492
  %v2507 = vpack.c.b16 %v2495, %v2494
  %v2508 = vpack.c.b16 %v2497, %v2496
  %v2509 = vpack.c.b16 %v2499, %v2498
  %2520 = vmatprep.subr.bf16.mxu0 0
  %2521 = vmatpush1.bf16.msra.mxu0 %v2500
  %2522 = vmatprep.subr.bf16.mxu0 0
  %2523 = vmatpush1.bf16.msra.mxu0 %v2501
  %2524 = vmatprep.subr.bf16.mxu0 0
  %2525 = vmatpush1.bf16.msra.mxu0 %v2502
  %2526 = vmatprep.subr.bf16.mxu0 0
  %2527 = vmatpush1.bf16.msra.mxu0 %v2503
  %2528 = vmatprep.subr.bf16.mxu0 0
  %2529 = vmatpush1.bf16.msra.mxu0 %v2504
  %2530 = vmatprep.subr.bf16.mxu0 0
  %2531 = vmatpush1.bf16.msra.mxu0 %v2505
  %2532 = vmatprep.subr.bf16.mxu0 0
  %2533 = vmatpush1.bf16.msra.mxu0 %v2506
  %2534 = vmatprep.subr.bf16.mxu0 0
  %2535 = vmatpush1.bf16.msra.mxu0 %v2507
  %2536 = vmatprep.subr.bf16.mxu0 0
  %2537 = vmatpush1.bf16.msra.mxu0 %v2508
  %2538 = vmatprep.subr.bf16.mxu0 0
  %2539 = vmatpush1.bf16.msra.mxu0 %v2509
  %2540 = vmatprep.subr.bf16.mxu0 0
  %2541 = vmatpush1.bf16.msra.mxu0 0
  %2542 = vmatprep.subr.bf16.mxu0 0
  %2543 = vmatpush1.bf16.msra.mxu0 0
  %2544 = vmatprep.subr.bf16.mxu0 0
  %2545 = vmatpush1.bf16.msra.mxu0 0
  %2546 = vmatprep.subr.bf16.mxu0 0
  %2547 = vmatpush1.bf16.msra.mxu0 0
  %2548 = vmatprep.subr.bf16.mxu0 0
  %2549 = vmatpush1.bf16.msra.mxu0 0
  %2550 = vmatprep.subr.bf16.mxu0 0
  %2551 = vmatpush1.bf16.msra.mxu0 0
  %2552 = vmatprep.mubr.bf16.mxu0 %v445
  %2553 = vmatmul.mubr.bf16.gmra.mrb[0].mxu0 %v347
  %v2554 = vpop.f32.mrb[0].mxu0
  %v2555 = vadd.f32 %v158, %v2554
  %v2556 = vpop.f32.mrb[0].mxu0
  %v2557 = vpop.f32.mrb[0].mxu0
  %v2558 = vadd.f32 %v163, %v2557
  %v2559 = vpop.f32.mrb[0].mxu0
  %2560 = vmatprep.mubr.bf16.mxu0 %v448
  %2561 = vmatmul.mubr.bf16.gmra.mrb[0].mxu0 %v349
  %v2562 = vpop.f32.mrb[0].mxu0
  %v2563 = vadd.f32 %v168, %v2562
  %v2564 = vpop.f32.mrb[0].mxu0
  %v2565 = vpop.f32.mrb[0].mxu0
  %v2566 = vadd.f32 %v173, %v2565
  %v2567 = vpop.f32.mrb[0].mxu0
  %2568 = vmatprep.mubr.bf16.mxu0 %v451
  %2569 = vmatmul.mubr.bf16.gmra.mrb[0].mxu0 %v351
  %v2570 = vpop.f32.mrb[0].mxu0
  %v2571 = vadd.f32 %v178, %v2570
  %v2572 = vpop.f32.mrb[0].mxu0
  %v2573 = vpop.f32.mrb[0].mxu0
  %v2574 = vadd.f32 %v183, %v2573
  %v2575 = vpop.f32.mrb[0].mxu0
  %2576 = vmatprep.mubr.bf16.mxu0 %v454
  %2577 = vmatmul.mubr.bf16.gmra.mrb[0].mxu0 %v353
  %v2578 = vpop.f32.mrb[0].mxu0
  %v2579 = vadd.f32 %v188, %v2578
  %v2580 = vpop.f32.mrb[0].mxu0
  %v2581 = vpop.f32.mrb[0].mxu0
  %v2582 = vadd.f32 %v193, %v2581
  %v2583 = vpop.f32.mrb[0].mxu0
  %2584 = vmatprep.mubr.bf16.mxu0 %v457
  %2585 = vmatmul.mubr.bf16.gmra.mrb[0].mxu0 %v355
  %v2586 = vpop.f32.mrb[0].mxu0
  %v2587 = vadd.f32 %v198, %v2586
  %v2588 = vpop.f32.mrb[0].mxu0
  %v2589 = vpop.f32.mrb[0].mxu0
  %v2590 = vadd.f32 %v203, %v2589
  %v2591 = vpop.f32.mrb[0].mxu0
  %2592 = vmatprep.mubr.bf16.mxu0 %v460
  %2593 = vmatmul.mubr.bf16.gmra.mrb[0].mxu0 %v357
  %v2594 = vpop.f32.mrb[0].mxu0
  %v2595 = vadd.f32 %v208, %v2594
  %v2596 = vpop.f32.mrb[0].mxu0
  %v2597 = vpop.f32.mrb[0].mxu0
  %v2598 = vadd.f32 %v213, %v2597
  %v2599 = vpop.f32.mrb[0].mxu0
  %2600 = vmatprep.mubr.bf16.mxu0 %v463
  %2601 = vmatmul.mubr.bf16.gmra.mrb[0].mxu0 %v359
  %v2602 = vpop.f32.mrb[0].mxu0
  %v2603 = vadd.f32 %v218, %v2602
  %v2604 = vpop.f32.mrb[0].mxu0
  %v2605 = vpop.f32.mrb[0].mxu0
  %v2606 = vadd.f32 %v223, %v2605
  %v2607 = vpop.f32.mrb[0].mxu0
  %2608 = vmatprep.mubr.bf16.mxu0 %v466
  %2609 = vmatmul.mubr.bf16.gmra.mrb[0].mxu0 %v361
  %v2610 = vpop.f32.mrb[0].mxu0
  %v2611 = vadd.f32 %v228, %v2610
  %v2612 = vpop.f32.mrb[0].mxu0
  %v2613 = vpop.f32.mrb[0].mxu0
  %v2614 = vadd.f32 %v233, %v2613
  %v2615 = vpop.f32.mrb[0].mxu0
  %2616 = vmatprep.mubr.bf16.mxu0 %v469
  %2617 = vmatmul.mubr.bf16.gmra.mrb[0].mxu0 %v363
  %v2618 = vpop.f32.mrb[0].mxu0
  %v2619 = vadd.f32 %v238, %v2618
  %v2620 = vpop.f32.mrb[0].mxu0
  %v2621 = vpop.f32.mrb[0].mxu0
  %v2622 = vadd.f32 %v243, %v2621
  %v2623 = vpop.f32.mrb[0].mxu0
  %2624 = vmatprep.mubr.bf16.mxu0 %v472
  %2625 = vmatmul.mubr.bf16.gmra.mrb[0].mxu0 %v365
  %v2626 = vpop.f32.mrb[0].mxu0
  %v2627 = vadd.f32 %v248, %v2626
  %v2628 = vpop.f32.mrb[0].mxu0
  %v2629 = vpop.f32.mrb[0].mxu0
  %v2630 = vadd.f32 %v253, %v2629
  %v2631 = vpop.f32.mrb[0].mxu0
  %2632 = vmatprep.mubr.bf16.mxu0 %v475
  %2633 = vmatmul.mubr.bf16.gmra.mrb[0].mxu0 %v367
  %v2634 = vpop.f32.mrb[0].mxu0
  %v2635 = vadd.f32 %v258, %v2634
  %v2636 = vpop.f32.mrb[0].mxu0
  %v2637 = vpop.f32.mrb[0].mxu0
  %v2638 = vadd.f32 %v263, %v2637
  %v2639 = vpop.f32.mrb[0].mxu0
  %2640 = vmatprep.mubr.bf16.mxu0 %v478
  %2641 = vmatmul.mubr.bf16.gmra.mrb[0].mxu0 %v369
  %v2642 = vpop.f32.mrb[0].mxu0
  %v2643 = vadd.f32 %v268, %v2642
  %v2644 = vpop.f32.mrb[0].mxu0
  %v2645 = vpop.f32.mrb[0].mxu0
  %v2646 = vadd.f32 %v273, %v2645
  %v2647 = vpop.f32.mrb[0].mxu0
  %2648 = vdwg.mxu0
  %v2649 = vmax.f32 %v2555, 0.0
  %v2650 = vmax.f32 %v2558, 0.0
  %v2651 = vmax.f32 %v2563, 0.0
  %v2652 = vmax.f32 %v2566, 0.0
  %v2653 = vmax.f32 %v2571, 0.0
  %v2654 = vmax.f32 %v2574, 0.0
  %v2655 = vmax.f32 %v2579, 0.0
  %v2656 = vmax.f32 %v2582, 0.0
  %v2657 = vmax.f32 %v2587, 0.0
  %v2658 = vmax.f32 %v2590, 0.0
  %v2659 = vmax.f32 %v2595, 0.0
  %v2660 = vmax.f32 %v2598, 0.0
  %v2661 = vmax.f32 %v2603, 0.0
  %v2662 = vmax.f32 %v2606, 0.0
  %v2663 = vmax.f32 %v2611, 0.0
  %v2664 = vmax.f32 %v2614, 0.0
  %v2665 = vmax.f32 %v2619, 0.0
  %v2666 = vmax.f32 %v2622, 0.0
  %v2667 = vmax.f32 %v2627, 0.0
  %v2668 = vmax.f32 %v2630, 0.0
  %v2669 = vmax.f32 %v2635, 0.0
  %v2670 = vmax.f32 %v2638, 0.0
  %v2671 = vmax.f32 %v2643, 0.0
  %v2672 = vmax.f32 %v2646, 0.0
  %s2673 = scalar_lea.vmem %s0, 144
  %v2674 = vld [vmem:[%s2673] sm:$0xf]
  %v2675 = vld [vmem:[%s2673 + $0x4] sm:$0xf]
  %v2676 = vld [vmem:[%s2673 + $0x8] sm:$0xf]
  %v2677 = vld [vmem:[%s2673 + $0xc] sm:$0xf]
  %v2678 = vld [vmem:[%s2673 + $0x10] sm:$0xf]
  %v2679 = vld [vmem:[%s2673 + $0x14] sm:$0xf]
  %v2680 = vld [vmem:[%s2673 + $0x18] sm:$0xf]
  %v2681 = vld [vmem:[%s2673 + $0x1c] sm:$0xf]
  %v2682 = vld [vmem:[%s2673 + $0x20] sm:$0xf]
  %v2683 = vld [vmem:[%s2673 + $0x24] sm:$0xf]
  %v2684 = vld [vmem:[%s2673 + $0x28] sm:$0xf]
  %v2685 = vld [vmem:[%s2673 + $0x2c] sm:$0xf]
  %v2686 = vld [vmem:[%s2673 + $0x30] sm:$0xf]
  %v2687 = vld [vmem:[%s2673 + $0x34] sm:$0xf]
  %v2688 = vld [vmem:[%s2673 + $0x38] sm:$0xf]
  %v2689 = vld [vmem:[%s2673 + $0x3c] sm:$0xf]
  %v2690 = vld [vmem:[%s2673 + $0x40] sm:$0xf]
  %v2691 = vld [vmem:[%s2673 + $0x44] sm:$0xf]
  %v2692 = vld [vmem:[%s2673 + $0x48] sm:$0xf]
  %v2693 = vld [vmem:[%s2673 + $0x4c] sm:$0xf]
  %v2714 = vunpack.c.l.b16 %v2674
  %v2715 = vunpack.c.l.b16 %v2675
  %v2716 = vunpack.c.l.b16 %v2676
  %v2717 = vunpack.c.l.b16 %v2677
  %v2718 = vunpack.c.l.b16 %v2678
  %v2719 = vunpack.c.l.b16 %v2679
  %v2720 = vunpack.c.l.b16 %v2680
  %v2721 = vunpack.c.l.b16 %v2681
  %v2722 = vunpack.c.l.b16 %v2682
  %v2723 = vunpack.c.l.b16 %v2683
  %v2724 = vunpack.c.l.b16 %v2684
  %v2725 = vunpack.c.l.b16 %v2685
  %v2726 = vunpack.c.l.b16 %v2686
  %v2727 = vunpack.c.l.b16 %v2687
  %v2728 = vunpack.c.l.b16 %v2688
  %v2729 = vunpack.c.l.b16 %v2689
  %v2730 = vunpack.c.l.b16 %v2690
  %v2731 = vunpack.c.l.b16 %v2691
  %v2732 = vunpack.c.l.b16 %v2692
  %v2733 = vunpack.c.l.b16 %v2693
  %v2734 = vpack.c.b16 %v2715, %v2714
  %v2735 = vpack.c.b16 %v2717, %v2716
  %v2736 = vpack.c.b16 %v2719, %v2718
  %v2737 = vpack.c.b16 %v2721, %v2720
  %v2738 = vpack.c.b16 %v2723, %v2722
  %v2739 = vpack.c.b16 %v2725, %v2724
  %v2740 = vpack.c.b16 %v2727, %v2726
  %v2741 = vpack.c.b16 %v2729, %v2728
  %v2742 = vpack.c.b16 %v2731, %v2730
  %v2743 = vpack.c.b16 %v2733, %v2732
  %2754 = vmatprep.subr.bf16.mxu0 0
  %2755 = vmatpush1.bf16.msra.mxu0 %v2734
  %2756 = vmatprep.subr.bf16.mxu0 0
  %2757 = vmatpush1.bf16.msra.mxu0 %v2735
  %2758 = vmatprep.subr.bf16.mxu0 0
  %2759 = vmatpush1.bf16.msra.mxu0 %v2736
  %2760 = vmatprep.subr.bf16.mxu0 0
  %2761 = vmatpush1.bf16.msra.mxu0 %v2737
  %2762 = vmatprep.subr.bf16.mxu0 0
  %2763 = vmatpush1.bf16.msra.mxu0 %v2738
  %2764 = vmatprep.subr.bf16.mxu0 0
  %2765 = vmatpush1.bf16.msra.mxu0 %v2739
  %2766 = vmatprep.subr.bf16.mxu0 0
  %2767 = vmatpush1.bf16.msra.mxu0 %v2740
  %2768 = vmatprep.subr.bf16.mxu0 0
  %2769 = vmatpush1.bf16.msra.mxu0 %v2741
  %2770 = vmatprep.subr.bf16.mxu0 0
  %2771 = vmatpush1.bf16.msra.mxu0 %v2742
  %2772 = vmatprep.subr.bf16.mxu0 0
  %2773 = vmatpush1.bf16.msra.mxu0 %v2743
  %2774 = vmatprep.subr.bf16.mxu0 0
  %2775 = vmatpush1.bf16.msra.mxu0 0
  %2776 = vmatprep.subr.bf16.mxu0 0
  %2777 = vmatpush1.bf16.msra.mxu0 0
  %2778 = vmatprep.subr.bf16.mxu0 0
  %2779 = vmatpush1.bf16.msra.mxu0 0
  %2780 = vmatprep.subr.bf16.mxu0 0
  %2781 = vmatpush1.bf16.msra.mxu0 0
  %2782 = vmatprep.subr.bf16.mxu0 0
  %2783 = vmatpush1.bf16.msra.mxu0 0
  %2784 = vmatprep.subr.bf16.mxu0 0
  %2785 = vmatpush1.bf16.msra.mxu0 0
  %2786 = vmatprep.mubr.bf16.mxu0 %v445
  %2787 = vmatmul.mubr.bf16.gmra.mrb[0].mxu0 %v347
  %v2788 = vpop.f32.mrb[0].mxu0
  %v2789 = vadd.f32 %v158, %v2788
  %v2790 = vpop.f32.mrb[0].mxu0
  %v2791 = vpop.f32.mrb[0].mxu0
  %v2792 = vadd.f32 %v163, %v2791
  %v2793 = vpop.f32.mrb[0].mxu0
  %2794 = vmatprep.mubr.bf16.mxu0 %v448
  %2795 = vmatmul.mubr.bf16.gmra.mrb[0].mxu0 %v349
  %v2796 = vpop.f32.mrb[0].mxu0
  %v2797 = vadd.f32 %v168, %v2796
  %v2798 = vpop.f32.mrb[0].mxu0
  %v2799 = vpop.f32.mrb[0].mxu0
  %v2800 = vadd.f32 %v173, %v2799
  %v2801 = vpop.f32.mrb[0].mxu0
  %2802 = vmatprep.mubr.bf16.mxu0 %v451
  %2803 = vmatmul.mubr.bf16.gmra.mrb[0].mxu0 %v351
  %v2804 = vpop.f32.mrb[0].mxu0
  %v2805 = vadd.f32 %v178, %v2804
  %v2806 = vpop.f32.mrb[0].mxu0
  %v2807 = vpop.f32.mrb[0].mxu0
  %v2808 = vadd.f32 %v183, %v2807
  %v2809 = vpop.f32.mrb[0].mxu0
  %2810 = vmatprep.mubr.bf16.mxu0 %v454
  %2811 = vmatmul.mubr.bf16.gmra.mrb[0].mxu0 %v353
  %v2812 = vpop.f32.mrb[0].mxu0
  %v2813 = vadd.f32 %v188, %v2812
  %v2814 = vpop.f32.mrb[0].mxu0
  %v2815 = vpop.f32.mrb[0].mxu0
  %v2816 = vadd.f32 %v193, %v2815
  %v2817 = vpop.f32.mrb[0].mxu0
  %2818 = vmatprep.mubr.bf16.mxu0 %v457
  %2819 = vmatmul.mubr.bf16.gmra.mrb[0].mxu0 %v355
  %v2820 = vpop.f32.mrb[0].mxu0
  %v2821 = vadd.f32 %v198, %v2820
  %v2822 = vpop.f32.mrb[0].mxu0
  %v2823 = vpop.f32.mrb[0].mxu0
  %v2824 = vadd.f32 %v203, %v2823
  %v2825 = vpop.f32.mrb[0].mxu0
  %2826 = vmatprep.mubr.bf16.mxu0 %v460
  %2827 = vmatmul.mubr.bf16.gmra.mrb[0].mxu0 %v357
  %v2828 = vpop.f32.mrb[0].mxu0
  %v2829 = vadd.f32 %v208, %v2828
  %v2830 = vpop.f32.mrb[0].mxu0
  %v2831 = vpop.f32.mrb[0].mxu0
  %v2832 = vadd.f32 %v213, %v2831
  %v2833 = vpop.f32.mrb[0].mxu0
  %2834 = vmatprep.mubr.bf16.mxu0 %v463
  %2835 = vmatmul.mubr.bf16.gmra.mrb[0].mxu0 %v359
  %v2836 = vpop.f32.mrb[0].mxu0
  %v2837 = vadd.f32 %v218, %v2836
  %v2838 = vpop.f32.mrb[0].mxu0
  %v2839 = vpop.f32.mrb[0].mxu0
  %v2840 = vadd.f32 %v223, %v2839
  %v2841 = vpop.f32.mrb[0].mxu0
  %2842 = vmatprep.mubr.bf16.mxu0 %v466
  %2843 = vmatmul.mubr.bf16.gmra.mrb[0].mxu0 %v361
  %v2844 = vpop.f32.mrb[0].mxu0
  %v2845 = vadd.f32 %v228, %v2844
  %v2846 = vpop.f32.mrb[0].mxu0
  %v2847 = vpop.f32.mrb[0].mxu0
  %v2848 = vadd.f32 %v233, %v2847
  %v2849 = vpop.f32.mrb[0].mxu0
  %2850 = vmatprep.mubr.bf16.mxu0 %v469
  %2851 = vmatmul.mubr.bf16.gmra.mrb[0].mxu0 %v363
  %v2852 = vpop.f32.mrb[0].mxu0
  %v2853 = vadd.f32 %v238, %v2852
  %v2854 = vpop.f32.mrb[0].mxu0
  %v2855 = vpop.f32.mrb[0].mxu0
  %v2856 = vadd.f32 %v243, %v2855
  %v2857 = vpop.f32.mrb[0].mxu0
  %2858 = vmatprep.mubr.bf16.mxu0 %v472
  %2859 = vmatmul.mubr.bf16.gmra.mrb[0].mxu0 %v365
  %v2860 = vpop.f32.mrb[0].mxu0
  %v2861 = vadd.f32 %v248, %v2860
  %v2862 = vpop.f32.mrb[0].mxu0
  %v2863 = vpop.f32.mrb[0].mxu0
  %v2864 = vadd.f32 %v253, %v2863
  %v2865 = vpop.f32.mrb[0].mxu0
  %2866 = vmatprep.mubr.bf16.mxu0 %v475
  %2867 = vmatmul.mubr.bf16.gmra.mrb[0].mxu0 %v367
  %v2868 = vpop.f32.mrb[0].mxu0
  %v2869 = vadd.f32 %v258, %v2868
  %v2870 = vpop.f32.mrb[0].mxu0
  %v2871 = vpop.f32.mrb[0].mxu0
  %v2872 = vadd.f32 %v263, %v2871
  %v2873 = vpop.f32.mrb[0].mxu0
  %2874 = vmatprep.mubr.bf16.mxu0 %v478
  %2875 = vmatmul.mubr.bf16.gmra.mrb[0].mxu0 %v369
  %v2876 = vpop.f32.mrb[0].mxu0
  %v2877 = vadd.f32 %v268, %v2876
  %v2878 = vpop.f32.mrb[0].mxu0
  %v2879 = vpop.f32.mrb[0].mxu0
  %v2880 = vadd.f32 %v273, %v2879
  %v2881 = vpop.f32.mrb[0].mxu0
  %2882 = vdwg.mxu0
  %v2883 = vmax.f32 %v2789, 0.0
  %v2884 = vmax.f32 %v2792, 0.0
  %v2885 = vmax.f32 %v2797, 0.0
  %v2886 = vmax.f32 %v2800, 0.0
  %v2887 = vmax.f32 %v2805, 0.0
  %v2888 = vmax.f32 %v2808, 0.0
  %v2889 = vmax.f32 %v2813, 0.0
  %v2890 = vmax.f32 %v2816, 0.0
  %v2891 = vmax.f32 %v2821, 0.0
  %v2892 = vmax.f32 %v2824, 0.0
  %v2893 = vmax.f32 %v2829, 0.0
  %v2894 = vmax.f32 %v2832, 0.0
  %v2895 = vmax.f32 %v2837, 0.0
  %v2896 = vmax.f32 %v2840, 0.0
  %v2897 = vmax.f32 %v2845, 0.0
  %v2898 = vmax.f32 %v2848, 0.0
  %v2899 = vmax.f32 %v2853, 0.0
  %v2900 = vmax.f32 %v2856, 0.0
  %v2901 = vmax.f32 %v2861, 0.0
  %v2902 = vmax.f32 %v2864, 0.0
  %v2903 = vmax.f32 %v2869, 0.0
  %v2904 = vmax.f32 %v2872, 0.0
  %v2905 = vmax.f32 %v2877, 0.0
  %v2906 = vmax.f32 %v2880, 0.0
  %v2907 = vmax.f32 %v2649, %v2883
  %v2908 = vmax.f32 %v2650, %v2884
  %v2909 = vmax.f32 %v2651, %v2885
  %v2910 = vmax.f32 %v2652, %v2886
  %v2911 = vmax.f32 %v2653, %v2887
  %v2912 = vmax.f32 %v2654, %v2888
  %v2913 = vmax.f32 %v2655, %v2889
  %v2914 = vmax.f32 %v2656, %v2890
  %v2915 = vmax.f32 %v2657, %v2891
  %v2916 = vmax.f32 %v2658, %v2892
  %v2917 = vmax.f32 %v2659, %v2893
  %v2918 = vmax.f32 %v2660, %v2894
  %v2919 = vmax.f32 %v2661, %v2895
  %v2920 = vmax.f32 %v2662, %v2896
  %v2921 = vmax.f32 %v2663, %v2897
  %v2922 = vmax.f32 %v2664, %v2898
  %v2923 = vmax.f32 %v2665, %v2899
  %v2924 = vmax.f32 %v2666, %v2900
  %v2925 = vmax.f32 %v2667, %v2901
  %v2926 = vmax.f32 %v2668, %v2902
  %v2927 = vmax.f32 %v2669, %v2903
  %v2928 = vmax.f32 %v2670, %v2904
  %v2929 = vmax.f32 %v2671, %v2905
  %v2930 = vmax.f32 %v2672, %v2906
  %v2931 = vmax.f32 %v2907, %v2908
  %v2932 = vmax.f32 %v2909, %v2910
  %v2933 = vmax.f32 %v2911, %v2912
  %v2934 = vmax.f32 %v2913, %v2914
  %v2935 = vmax.f32 %v2915, %v2916
  %v2936 = vmax.f32 %v2917, %v2918
  %v2937 = vmax.f32 %v2919, %v2920
  %v2938 = vmax.f32 %v2921, %v2922
  %v2939 = vmax.f32 %v2923, %v2924
  %v2940 = vmax.f32 %v2925, %v2926
  %v2941 = vmax.f32 %v2927, %v2928
  %v2942 = vmax.f32 %v2929, %v2930
  %v2943 = vpack.c.bf16 %v2932, %v2931
  %v2944 = vpack.c.bf16 %v2934, %v2933
  %v2945 = vpack.c.bf16 %v2936, %v2935
  %v2946 = vpack.c.bf16 %v2938, %v2937
  %v2947 = vpack.c.bf16 %v2940, %v2939
  %v2948 = vpack.c.bf16 %v2942, %v2941
  %s2949 = scalar_lea.vmem %s0, 160
  %v2950 = vld [vmem:[%s2949] sm:$0xf]
  %v2951 = vld [vmem:[%s2949 + $0x4] sm:$0xf]
  %v2952 = vld [vmem:[%s2949 + $0x8] sm:$0xf]
  %v2953 = vld [vmem:[%s2949 + $0xc] sm:$0xf]
  %v2954 = vld [vmem:[%s2949 + $0x10] sm:$0xf]
  %v2955 = vld [vmem:[%s2949 + $0x14] sm:$0xf]
  %v2956 = vld [vmem:[%s2949 + $0x18] sm:$0xf]
  %v2957 = vld [vmem:[%s2949 + $0x1c] sm:$0xf]
  %v2958 = vld [vmem:[%s2949 + $0x20] sm:$0xf]
  %v2959 = vld [vmem:[%s2949 + $0x24] sm:$0xf]
  %v2960 = vld [vmem:[%s2949 + $0x28] sm:$0xf]
  %v2961 = vld [vmem:[%s2949 + $0x2c] sm:$0xf]
  %v2962 = vld [vmem:[%s2949 + $0x30] sm:$0xf]
  %v2963 = vld [vmem:[%s2949 + $0x34] sm:$0xf]
  %v2964 = vld [vmem:[%s2949 + $0x38] sm:$0xf]
  %v2965 = vld [vmem:[%s2949 + $0x3c] sm:$0xf]
  %v2966 = vld [vmem:[%s2949 + $0x40] sm:$0xf]
  %v2967 = vld [vmem:[%s2949 + $0x44] sm:$0xf]
  %v2968 = vld [vmem:[%s2949 + $0x48] sm:$0xf]
  %v2969 = vld [vmem:[%s2949 + $0x4c] sm:$0xf]
  %v2990 = vunpack.c.l.b16 %v2950
  %v2991 = vunpack.c.l.b16 %v2951
  %v2992 = vunpack.c.l.b16 %v2952
  %v2993 = vunpack.c.l.b16 %v2953
  %v2994 = vunpack.c.l.b16 %v2954
  %v2995 = vunpack.c.l.b16 %v2955
  %v2996 = vunpack.c.l.b16 %v2956
  %v2997 = vunpack.c.l.b16 %v2957
  %v2998 = vunpack.c.l.b16 %v2958
  %v2999 = vunpack.c.l.b16 %v2959
  %v3000 = vunpack.c.l.b16 %v2960
  %v3001 = vunpack.c.l.b16 %v2961
  %v3002 = vunpack.c.l.b16 %v2962
  %v3003 = vunpack.c.l.b16 %v2963
  %v3004 = vunpack.c.l.b16 %v2964
  %v3005 = vunpack.c.l.b16 %v2965
  %v3006 = vunpack.c.l.b16 %v2966
  %v3007 = vunpack.c.l.b16 %v2967
  %v3008 = vunpack.c.l.b16 %v2968
  %v3009 = vunpack.c.l.b16 %v2969
  %v3010 = vpack.c.b16 %v2991, %v2990
  %v3011 = vpack.c.b16 %v2993, %v2992
  %v3012 = vpack.c.b16 %v2995, %v2994
  %v3013 = vpack.c.b16 %v2997, %v2996
  %v3014 = vpack.c.b16 %v2999, %v2998
  %v3015 = vpack.c.b16 %v3001, %v3000
  %v3016 = vpack.c.b16 %v3003, %v3002
  %v3017 = vpack.c.b16 %v3005, %v3004
  %v3018 = vpack.c.b16 %v3007, %v3006
  %v3019 = vpack.c.b16 %v3009, %v3008
  %3030 = vmatprep.subr.bf16.mxu0 0
  %3031 = vmatpush1.bf16.msra.mxu0 %v3010
  %3032 = vmatprep.subr.bf16.mxu0 0
  %3033 = vmatpush1.bf16.msra.mxu0 %v3011
  %3034 = vmatprep.subr.bf16.mxu0 0
  %3035 = vmatpush1.bf16.msra.mxu0 %v3012
  %3036 = vmatprep.subr.bf16.mxu0 0
  %3037 = vmatpush1.bf16.msra.mxu0 %v3013
  %3038 = vmatprep.subr.bf16.mxu0 0
  %3039 = vmatpush1.bf16.msra.mxu0 %v3014
  %3040 = vmatprep.subr.bf16.mxu0 0
  %3041 = vmatpush1.bf16.msra.mxu0 %v3015
  %3042 = vmatprep.subr.bf16.mxu0 0
  %3043 = vmatpush1.bf16.msra.mxu0 %v3016
  %3044 = vmatprep.subr.bf16.mxu0 0
  %3045 = vmatpush1.bf16.msra.mxu0 %v3017
  %3046 = vmatprep.subr.bf16.mxu0 0
  %3047 = vmatpush1.bf16.msra.mxu0 %v3018
  %3048 = vmatprep.subr.bf16.mxu0 0
  %3049 = vmatpush1.bf16.msra.mxu0 %v3019
  %3050 = vmatprep.subr.bf16.mxu0 0
  %3051 = vmatpush1.bf16.msra.mxu0 0
  %3052 = vmatprep.subr.bf16.mxu0 0
  %3053 = vmatpush1.bf16.msra.mxu0 0
  %3054 = vmatprep.subr.bf16.mxu0 0
  %3055 = vmatpush1.bf16.msra.mxu0 0
  %3056 = vmatprep.subr.bf16.mxu0 0
  %3057 = vmatpush1.bf16.msra.mxu0 0
  %3058 = vmatprep.subr.bf16.mxu0 0
  %3059 = vmatpush1.bf16.msra.mxu0 0
  %3060 = vmatprep.subr.bf16.mxu0 0
  %3061 = vmatpush1.bf16.msra.mxu0 0
  %3062 = vmatprep.mubr.bf16.mxu0 %v445
  %3063 = vmatmul.mubr.bf16.gmra.mrb[0].mxu0 %v347
  %v3064 = vpop.f32.mrb[0].mxu0
  %v3065 = vadd.f32 %v158, %v3064
  %v3066 = vpop.f32.mrb[0].mxu0
  %v3067 = vpop.f32.mrb[0].mxu0
  %v3068 = vadd.f32 %v163, %v3067
  %v3069 = vpop.f32.mrb[0].mxu0
  %3070 = vmatprep.mubr.bf16.mxu0 %v448
  %3071 = vmatmul.mubr.bf16.gmra.mrb[0].mxu0 %v349
  %v3072 = vpop.f32.mrb[0].mxu0
  %v3073 = vadd.f32 %v168, %v3072
  %v3074 = vpop.f32.mrb[0].mxu0
  %v3075 = vpop.f32.mrb[0].mxu0
  %v3076 = vadd.f32 %v173, %v3075
  %v3077 = vpop.f32.mrb[0].mxu0
  %3078 = vmatprep.mubr.bf16.mxu0 %v451
  %3079 = vmatmul.mubr.bf16.gmra.mrb[0].mxu0 %v351
  %v3080 = vpop.f32.mrb[0].mxu0
  %v3081 = vadd.f32 %v178, %v3080
  %v3082 = vpop.f32.mrb[0].mxu0
  %v3083 = vpop.f32.mrb[0].mxu0
  %v3084 = vadd.f32 %v183, %v3083
  %v3085 = vpop.f32.mrb[0].mxu0
  %3086 = vmatprep.mubr.bf16.mxu0 %v454
  %3087 = vmatmul.mubr.bf16.gmra.mrb[0].mxu0 %v353
  %v3088 = vpop.f32.mrb[0].mxu0
  %v3089 = vadd.f32 %v188, %v3088
  %v3090 = vpop.f32.mrb[0].mxu0
  %v3091 = vpop.f32.mrb[0].mxu0
  %v3092 = vadd.f32 %v193, %v3091
  %v3093 = vpop.f32.mrb[0].mxu0
  %3094 = vmatprep.mubr.bf16.mxu0 %v457
  %3095 = vmatmul.mubr.bf16.gmra.mrb[0].mxu0 %v355
  %v3096 = vpop.f32.mrb[0].mxu0
  %v3097 = vadd.f32 %v198, %v3096
  %v3098 = vpop.f32.mrb[0].mxu0
  %v3099 = vpop.f32.mrb[0].mxu0
  %v3100 = vadd.f32 %v203, %v3099
  %v3101 = vpop.f32.mrb[0].mxu0
  %3102 = vmatprep.mubr.bf16.mxu0 %v460
  %3103 = vmatmul.mubr.bf16.gmra.mrb[0].mxu0 %v357
  %v3104 = vpop.f32.mrb[0].mxu0
  %v3105 = vadd.f32 %v208, %v3104
  %v3106 = vpop.f32.mrb[0].mxu0
  %v3107 = vpop.f32.mrb[0].mxu0
  %v3108 = vadd.f32 %v213, %v3107
  %v3109 = vpop.f32.mrb[0].mxu0
  %3110 = vmatprep.mubr.bf16.mxu0 %v463
  %3111 = vmatmul.mubr.bf16.gmra.mrb[0].mxu0 %v359
  %v3112 = vpop.f32.mrb[0].mxu0
  %v3113 = vadd.f32 %v218, %v3112
  %v3114 = vpop.f32.mrb[0].mxu0
  %v3115 = vpop.f32.mrb[0].mxu0
  %v3116 = vadd.f32 %v223, %v3115
  %v3117 = vpop.f32.mrb[0].mxu0
  %3118 = vmatprep.mubr.bf16.mxu0 %v466
  %3119 = vmatmul.mubr.bf16.gmra.mrb[0].mxu0 %v361
  %v3120 = vpop.f32.mrb[0].mxu0
  %v3121 = vadd.f32 %v228, %v3120
  %v3122 = vpop.f32.mrb[0].mxu0
  %v3123 = vpop.f32.mrb[0].mxu0
  %v3124 = vadd.f32 %v233, %v3123
  %v3125 = vpop.f32.mrb[0].mxu0
  %3126 = vmatprep.mubr.bf16.mxu0 %v469
  %3127 = vmatmul.mubr.bf16.gmra.mrb[0].mxu0 %v363
  %v3128 = vpop.f32.mrb[0].mxu0
  %v3129 = vadd.f32 %v238, %v3128
  %v3130 = vpop.f32.mrb[0].mxu0
  %v3131 = vpop.f32.mrb[0].mxu0
  %v3132 = vadd.f32 %v243, %v3131
  %v3133 = vpop.f32.mrb[0].mxu0
  %3134 = vmatprep.mubr.bf16.mxu0 %v472
  %3135 = vmatmul.mubr.bf16.gmra.mrb[0].mxu0 %v365
  %v3136 = vpop.f32.mrb[0].mxu0
  %v3137 = vadd.f32 %v248, %v3136
  %v3138 = vpop.f32.mrb[0].mxu0
  %v3139 = vpop.f32.mrb[0].mxu0
  %v3140 = vadd.f32 %v253, %v3139
  %v3141 = vpop.f32.mrb[0].mxu0
  %3142 = vmatprep.mubr.bf16.mxu0 %v475
  %3143 = vmatmul.mubr.bf16.gmra.mrb[0].mxu0 %v367
  %v3144 = vpop.f32.mrb[0].mxu0
  %v3145 = vadd.f32 %v258, %v3144
  %v3146 = vpop.f32.mrb[0].mxu0
  %v3147 = vpop.f32.mrb[0].mxu0
  %v3148 = vadd.f32 %v263, %v3147
  %v3149 = vpop.f32.mrb[0].mxu0
  %3150 = vmatprep.mubr.bf16.mxu0 %v478
  %3151 = vmatmul.mubr.bf16.gmra.mrb[0].mxu0 %v369
  %v3152 = vpop.f32.mrb[0].mxu0
  %v3153 = vadd.f32 %v268, %v3152
  %v3154 = vpop.f32.mrb[0].mxu0
  %v3155 = vpop.f32.mrb[0].mxu0
  %v3156 = vadd.f32 %v273, %v3155
  %v3157 = vpop.f32.mrb[0].mxu0
  %3158 = vdwg.mxu0
  %v3159 = vmax.f32 %v3065, 0.0
  %v3160 = vmax.f32 %v3068, 0.0
  %v3161 = vmax.f32 %v3073, 0.0
  %v3162 = vmax.f32 %v3076, 0.0
  %v3163 = vmax.f32 %v3081, 0.0
  %v3164 = vmax.f32 %v3084, 0.0
  %v3165 = vmax.f32 %v3089, 0.0
  %v3166 = vmax.f32 %v3092, 0.0
  %v3167 = vmax.f32 %v3097, 0.0
  %v3168 = vmax.f32 %v3100, 0.0
  %v3169 = vmax.f32 %v3105, 0.0
  %v3170 = vmax.f32 %v3108, 0.0
  %v3171 = vmax.f32 %v3113, 0.0
  %v3172 = vmax.f32 %v3116, 0.0
  %v3173 = vmax.f32 %v3121, 0.0
  %v3174 = vmax.f32 %v3124, 0.0
  %v3175 = vmax.f32 %v3129, 0.0
  %v3176 = vmax.f32 %v3132, 0.0
  %v3177 = vmax.f32 %v3137, 0.0
  %v3178 = vmax.f32 %v3140, 0.0
  %v3179 = vmax.f32 %v3145, 0.0
  %v3180 = vmax.f32 %v3148, 0.0
  %v3181 = vmax.f32 %v3153, 0.0
  %v3182 = vmax.f32 %v3156, 0.0
  %s3183 = scalar_lea.vmem %s0, 176
  %v3184 = vld [vmem:[%s3183] sm:$0xf]
  %v3185 = vld [vmem:[%s3183 + $0x4] sm:$0xf]
  %v3186 = vld [vmem:[%s3183 + $0x8] sm:$0xf]
  %v3187 = vld [vmem:[%s3183 + $0xc] sm:$0xf]
  %v3188 = vld [vmem:[%s3183 + $0x10] sm:$0xf]
  %v3189 = vld [vmem:[%s3183 + $0x14] sm:$0xf]
  %v3190 = vld [vmem:[%s3183 + $0x18] sm:$0xf]
  %v3191 = vld [vmem:[%s3183 + $0x1c] sm:$0xf]
  %v3192 = vld [vmem:[%s3183 + $0x20] sm:$0xf]
  %v3193 = vld [vmem:[%s3183 + $0x24] sm:$0xf]
  %v3194 = vld [vmem:[%s3183 + $0x28] sm:$0xf]
  %v3195 = vld [vmem:[%s3183 + $0x2c] sm:$0xf]
  %v3196 = vld [vmem:[%s3183 + $0x30] sm:$0xf]
  %v3197 = vld [vmem:[%s3183 + $0x34] sm:$0xf]
  %v3198 = vld [vmem:[%s3183 + $0x38] sm:$0xf]
  %v3199 = vld [vmem:[%s3183 + $0x3c] sm:$0xf]
  %v3200 = vld [vmem:[%s3183 + $0x40] sm:$0xf]
  %v3201 = vld [vmem:[%s3183 + $0x44] sm:$0xf]
  %v3202 = vld [vmem:[%s3183 + $0x48] sm:$0xf]
  %v3203 = vld [vmem:[%s3183 + $0x4c] sm:$0xf]
  %v3224 = vunpack.c.l.b16 %v3184
  %v3225 = vunpack.c.l.b16 %v3185
  %v3226 = vunpack.c.l.b16 %v3186
  %v3227 = vunpack.c.l.b16 %v3187
  %v3228 = vunpack.c.l.b16 %v3188
  %v3229 = vunpack.c.l.b16 %v3189
  %v3230 = vunpack.c.l.b16 %v3190
  %v3231 = vunpack.c.l.b16 %v3191
  %v3232 = vunpack.c.l.b16 %v3192
  %v3233 = vunpack.c.l.b16 %v3193
  %v3234 = vunpack.c.l.b16 %v3194
  %v3235 = vunpack.c.l.b16 %v3195
  %v3236 = vunpack.c.l.b16 %v3196
  %v3237 = vunpack.c.l.b16 %v3197
  %v3238 = vunpack.c.l.b16 %v3198
  %v3239 = vunpack.c.l.b16 %v3199
  %v3240 = vunpack.c.l.b16 %v3200
  %v3241 = vunpack.c.l.b16 %v3201
  %v3242 = vunpack.c.l.b16 %v3202
  %v3243 = vunpack.c.l.b16 %v3203
  %v3244 = vpack.c.b16 %v3225, %v3224
  %v3245 = vpack.c.b16 %v3227, %v3226
  %v3246 = vpack.c.b16 %v3229, %v3228
  %v3247 = vpack.c.b16 %v3231, %v3230
  %v3248 = vpack.c.b16 %v3233, %v3232
  %v3249 = vpack.c.b16 %v3235, %v3234
  %v3250 = vpack.c.b16 %v3237, %v3236
  %v3251 = vpack.c.b16 %v3239, %v3238
  %v3252 = vpack.c.b16 %v3241, %v3240
  %v3253 = vpack.c.b16 %v3243, %v3242
  %3264 = vmatprep.subr.bf16.mxu0 0
  %3265 = vmatpush1.bf16.msra.mxu0 %v3244
  %3266 = vmatprep.subr.bf16.mxu0 0
  %3267 = vmatpush1.bf16.msra.mxu0 %v3245
  %3268 = vmatprep.subr.bf16.mxu0 0
  %3269 = vmatpush1.bf16.msra.mxu0 %v3246
  %3270 = vmatprep.subr.bf16.mxu0 0
  %3271 = vmatpush1.bf16.msra.mxu0 %v3247
  %3272 = vmatprep.subr.bf16.mxu0 0
  %3273 = vmatpush1.bf16.msra.mxu0 %v3248
  %3274 = vmatprep.subr.bf16.mxu0 0
  %3275 = vmatpush1.bf16.msra.mxu0 %v3249
  %3276 = vmatprep.subr.bf16.mxu0 0
  %3277 = vmatpush1.bf16.msra.mxu0 %v3250
  %3278 = vmatprep.subr.bf16.mxu0 0
  %3279 = vmatpush1.bf16.msra.mxu0 %v3251
  %3280 = vmatprep.subr.bf16.mxu0 0
  %3281 = vmatpush1.bf16.msra.mxu0 %v3252
  %3282 = vmatprep.subr.bf16.mxu0 0
  %3283 = vmatpush1.bf16.msra.mxu0 %v3253
  %3284 = vmatprep.subr.bf16.mxu0 0
  %3285 = vmatpush1.bf16.msra.mxu0 0
  %3286 = vmatprep.subr.bf16.mxu0 0
  %3287 = vmatpush1.bf16.msra.mxu0 0
  %3288 = vmatprep.subr.bf16.mxu0 0
  %3289 = vmatpush1.bf16.msra.mxu0 0
  %3290 = vmatprep.subr.bf16.mxu0 0
  %3291 = vmatpush1.bf16.msra.mxu0 0
  %3292 = vmatprep.subr.bf16.mxu0 0
  %3293 = vmatpush1.bf16.msra.mxu0 0
  %3294 = vmatprep.subr.bf16.mxu0 0
  %3295 = vmatpush1.bf16.msra.mxu0 0
  %3296 = vmatprep.mubr.bf16.mxu0 %v445
  %3297 = vmatmul.mubr.bf16.gmra.mrb[0].mxu0 %v347
  %v3298 = vpop.f32.mrb[0].mxu0
  %v3299 = vadd.f32 %v158, %v3298
  %v3300 = vpop.f32.mrb[0].mxu0
  %v3301 = vpop.f32.mrb[0].mxu0
  %v3302 = vadd.f32 %v163, %v3301
  %v3303 = vpop.f32.mrb[0].mxu0
  %3304 = vmatprep.mubr.bf16.mxu0 %v448
  %3305 = vmatmul.mubr.bf16.gmra.mrb[0].mxu0 %v349
  %v3306 = vpop.f32.mrb[0].mxu0
  %v3307 = vadd.f32 %v168, %v3306
  %v3308 = vpop.f32.mrb[0].mxu0
  %v3309 = vpop.f32.mrb[0].mxu0
  %v3310 = vadd.f32 %v173, %v3309
  %v3311 = vpop.f32.mrb[0].mxu0
  %3312 = vmatprep.mubr.bf16.mxu0 %v451
  %3313 = vmatmul.mubr.bf16.gmra.mrb[0].mxu0 %v351
  %v3314 = vpop.f32.mrb[0].mxu0
  %v3315 = vadd.f32 %v178, %v3314
  %v3316 = vpop.f32.mrb[0].mxu0
  %v3317 = vpop.f32.mrb[0].mxu0
  %v3318 = vadd.f32 %v183, %v3317
  %v3319 = vpop.f32.mrb[0].mxu0
  %3320 = vmatprep.mubr.bf16.mxu0 %v454
  %3321 = vmatmul.mubr.bf16.gmra.mrb[0].mxu0 %v353
  %v3322 = vpop.f32.mrb[0].mxu0
  %v3323 = vadd.f32 %v188, %v3322
  %v3324 = vpop.f32.mrb[0].mxu0
  %v3325 = vpop.f32.mrb[0].mxu0
  %v3326 = vadd.f32 %v193, %v3325
  %v3327 = vpop.f32.mrb[0].mxu0
  %3328 = vmatprep.mubr.bf16.mxu0 %v457
  %3329 = vmatmul.mubr.bf16.gmra.mrb[0].mxu0 %v355
  %v3330 = vpop.f32.mrb[0].mxu0
  %v3331 = vadd.f32 %v198, %v3330
  %v3332 = vpop.f32.mrb[0].mxu0
  %v3333 = vpop.f32.mrb[0].mxu0
  %v3334 = vadd.f32 %v203, %v3333
  %v3335 = vpop.f32.mrb[0].mxu0
  %3336 = vmatprep.mubr.bf16.mxu0 %v460
  %3337 = vmatmul.mubr.bf16.gmra.mrb[0].mxu0 %v357
  %v3338 = vpop.f32.mrb[0].mxu0
  %v3339 = vadd.f32 %v208, %v3338
  %v3340 = vpop.f32.mrb[0].mxu0
  %v3341 = vpop.f32.mrb[0].mxu0
  %v3342 = vadd.f32 %v213, %v3341
  %v3343 = vpop.f32.mrb[0].mxu0
  %3344 = vmatprep.mubr.bf16.mxu0 %v463
  %3345 = vmatmul.mubr.bf16.gmra.mrb[0].mxu0 %v359
  %v3346 = vpop.f32.mrb[0].mxu0
  %v3347 = vadd.f32 %v218, %v3346
  %v3348 = vpop.f32.mrb[0].mxu0
  %v3349 = vpop.f32.mrb[0].mxu0
  %v3350 = vadd.f32 %v223, %v3349
  %v3351 = vpop.f32.mrb[0].mxu0
  %3352 = vmatprep.mubr.bf16.mxu0 %v466
  %3353 = vmatmul.mubr.bf16.gmra.mrb[0].mxu0 %v361
  %v3354 = vpop.f32.mrb[0].mxu0
  %v3355 = vadd.f32 %v228, %v3354
  %v3356 = vpop.f32.mrb[0].mxu0
  %v3357 = vpop.f32.mrb[0].mxu0
  %v3358 = vadd.f32 %v233, %v3357
  %v3359 = vpop.f32.mrb[0].mxu0
  %3360 = vmatprep.mubr.bf16.mxu0 %v469
  %3361 = vmatmul.mubr.bf16.gmra.mrb[0].mxu0 %v363
  %v3362 = vpop.f32.mrb[0].mxu0
  %v3363 = vadd.f32 %v238, %v3362
  %v3364 = vpop.f32.mrb[0].mxu0
  %v3365 = vpop.f32.mrb[0].mxu0
  %v3366 = vadd.f32 %v243, %v3365
  %v3367 = vpop.f32.mrb[0].mxu0
  %3368 = vmatprep.mubr.bf16.mxu0 %v472
  %3369 = vmatmul.mubr.bf16.gmra.mrb[0].mxu0 %v365
  %v3370 = vpop.f32.mrb[0].mxu0
  %v3371 = vadd.f32 %v248, %v3370
  %v3372 = vpop.f32.mrb[0].mxu0
  %v3373 = vpop.f32.mrb[0].mxu0
  %v3374 = vadd.f32 %v253, %v3373
  %v3375 = vpop.f32.mrb[0].mxu0
  %3376 = vmatprep.mubr.bf16.mxu0 %v475
  %3377 = vmatmul.mubr.bf16.gmra.mrb[0].mxu0 %v367
  %v3378 = vpop.f32.mrb[0].mxu0
  %v3379 = vadd.f32 %v258, %v3378
  %v3380 = vpop.f32.mrb[0].mxu0
  %v3381 = vpop.f32.mrb[0].mxu0
  %v3382 = vadd.f32 %v263, %v3381
  %v3383 = vpop.f32.mrb[0].mxu0
  %3384 = vmatprep.mubr.bf16.mxu0 %v478
  %3385 = vmatmul.mubr.bf16.gmra.mrb[0].mxu0 %v369
  %v3386 = vpop.f32.mrb[0].mxu0
  %v3387 = vadd.f32 %v268, %v3386
  %v3388 = vpop.f32.mrb[0].mxu0
  %v3389 = vpop.f32.mrb[0].mxu0
  %v3390 = vadd.f32 %v273, %v3389
  %v3391 = vpop.f32.mrb[0].mxu0
  %3392 = vdwg.mxu0
  %v3393 = vmax.f32 %v3299, 0.0
  %v3394 = vmax.f32 %v3302, 0.0
  %v3395 = vmax.f32 %v3307, 0.0
  %v3396 = vmax.f32 %v3310, 0.0
  %v3397 = vmax.f32 %v3315, 0.0
  %v3398 = vmax.f32 %v3318, 0.0
  %v3399 = vmax.f32 %v3323, 0.0
  %v3400 = vmax.f32 %v3326, 0.0
  %v3401 = vmax.f32 %v3331, 0.0
  %v3402 = vmax.f32 %v3334, 0.0
  %v3403 = vmax.f32 %v3339, 0.0
  %v3404 = vmax.f32 %v3342, 0.0
  %v3405 = vmax.f32 %v3347, 0.0
  %v3406 = vmax.f32 %v3350, 0.0
  %v3407 = vmax.f32 %v3355, 0.0
  %v3408 = vmax.f32 %v3358, 0.0
  %v3409 = vmax.f32 %v3363, 0.0
  %v3410 = vmax.f32 %v3366, 0.0
  %v3411 = vmax.f32 %v3371, 0.0
  %v3412 = vmax.f32 %v3374, 0.0
  %v3413 = vmax.f32 %v3379, 0.0
  %v3414 = vmax.f32 %v3382, 0.0
  %v3415 = vmax.f32 %v3387, 0.0
  %v3416 = vmax.f32 %v3390, 0.0
  %v3417 = vmax.f32 %v3159, %v3393
  %v3418 = vmax.f32 %v3160, %v3394
  %v3419 = vmax.f32 %v3161, %v3395
  %v3420 = vmax.f32 %v3162, %v3396
  %v3421 = vmax.f32 %v3163, %v3397
  %v3422 = vmax.f32 %v3164, %v3398
  %v3423 = vmax.f32 %v3165, %v3399
  %v3424 = vmax.f32 %v3166, %v3400
  %v3425 = vmax.f32 %v3167, %v3401
  %v3426 = vmax.f32 %v3168, %v3402
  %v3427 = vmax.f32 %v3169, %v3403
  %v3428 = vmax.f32 %v3170, %v3404
  %v3429 = vmax.f32 %v3171, %v3405
  %v3430 = vmax.f32 %v3172, %v3406
  %v3431 = vmax.f32 %v3173, %v3407
  %v3432 = vmax.f32 %v3174, %v3408
  %v3433 = vmax.f32 %v3175, %v3409
  %v3434 = vmax.f32 %v3176, %v3410
  %v3435 = vmax.f32 %v3177, %v3411
  %v3436 = vmax.f32 %v3178, %v3412
  %v3437 = vmax.f32 %v3179, %v3413
  %v3438 = vmax.f32 %v3180, %v3414
  %v3439 = vmax.f32 %v3181, %v3415
  %v3440 = vmax.f32 %v3182, %v3416
  %v3441 = vmax.f32 %v3417, %v3418
  %v3442 = vmax.f32 %v3419, %v3420
  %v3443 = vmax.f32 %v3421, %v3422
  %v3444 = vmax.f32 %v3423, %v3424
  %v3445 = vmax.f32 %v3425, %v3426
  %v3446 = vmax.f32 %v3427, %v3428
  %v3447 = vmax.f32 %v3429, %v3430
  %v3448 = vmax.f32 %v3431, %v3432
  %v3449 = vmax.f32 %v3433, %v3434
  %v3450 = vmax.f32 %v3435, %v3436
  %v3451 = vmax.f32 %v3437, %v3438
  %v3452 = vmax.f32 %v3439, %v3440
  %v3453 = vpack.c.bf16 %v3442, %v3441
  %v3454 = vpack.c.bf16 %v3444, %v3443
  %v3455 = vpack.c.bf16 %v3446, %v3445
  %v3456 = vpack.c.bf16 %v3448, %v3447
  %v3457 = vpack.c.bf16 %v3450, %v3449
  %v3458 = vpack.c.bf16 %v3452, %v3451
  %s3459 = scalar_lea.vmem %s0, 192
  %v3460 = vld [vmem:[%s3459] sm:$0xf]
  %v3461 = vld [vmem:[%s3459 + $0x4] sm:$0xf]
  %v3462 = vld [vmem:[%s3459 + $0x8] sm:$0xf]
  %v3463 = vld [vmem:[%s3459 + $0xc] sm:$0xf]
  %v3464 = vld [vmem:[%s3459 + $0x10] sm:$0xf]
  %v3465 = vld [vmem:[%s3459 + $0x14] sm:$0xf]
  %v3466 = vld [vmem:[%s3459 + $0x18] sm:$0xf]
  %v3467 = vld [vmem:[%s3459 + $0x1c] sm:$0xf]
  %v3468 = vld [vmem:[%s3459 + $0x20] sm:$0xf]
  %v3469 = vld [vmem:[%s3459 + $0x24] sm:$0xf]
  %v3470 = vld [vmem:[%s3459 + $0x28] sm:$0xf]
  %v3471 = vld [vmem:[%s3459 + $0x2c] sm:$0xf]
  %v3472 = vld [vmem:[%s3459 + $0x30] sm:$0xf]
  %v3473 = vld [vmem:[%s3459 + $0x34] sm:$0xf]
  %v3474 = vld [vmem:[%s3459 + $0x38] sm:$0xf]
  %v3475 = vld [vmem:[%s3459 + $0x3c] sm:$0xf]
  %v3476 = vld [vmem:[%s3459 + $0x40] sm:$0xf]
  %v3477 = vld [vmem:[%s3459 + $0x44] sm:$0xf]
  %v3478 = vld [vmem:[%s3459 + $0x48] sm:$0xf]
  %v3479 = vld [vmem:[%s3459 + $0x4c] sm:$0xf]
  %v3500 = vunpack.c.l.b16 %v3460
  %v3501 = vunpack.c.l.b16 %v3461
  %v3502 = vunpack.c.l.b16 %v3462
  %v3503 = vunpack.c.l.b16 %v3463
  %v3504 = vunpack.c.l.b16 %v3464
  %v3505 = vunpack.c.l.b16 %v3465
  %v3506 = vunpack.c.l.b16 %v3466
  %v3507 = vunpack.c.l.b16 %v3467
  %v3508 = vunpack.c.l.b16 %v3468
  %v3509 = vunpack.c.l.b16 %v3469
  %v3510 = vunpack.c.l.b16 %v3470
  %v3511 = vunpack.c.l.b16 %v3471
  %v3512 = vunpack.c.l.b16 %v3472
  %v3513 = vunpack.c.l.b16 %v3473
  %v3514 = vunpack.c.l.b16 %v3474
  %v3515 = vunpack.c.l.b16 %v3475
  %v3516 = vunpack.c.l.b16 %v3476
  %v3517 = vunpack.c.l.b16 %v3477
  %v3518 = vunpack.c.l.b16 %v3478
  %v3519 = vunpack.c.l.b16 %v3479
  %v3520 = vpack.c.b16 %v3501, %v3500
  %v3521 = vpack.c.b16 %v3503, %v3502
  %v3522 = vpack.c.b16 %v3505, %v3504
  %v3523 = vpack.c.b16 %v3507, %v3506
  %v3524 = vpack.c.b16 %v3509, %v3508
  %v3525 = vpack.c.b16 %v3511, %v3510
  %v3526 = vpack.c.b16 %v3513, %v3512
  %v3527 = vpack.c.b16 %v3515, %v3514
  %v3528 = vpack.c.b16 %v3517, %v3516
  %v3529 = vpack.c.b16 %v3519, %v3518
  %3540 = vmatprep.subr.bf16.mxu0 0
  %3541 = vmatpush1.bf16.msra.mxu0 %v3520
  %3542 = vmatprep.subr.bf16.mxu0 0
  %3543 = vmatpush1.bf16.msra.mxu0 %v3521
  %3544 = vmatprep.subr.bf16.mxu0 0
  %3545 = vmatpush1.bf16.msra.mxu0 %v3522
  %3546 = vmatprep.subr.bf16.mxu0 0
  %3547 = vmatpush1.bf16.msra.mxu0 %v3523
  %3548 = vmatprep.subr.bf16.mxu0 0
  %3549 = vmatpush1.bf16.msra.mxu0 %v3524
  %3550 = vmatprep.subr.bf16.mxu0 0
  %3551 = vmatpush1.bf16.msra.mxu0 %v3525
  %3552 = vmatprep.subr.bf16.mxu0 0
  %3553 = vmatpush1.bf16.msra.mxu0 %v3526
  %3554 = vmatprep.subr.bf16.mxu0 0
  %3555 = vmatpush1.bf16.msra.mxu0 %v3527
  %3556 = vmatprep.subr.bf16.mxu0 0
  %3557 = vmatpush1.bf16.msra.mxu0 %v3528
  %3558 = vmatprep.subr.bf16.mxu0 0
  %3559 = vmatpush1.bf16.msra.mxu0 %v3529
  %3560 = vmatprep.subr.bf16.mxu0 0
  %3561 = vmatpush1.bf16.msra.mxu0 0
  %3562 = vmatprep.subr.bf16.mxu0 0
  %3563 = vmatpush1.bf16.msra.mxu0 0
  %3564 = vmatprep.subr.bf16.mxu0 0
  %3565 = vmatpush1.bf16.msra.mxu0 0
  %3566 = vmatprep.subr.bf16.mxu0 0
  %3567 = vmatpush1.bf16.msra.mxu0 0
  %3568 = vmatprep.subr.bf16.mxu0 0
  %3569 = vmatpush1.bf16.msra.mxu0 0
  %3570 = vmatprep.subr.bf16.mxu0 0
  %3571 = vmatpush1.bf16.msra.mxu0 0
  %3572 = vmatprep.mubr.bf16.mxu0 %v445
  %3573 = vmatmul.mubr.bf16.gmra.mrb[0].mxu0 %v347
  %v3574 = vpop.f32.mrb[0].mxu0
  %v3575 = vadd.f32 %v158, %v3574
  %v3576 = vpop.f32.mrb[0].mxu0
  %v3577 = vpop.f32.mrb[0].mxu0
  %v3578 = vadd.f32 %v163, %v3577
  %v3579 = vpop.f32.mrb[0].mxu0
  %3580 = vmatprep.mubr.bf16.mxu0 %v448
  %3581 = vmatmul.mubr.bf16.gmra.mrb[0].mxu0 %v349
  %v3582 = vpop.f32.mrb[0].mxu0
  %v3583 = vadd.f32 %v168, %v3582
  %v3584 = vpop.f32.mrb[0].mxu0
  %v3585 = vpop.f32.mrb[0].mxu0
  %v3586 = vadd.f32 %v173, %v3585
  %v3587 = vpop.f32.mrb[0].mxu0
  %3588 = vmatprep.mubr.bf16.mxu0 %v451
  %3589 = vmatmul.mubr.bf16.gmra.mrb[0].mxu0 %v351
  %v3590 = vpop.f32.mrb[0].mxu0
  %v3591 = vadd.f32 %v178, %v3590
  %v3592 = vpop.f32.mrb[0].mxu0
  %v3593 = vpop.f32.mrb[0].mxu0
  %v3594 = vadd.f32 %v183, %v3593
  %v3595 = vpop.f32.mrb[0].mxu0
  %3596 = vmatprep.mubr.bf16.mxu0 %v454
  %3597 = vmatmul.mubr.bf16.gmra.mrb[0].mxu0 %v353
  %v3598 = vpop.f32.mrb[0].mxu0
  %v3599 = vadd.f32 %v188, %v3598
  %v3600 = vpop.f32.mrb[0].mxu0
  %v3601 = vpop.f32.mrb[0].mxu0
  %v3602 = vadd.f32 %v193, %v3601
  %v3603 = vpop.f32.mrb[0].mxu0
  %3604 = vmatprep.mubr.bf16.mxu0 %v457
  %3605 = vmatmul.mubr.bf16.gmra.mrb[0].mxu0 %v355
  %v3606 = vpop.f32.mrb[0].mxu0
  %v3607 = vadd.f32 %v198, %v3606
  %v3608 = vpop.f32.mrb[0].mxu0
  %v3609 = vpop.f32.mrb[0].mxu0
  %v3610 = vadd.f32 %v203, %v3609
  %v3611 = vpop.f32.mrb[0].mxu0
  %3612 = vmatprep.mubr.bf16.mxu0 %v460
  %3613 = vmatmul.mubr.bf16.gmra.mrb[0].mxu0 %v357
  %v3614 = vpop.f32.mrb[0].mxu0
  %v3615 = vadd.f32 %v208, %v3614
  %v3616 = vpop.f32.mrb[0].mxu0
  %v3617 = vpop.f32.mrb[0].mxu0
  %v3618 = vadd.f32 %v213, %v3617
  %v3619 = vpop.f32.mrb[0].mxu0
  %3620 = vmatprep.mubr.bf16.mxu0 %v463
  %3621 = vmatmul.mubr.bf16.gmra.mrb[0].mxu0 %v359
  %v3622 = vpop.f32.mrb[0].mxu0
  %v3623 = vadd.f32 %v218, %v3622
  %v3624 = vpop.f32.mrb[0].mxu0
  %v3625 = vpop.f32.mrb[0].mxu0
  %v3626 = vadd.f32 %v223, %v3625
  %v3627 = vpop.f32.mrb[0].mxu0
  %3628 = vmatprep.mubr.bf16.mxu0 %v466
  %3629 = vmatmul.mubr.bf16.gmra.mrb[0].mxu0 %v361
  %v3630 = vpop.f32.mrb[0].mxu0
  %v3631 = vadd.f32 %v228, %v3630
  %v3632 = vpop.f32.mrb[0].mxu0
  %v3633 = vpop.f32.mrb[0].mxu0
  %v3634 = vadd.f32 %v233, %v3633
  %v3635 = vpop.f32.mrb[0].mxu0
  %3636 = vmatprep.mubr.bf16.mxu0 %v469
  %3637 = vmatmul.mubr.bf16.gmra.mrb[0].mxu0 %v363
  %v3638 = vpop.f32.mrb[0].mxu0
  %v3639 = vadd.f32 %v238, %v3638
  %v3640 = vpop.f32.mrb[0].mxu0
  %v3641 = vpop.f32.mrb[0].mxu0
  %v3642 = vadd.f32 %v243, %v3641
  %v3643 = vpop.f32.mrb[0].mxu0
  %3644 = vmatprep.mubr.bf16.mxu0 %v472
  %3645 = vmatmul.mubr.bf16.gmra.mrb[0].mxu0 %v365
  %v3646 = vpop.f32.mrb[0].mxu0
  %v3647 = vadd.f32 %v248, %v3646
  %v3648 = vpop.f32.mrb[0].mxu0
  %v3649 = vpop.f32.mrb[0].mxu0
  %v3650 = vadd.f32 %v253, %v3649
  %v3651 = vpop.f32.mrb[0].mxu0
  %3652 = vmatprep.mubr.bf16.mxu0 %v475
  %3653 = vmatmul.mubr.bf16.gmra.mrb[0].mxu0 %v367
  %v3654 = vpop.f32.mrb[0].mxu0
  %v3655 = vadd.f32 %v258, %v3654
  %v3656 = vpop.f32.mrb[0].mxu0
  %v3657 = vpop.f32.mrb[0].mxu0
  %v3658 = vadd.f32 %v263, %v3657
  %v3659 = vpop.f32.mrb[0].mxu0
  %3660 = vmatprep.mubr.bf16.mxu0 %v478
  %3661 = vmatmul.mubr.bf16.gmra.mrb[0].mxu0 %v369
  %v3662 = vpop.f32.mrb[0].mxu0
  %v3663 = vadd.f32 %v268, %v3662
  %v3664 = vpop.f32.mrb[0].mxu0
  %v3665 = vpop.f32.mrb[0].mxu0
  %v3666 = vadd.f32 %v273, %v3665
  %v3667 = vpop.f32.mrb[0].mxu0
  %3668 = vdwg.mxu0
  %v3669 = vmax.f32 %v3575, 0.0
  %v3670 = vmax.f32 %v3578, 0.0
  %v3671 = vmax.f32 %v3583, 0.0
  %v3672 = vmax.f32 %v3586, 0.0
  %v3673 = vmax.f32 %v3591, 0.0
  %v3674 = vmax.f32 %v3594, 0.0
  %v3675 = vmax.f32 %v3599, 0.0
  %v3676 = vmax.f32 %v3602, 0.0
  %v3677 = vmax.f32 %v3607, 0.0
  %v3678 = vmax.f32 %v3610, 0.0
  %v3679 = vmax.f32 %v3615, 0.0
  %v3680 = vmax.f32 %v3618, 0.0
  %v3681 = vmax.f32 %v3623, 0.0
  %v3682 = vmax.f32 %v3626, 0.0
  %v3683 = vmax.f32 %v3631, 0.0
  %v3684 = vmax.f32 %v3634, 0.0
  %v3685 = vmax.f32 %v3639, 0.0
  %v3686 = vmax.f32 %v3642, 0.0
  %v3687 = vmax.f32 %v3647, 0.0
  %v3688 = vmax.f32 %v3650, 0.0
  %v3689 = vmax.f32 %v3655, 0.0
  %v3690 = vmax.f32 %v3658, 0.0
  %v3691 = vmax.f32 %v3663, 0.0
  %v3692 = vmax.f32 %v3666, 0.0
  %s3693 = scalar_lea.vmem %s0, 208
  %v3694 = vld [vmem:[%s3693] sm:$0xf]
  %v3695 = vld [vmem:[%s3693 + $0x4] sm:$0xf]
  %v3696 = vld [vmem:[%s3693 + $0x8] sm:$0xf]
  %v3697 = vld [vmem:[%s3693 + $0xc] sm:$0xf]
  %v3698 = vld [vmem:[%s3693 + $0x10] sm:$0xf]
  %v3699 = vld [vmem:[%s3693 + $0x14] sm:$0xf]
  %v3700 = vld [vmem:[%s3693 + $0x18] sm:$0xf]
  %v3701 = vld [vmem:[%s3693 + $0x1c] sm:$0xf]
  %v3702 = vld [vmem:[%s3693 + $0x20] sm:$0xf]
  %v3703 = vld [vmem:[%s3693 + $0x24] sm:$0xf]
  %v3704 = vld [vmem:[%s3693 + $0x28] sm:$0xf]
  %v3705 = vld [vmem:[%s3693 + $0x2c] sm:$0xf]
  %v3706 = vld [vmem:[%s3693 + $0x30] sm:$0xf]
  %v3707 = vld [vmem:[%s3693 + $0x34] sm:$0xf]
  %v3708 = vld [vmem:[%s3693 + $0x38] sm:$0xf]
  %v3709 = vld [vmem:[%s3693 + $0x3c] sm:$0xf]
  %v3710 = vld [vmem:[%s3693 + $0x40] sm:$0xf]
  %v3711 = vld [vmem:[%s3693 + $0x44] sm:$0xf]
  %v3712 = vld [vmem:[%s3693 + $0x48] sm:$0xf]
  %v3713 = vld [vmem:[%s3693 + $0x4c] sm:$0xf]
  %v3734 = vunpack.c.l.b16 %v3694
  %v3735 = vunpack.c.l.b16 %v3695
  %v3736 = vunpack.c.l.b16 %v3696
  %v3737 = vunpack.c.l.b16 %v3697
  %v3738 = vunpack.c.l.b16 %v3698
  %v3739 = vunpack.c.l.b16 %v3699
  %v3740 = vunpack.c.l.b16 %v3700
  %v3741 = vunpack.c.l.b16 %v3701
  %v3742 = vunpack.c.l.b16 %v3702
  %v3743 = vunpack.c.l.b16 %v3703
  %v3744 = vunpack.c.l.b16 %v3704
  %v3745 = vunpack.c.l.b16 %v3705
  %v3746 = vunpack.c.l.b16 %v3706
  %v3747 = vunpack.c.l.b16 %v3707
  %v3748 = vunpack.c.l.b16 %v3708
  %v3749 = vunpack.c.l.b16 %v3709
  %v3750 = vunpack.c.l.b16 %v3710
  %v3751 = vunpack.c.l.b16 %v3711
  %v3752 = vunpack.c.l.b16 %v3712
  %v3753 = vunpack.c.l.b16 %v3713
  %v3754 = vpack.c.b16 %v3735, %v3734
  %v3755 = vpack.c.b16 %v3737, %v3736
  %v3756 = vpack.c.b16 %v3739, %v3738
  %v3757 = vpack.c.b16 %v3741, %v3740
  %v3758 = vpack.c.b16 %v3743, %v3742
  %v3759 = vpack.c.b16 %v3745, %v3744
  %v3760 = vpack.c.b16 %v3747, %v3746
  %v3761 = vpack.c.b16 %v3749, %v3748
  %v3762 = vpack.c.b16 %v3751, %v3750
  %v3763 = vpack.c.b16 %v3753, %v3752
  %3774 = vmatprep.subr.bf16.mxu0 0
  %3775 = vmatpush1.bf16.msra.mxu0 %v3754
  %3776 = vmatprep.subr.bf16.mxu0 0
  %3777 = vmatpush1.bf16.msra.mxu0 %v3755
  %3778 = vmatprep.subr.bf16.mxu0 0
  %3779 = vmatpush1.bf16.msra.mxu0 %v3756
  %3780 = vmatprep.subr.bf16.mxu0 0
  %3781 = vmatpush1.bf16.msra.mxu0 %v3757
  %3782 = vmatprep.subr.bf16.mxu0 0
  %3783 = vmatpush1.bf16.msra.mxu0 %v3758
  %3784 = vmatprep.subr.bf16.mxu0 0
  %3785 = vmatpush1.bf16.msra.mxu0 %v3759
  %3786 = vmatprep.subr.bf16.mxu0 0
  %3787 = vmatpush1.bf16.msra.mxu0 %v3760
  %3788 = vmatprep.subr.bf16.mxu0 0
  %3789 = vmatpush1.bf16.msra.mxu0 %v3761
  %3790 = vmatprep.subr.bf16.mxu0 0
  %3791 = vmatpush1.bf16.msra.mxu0 %v3762
  %3792 = vmatprep.subr.bf16.mxu0 0
  %3793 = vmatpush1.bf16.msra.mxu0 %v3763
  %3794 = vmatprep.subr.bf16.mxu0 0
  %3795 = vmatpush1.bf16.msra.mxu0 0
  %3796 = vmatprep.subr.bf16.mxu0 0
  %3797 = vmatpush1.bf16.msra.mxu0 0
  %3798 = vmatprep.subr.bf16.mxu0 0
  %3799 = vmatpush1.bf16.msra.mxu0 0
  %3800 = vmatprep.subr.bf16.mxu0 0
  %3801 = vmatpush1.bf16.msra.mxu0 0
  %3802 = vmatprep.subr.bf16.mxu0 0
  %3803 = vmatpush1.bf16.msra.mxu0 0
  %3804 = vmatprep.subr.bf16.mxu0 0
  %3805 = vmatpush1.bf16.msra.mxu0 0
  %3806 = vmatprep.mubr.bf16.mxu0 %v445
  %3807 = vmatmul.mubr.bf16.gmra.mrb[0].mxu0 %v347
  %v3808 = vpop.f32.mrb[0].mxu0
  %v3809 = vadd.f32 %v158, %v3808
  %v3810 = vpop.f32.mrb[0].mxu0
  %v3811 = vpop.f32.mrb[0].mxu0
  %v3812 = vadd.f32 %v163, %v3811
  %v3813 = vpop.f32.mrb[0].mxu0
  %3814 = vmatprep.mubr.bf16.mxu0 %v448
  %3815 = vmatmul.mubr.bf16.gmra.mrb[0].mxu0 %v349
  %v3816 = vpop.f32.mrb[0].mxu0
  %v3817 = vadd.f32 %v168, %v3816
  %v3818 = vpop.f32.mrb[0].mxu0
  %v3819 = vpop.f32.mrb[0].mxu0
  %v3820 = vadd.f32 %v173, %v3819
  %v3821 = vpop.f32.mrb[0].mxu0
  %3822 = vmatprep.mubr.bf16.mxu0 %v451
  %3823 = vmatmul.mubr.bf16.gmra.mrb[0].mxu0 %v351
  %v3824 = vpop.f32.mrb[0].mxu0
  %v3825 = vadd.f32 %v178, %v3824
  %v3826 = vpop.f32.mrb[0].mxu0
  %v3827 = vpop.f32.mrb[0].mxu0
  %v3828 = vadd.f32 %v183, %v3827
  %v3829 = vpop.f32.mrb[0].mxu0
  %3830 = vmatprep.mubr.bf16.mxu0 %v454
  %3831 = vmatmul.mubr.bf16.gmra.mrb[0].mxu0 %v353
  %v3832 = vpop.f32.mrb[0].mxu0
  %v3833 = vadd.f32 %v188, %v3832
  %v3834 = vpop.f32.mrb[0].mxu0
  %v3835 = vpop.f32.mrb[0].mxu0
  %v3836 = vadd.f32 %v193, %v3835
  %v3837 = vpop.f32.mrb[0].mxu0
  %3838 = vmatprep.mubr.bf16.mxu0 %v457
  %3839 = vmatmul.mubr.bf16.gmra.mrb[0].mxu0 %v355
  %v3840 = vpop.f32.mrb[0].mxu0
  %v3841 = vadd.f32 %v198, %v3840
  %v3842 = vpop.f32.mrb[0].mxu0
  %v3843 = vpop.f32.mrb[0].mxu0
  %v3844 = vadd.f32 %v203, %v3843
  %v3845 = vpop.f32.mrb[0].mxu0
  %3846 = vmatprep.mubr.bf16.mxu0 %v460
  %3847 = vmatmul.mubr.bf16.gmra.mrb[0].mxu0 %v357
  %v3848 = vpop.f32.mrb[0].mxu0
  %v3849 = vadd.f32 %v208, %v3848
  %v3850 = vpop.f32.mrb[0].mxu0
  %v3851 = vpop.f32.mrb[0].mxu0
  %v3852 = vadd.f32 %v213, %v3851
  %v3853 = vpop.f32.mrb[0].mxu0
  %3854 = vmatprep.mubr.bf16.mxu0 %v463
  %3855 = vmatmul.mubr.bf16.gmra.mrb[0].mxu0 %v359
  %v3856 = vpop.f32.mrb[0].mxu0
  %v3857 = vadd.f32 %v218, %v3856
  %v3858 = vpop.f32.mrb[0].mxu0
  %v3859 = vpop.f32.mrb[0].mxu0
  %v3860 = vadd.f32 %v223, %v3859
  %v3861 = vpop.f32.mrb[0].mxu0
  %3862 = vmatprep.mubr.bf16.mxu0 %v466
  %3863 = vmatmul.mubr.bf16.gmra.mrb[0].mxu0 %v361
  %v3864 = vpop.f32.mrb[0].mxu0
  %v3865 = vadd.f32 %v228, %v3864
  %v3866 = vpop.f32.mrb[0].mxu0
  %v3867 = vpop.f32.mrb[0].mxu0
  %v3868 = vadd.f32 %v233, %v3867
  %v3869 = vpop.f32.mrb[0].mxu0
  %3870 = vmatprep.mubr.bf16.mxu0 %v469
  %3871 = vmatmul.mubr.bf16.gmra.mrb[0].mxu0 %v363
  %v3872 = vpop.f32.mrb[0].mxu0
  %v3873 = vadd.f32 %v238, %v3872
  %v3874 = vpop.f32.mrb[0].mxu0
  %v3875 = vpop.f32.mrb[0].mxu0
  %v3876 = vadd.f32 %v243, %v3875
  %v3877 = vpop.f32.mrb[0].mxu0
  %3878 = vmatprep.mubr.bf16.mxu0 %v472
  %3879 = vmatmul.mubr.bf16.gmra.mrb[0].mxu0 %v365
  %v3880 = vpop.f32.mrb[0].mxu0
  %v3881 = vadd.f32 %v248, %v3880
  %v3882 = vpop.f32.mrb[0].mxu0
  %v3883 = vpop.f32.mrb[0].mxu0
  %v3884 = vadd.f32 %v253, %v3883
  %v3885 = vpop.f32.mrb[0].mxu0
  %3886 = vmatprep.mubr.bf16.mxu0 %v475
  %3887 = vmatmul.mubr.bf16.gmra.mrb[0].mxu0 %v367
  %v3888 = vpop.f32.mrb[0].mxu0
  %v3889 = vadd.f32 %v258, %v3888
  %v3890 = vpop.f32.mrb[0].mxu0
  %v3891 = vpop.f32.mrb[0].mxu0
  %v3892 = vadd.f32 %v263, %v3891
  %v3893 = vpop.f32.mrb[0].mxu0
  %3894 = vmatprep.mubr.bf16.mxu0 %v478
  %3895 = vmatmul.mubr.bf16.gmra.mrb[0].mxu0 %v369
  %v3896 = vpop.f32.mrb[0].mxu0
  %v3897 = vadd.f32 %v268, %v3896
  %v3898 = vpop.f32.mrb[0].mxu0
  %v3899 = vpop.f32.mrb[0].mxu0
  %v3900 = vadd.f32 %v273, %v3899
  %v3901 = vpop.f32.mrb[0].mxu0
  %3902 = vdwg.mxu0
  %v3903 = vmax.f32 %v3809, 0.0
  %v3904 = vmax.f32 %v3812, 0.0
  %v3905 = vmax.f32 %v3817, 0.0
  %v3906 = vmax.f32 %v3820, 0.0
  %v3907 = vmax.f32 %v3825, 0.0
  %v3908 = vmax.f32 %v3828, 0.0
  %v3909 = vmax.f32 %v3833, 0.0
  %v3910 = vmax.f32 %v3836, 0.0
  %v3911 = vmax.f32 %v3841, 0.0
  %v3912 = vmax.f32 %v3844, 0.0
  %v3913 = vmax.f32 %v3849, 0.0
  %v3914 = vmax.f32 %v3852, 0.0
  %v3915 = vmax.f32 %v3857, 0.0
  %v3916 = vmax.f32 %v3860, 0.0
  %v3917 = vmax.f32 %v3865, 0.0
  %v3918 = vmax.f32 %v3868, 0.0
  %v3919 = vmax.f32 %v3873, 0.0
  %v3920 = vmax.f32 %v3876, 0.0
  %v3921 = vmax.f32 %v3881, 0.0
  %v3922 = vmax.f32 %v3884, 0.0
  %v3923 = vmax.f32 %v3889, 0.0
  %v3924 = vmax.f32 %v3892, 0.0
  %v3925 = vmax.f32 %v3897, 0.0
  %v3926 = vmax.f32 %v3900, 0.0
  %v3927 = vmax.f32 %v3669, %v3903
  %v3928 = vmax.f32 %v3670, %v3904
  %v3929 = vmax.f32 %v3671, %v3905
  %v3930 = vmax.f32 %v3672, %v3906
  %v3931 = vmax.f32 %v3673, %v3907
  %v3932 = vmax.f32 %v3674, %v3908
  %v3933 = vmax.f32 %v3675, %v3909
  %v3934 = vmax.f32 %v3676, %v3910
  %v3935 = vmax.f32 %v3677, %v3911
  %v3936 = vmax.f32 %v3678, %v3912
  %v3937 = vmax.f32 %v3679, %v3913
  %v3938 = vmax.f32 %v3680, %v3914
  %v3939 = vmax.f32 %v3681, %v3915
  %v3940 = vmax.f32 %v3682, %v3916
  %v3941 = vmax.f32 %v3683, %v3917
  %v3942 = vmax.f32 %v3684, %v3918
  %v3943 = vmax.f32 %v3685, %v3919
  %v3944 = vmax.f32 %v3686, %v3920
  %v3945 = vmax.f32 %v3687, %v3921
  %v3946 = vmax.f32 %v3688, %v3922
  %v3947 = vmax.f32 %v3689, %v3923
  %v3948 = vmax.f32 %v3690, %v3924
  %v3949 = vmax.f32 %v3691, %v3925
  %v3950 = vmax.f32 %v3692, %v3926
  %v3951 = vmax.f32 %v3927, %v3928
  %v3952 = vmax.f32 %v3929, %v3930
  %v3953 = vmax.f32 %v3931, %v3932
  %v3954 = vmax.f32 %v3933, %v3934
  %v3955 = vmax.f32 %v3935, %v3936
  %v3956 = vmax.f32 %v3937, %v3938
  %v3957 = vmax.f32 %v3939, %v3940
  %v3958 = vmax.f32 %v3941, %v3942
  %v3959 = vmax.f32 %v3943, %v3944
  %v3960 = vmax.f32 %v3945, %v3946
  %v3961 = vmax.f32 %v3947, %v3948
  %v3962 = vmax.f32 %v3949, %v3950
  %v3963 = vpack.c.bf16 %v3952, %v3951
  %v3964 = vpack.c.bf16 %v3954, %v3953
  %v3965 = vpack.c.bf16 %v3956, %v3955
  %v3966 = vpack.c.bf16 %v3958, %v3957
  %v3967 = vpack.c.bf16 %v3960, %v3959
  %v3968 = vpack.c.bf16 %v3962, %v3961
  %s3969 = scalar_lea.vmem %s0, 224
  %v3970 = vld [vmem:[%s3969] sm:$0xf]
  %v3971 = vld [vmem:[%s3969 + $0x4] sm:$0xf]
  %v3972 = vld [vmem:[%s3969 + $0x8] sm:$0xf]
  %v3973 = vld [vmem:[%s3969 + $0xc] sm:$0xf]
  %v3974 = vld [vmem:[%s3969 + $0x10] sm:$0xf]
  %v3975 = vld [vmem:[%s3969 + $0x14] sm:$0xf]
  %v3976 = vld [vmem:[%s3969 + $0x18] sm:$0xf]
  %v3977 = vld [vmem:[%s3969 + $0x1c] sm:$0xf]
  %v3978 = vld [vmem:[%s3969 + $0x20] sm:$0xf]
  %v3979 = vld [vmem:[%s3969 + $0x24] sm:$0xf]
  %v3980 = vld [vmem:[%s3969 + $0x28] sm:$0xf]
  %v3981 = vld [vmem:[%s3969 + $0x2c] sm:$0xf]
  %v3982 = vld [vmem:[%s3969 + $0x30] sm:$0xf]
  %v3983 = vld [vmem:[%s3969 + $0x34] sm:$0xf]
  %v3984 = vld [vmem:[%s3969 + $0x38] sm:$0xf]
  %v3985 = vld [vmem:[%s3969 + $0x3c] sm:$0xf]
  %v3986 = vld [vmem:[%s3969 + $0x40] sm:$0xf]
  %v3987 = vld [vmem:[%s3969 + $0x44] sm:$0xf]
  %v3988 = vld [vmem:[%s3969 + $0x48] sm:$0xf]
  %v3989 = vld [vmem:[%s3969 + $0x4c] sm:$0xf]
  %v4010 = vunpack.c.l.b16 %v3970
  %v4011 = vunpack.c.l.b16 %v3971
  %v4012 = vunpack.c.l.b16 %v3972
  %v4013 = vunpack.c.l.b16 %v3973
  %v4014 = vunpack.c.l.b16 %v3974
  %v4015 = vunpack.c.l.b16 %v3975
  %v4016 = vunpack.c.l.b16 %v3976
  %v4017 = vunpack.c.l.b16 %v3977
  %v4018 = vunpack.c.l.b16 %v3978
  %v4019 = vunpack.c.l.b16 %v3979
  %v4020 = vunpack.c.l.b16 %v3980
  %v4021 = vunpack.c.l.b16 %v3981
  %v4022 = vunpack.c.l.b16 %v3982
  %v4023 = vunpack.c.l.b16 %v3983
  %v4024 = vunpack.c.l.b16 %v3984
  %v4025 = vunpack.c.l.b16 %v3985
  %v4026 = vunpack.c.l.b16 %v3986
  %v4027 = vunpack.c.l.b16 %v3987
  %v4028 = vunpack.c.l.b16 %v3988
  %v4029 = vunpack.c.l.b16 %v3989
  %v4030 = vpack.c.b16 %v4011, %v4010
  %v4031 = vpack.c.b16 %v4013, %v4012
  %v4032 = vpack.c.b16 %v4015, %v4014
  %v4033 = vpack.c.b16 %v4017, %v4016
  %v4034 = vpack.c.b16 %v4019, %v4018
  %v4035 = vpack.c.b16 %v4021, %v4020
  %v4036 = vpack.c.b16 %v4023, %v4022
  %v4037 = vpack.c.b16 %v4025, %v4024
  %v4038 = vpack.c.b16 %v4027, %v4026
  %v4039 = vpack.c.b16 %v4029, %v4028
  %4050 = vmatprep.subr.bf16.mxu0 0
  %4051 = vmatpush1.bf16.msra.mxu0 %v4030
  %4052 = vmatprep.subr.bf16.mxu0 0
  %4053 = vmatpush1.bf16.msra.mxu0 %v4031
  %4054 = vmatprep.subr.bf16.mxu0 0
  %4055 = vmatpush1.bf16.msra.mxu0 %v4032
  %4056 = vmatprep.subr.bf16.mxu0 0
  %4057 = vmatpush1.bf16.msra.mxu0 %v4033
  %4058 = vmatprep.subr.bf16.mxu0 0
  %4059 = vmatpush1.bf16.msra.mxu0 %v4034
  %4060 = vmatprep.subr.bf16.mxu0 0
  %4061 = vmatpush1.bf16.msra.mxu0 %v4035
  %4062 = vmatprep.subr.bf16.mxu0 0
  %4063 = vmatpush1.bf16.msra.mxu0 %v4036
  %4064 = vmatprep.subr.bf16.mxu0 0
  %4065 = vmatpush1.bf16.msra.mxu0 %v4037
  %4066 = vmatprep.subr.bf16.mxu0 0
  %4067 = vmatpush1.bf16.msra.mxu0 %v4038
  %4068 = vmatprep.subr.bf16.mxu0 0
  %4069 = vmatpush1.bf16.msra.mxu0 %v4039
  %4070 = vmatprep.subr.bf16.mxu0 0
  %4071 = vmatpush1.bf16.msra.mxu0 0
  %4072 = vmatprep.subr.bf16.mxu0 0
  %4073 = vmatpush1.bf16.msra.mxu0 0
  %4074 = vmatprep.subr.bf16.mxu0 0
  %4075 = vmatpush1.bf16.msra.mxu0 0
  %4076 = vmatprep.subr.bf16.mxu0 0
  %4077 = vmatpush1.bf16.msra.mxu0 0
  %4078 = vmatprep.subr.bf16.mxu0 0
  %4079 = vmatpush1.bf16.msra.mxu0 0
  %4080 = vmatprep.subr.bf16.mxu0 0
  %4081 = vmatpush1.bf16.msra.mxu0 0
  %4082 = vmatprep.mubr.bf16.mxu0 %v445
  %4083 = vmatmul.mubr.bf16.gmra.mrb[0].mxu0 %v347
  %v4084 = vpop.f32.mrb[0].mxu0
  %v4085 = vadd.f32 %v158, %v4084
  %v4086 = vpop.f32.mrb[0].mxu0
  %v4087 = vpop.f32.mrb[0].mxu0
  %v4088 = vadd.f32 %v163, %v4087
  %v4089 = vpop.f32.mrb[0].mxu0
  %4090 = vmatprep.mubr.bf16.mxu0 %v448
  %4091 = vmatmul.mubr.bf16.gmra.mrb[0].mxu0 %v349
  %v4092 = vpop.f32.mrb[0].mxu0
  %v4093 = vadd.f32 %v168, %v4092
  %v4094 = vpop.f32.mrb[0].mxu0
  %v4095 = vpop.f32.mrb[0].mxu0
  %v4096 = vadd.f32 %v173, %v4095
  %v4097 = vpop.f32.mrb[0].mxu0
  %4098 = vmatprep.mubr.bf16.mxu0 %v451
  %4099 = vmatmul.mubr.bf16.gmra.mrb[0].mxu0 %v351
  %v4100 = vpop.f32.mrb[0].mxu0
  %v4101 = vadd.f32 %v178, %v4100
  %v4102 = vpop.f32.mrb[0].mxu0
  %v4103 = vpop.f32.mrb[0].mxu0
  %v4104 = vadd.f32 %v183, %v4103
  %v4105 = vpop.f32.mrb[0].mxu0
  %4106 = vmatprep.mubr.bf16.mxu0 %v454
  %4107 = vmatmul.mubr.bf16.gmra.mrb[0].mxu0 %v353
  %v4108 = vpop.f32.mrb[0].mxu0
  %v4109 = vadd.f32 %v188, %v4108
  %v4110 = vpop.f32.mrb[0].mxu0
  %v4111 = vpop.f32.mrb[0].mxu0
  %v4112 = vadd.f32 %v193, %v4111
  %v4113 = vpop.f32.mrb[0].mxu0
  %4114 = vmatprep.mubr.bf16.mxu0 %v457
  %4115 = vmatmul.mubr.bf16.gmra.mrb[0].mxu0 %v355
  %v4116 = vpop.f32.mrb[0].mxu0
  %v4117 = vadd.f32 %v198, %v4116
  %v4118 = vpop.f32.mrb[0].mxu0
  %v4119 = vpop.f32.mrb[0].mxu0
  %v4120 = vadd.f32 %v203, %v4119
  %v4121 = vpop.f32.mrb[0].mxu0
  %4122 = vmatprep.mubr.bf16.mxu0 %v460
  %4123 = vmatmul.mubr.bf16.gmra.mrb[0].mxu0 %v357
  %v4124 = vpop.f32.mrb[0].mxu0
  %v4125 = vadd.f32 %v208, %v4124
  %v4126 = vpop.f32.mrb[0].mxu0
  %v4127 = vpop.f32.mrb[0].mxu0
  %v4128 = vadd.f32 %v213, %v4127
  %v4129 = vpop.f32.mrb[0].mxu0
  %4130 = vmatprep.mubr.bf16.mxu0 %v463
  %4131 = vmatmul.mubr.bf16.gmra.mrb[0].mxu0 %v359
  %v4132 = vpop.f32.mrb[0].mxu0
  %v4133 = vadd.f32 %v218, %v4132
  %v4134 = vpop.f32.mrb[0].mxu0
  %v4135 = vpop.f32.mrb[0].mxu0
  %v4136 = vadd.f32 %v223, %v4135
  %v4137 = vpop.f32.mrb[0].mxu0
  %4138 = vmatprep.mubr.bf16.mxu0 %v466
  %4139 = vmatmul.mubr.bf16.gmra.mrb[0].mxu0 %v361
  %v4140 = vpop.f32.mrb[0].mxu0
  %v4141 = vadd.f32 %v228, %v4140
  %v4142 = vpop.f32.mrb[0].mxu0
  %v4143 = vpop.f32.mrb[0].mxu0
  %v4144 = vadd.f32 %v233, %v4143
  %v4145 = vpop.f32.mrb[0].mxu0
  %4146 = vmatprep.mubr.bf16.mxu0 %v469
  %4147 = vmatmul.mubr.bf16.gmra.mrb[0].mxu0 %v363
  %v4148 = vpop.f32.mrb[0].mxu0
  %v4149 = vadd.f32 %v238, %v4148
  %v4150 = vpop.f32.mrb[0].mxu0
  %v4151 = vpop.f32.mrb[0].mxu0
  %v4152 = vadd.f32 %v243, %v4151
  %v4153 = vpop.f32.mrb[0].mxu0
  %4154 = vmatprep.mubr.bf16.mxu0 %v472
  %4155 = vmatmul.mubr.bf16.gmra.mrb[0].mxu0 %v365
  %v4156 = vpop.f32.mrb[0].mxu0
  %v4157 = vadd.f32 %v248, %v4156
  %v4158 = vpop.f32.mrb[0].mxu0
  %v4159 = vpop.f32.mrb[0].mxu0
  %v4160 = vadd.f32 %v253, %v4159
  %v4161 = vpop.f32.mrb[0].mxu0
  %4162 = vmatprep.mubr.bf16.mxu0 %v475
  %4163 = vmatmul.mubr.bf16.gmra.mrb[0].mxu0 %v367
  %v4164 = vpop.f32.mrb[0].mxu0
  %v4165 = vadd.f32 %v258, %v4164
  %v4166 = vpop.f32.mrb[0].mxu0
  %v4167 = vpop.f32.mrb[0].mxu0
  %v4168 = vadd.f32 %v263, %v4167
  %v4169 = vpop.f32.mrb[0].mxu0
  %4170 = vmatprep.mubr.bf16.mxu0 %v478
  %4171 = vmatmul.mubr.bf16.gmra.mrb[0].mxu0 %v369
  %v4172 = vpop.f32.mrb[0].mxu0
  %v4173 = vadd.f32 %v268, %v4172
  %v4174 = vpop.f32.mrb[0].mxu0
  %v4175 = vpop.f32.mrb[0].mxu0
  %v4176 = vadd.f32 %v273, %v4175
  %v4177 = vpop.f32.mrb[0].mxu0
  %4178 = vdwg.mxu0
  %v4179 = vmax.f32 %v4085, 0.0
  %v4180 = vmax.f32 %v4088, 0.0
  %v4181 = vmax.f32 %v4093, 0.0
  %v4182 = vmax.f32 %v4096, 0.0
  %v4183 = vmax.f32 %v4101, 0.0
  %v4184 = vmax.f32 %v4104, 0.0
  %v4185 = vmax.f32 %v4109, 0.0
  %v4186 = vmax.f32 %v4112, 0.0
  %v4187 = vmax.f32 %v4117, 0.0
  %v4188 = vmax.f32 %v4120, 0.0
  %v4189 = vmax.f32 %v4125, 0.0
  %v4190 = vmax.f32 %v4128, 0.0
  %v4191 = vmax.f32 %v4133, 0.0
  %v4192 = vmax.f32 %v4136, 0.0
  %v4193 = vmax.f32 %v4141, 0.0
  %v4194 = vmax.f32 %v4144, 0.0
  %v4195 = vmax.f32 %v4149, 0.0
  %v4196 = vmax.f32 %v4152, 0.0
  %v4197 = vmax.f32 %v4157, 0.0
  %v4198 = vmax.f32 %v4160, 0.0
  %v4199 = vmax.f32 %v4165, 0.0
  %v4200 = vmax.f32 %v4168, 0.0
  %v4201 = vmax.f32 %v4173, 0.0
  %v4202 = vmax.f32 %v4176, 0.0
  %s4203 = scalar_lea.vmem %s0, 240
  %v4204 = vld [vmem:[%s4203] sm:$0xf]
  %v4205 = vld [vmem:[%s4203 + $0x4] sm:$0xf]
  %v4206 = vld [vmem:[%s4203 + $0x8] sm:$0xf]
  %v4207 = vld [vmem:[%s4203 + $0xc] sm:$0xf]
  %v4208 = vld [vmem:[%s4203 + $0x10] sm:$0xf]
  %v4209 = vld [vmem:[%s4203 + $0x14] sm:$0xf]
  %v4210 = vld [vmem:[%s4203 + $0x18] sm:$0xf]
  %v4211 = vld [vmem:[%s4203 + $0x1c] sm:$0xf]
  %v4212 = vld [vmem:[%s4203 + $0x20] sm:$0xf]
  %v4213 = vld [vmem:[%s4203 + $0x24] sm:$0xf]
  %v4214 = vld [vmem:[%s4203 + $0x28] sm:$0xf]
  %v4215 = vld [vmem:[%s4203 + $0x2c] sm:$0xf]
  %v4216 = vld [vmem:[%s4203 + $0x30] sm:$0xf]
  %v4217 = vld [vmem:[%s4203 + $0x34] sm:$0xf]
  %v4218 = vld [vmem:[%s4203 + $0x38] sm:$0xf]
  %v4219 = vld [vmem:[%s4203 + $0x3c] sm:$0xf]
  %v4220 = vld [vmem:[%s4203 + $0x40] sm:$0xf]
  %v4221 = vld [vmem:[%s4203 + $0x44] sm:$0xf]
  %v4222 = vld [vmem:[%s4203 + $0x48] sm:$0xf]
  %v4223 = vld [vmem:[%s4203 + $0x4c] sm:$0xf]
  %v4244 = vunpack.c.l.b16 %v4204
  %v4245 = vunpack.c.l.b16 %v4205
  %v4246 = vunpack.c.l.b16 %v4206
  %v4247 = vunpack.c.l.b16 %v4207
  %v4248 = vunpack.c.l.b16 %v4208
  %v4249 = vunpack.c.l.b16 %v4209
  %v4250 = vunpack.c.l.b16 %v4210
  %v4251 = vunpack.c.l.b16 %v4211
  %v4252 = vunpack.c.l.b16 %v4212
  %v4253 = vunpack.c.l.b16 %v4213
  %v4254 = vunpack.c.l.b16 %v4214
  %v4255 = vunpack.c.l.b16 %v4215
  %v4256 = vunpack.c.l.b16 %v4216
  %v4257 = vunpack.c.l.b16 %v4217
  %v4258 = vunpack.c.l.b16 %v4218
  %v4259 = vunpack.c.l.b16 %v4219
  %v4260 = vunpack.c.l.b16 %v4220
  %v4261 = vunpack.c.l.b16 %v4221
  %v4262 = vunpack.c.l.b16 %v4222
  %v4263 = vunpack.c.l.b16 %v4223
  %v4264 = vpack.c.b16 %v4245, %v4244
  %v4265 = vpack.c.b16 %v4247, %v4246
  %v4266 = vpack.c.b16 %v4249, %v4248
  %v4267 = vpack.c.b16 %v4251, %v4250
  %v4268 = vpack.c.b16 %v4253, %v4252
  %v4269 = vpack.c.b16 %v4255, %v4254
  %v4270 = vpack.c.b16 %v4257, %v4256
  %v4271 = vpack.c.b16 %v4259, %v4258
  %v4272 = vpack.c.b16 %v4261, %v4260
  %v4273 = vpack.c.b16 %v4263, %v4262
  %4284 = vmatprep.subr.bf16.mxu0 0
  %4285 = vmatpush1.bf16.msra.mxu0 %v4264
  %4286 = vmatprep.subr.bf16.mxu0 0
  %4287 = vmatpush1.bf16.msra.mxu0 %v4265
  %4288 = vmatprep.subr.bf16.mxu0 0
  %4289 = vmatpush1.bf16.msra.mxu0 %v4266
  %4290 = vmatprep.subr.bf16.mxu0 0
  %4291 = vmatpush1.bf16.msra.mxu0 %v4267
  %4292 = vmatprep.subr.bf16.mxu0 0
  %4293 = vmatpush1.bf16.msra.mxu0 %v4268
  %4294 = vmatprep.subr.bf16.mxu0 0
  %4295 = vmatpush1.bf16.msra.mxu0 %v4269
  %4296 = vmatprep.subr.bf16.mxu0 0
  %4297 = vmatpush1.bf16.msra.mxu0 %v4270
  %4298 = vmatprep.subr.bf16.mxu0 0
  %4299 = vmatpush1.bf16.msra.mxu0 %v4271
  %4300 = vmatprep.subr.bf16.mxu0 0
  %4301 = vmatpush1.bf16.msra.mxu0 %v4272
  %4302 = vmatprep.subr.bf16.mxu0 0
  %4303 = vmatpush1.bf16.msra.mxu0 %v4273
  %4304 = vmatprep.subr.bf16.mxu0 0
  %4305 = vmatpush1.bf16.msra.mxu0 0
  %4306 = vmatprep.subr.bf16.mxu0 0
  %4307 = vmatpush1.bf16.msra.mxu0 0
  %4308 = vmatprep.subr.bf16.mxu0 0
  %4309 = vmatpush1.bf16.msra.mxu0 0
  %4310 = vmatprep.subr.bf16.mxu0 0
  %4311 = vmatpush1.bf16.msra.mxu0 0
  %4312 = vmatprep.subr.bf16.mxu0 0
  %4313 = vmatpush1.bf16.msra.mxu0 0
  %4314 = vmatprep.subr.bf16.mxu0 0
  %4315 = vmatpush1.bf16.msra.mxu0 0
  %4316 = vmatprep.mubr.bf16.mxu0 %v445
  %4317 = vmatmul.mubr.bf16.gmra.mrb[0].mxu0 %v347
  %v4318 = vpop.f32.mrb[0].mxu0
  %v4319 = vadd.f32 %v158, %v4318
  %v4320 = vpop.f32.mrb[0].mxu0
  %v4321 = vpop.f32.mrb[0].mxu0
  %v4322 = vadd.f32 %v163, %v4321
  %v4323 = vpop.f32.mrb[0].mxu0
  %4324 = vmatprep.mubr.bf16.mxu0 %v448
  %4325 = vmatmul.mubr.bf16.gmra.mrb[0].mxu0 %v349
  %v4326 = vpop.f32.mrb[0].mxu0
  %v4327 = vadd.f32 %v168, %v4326
  %v4328 = vpop.f32.mrb[0].mxu0
  %v4329 = vpop.f32.mrb[0].mxu0
  %v4330 = vadd.f32 %v173, %v4329
  %v4331 = vpop.f32.mrb[0].mxu0
  %4332 = vmatprep.mubr.bf16.mxu0 %v451
  %4333 = vmatmul.mubr.bf16.gmra.mrb[0].mxu0 %v351
  %v4334 = vpop.f32.mrb[0].mxu0
  %v4335 = vadd.f32 %v178, %v4334
  %v4336 = vpop.f32.mrb[0].mxu0
  %v4337 = vpop.f32.mrb[0].mxu0
  %v4338 = vadd.f32 %v183, %v4337
  %v4339 = vpop.f32.mrb[0].mxu0
  %4340 = vmatprep.mubr.bf16.mxu0 %v454
  %4341 = vmatmul.mubr.bf16.gmra.mrb[0].mxu0 %v353
  %v4342 = vpop.f32.mrb[0].mxu0
  %v4343 = vadd.f32 %v188, %v4342
  %v4344 = vpop.f32.mrb[0].mxu0
  %v4345 = vpop.f32.mrb[0].mxu0
  %v4346 = vadd.f32 %v193, %v4345
  %v4347 = vpop.f32.mrb[0].mxu0
  %4348 = vmatprep.mubr.bf16.mxu0 %v457
  %4349 = vmatmul.mubr.bf16.gmra.mrb[0].mxu0 %v355
  %v4350 = vpop.f32.mrb[0].mxu0
  %v4351 = vadd.f32 %v198, %v4350
  %v4352 = vpop.f32.mrb[0].mxu0
  %v4353 = vpop.f32.mrb[0].mxu0
  %v4354 = vadd.f32 %v203, %v4353
  %v4355 = vpop.f32.mrb[0].mxu0
  %4356 = vmatprep.mubr.bf16.mxu0 %v460
  %4357 = vmatmul.mubr.bf16.gmra.mrb[0].mxu0 %v357
  %v4358 = vpop.f32.mrb[0].mxu0
  %v4359 = vadd.f32 %v208, %v4358
  %v4360 = vpop.f32.mrb[0].mxu0
  %v4361 = vpop.f32.mrb[0].mxu0
  %v4362 = vadd.f32 %v213, %v4361
  %v4363 = vpop.f32.mrb[0].mxu0
  %4364 = vmatprep.mubr.bf16.mxu0 %v463
  %4365 = vmatmul.mubr.bf16.gmra.mrb[0].mxu0 %v359
  %v4366 = vpop.f32.mrb[0].mxu0
  %v4367 = vadd.f32 %v218, %v4366
  %v4368 = vpop.f32.mrb[0].mxu0
  %v4369 = vpop.f32.mrb[0].mxu0
  %v4370 = vadd.f32 %v223, %v4369
  %v4371 = vpop.f32.mrb[0].mxu0
  %4372 = vmatprep.mubr.bf16.mxu0 %v466
  %4373 = vmatmul.mubr.bf16.gmra.mrb[0].mxu0 %v361
  %v4374 = vpop.f32.mrb[0].mxu0
  %v4375 = vadd.f32 %v228, %v4374
  %v4376 = vpop.f32.mrb[0].mxu0
  %v4377 = vpop.f32.mrb[0].mxu0
  %v4378 = vadd.f32 %v233, %v4377
  %v4379 = vpop.f32.mrb[0].mxu0
  %4380 = vmatprep.mubr.bf16.mxu0 %v469
  %4381 = vmatmul.mubr.bf16.gmra.mrb[0].mxu0 %v363
  %v4382 = vpop.f32.mrb[0].mxu0
  %v4383 = vadd.f32 %v238, %v4382
  %v4384 = vpop.f32.mrb[0].mxu0
  %v4385 = vpop.f32.mrb[0].mxu0
  %v4386 = vadd.f32 %v243, %v4385
  %v4387 = vpop.f32.mrb[0].mxu0
  %4388 = vmatprep.mubr.bf16.mxu0 %v472
  %4389 = vmatmul.mubr.bf16.gmra.mrb[0].mxu0 %v365
  %v4390 = vpop.f32.mrb[0].mxu0
  %v4391 = vadd.f32 %v248, %v4390
  %v4392 = vpop.f32.mrb[0].mxu0
  %v4393 = vpop.f32.mrb[0].mxu0
  %v4394 = vadd.f32 %v253, %v4393
  %v4395 = vpop.f32.mrb[0].mxu0
  %4396 = vmatprep.mubr.bf16.mxu0 %v475
  %4397 = vmatmul.mubr.bf16.gmra.mrb[0].mxu0 %v367
  %v4398 = vpop.f32.mrb[0].mxu0
  %v4399 = vadd.f32 %v258, %v4398
  %v4400 = vpop.f32.mrb[0].mxu0
  %v4401 = vpop.f32.mrb[0].mxu0
  %v4402 = vadd.f32 %v263, %v4401
  %v4403 = vpop.f32.mrb[0].mxu0
  %4404 = vmatprep.mubr.bf16.mxu0 %v478
  %4405 = vmatmul.mubr.bf16.gmra.mrb[0].mxu0 %v369
  %v4406 = vpop.f32.mrb[0].mxu0
  %v4407 = vadd.f32 %v268, %v4406
  %v4408 = vpop.f32.mrb[0].mxu0
  %v4409 = vpop.f32.mrb[0].mxu0
  %v4410 = vadd.f32 %v273, %v4409
  %v4411 = vpop.f32.mrb[0].mxu0
  %4412 = vdwg.mxu0
  %v4413 = vmax.f32 %v4319, 0.0
  %v4414 = vmax.f32 %v4322, 0.0
  %v4415 = vmax.f32 %v4327, 0.0
  %v4416 = vmax.f32 %v4330, 0.0
  %v4417 = vmax.f32 %v4335, 0.0
  %v4418 = vmax.f32 %v4338, 0.0
  %v4419 = vmax.f32 %v4343, 0.0
  %v4420 = vmax.f32 %v4346, 0.0
  %v4421 = vmax.f32 %v4351, 0.0
  %v4422 = vmax.f32 %v4354, 0.0
  %v4423 = vmax.f32 %v4359, 0.0
  %v4424 = vmax.f32 %v4362, 0.0
  %v4425 = vmax.f32 %v4367, 0.0
  %v4426 = vmax.f32 %v4370, 0.0
  %v4427 = vmax.f32 %v4375, 0.0
  %v4428 = vmax.f32 %v4378, 0.0
  %v4429 = vmax.f32 %v4383, 0.0
  %v4430 = vmax.f32 %v4386, 0.0
  %v4431 = vmax.f32 %v4391, 0.0
  %v4432 = vmax.f32 %v4394, 0.0
  %v4433 = vmax.f32 %v4399, 0.0
  %v4434 = vmax.f32 %v4402, 0.0
  %v4435 = vmax.f32 %v4407, 0.0
  %v4436 = vmax.f32 %v4410, 0.0
  %v4437 = vmax.f32 %v4179, %v4413
  %v4438 = vmax.f32 %v4180, %v4414
  %v4439 = vmax.f32 %v4181, %v4415
  %v4440 = vmax.f32 %v4182, %v4416
  %v4441 = vmax.f32 %v4183, %v4417
  %v4442 = vmax.f32 %v4184, %v4418
  %v4443 = vmax.f32 %v4185, %v4419
  %v4444 = vmax.f32 %v4186, %v4420
  %v4445 = vmax.f32 %v4187, %v4421
  %v4446 = vmax.f32 %v4188, %v4422
  %v4447 = vmax.f32 %v4189, %v4423
  %v4448 = vmax.f32 %v4190, %v4424
  %v4449 = vmax.f32 %v4191, %v4425
  %v4450 = vmax.f32 %v4192, %v4426
  %v4451 = vmax.f32 %v4193, %v4427
  %v4452 = vmax.f32 %v4194, %v4428
  %v4453 = vmax.f32 %v4195, %v4429
  %v4454 = vmax.f32 %v4196, %v4430
  %v4455 = vmax.f32 %v4197, %v4431
  %v4456 = vmax.f32 %v4198, %v4432
  %v4457 = vmax.f32 %v4199, %v4433
  %v4458 = vmax.f32 %v4200, %v4434
  %v4459 = vmax.f32 %v4201, %v4435
  %v4460 = vmax.f32 %v4202, %v4436
  %v4461 = vmax.f32 %v4437, %v4438
  %v4462 = vmax.f32 %v4439, %v4440
  %v4463 = vmax.f32 %v4441, %v4442
  %v4464 = vmax.f32 %v4443, %v4444
  %v4465 = vmax.f32 %v4445, %v4446
  %v4466 = vmax.f32 %v4447, %v4448
  %v4467 = vmax.f32 %v4449, %v4450
  %v4468 = vmax.f32 %v4451, %v4452
  %v4469 = vmax.f32 %v4453, %v4454
  %v4470 = vmax.f32 %v4455, %v4456
  %v4471 = vmax.f32 %v4457, %v4458
  %v4472 = vmax.f32 %v4459, %v4460
  %v4473 = vpack.c.bf16 %v4462, %v4461
  %v4474 = vpack.c.bf16 %v4464, %v4463
  %v4475 = vpack.c.bf16 %v4466, %v4465
  %v4476 = vpack.c.bf16 %v4468, %v4467
  %v4477 = vpack.c.bf16 %v4470, %v4469
  %v4478 = vpack.c.bf16 %v4472, %v4471
  %s4479 = scalar_lea.vmem %s0, 256
  %v4480 = vld [vmem:[%s4479] sm:$0xf]
  %v4481 = vld [vmem:[%s4479 + $0x4] sm:$0xf]
  %v4482 = vld [vmem:[%s4479 + $0x8] sm:$0xf]
  %v4483 = vld [vmem:[%s4479 + $0xc] sm:$0xf]
  %v4484 = vld [vmem:[%s4479 + $0x10] sm:$0xf]
  %v4485 = vld [vmem:[%s4479 + $0x14] sm:$0xf]
  %v4486 = vld [vmem:[%s4479 + $0x18] sm:$0xf]
  %v4487 = vld [vmem:[%s4479 + $0x1c] sm:$0xf]
  %v4488 = vld [vmem:[%s4479 + $0x20] sm:$0xf]
  %v4489 = vld [vmem:[%s4479 + $0x24] sm:$0xf]
  %v4490 = vld [vmem:[%s4479 + $0x28] sm:$0xf]
  %v4491 = vld [vmem:[%s4479 + $0x2c] sm:$0xf]
  %v4492 = vld [vmem:[%s4479 + $0x30] sm:$0xf]
  %v4493 = vld [vmem:[%s4479 + $0x34] sm:$0xf]
  %v4494 = vld [vmem:[%s4479 + $0x38] sm:$0xf]
  %v4495 = vld [vmem:[%s4479 + $0x3c] sm:$0xf]
  %v4496 = vld [vmem:[%s4479 + $0x40] sm:$0xf]
  %v4497 = vld [vmem:[%s4479 + $0x44] sm:$0xf]
  %v4498 = vld [vmem:[%s4479 + $0x48] sm:$0xf]
  %v4499 = vld [vmem:[%s4479 + $0x4c] sm:$0xf]
  %v4520 = vunpack.c.l.b16 %v4480
  %v4521 = vunpack.c.l.b16 %v4481
  %v4522 = vunpack.c.l.b16 %v4482
  %v4523 = vunpack.c.l.b16 %v4483
  %v4524 = vunpack.c.l.b16 %v4484
  %v4525 = vunpack.c.l.b16 %v4485
  %v4526 = vunpack.c.l.b16 %v4486
  %v4527 = vunpack.c.l.b16 %v4487
  %v4528 = vunpack.c.l.b16 %v4488
  %v4529 = vunpack.c.l.b16 %v4489
  %v4530 = vunpack.c.l.b16 %v4490
  %v4531 = vunpack.c.l.b16 %v4491
  %v4532 = vunpack.c.l.b16 %v4492
  %v4533 = vunpack.c.l.b16 %v4493
  %v4534 = vunpack.c.l.b16 %v4494
  %v4535 = vunpack.c.l.b16 %v4495
  %v4536 = vunpack.c.l.b16 %v4496
  %v4537 = vunpack.c.l.b16 %v4497
  %v4538 = vunpack.c.l.b16 %v4498
  %v4539 = vunpack.c.l.b16 %v4499
  %v4540 = vpack.c.b16 %v4521, %v4520
  %v4541 = vpack.c.b16 %v4523, %v4522
  %v4542 = vpack.c.b16 %v4525, %v4524
  %v4543 = vpack.c.b16 %v4527, %v4526
  %v4544 = vpack.c.b16 %v4529, %v4528
  %v4545 = vpack.c.b16 %v4531, %v4530
  %v4546 = vpack.c.b16 %v4533, %v4532
  %v4547 = vpack.c.b16 %v4535, %v4534
  %v4548 = vpack.c.b16 %v4537, %v4536
  %v4549 = vpack.c.b16 %v4539, %v4538
  %4560 = vmatprep.subr.bf16.mxu0 0
  %4561 = vmatpush1.bf16.msra.mxu0 %v4540
  %4562 = vmatprep.subr.bf16.mxu0 0
  %4563 = vmatpush1.bf16.msra.mxu0 %v4541
  %4564 = vmatprep.subr.bf16.mxu0 0
  %4565 = vmatpush1.bf16.msra.mxu0 %v4542
  %4566 = vmatprep.subr.bf16.mxu0 0
  %4567 = vmatpush1.bf16.msra.mxu0 %v4543
  %4568 = vmatprep.subr.bf16.mxu0 0
  %4569 = vmatpush1.bf16.msra.mxu0 %v4544
  %4570 = vmatprep.subr.bf16.mxu0 0
  %4571 = vmatpush1.bf16.msra.mxu0 %v4545
  %4572 = vmatprep.subr.bf16.mxu0 0
  %4573 = vmatpush1.bf16.msra.mxu0 %v4546
  %4574 = vmatprep.subr.bf16.mxu0 0
  %4575 = vmatpush1.bf16.msra.mxu0 %v4547
  %4576 = vmatprep.subr.bf16.mxu0 0
  %4577 = vmatpush1.bf16.msra.mxu0 %v4548
  %4578 = vmatprep.subr.bf16.mxu0 0
  %4579 = vmatpush1.bf16.msra.mxu0 %v4549
  %4580 = vmatprep.subr.bf16.mxu0 0
  %4581 = vmatpush1.bf16.msra.mxu0 0
  %4582 = vmatprep.subr.bf16.mxu0 0
  %4583 = vmatpush1.bf16.msra.mxu0 0
  %4584 = vmatprep.subr.bf16.mxu0 0
  %4585 = vmatpush1.bf16.msra.mxu0 0
  %4586 = vmatprep.subr.bf16.mxu0 0
  %4587 = vmatpush1.bf16.msra.mxu0 0
  %4588 = vmatprep.subr.bf16.mxu0 0
  %4589 = vmatpush1.bf16.msra.mxu0 0
  %4590 = vmatprep.subr.bf16.mxu0 0
  %4591 = vmatpush1.bf16.msra.mxu0 0
  %4592 = vmatprep.mubr.bf16.mxu0 %v445
  %4593 = vmatmul.mubr.bf16.gmra.mrb[0].mxu0 %v347
  %v4594 = vpop.f32.mrb[0].mxu0
  %v4595 = vadd.f32 %v158, %v4594
  %v4596 = vpop.f32.mrb[0].mxu0
  %v4597 = vpop.f32.mrb[0].mxu0
  %v4598 = vadd.f32 %v163, %v4597
  %v4599 = vpop.f32.mrb[0].mxu0
  %4600 = vmatprep.mubr.bf16.mxu0 %v448
  %4601 = vmatmul.mubr.bf16.gmra.mrb[0].mxu0 %v349
  %v4602 = vpop.f32.mrb[0].mxu0
  %v4603 = vadd.f32 %v168, %v4602
  %v4604 = vpop.f32.mrb[0].mxu0
  %v4605 = vpop.f32.mrb[0].mxu0
  %v4606 = vadd.f32 %v173, %v4605
  %v4607 = vpop.f32.mrb[0].mxu0
  %4608 = vmatprep.mubr.bf16.mxu0 %v451
  %4609 = vmatmul.mubr.bf16.gmra.mrb[0].mxu0 %v351
  %v4610 = vpop.f32.mrb[0].mxu0
  %v4611 = vadd.f32 %v178, %v4610
  %v4612 = vpop.f32.mrb[0].mxu0
  %v4613 = vpop.f32.mrb[0].mxu0
  %v4614 = vadd.f32 %v183, %v4613
  %v4615 = vpop.f32.mrb[0].mxu0
  %4616 = vmatprep.mubr.bf16.mxu0 %v454
  %4617 = vmatmul.mubr.bf16.gmra.mrb[0].mxu0 %v353
  %v4618 = vpop.f32.mrb[0].mxu0
  %v4619 = vadd.f32 %v188, %v4618
  %v4620 = vpop.f32.mrb[0].mxu0
  %v4621 = vpop.f32.mrb[0].mxu0
  %v4622 = vadd.f32 %v193, %v4621
  %v4623 = vpop.f32.mrb[0].mxu0
  %4624 = vmatprep.mubr.bf16.mxu0 %v457
  %4625 = vmatmul.mubr.bf16.gmra.mrb[0].mxu0 %v355
  %v4626 = vpop.f32.mrb[0].mxu0
  %v4627 = vadd.f32 %v198, %v4626
  %v4628 = vpop.f32.mrb[0].mxu0
  %v4629 = vpop.f32.mrb[0].mxu0
  %v4630 = vadd.f32 %v203, %v4629
  %v4631 = vpop.f32.mrb[0].mxu0
  %4632 = vmatprep.mubr.bf16.mxu0 %v460
  %4633 = vmatmul.mubr.bf16.gmra.mrb[0].mxu0 %v357
  %v4634 = vpop.f32.mrb[0].mxu0
  %v4635 = vadd.f32 %v208, %v4634
  %v4636 = vpop.f32.mrb[0].mxu0
  %v4637 = vpop.f32.mrb[0].mxu0
  %v4638 = vadd.f32 %v213, %v4637
  %v4639 = vpop.f32.mrb[0].mxu0
  %4640 = vmatprep.mubr.bf16.mxu0 %v463
  %4641 = vmatmul.mubr.bf16.gmra.mrb[0].mxu0 %v359
  %v4642 = vpop.f32.mrb[0].mxu0
  %v4643 = vadd.f32 %v218, %v4642
  %v4644 = vpop.f32.mrb[0].mxu0
  %v4645 = vpop.f32.mrb[0].mxu0
  %v4646 = vadd.f32 %v223, %v4645
  %v4647 = vpop.f32.mrb[0].mxu0
  %4648 = vmatprep.mubr.bf16.mxu0 %v466
  %4649 = vmatmul.mubr.bf16.gmra.mrb[0].mxu0 %v361
  %v4650 = vpop.f32.mrb[0].mxu0
  %v4651 = vadd.f32 %v228, %v4650
  %v4652 = vpop.f32.mrb[0].mxu0
  %v4653 = vpop.f32.mrb[0].mxu0
  %v4654 = vadd.f32 %v233, %v4653
  %v4655 = vpop.f32.mrb[0].mxu0
  %4656 = vmatprep.mubr.bf16.mxu0 %v469
  %4657 = vmatmul.mubr.bf16.gmra.mrb[0].mxu0 %v363
  %v4658 = vpop.f32.mrb[0].mxu0
  %v4659 = vadd.f32 %v238, %v4658
  %v4660 = vpop.f32.mrb[0].mxu0
  %v4661 = vpop.f32.mrb[0].mxu0
  %v4662 = vadd.f32 %v243, %v4661
  %v4663 = vpop.f32.mrb[0].mxu0
  %4664 = vmatprep.mubr.bf16.mxu0 %v472
  %4665 = vmatmul.mubr.bf16.gmra.mrb[0].mxu0 %v365
  %v4666 = vpop.f32.mrb[0].mxu0
  %v4667 = vadd.f32 %v248, %v4666
  %v4668 = vpop.f32.mrb[0].mxu0
  %v4669 = vpop.f32.mrb[0].mxu0
  %v4670 = vadd.f32 %v253, %v4669
  %v4671 = vpop.f32.mrb[0].mxu0
  %4672 = vmatprep.mubr.bf16.mxu0 %v475
  %4673 = vmatmul.mubr.bf16.gmra.mrb[0].mxu0 %v367
  %v4674 = vpop.f32.mrb[0].mxu0
  %v4675 = vadd.f32 %v258, %v4674
  %v4676 = vpop.f32.mrb[0].mxu0
  %v4677 = vpop.f32.mrb[0].mxu0
  %v4678 = vadd.f32 %v263, %v4677
  %v4679 = vpop.f32.mrb[0].mxu0
  %4680 = vmatprep.mubr.bf16.mxu0 %v478
  %4681 = vmatmul.mubr.bf16.gmra.mrb[0].mxu0 %v369
  %v4682 = vpop.f32.mrb[0].mxu0
  %v4683 = vadd.f32 %v268, %v4682
  %v4684 = vpop.f32.mrb[0].mxu0
  %v4685 = vpop.f32.mrb[0].mxu0
  %v4686 = vadd.f32 %v273, %v4685
  %v4687 = vpop.f32.mrb[0].mxu0
  %4688 = vdwg.mxu0
  %v4689 = vmax.f32 %v4595, 0.0
  %v4690 = vmax.f32 %v4598, 0.0
  %v4691 = vmax.f32 %v4603, 0.0
  %v4692 = vmax.f32 %v4606, 0.0
  %v4693 = vmax.f32 %v4611, 0.0
  %v4694 = vmax.f32 %v4614, 0.0
  %v4695 = vmax.f32 %v4619, 0.0
  %v4696 = vmax.f32 %v4622, 0.0
  %v4697 = vmax.f32 %v4627, 0.0
  %v4698 = vmax.f32 %v4630, 0.0
  %v4699 = vmax.f32 %v4635, 0.0
  %v4700 = vmax.f32 %v4638, 0.0
  %v4701 = vmax.f32 %v4643, 0.0
  %v4702 = vmax.f32 %v4646, 0.0
  %v4703 = vmax.f32 %v4651, 0.0
  %v4704 = vmax.f32 %v4654, 0.0
  %v4705 = vmax.f32 %v4659, 0.0
  %v4706 = vmax.f32 %v4662, 0.0
  %v4707 = vmax.f32 %v4667, 0.0
  %v4708 = vmax.f32 %v4670, 0.0
  %v4709 = vmax.f32 %v4675, 0.0
  %v4710 = vmax.f32 %v4678, 0.0
  %v4711 = vmax.f32 %v4683, 0.0
  %v4712 = vmax.f32 %v4686, 0.0
  %s4713 = scalar_lea.vmem %s0, 272
  %v4714 = vld [vmem:[%s4713] sm:$0xf]
  %v4715 = vld [vmem:[%s4713 + $0x4] sm:$0xf]
  %v4716 = vld [vmem:[%s4713 + $0x8] sm:$0xf]
  %v4717 = vld [vmem:[%s4713 + $0xc] sm:$0xf]
  %v4718 = vld [vmem:[%s4713 + $0x10] sm:$0xf]
  %v4719 = vld [vmem:[%s4713 + $0x14] sm:$0xf]
  %v4720 = vld [vmem:[%s4713 + $0x18] sm:$0xf]
  %v4721 = vld [vmem:[%s4713 + $0x1c] sm:$0xf]
  %v4722 = vld [vmem:[%s4713 + $0x20] sm:$0xf]
  %v4723 = vld [vmem:[%s4713 + $0x24] sm:$0xf]
  %v4724 = vld [vmem:[%s4713 + $0x28] sm:$0xf]
  %v4725 = vld [vmem:[%s4713 + $0x2c] sm:$0xf]
  %v4726 = vld [vmem:[%s4713 + $0x30] sm:$0xf]
  %v4727 = vld [vmem:[%s4713 + $0x34] sm:$0xf]
  %v4728 = vld [vmem:[%s4713 + $0x38] sm:$0xf]
  %v4729 = vld [vmem:[%s4713 + $0x3c] sm:$0xf]
  %v4730 = vld [vmem:[%s4713 + $0x40] sm:$0xf]
  %v4731 = vld [vmem:[%s4713 + $0x44] sm:$0xf]
  %v4732 = vld [vmem:[%s4713 + $0x48] sm:$0xf]
  %v4733 = vld [vmem:[%s4713 + $0x4c] sm:$0xf]
  %v4754 = vunpack.c.l.b16 %v4714
  %v4755 = vunpack.c.l.b16 %v4715
  %v4756 = vunpack.c.l.b16 %v4716
  %v4757 = vunpack.c.l.b16 %v4717
  %v4758 = vunpack.c.l.b16 %v4718
  %v4759 = vunpack.c.l.b16 %v4719
  %v4760 = vunpack.c.l.b16 %v4720
  %v4761 = vunpack.c.l.b16 %v4721
  %v4762 = vunpack.c.l.b16 %v4722
  %v4763 = vunpack.c.l.b16 %v4723
  %v4764 = vunpack.c.l.b16 %v4724
  %v4765 = vunpack.c.l.b16 %v4725
  %v4766 = vunpack.c.l.b16 %v4726
  %v4767 = vunpack.c.l.b16 %v4727
  %v4768 = vunpack.c.l.b16 %v4728
  %v4769 = vunpack.c.l.b16 %v4729
  %v4770 = vunpack.c.l.b16 %v4730
  %v4771 = vunpack.c.l.b16 %v4731
  %v4772 = vunpack.c.l.b16 %v4732
  %v4773 = vunpack.c.l.b16 %v4733
  %v4774 = vpack.c.b16 %v4755, %v4754
  %v4775 = vpack.c.b16 %v4757, %v4756
  %v4776 = vpack.c.b16 %v4759, %v4758
  %v4777 = vpack.c.b16 %v4761, %v4760
  %v4778 = vpack.c.b16 %v4763, %v4762
  %v4779 = vpack.c.b16 %v4765, %v4764
  %v4780 = vpack.c.b16 %v4767, %v4766
  %v4781 = vpack.c.b16 %v4769, %v4768
  %v4782 = vpack.c.b16 %v4771, %v4770
  %v4783 = vpack.c.b16 %v4773, %v4772
  %4794 = vmatprep.subr.bf16.mxu0 0
  %4795 = vmatpush1.bf16.msra.mxu0 %v4774
  %4796 = vmatprep.subr.bf16.mxu0 0
  %4797 = vmatpush1.bf16.msra.mxu0 %v4775
  %4798 = vmatprep.subr.bf16.mxu0 0
  %4799 = vmatpush1.bf16.msra.mxu0 %v4776
  %4800 = vmatprep.subr.bf16.mxu0 0
  %4801 = vmatpush1.bf16.msra.mxu0 %v4777
  %4802 = vmatprep.subr.bf16.mxu0 0
  %4803 = vmatpush1.bf16.msra.mxu0 %v4778
  %4804 = vmatprep.subr.bf16.mxu0 0
  %4805 = vmatpush1.bf16.msra.mxu0 %v4779
  %4806 = vmatprep.subr.bf16.mxu0 0
  %4807 = vmatpush1.bf16.msra.mxu0 %v4780
  %4808 = vmatprep.subr.bf16.mxu0 0
  %4809 = vmatpush1.bf16.msra.mxu0 %v4781
  %4810 = vmatprep.subr.bf16.mxu0 0
  %4811 = vmatpush1.bf16.msra.mxu0 %v4782
  %4812 = vmatprep.subr.bf16.mxu0 0
  %4813 = vmatpush1.bf16.msra.mxu0 %v4783
  %4814 = vmatprep.subr.bf16.mxu0 0
  %4815 = vmatpush1.bf16.msra.mxu0 0
  %4816 = vmatprep.subr.bf16.mxu0 0
  %4817 = vmatpush1.bf16.msra.mxu0 0
  %4818 = vmatprep.subr.bf16.mxu0 0
  %4819 = vmatpush1.bf16.msra.mxu0 0
  %4820 = vmatprep.subr.bf16.mxu0 0
  %4821 = vmatpush1.bf16.msra.mxu0 0
  %4822 = vmatprep.subr.bf16.mxu0 0
  %4823 = vmatpush1.bf16.msra.mxu0 0
  %4824 = vmatprep.subr.bf16.mxu0 0
  %4825 = vmatpush1.bf16.msra.mxu0 0
  %4826 = vmatprep.mubr.bf16.mxu0 %v445
  %4827 = vmatmul.mubr.bf16.gmra.mrb[0].mxu0 %v347
  %v4828 = vpop.f32.mrb[0].mxu0
  %v4829 = vadd.f32 %v158, %v4828
  %v4830 = vpop.f32.mrb[0].mxu0
  %v4831 = vpop.f32.mrb[0].mxu0
  %v4832 = vadd.f32 %v163, %v4831
  %v4833 = vpop.f32.mrb[0].mxu0
  %4834 = vmatprep.mubr.bf16.mxu0 %v448
  %4835 = vmatmul.mubr.bf16.gmra.mrb[0].mxu0 %v349
  %v4836 = vpop.f32.mrb[0].mxu0
  %v4837 = vadd.f32 %v168, %v4836
  %v4838 = vpop.f32.mrb[0].mxu0
  %v4839 = vpop.f32.mrb[0].mxu0
  %v4840 = vadd.f32 %v173, %v4839
  %v4841 = vpop.f32.mrb[0].mxu0
  %4842 = vmatprep.mubr.bf16.mxu0 %v451
  %4843 = vmatmul.mubr.bf16.gmra.mrb[0].mxu0 %v351
  %v4844 = vpop.f32.mrb[0].mxu0
  %v4845 = vadd.f32 %v178, %v4844
  %v4846 = vpop.f32.mrb[0].mxu0
  %v4847 = vpop.f32.mrb[0].mxu0
  %v4848 = vadd.f32 %v183, %v4847
  %v4849 = vpop.f32.mrb[0].mxu0
  %4850 = vmatprep.mubr.bf16.mxu0 %v454
  %4851 = vmatmul.mubr.bf16.gmra.mrb[0].mxu0 %v353
  %v4852 = vpop.f32.mrb[0].mxu0
  %v4853 = vadd.f32 %v188, %v4852
  %v4854 = vpop.f32.mrb[0].mxu0
  %v4855 = vpop.f32.mrb[0].mxu0
  %v4856 = vadd.f32 %v193, %v4855
  %v4857 = vpop.f32.mrb[0].mxu0
  %4858 = vmatprep.mubr.bf16.mxu0 %v457
  %4859 = vmatmul.mubr.bf16.gmra.mrb[0].mxu0 %v355
  %v4860 = vpop.f32.mrb[0].mxu0
  %v4861 = vadd.f32 %v198, %v4860
  %v4862 = vpop.f32.mrb[0].mxu0
  %v4863 = vpop.f32.mrb[0].mxu0
  %v4864 = vadd.f32 %v203, %v4863
  %v4865 = vpop.f32.mrb[0].mxu0
  %4866 = vmatprep.mubr.bf16.mxu0 %v460
  %4867 = vmatmul.mubr.bf16.gmra.mrb[0].mxu0 %v357
  %v4868 = vpop.f32.mrb[0].mxu0
  %v4869 = vadd.f32 %v208, %v4868
  %v4870 = vpop.f32.mrb[0].mxu0
  %v4871 = vpop.f32.mrb[0].mxu0
  %v4872 = vadd.f32 %v213, %v4871
  %v4873 = vpop.f32.mrb[0].mxu0
  %4874 = vmatprep.mubr.bf16.mxu0 %v463
  %4875 = vmatmul.mubr.bf16.gmra.mrb[0].mxu0 %v359
  %v4876 = vpop.f32.mrb[0].mxu0
  %v4877 = vadd.f32 %v218, %v4876
  %v4878 = vpop.f32.mrb[0].mxu0
  %v4879 = vpop.f32.mrb[0].mxu0
  %v4880 = vadd.f32 %v223, %v4879
  %v4881 = vpop.f32.mrb[0].mxu0
  %4882 = vmatprep.mubr.bf16.mxu0 %v466
  %4883 = vmatmul.mubr.bf16.gmra.mrb[0].mxu0 %v361
  %v4884 = vpop.f32.mrb[0].mxu0
  %v4885 = vadd.f32 %v228, %v4884
  %v4886 = vpop.f32.mrb[0].mxu0
  %v4887 = vpop.f32.mrb[0].mxu0
  %v4888 = vadd.f32 %v233, %v4887
  %v4889 = vpop.f32.mrb[0].mxu0
  %4890 = vmatprep.mubr.bf16.mxu0 %v469
  %4891 = vmatmul.mubr.bf16.gmra.mrb[0].mxu0 %v363
  %v4892 = vpop.f32.mrb[0].mxu0
  %v4893 = vadd.f32 %v238, %v4892
  %v4894 = vpop.f32.mrb[0].mxu0
  %v4895 = vpop.f32.mrb[0].mxu0
  %v4896 = vadd.f32 %v243, %v4895
  %v4897 = vpop.f32.mrb[0].mxu0
  %4898 = vmatprep.mubr.bf16.mxu0 %v472
  %4899 = vmatmul.mubr.bf16.gmra.mrb[0].mxu0 %v365
  %v4900 = vpop.f32.mrb[0].mxu0
  %v4901 = vadd.f32 %v248, %v4900
  %v4902 = vpop.f32.mrb[0].mxu0
  %v4903 = vpop.f32.mrb[0].mxu0
  %v4904 = vadd.f32 %v253, %v4903
  %v4905 = vpop.f32.mrb[0].mxu0
  %4906 = vmatprep.mubr.bf16.mxu0 %v475
  %4907 = vmatmul.mubr.bf16.gmra.mrb[0].mxu0 %v367
  %v4908 = vpop.f32.mrb[0].mxu0
  %v4909 = vadd.f32 %v258, %v4908
  %v4910 = vpop.f32.mrb[0].mxu0
  %v4911 = vpop.f32.mrb[0].mxu0
  %v4912 = vadd.f32 %v263, %v4911
  %v4913 = vpop.f32.mrb[0].mxu0
  %4914 = vmatprep.mubr.bf16.mxu0 %v478
  %4915 = vmatmul.mubr.bf16.gmra.mrb[0].mxu0 %v369
  %v4916 = vpop.f32.mrb[0].mxu0
  %v4917 = vadd.f32 %v268, %v4916
  %v4918 = vpop.f32.mrb[0].mxu0
  %v4919 = vpop.f32.mrb[0].mxu0
  %v4920 = vadd.f32 %v273, %v4919
  %v4921 = vpop.f32.mrb[0].mxu0
  %4922 = vdwg.mxu0
  %v4923 = vmax.f32 %v4829, 0.0
  %v4924 = vmax.f32 %v4832, 0.0
  %v4925 = vmax.f32 %v4837, 0.0
  %v4926 = vmax.f32 %v4840, 0.0
  %v4927 = vmax.f32 %v4845, 0.0
  %v4928 = vmax.f32 %v4848, 0.0
  %v4929 = vmax.f32 %v4853, 0.0
  %v4930 = vmax.f32 %v4856, 0.0
  %v4931 = vmax.f32 %v4861, 0.0
  %v4932 = vmax.f32 %v4864, 0.0
  %v4933 = vmax.f32 %v4869, 0.0
  %v4934 = vmax.f32 %v4872, 0.0
  %v4935 = vmax.f32 %v4877, 0.0
  %v4936 = vmax.f32 %v4880, 0.0
  %v4937 = vmax.f32 %v4885, 0.0
  %v4938 = vmax.f32 %v4888, 0.0
  %v4939 = vmax.f32 %v4893, 0.0
  %v4940 = vmax.f32 %v4896, 0.0
  %v4941 = vmax.f32 %v4901, 0.0
  %v4942 = vmax.f32 %v4904, 0.0
  %v4943 = vmax.f32 %v4909, 0.0
  %v4944 = vmax.f32 %v4912, 0.0
  %v4945 = vmax.f32 %v4917, 0.0
  %v4946 = vmax.f32 %v4920, 0.0
  %v4947 = vmax.f32 %v4689, %v4923
  %v4948 = vmax.f32 %v4690, %v4924
  %v4949 = vmax.f32 %v4691, %v4925
  %v4950 = vmax.f32 %v4692, %v4926
  %v4951 = vmax.f32 %v4693, %v4927
  %v4952 = vmax.f32 %v4694, %v4928
  %v4953 = vmax.f32 %v4695, %v4929
  %v4954 = vmax.f32 %v4696, %v4930
  %v4955 = vmax.f32 %v4697, %v4931
  %v4956 = vmax.f32 %v4698, %v4932
  %v4957 = vmax.f32 %v4699, %v4933
  %v4958 = vmax.f32 %v4700, %v4934
  %v4959 = vmax.f32 %v4701, %v4935
  %v4960 = vmax.f32 %v4702, %v4936
  %v4961 = vmax.f32 %v4703, %v4937
  %v4962 = vmax.f32 %v4704, %v4938
  %v4963 = vmax.f32 %v4705, %v4939
  %v4964 = vmax.f32 %v4706, %v4940
  %v4965 = vmax.f32 %v4707, %v4941
  %v4966 = vmax.f32 %v4708, %v4942
  %v4967 = vmax.f32 %v4709, %v4943
  %v4968 = vmax.f32 %v4710, %v4944
  %v4969 = vmax.f32 %v4711, %v4945
  %v4970 = vmax.f32 %v4712, %v4946
  %v4971 = vmax.f32 %v4947, %v4948
  %v4972 = vmax.f32 %v4949, %v4950
  %v4973 = vmax.f32 %v4951, %v4952
  %v4974 = vmax.f32 %v4953, %v4954
  %v4975 = vmax.f32 %v4955, %v4956
  %v4976 = vmax.f32 %v4957, %v4958
  %v4977 = vmax.f32 %v4959, %v4960
  %v4978 = vmax.f32 %v4961, %v4962
  %v4979 = vmax.f32 %v4963, %v4964
  %v4980 = vmax.f32 %v4965, %v4966
  %v4981 = vmax.f32 %v4967, %v4968
  %v4982 = vmax.f32 %v4969, %v4970
  %v4983 = vpack.c.bf16 %v4972, %v4971
  %v4984 = vpack.c.bf16 %v4974, %v4973
  %v4985 = vpack.c.bf16 %v4976, %v4975
  %v4986 = vpack.c.bf16 %v4978, %v4977
  %v4987 = vpack.c.bf16 %v4980, %v4979
  %v4988 = vpack.c.bf16 %v4982, %v4981
  %s4989 = scalar_lea.vmem %s0, 288
  %v4990 = vld [vmem:[%s4989] sm:$0xf]
  %v4991 = vld [vmem:[%s4989 + $0x4] sm:$0xf]
  %v4992 = vld [vmem:[%s4989 + $0x8] sm:$0xf]
  %v4993 = vld [vmem:[%s4989 + $0xc] sm:$0xf]
  %v4994 = vld [vmem:[%s4989 + $0x10] sm:$0xf]
  %v4995 = vld [vmem:[%s4989 + $0x14] sm:$0xf]
  %v4996 = vld [vmem:[%s4989 + $0x18] sm:$0xf]
  %v4997 = vld [vmem:[%s4989 + $0x1c] sm:$0xf]
  %v4998 = vld [vmem:[%s4989 + $0x20] sm:$0xf]
  %v4999 = vld [vmem:[%s4989 + $0x24] sm:$0xf]
  %v5000 = vld [vmem:[%s4989 + $0x28] sm:$0xf]
  %v5001 = vld [vmem:[%s4989 + $0x2c] sm:$0xf]
  %v5002 = vld [vmem:[%s4989 + $0x30] sm:$0xf]
  %v5003 = vld [vmem:[%s4989 + $0x34] sm:$0xf]
  %v5004 = vld [vmem:[%s4989 + $0x38] sm:$0xf]
  %v5005 = vld [vmem:[%s4989 + $0x3c] sm:$0xf]
  %v5006 = vld [vmem:[%s4989 + $0x40] sm:$0xf]
  %v5007 = vld [vmem:[%s4989 + $0x44] sm:$0xf]
  %v5008 = vld [vmem:[%s4989 + $0x48] sm:$0xf]
  %v5009 = vld [vmem:[%s4989 + $0x4c] sm:$0xf]
  %v5030 = vunpack.c.l.b16 %v4990
  %v5031 = vunpack.c.l.b16 %v4991
  %v5032 = vunpack.c.l.b16 %v4992
  %v5033 = vunpack.c.l.b16 %v4993
  %v5034 = vunpack.c.l.b16 %v4994
  %v5035 = vunpack.c.l.b16 %v4995
  %v5036 = vunpack.c.l.b16 %v4996
  %v5037 = vunpack.c.l.b16 %v4997
  %v5038 = vunpack.c.l.b16 %v4998
  %v5039 = vunpack.c.l.b16 %v4999
  %v5040 = vunpack.c.l.b16 %v5000
  %v5041 = vunpack.c.l.b16 %v5001
  %v5042 = vunpack.c.l.b16 %v5002
  %v5043 = vunpack.c.l.b16 %v5003
  %v5044 = vunpack.c.l.b16 %v5004
  %v5045 = vunpack.c.l.b16 %v5005
  %v5046 = vunpack.c.l.b16 %v5006
  %v5047 = vunpack.c.l.b16 %v5007
  %v5048 = vunpack.c.l.b16 %v5008
  %v5049 = vunpack.c.l.b16 %v5009
  %v5050 = vpack.c.b16 %v5031, %v5030
  %v5051 = vpack.c.b16 %v5033, %v5032
  %v5052 = vpack.c.b16 %v5035, %v5034
  %v5053 = vpack.c.b16 %v5037, %v5036
  %v5054 = vpack.c.b16 %v5039, %v5038
  %v5055 = vpack.c.b16 %v5041, %v5040
  %v5056 = vpack.c.b16 %v5043, %v5042
  %v5057 = vpack.c.b16 %v5045, %v5044
  %v5058 = vpack.c.b16 %v5047, %v5046
  %v5059 = vpack.c.b16 %v5049, %v5048
  %5070 = vmatprep.subr.bf16.mxu0 0
  %5071 = vmatpush1.bf16.msra.mxu0 %v5050
  %5072 = vmatprep.subr.bf16.mxu0 0
  %5073 = vmatpush1.bf16.msra.mxu0 %v5051
  %5074 = vmatprep.subr.bf16.mxu0 0
  %5075 = vmatpush1.bf16.msra.mxu0 %v5052
  %5076 = vmatprep.subr.bf16.mxu0 0
  %5077 = vmatpush1.bf16.msra.mxu0 %v5053
  %5078 = vmatprep.subr.bf16.mxu0 0
  %5079 = vmatpush1.bf16.msra.mxu0 %v5054
  %5080 = vmatprep.subr.bf16.mxu0 0
  %5081 = vmatpush1.bf16.msra.mxu0 %v5055
  %5082 = vmatprep.subr.bf16.mxu0 0
  %5083 = vmatpush1.bf16.msra.mxu0 %v5056
  %5084 = vmatprep.subr.bf16.mxu0 0
  %5085 = vmatpush1.bf16.msra.mxu0 %v5057
  %5086 = vmatprep.subr.bf16.mxu0 0
  %5087 = vmatpush1.bf16.msra.mxu0 %v5058
  %5088 = vmatprep.subr.bf16.mxu0 0
  %5089 = vmatpush1.bf16.msra.mxu0 %v5059
  %5090 = vmatprep.subr.bf16.mxu0 0
  %5091 = vmatpush1.bf16.msra.mxu0 0
  %5092 = vmatprep.subr.bf16.mxu0 0
  %5093 = vmatpush1.bf16.msra.mxu0 0
  %5094 = vmatprep.subr.bf16.mxu0 0
  %5095 = vmatpush1.bf16.msra.mxu0 0
  %5096 = vmatprep.subr.bf16.mxu0 0
  %5097 = vmatpush1.bf16.msra.mxu0 0
  %5098 = vmatprep.subr.bf16.mxu0 0
  %5099 = vmatpush1.bf16.msra.mxu0 0
  %5100 = vmatprep.subr.bf16.mxu0 0
  %5101 = vmatpush1.bf16.msra.mxu0 0
  %5102 = vmatprep.mubr.bf16.mxu0 %v445
  %5103 = vmatmul.mubr.bf16.gmra.mrb[0].mxu0 %v347
  %v5104 = vpop.f32.mrb[0].mxu0
  %v5105 = vadd.f32 %v158, %v5104
  %v5106 = vpop.f32.mrb[0].mxu0
  %v5107 = vpop.f32.mrb[0].mxu0
  %v5108 = vadd.f32 %v163, %v5107
  %v5109 = vpop.f32.mrb[0].mxu0
  %5110 = vmatprep.mubr.bf16.mxu0 %v448
  %5111 = vmatmul.mubr.bf16.gmra.mrb[0].mxu0 %v349
  %v5112 = vpop.f32.mrb[0].mxu0
  %v5113 = vadd.f32 %v168, %v5112
  %v5114 = vpop.f32.mrb[0].mxu0
  %v5115 = vpop.f32.mrb[0].mxu0
  %v5116 = vadd.f32 %v173, %v5115
  %v5117 = vpop.f32.mrb[0].mxu0
  %5118 = vmatprep.mubr.bf16.mxu0 %v451
  %5119 = vmatmul.mubr.bf16.gmra.mrb[0].mxu0 %v351
  %v5120 = vpop.f32.mrb[0].mxu0
  %v5121 = vadd.f32 %v178, %v5120
  %v5122 = vpop.f32.mrb[0].mxu0
  %v5123 = vpop.f32.mrb[0].mxu0
  %v5124 = vadd.f32 %v183, %v5123
  %v5125 = vpop.f32.mrb[0].mxu0
  %5126 = vmatprep.mubr.bf16.mxu0 %v454
  %5127 = vmatmul.mubr.bf16.gmra.mrb[0].mxu0 %v353
  %v5128 = vpop.f32.mrb[0].mxu0
  %v5129 = vadd.f32 %v188, %v5128
  %v5130 = vpop.f32.mrb[0].mxu0
  %v5131 = vpop.f32.mrb[0].mxu0
  %v5132 = vadd.f32 %v193, %v5131
  %v5133 = vpop.f32.mrb[0].mxu0
  %5134 = vmatprep.mubr.bf16.mxu0 %v457
  %5135 = vmatmul.mubr.bf16.gmra.mrb[0].mxu0 %v355
  %v5136 = vpop.f32.mrb[0].mxu0
  %v5137 = vadd.f32 %v198, %v5136
  %v5138 = vpop.f32.mrb[0].mxu0
  %v5139 = vpop.f32.mrb[0].mxu0
  %v5140 = vadd.f32 %v203, %v5139
  %v5141 = vpop.f32.mrb[0].mxu0
  %5142 = vmatprep.mubr.bf16.mxu0 %v460
  %5143 = vmatmul.mubr.bf16.gmra.mrb[0].mxu0 %v357
  %v5144 = vpop.f32.mrb[0].mxu0
  %v5145 = vadd.f32 %v208, %v5144
  %v5146 = vpop.f32.mrb[0].mxu0
  %v5147 = vpop.f32.mrb[0].mxu0
  %v5148 = vadd.f32 %v213, %v5147
  %v5149 = vpop.f32.mrb[0].mxu0
  %5150 = vmatprep.mubr.bf16.mxu0 %v463
  %5151 = vmatmul.mubr.bf16.gmra.mrb[0].mxu0 %v359
  %v5152 = vpop.f32.mrb[0].mxu0
  %v5153 = vadd.f32 %v218, %v5152
  %v5154 = vpop.f32.mrb[0].mxu0
  %v5155 = vpop.f32.mrb[0].mxu0
  %v5156 = vadd.f32 %v223, %v5155
  %v5157 = vpop.f32.mrb[0].mxu0
  %5158 = vmatprep.mubr.bf16.mxu0 %v466
  %5159 = vmatmul.mubr.bf16.gmra.mrb[0].mxu0 %v361
  %v5160 = vpop.f32.mrb[0].mxu0
  %v5161 = vadd.f32 %v228, %v5160
  %v5162 = vpop.f32.mrb[0].mxu0
  %v5163 = vpop.f32.mrb[0].mxu0
  %v5164 = vadd.f32 %v233, %v5163
  %v5165 = vpop.f32.mrb[0].mxu0
  %5166 = vmatprep.mubr.bf16.mxu0 %v469
  %5167 = vmatmul.mubr.bf16.gmra.mrb[0].mxu0 %v363
  %v5168 = vpop.f32.mrb[0].mxu0
  %v5169 = vadd.f32 %v238, %v5168
  %v5170 = vpop.f32.mrb[0].mxu0
  %v5171 = vpop.f32.mrb[0].mxu0
  %v5172 = vadd.f32 %v243, %v5171
  %v5173 = vpop.f32.mrb[0].mxu0
  %5174 = vmatprep.mubr.bf16.mxu0 %v472
  %5175 = vmatmul.mubr.bf16.gmra.mrb[0].mxu0 %v365
  %v5176 = vpop.f32.mrb[0].mxu0
  %v5177 = vadd.f32 %v248, %v5176
  %v5178 = vpop.f32.mrb[0].mxu0
  %v5179 = vpop.f32.mrb[0].mxu0
  %v5180 = vadd.f32 %v253, %v5179
  %v5181 = vpop.f32.mrb[0].mxu0
  %5182 = vmatprep.mubr.bf16.mxu0 %v475
  %5183 = vmatmul.mubr.bf16.gmra.mrb[0].mxu0 %v367
  %v5184 = vpop.f32.mrb[0].mxu0
  %v5185 = vadd.f32 %v258, %v5184
  %v5186 = vpop.f32.mrb[0].mxu0
  %v5187 = vpop.f32.mrb[0].mxu0
  %v5188 = vadd.f32 %v263, %v5187
  %v5189 = vpop.f32.mrb[0].mxu0
  %5190 = vmatprep.mubr.bf16.mxu0 %v478
  %5191 = vmatmul.mubr.bf16.gmra.mrb[0].mxu0 %v369
  %v5192 = vpop.f32.mrb[0].mxu0
  %v5193 = vadd.f32 %v268, %v5192
  %v5194 = vpop.f32.mrb[0].mxu0
  %v5195 = vpop.f32.mrb[0].mxu0
  %v5196 = vadd.f32 %v273, %v5195
  %v5197 = vpop.f32.mrb[0].mxu0
  %5198 = vdwg.mxu0
  %v5199 = vmax.f32 %v5105, 0.0
  %v5200 = vmax.f32 %v5108, 0.0
  %v5201 = vmax.f32 %v5113, 0.0
  %v5202 = vmax.f32 %v5116, 0.0
  %v5203 = vmax.f32 %v5121, 0.0
  %v5204 = vmax.f32 %v5124, 0.0
  %v5205 = vmax.f32 %v5129, 0.0
  %v5206 = vmax.f32 %v5132, 0.0
  %v5207 = vmax.f32 %v5137, 0.0
  %v5208 = vmax.f32 %v5140, 0.0
  %v5209 = vmax.f32 %v5145, 0.0
  %v5210 = vmax.f32 %v5148, 0.0
  %v5211 = vmax.f32 %v5153, 0.0
  %v5212 = vmax.f32 %v5156, 0.0
  %v5213 = vmax.f32 %v5161, 0.0
  %v5214 = vmax.f32 %v5164, 0.0
  %v5215 = vmax.f32 %v5169, 0.0
  %v5216 = vmax.f32 %v5172, 0.0
  %v5217 = vmax.f32 %v5177, 0.0
  %v5218 = vmax.f32 %v5180, 0.0
  %v5219 = vmax.f32 %v5185, 0.0
  %v5220 = vmax.f32 %v5188, 0.0
  %v5221 = vmax.f32 %v5193, 0.0
  %v5222 = vmax.f32 %v5196, 0.0
  %s5223 = scalar_lea.vmem %s0, 304
  %v5224 = vld [vmem:[%s5223] sm:$0xf]
  %v5225 = vld [vmem:[%s5223 + $0x4] sm:$0xf]
  %v5226 = vld [vmem:[%s5223 + $0x8] sm:$0xf]
  %v5227 = vld [vmem:[%s5223 + $0xc] sm:$0xf]
  %v5228 = vld [vmem:[%s5223 + $0x10] sm:$0xf]
  %v5229 = vld [vmem:[%s5223 + $0x14] sm:$0xf]
  %v5230 = vld [vmem:[%s5223 + $0x18] sm:$0xf]
  %v5231 = vld [vmem:[%s5223 + $0x1c] sm:$0xf]
  %v5232 = vld [vmem:[%s5223 + $0x20] sm:$0xf]
  %v5233 = vld [vmem:[%s5223 + $0x24] sm:$0xf]
  %v5234 = vld [vmem:[%s5223 + $0x28] sm:$0xf]
  %v5235 = vld [vmem:[%s5223 + $0x2c] sm:$0xf]
  %v5236 = vld [vmem:[%s5223 + $0x30] sm:$0xf]
  %v5237 = vld [vmem:[%s5223 + $0x34] sm:$0xf]
  %v5238 = vld [vmem:[%s5223 + $0x38] sm:$0xf]
  %v5239 = vld [vmem:[%s5223 + $0x3c] sm:$0xf]
  %v5240 = vld [vmem:[%s5223 + $0x40] sm:$0xf]
  %v5241 = vld [vmem:[%s5223 + $0x44] sm:$0xf]
  %v5242 = vld [vmem:[%s5223 + $0x48] sm:$0xf]
  %v5243 = vld [vmem:[%s5223 + $0x4c] sm:$0xf]
  %v5264 = vunpack.c.l.b16 %v5224
  %v5265 = vunpack.c.l.b16 %v5225
  %v5266 = vunpack.c.l.b16 %v5226
  %v5267 = vunpack.c.l.b16 %v5227
  %v5268 = vunpack.c.l.b16 %v5228
  %v5269 = vunpack.c.l.b16 %v5229
  %v5270 = vunpack.c.l.b16 %v5230
  %v5271 = vunpack.c.l.b16 %v5231
  %v5272 = vunpack.c.l.b16 %v5232
  %v5273 = vunpack.c.l.b16 %v5233
  %v5274 = vunpack.c.l.b16 %v5234
  %v5275 = vunpack.c.l.b16 %v5235
  %v5276 = vunpack.c.l.b16 %v5236
  %v5277 = vunpack.c.l.b16 %v5237
  %v5278 = vunpack.c.l.b16 %v5238
  %v5279 = vunpack.c.l.b16 %v5239
  %v5280 = vunpack.c.l.b16 %v5240
  %v5281 = vunpack.c.l.b16 %v5241
  %v5282 = vunpack.c.l.b16 %v5242
  %v5283 = vunpack.c.l.b16 %v5243
  %v5284 = vpack.c.b16 %v5265, %v5264
  %v5285 = vpack.c.b16 %v5267, %v5266
  %v5286 = vpack.c.b16 %v5269, %v5268
  %v5287 = vpack.c.b16 %v5271, %v5270
  %v5288 = vpack.c.b16 %v5273, %v5272
  %v5289 = vpack.c.b16 %v5275, %v5274
  %v5290 = vpack.c.b16 %v5277, %v5276
  %v5291 = vpack.c.b16 %v5279, %v5278
  %v5292 = vpack.c.b16 %v5281, %v5280
  %v5293 = vpack.c.b16 %v5283, %v5282
  %5304 = vmatprep.subr.bf16.mxu0 0
  %5305 = vmatpush1.bf16.msra.mxu0 %v5284
  %5306 = vmatprep.subr.bf16.mxu0 0
  %5307 = vmatpush1.bf16.msra.mxu0 %v5285
  %5308 = vmatprep.subr.bf16.mxu0 0
  %5309 = vmatpush1.bf16.msra.mxu0 %v5286
  %5310 = vmatprep.subr.bf16.mxu0 0
  %5311 = vmatpush1.bf16.msra.mxu0 %v5287
  %5312 = vmatprep.subr.bf16.mxu0 0
  %5313 = vmatpush1.bf16.msra.mxu0 %v5288
  %5314 = vmatprep.subr.bf16.mxu0 0
  %5315 = vmatpush1.bf16.msra.mxu0 %v5289
  %5316 = vmatprep.subr.bf16.mxu0 0
  %5317 = vmatpush1.bf16.msra.mxu0 %v5290
  %5318 = vmatprep.subr.bf16.mxu0 0
  %5319 = vmatpush1.bf16.msra.mxu0 %v5291
  %5320 = vmatprep.subr.bf16.mxu0 0
  %5321 = vmatpush1.bf16.msra.mxu0 %v5292
  %5322 = vmatprep.subr.bf16.mxu0 0
  %5323 = vmatpush1.bf16.msra.mxu0 %v5293
  %5324 = vmatprep.subr.bf16.mxu0 0
  %5325 = vmatpush1.bf16.msra.mxu0 0
  %5326 = vmatprep.subr.bf16.mxu0 0
  %5327 = vmatpush1.bf16.msra.mxu0 0
  %5328 = vmatprep.subr.bf16.mxu0 0
  %5329 = vmatpush1.bf16.msra.mxu0 0
  %5330 = vmatprep.subr.bf16.mxu0 0
  %5331 = vmatpush1.bf16.msra.mxu0 0
  %5332 = vmatprep.subr.bf16.mxu0 0
  %5333 = vmatpush1.bf16.msra.mxu0 0
  %5334 = vmatprep.subr.bf16.mxu0 0
  %5335 = vmatpush1.bf16.msra.mxu0 0
  %5336 = vmatprep.mubr.bf16.mxu0 %v445
  %5337 = vmatmul.mubr.bf16.gmra.mrb[0].mxu0 %v347
  %v5338 = vpop.f32.mrb[0].mxu0
  %v5339 = vadd.f32 %v158, %v5338
  %v5340 = vpop.f32.mrb[0].mxu0
  %v5341 = vpop.f32.mrb[0].mxu0
  %v5342 = vadd.f32 %v163, %v5341
  %v5343 = vpop.f32.mrb[0].mxu0
  %5344 = vmatprep.mubr.bf16.mxu0 %v448
  %5345 = vmatmul.mubr.bf16.gmra.mrb[0].mxu0 %v349
  %v5346 = vpop.f32.mrb[0].mxu0
  %v5347 = vadd.f32 %v168, %v5346
  %v5348 = vpop.f32.mrb[0].mxu0
  %v5349 = vpop.f32.mrb[0].mxu0
  %v5350 = vadd.f32 %v173, %v5349
  %v5351 = vpop.f32.mrb[0].mxu0
  %5352 = vmatprep.mubr.bf16.mxu0 %v451
  %5353 = vmatmul.mubr.bf16.gmra.mrb[0].mxu0 %v351
  %v5354 = vpop.f32.mrb[0].mxu0
  %v5355 = vadd.f32 %v178, %v5354
  %v5356 = vpop.f32.mrb[0].mxu0
  %v5357 = vpop.f32.mrb[0].mxu0
  %v5358 = vadd.f32 %v183, %v5357
  %v5359 = vpop.f32.mrb[0].mxu0
  %5360 = vmatprep.mubr.bf16.mxu0 %v454
  %5361 = vmatmul.mubr.bf16.gmra.mrb[0].mxu0 %v353
  %v5362 = vpop.f32.mrb[0].mxu0
  %v5363 = vadd.f32 %v188, %v5362
  %v5364 = vpop.f32.mrb[0].mxu0
  %v5365 = vpop.f32.mrb[0].mxu0
  %v5366 = vadd.f32 %v193, %v5365
  %v5367 = vpop.f32.mrb[0].mxu0
  %5368 = vmatprep.mubr.bf16.mxu0 %v457
  %5369 = vmatmul.mubr.bf16.gmra.mrb[0].mxu0 %v355
  %v5370 = vpop.f32.mrb[0].mxu0
  %v5371 = vadd.f32 %v198, %v5370
  %v5372 = vpop.f32.mrb[0].mxu0
  %v5373 = vpop.f32.mrb[0].mxu0
  %v5374 = vadd.f32 %v203, %v5373
  %v5375 = vpop.f32.mrb[0].mxu0
  %5376 = vmatprep.mubr.bf16.mxu0 %v460
  %5377 = vmatmul.mubr.bf16.gmra.mrb[0].mxu0 %v357
  %v5378 = vpop.f32.mrb[0].mxu0
  %v5379 = vadd.f32 %v208, %v5378
  %v5380 = vpop.f32.mrb[0].mxu0
  %v5381 = vpop.f32.mrb[0].mxu0
  %v5382 = vadd.f32 %v213, %v5381
  %v5383 = vpop.f32.mrb[0].mxu0
  %5384 = vmatprep.mubr.bf16.mxu0 %v463
  %5385 = vmatmul.mubr.bf16.gmra.mrb[0].mxu0 %v359
  %v5386 = vpop.f32.mrb[0].mxu0
  %v5387 = vadd.f32 %v218, %v5386
  %v5388 = vpop.f32.mrb[0].mxu0
  %v5389 = vpop.f32.mrb[0].mxu0
  %v5390 = vadd.f32 %v223, %v5389
  %v5391 = vpop.f32.mrb[0].mxu0
  %5392 = vmatprep.mubr.bf16.mxu0 %v466
  %5393 = vmatmul.mubr.bf16.gmra.mrb[0].mxu0 %v361
  %v5394 = vpop.f32.mrb[0].mxu0
  %v5395 = vadd.f32 %v228, %v5394
  %v5396 = vpop.f32.mrb[0].mxu0
  %v5397 = vpop.f32.mrb[0].mxu0
  %v5398 = vadd.f32 %v233, %v5397
  %v5399 = vpop.f32.mrb[0].mxu0
  %5400 = vmatprep.mubr.bf16.mxu0 %v469
  %5401 = vmatmul.mubr.bf16.gmra.mrb[0].mxu0 %v363
  %v5402 = vpop.f32.mrb[0].mxu0
  %v5403 = vadd.f32 %v238, %v5402
  %v5404 = vpop.f32.mrb[0].mxu0
  %v5405 = vpop.f32.mrb[0].mxu0
  %v5406 = vadd.f32 %v243, %v5405
  %v5407 = vpop.f32.mrb[0].mxu0
  %5408 = vmatprep.mubr.bf16.mxu0 %v472
  %5409 = vmatmul.mubr.bf16.gmra.mrb[0].mxu0 %v365
  %v5410 = vpop.f32.mrb[0].mxu0
  %v5411 = vadd.f32 %v248, %v5410
  %v5412 = vpop.f32.mrb[0].mxu0
  %v5413 = vpop.f32.mrb[0].mxu0
  %v5414 = vadd.f32 %v253, %v5413
  %v5415 = vpop.f32.mrb[0].mxu0
  %5416 = vmatprep.mubr.bf16.mxu0 %v475
  %5417 = vmatmul.mubr.bf16.gmra.mrb[0].mxu0 %v367
  %v5418 = vpop.f32.mrb[0].mxu0
  %v5419 = vadd.f32 %v258, %v5418
  %v5420 = vpop.f32.mrb[0].mxu0
  %v5421 = vpop.f32.mrb[0].mxu0
  %v5422 = vadd.f32 %v263, %v5421
  %v5423 = vpop.f32.mrb[0].mxu0
  %5424 = vmatprep.mubr.bf16.mxu0 %v478
  %5425 = vmatmul.mubr.bf16.gmra.mrb[0].mxu0 %v369
  %v5426 = vpop.f32.mrb[0].mxu0
  %v5427 = vadd.f32 %v268, %v5426
  %v5428 = vpop.f32.mrb[0].mxu0
  %v5429 = vpop.f32.mrb[0].mxu0
  %v5430 = vadd.f32 %v273, %v5429
  %v5431 = vpop.f32.mrb[0].mxu0
  %5432 = vdwg.mxu0
  %v5433 = vmax.f32 %v5339, 0.0
  %v5434 = vmax.f32 %v5342, 0.0
  %v5435 = vmax.f32 %v5347, 0.0
  %v5436 = vmax.f32 %v5350, 0.0
  %v5437 = vmax.f32 %v5355, 0.0
  %v5438 = vmax.f32 %v5358, 0.0
  %v5439 = vmax.f32 %v5363, 0.0
  %v5440 = vmax.f32 %v5366, 0.0
  %v5441 = vmax.f32 %v5371, 0.0
  %v5442 = vmax.f32 %v5374, 0.0
  %v5443 = vmax.f32 %v5379, 0.0
  %v5444 = vmax.f32 %v5382, 0.0
  %v5445 = vmax.f32 %v5387, 0.0
  %v5446 = vmax.f32 %v5390, 0.0
  %v5447 = vmax.f32 %v5395, 0.0
  %v5448 = vmax.f32 %v5398, 0.0
  %v5449 = vmax.f32 %v5403, 0.0
  %v5450 = vmax.f32 %v5406, 0.0
  %v5451 = vmax.f32 %v5411, 0.0
  %v5452 = vmax.f32 %v5414, 0.0
  %v5453 = vmax.f32 %v5419, 0.0
  %v5454 = vmax.f32 %v5422, 0.0
  %v5455 = vmax.f32 %v5427, 0.0
  %v5456 = vmax.f32 %v5430, 0.0
  %v5457 = vmax.f32 %v5199, %v5433
  %v5458 = vmax.f32 %v5200, %v5434
  %v5459 = vmax.f32 %v5201, %v5435
  %v5460 = vmax.f32 %v5202, %v5436
  %v5461 = vmax.f32 %v5203, %v5437
  %v5462 = vmax.f32 %v5204, %v5438
  %v5463 = vmax.f32 %v5205, %v5439
  %v5464 = vmax.f32 %v5206, %v5440
  %v5465 = vmax.f32 %v5207, %v5441
  %v5466 = vmax.f32 %v5208, %v5442
  %v5467 = vmax.f32 %v5209, %v5443
  %v5468 = vmax.f32 %v5210, %v5444
  %v5469 = vmax.f32 %v5211, %v5445
  %v5470 = vmax.f32 %v5212, %v5446
  %v5471 = vmax.f32 %v5213, %v5447
  %v5472 = vmax.f32 %v5214, %v5448
  %v5473 = vmax.f32 %v5215, %v5449
  %v5474 = vmax.f32 %v5216, %v5450
  %v5475 = vmax.f32 %v5217, %v5451
  %v5476 = vmax.f32 %v5218, %v5452
  %v5477 = vmax.f32 %v5219, %v5453
  %v5478 = vmax.f32 %v5220, %v5454
  %v5479 = vmax.f32 %v5221, %v5455
  %v5480 = vmax.f32 %v5222, %v5456
  %v5481 = vmax.f32 %v5457, %v5458
  %v5482 = vmax.f32 %v5459, %v5460
  %v5483 = vmax.f32 %v5461, %v5462
  %v5484 = vmax.f32 %v5463, %v5464
  %v5485 = vmax.f32 %v5465, %v5466
  %v5486 = vmax.f32 %v5467, %v5468
  %v5487 = vmax.f32 %v5469, %v5470
  %v5488 = vmax.f32 %v5471, %v5472
  %v5489 = vmax.f32 %v5473, %v5474
  %v5490 = vmax.f32 %v5475, %v5476
  %v5491 = vmax.f32 %v5477, %v5478
  %v5492 = vmax.f32 %v5479, %v5480
  %v5493 = vpack.c.bf16 %v5482, %v5481
  %v5494 = vpack.c.bf16 %v5484, %v5483
  %v5495 = vpack.c.bf16 %v5486, %v5485
  %v5496 = vpack.c.bf16 %v5488, %v5487
  %v5497 = vpack.c.bf16 %v5490, %v5489
  %v5498 = vpack.c.bf16 %v5492, %v5491
  %s5499 = scalar_lea.vmem %s0, 320
  %v5500 = vld [vmem:[%s5499] sm:$0xf]
  %v5501 = vld [vmem:[%s5499 + $0x4] sm:$0xf]
  %v5502 = vld [vmem:[%s5499 + $0x8] sm:$0xf]
  %v5503 = vld [vmem:[%s5499 + $0xc] sm:$0xf]
  %v5504 = vld [vmem:[%s5499 + $0x10] sm:$0xf]
  %v5505 = vld [vmem:[%s5499 + $0x14] sm:$0xf]
  %v5506 = vld [vmem:[%s5499 + $0x18] sm:$0xf]
  %v5507 = vld [vmem:[%s5499 + $0x1c] sm:$0xf]
  %v5508 = vld [vmem:[%s5499 + $0x20] sm:$0xf]
  %v5509 = vld [vmem:[%s5499 + $0x24] sm:$0xf]
  %v5510 = vld [vmem:[%s5499 + $0x28] sm:$0xf]
  %v5511 = vld [vmem:[%s5499 + $0x2c] sm:$0xf]
  %v5512 = vld [vmem:[%s5499 + $0x30] sm:$0xf]
  %v5513 = vld [vmem:[%s5499 + $0x34] sm:$0xf]
  %v5514 = vld [vmem:[%s5499 + $0x38] sm:$0xf]
  %v5515 = vld [vmem:[%s5499 + $0x3c] sm:$0xf]
  %v5516 = vld [vmem:[%s5499 + $0x40] sm:$0xf]
  %v5517 = vld [vmem:[%s5499 + $0x44] sm:$0xf]
  %v5518 = vld [vmem:[%s5499 + $0x48] sm:$0xf]
  %v5519 = vld [vmem:[%s5499 + $0x4c] sm:$0xf]
  %v5540 = vunpack.c.l.b16 %v5500
  %v5541 = vunpack.c.l.b16 %v5501
  %v5542 = vunpack.c.l.b16 %v5502
  %v5543 = vunpack.c.l.b16 %v5503
  %v5544 = vunpack.c.l.b16 %v5504
  %v5545 = vunpack.c.l.b16 %v5505
  %v5546 = vunpack.c.l.b16 %v5506
  %v5547 = vunpack.c.l.b16 %v5507
  %v5548 = vunpack.c.l.b16 %v5508
  %v5549 = vunpack.c.l.b16 %v5509
  %v5550 = vunpack.c.l.b16 %v5510
  %v5551 = vunpack.c.l.b16 %v5511
  %v5552 = vunpack.c.l.b16 %v5512
  %v5553 = vunpack.c.l.b16 %v5513
  %v5554 = vunpack.c.l.b16 %v5514
  %v5555 = vunpack.c.l.b16 %v5515
  %v5556 = vunpack.c.l.b16 %v5516
  %v5557 = vunpack.c.l.b16 %v5517
  %v5558 = vunpack.c.l.b16 %v5518
  %v5559 = vunpack.c.l.b16 %v5519
  %v5560 = vpack.c.b16 %v5541, %v5540
  %v5561 = vpack.c.b16 %v5543, %v5542
  %v5562 = vpack.c.b16 %v5545, %v5544
  %v5563 = vpack.c.b16 %v5547, %v5546
  %v5564 = vpack.c.b16 %v5549, %v5548
  %v5565 = vpack.c.b16 %v5551, %v5550
  %v5566 = vpack.c.b16 %v5553, %v5552
  %v5567 = vpack.c.b16 %v5555, %v5554
  %v5568 = vpack.c.b16 %v5557, %v5556
  %v5569 = vpack.c.b16 %v5559, %v5558
  %5580 = vmatprep.subr.bf16.mxu0 0
  %5581 = vmatpush1.bf16.msra.mxu0 %v5560
  %5582 = vmatprep.subr.bf16.mxu0 0
  %5583 = vmatpush1.bf16.msra.mxu0 %v5561
  %5584 = vmatprep.subr.bf16.mxu0 0
  %5585 = vmatpush1.bf16.msra.mxu0 %v5562
  %5586 = vmatprep.subr.bf16.mxu0 0
  %5587 = vmatpush1.bf16.msra.mxu0 %v5563
  %5588 = vmatprep.subr.bf16.mxu0 0
  %5589 = vmatpush1.bf16.msra.mxu0 %v5564
  %5590 = vmatprep.subr.bf16.mxu0 0
  %5591 = vmatpush1.bf16.msra.mxu0 %v5565
  %5592 = vmatprep.subr.bf16.mxu0 0
  %5593 = vmatpush1.bf16.msra.mxu0 %v5566
  %5594 = vmatprep.subr.bf16.mxu0 0
  %5595 = vmatpush1.bf16.msra.mxu0 %v5567
  %5596 = vmatprep.subr.bf16.mxu0 0
  %5597 = vmatpush1.bf16.msra.mxu0 %v5568
  %5598 = vmatprep.subr.bf16.mxu0 0
  %5599 = vmatpush1.bf16.msra.mxu0 %v5569
  %5600 = vmatprep.subr.bf16.mxu0 0
  %5601 = vmatpush1.bf16.msra.mxu0 0
  %5602 = vmatprep.subr.bf16.mxu0 0
  %5603 = vmatpush1.bf16.msra.mxu0 0
  %5604 = vmatprep.subr.bf16.mxu0 0
  %5605 = vmatpush1.bf16.msra.mxu0 0
  %5606 = vmatprep.subr.bf16.mxu0 0
  %5607 = vmatpush1.bf16.msra.mxu0 0
  %5608 = vmatprep.subr.bf16.mxu0 0
  %5609 = vmatpush1.bf16.msra.mxu0 0
  %5610 = vmatprep.subr.bf16.mxu0 0
  %5611 = vmatpush1.bf16.msra.mxu0 0
  %5612 = vmatprep.mubr.bf16.mxu0 %v445
  %5613 = vmatmul.mubr.bf16.gmra.mrb[0].mxu0 %v347
  %v5614 = vpop.f32.mrb[0].mxu0
  %v5615 = vadd.f32 %v158, %v5614
  %v5616 = vpop.f32.mrb[0].mxu0
  %v5617 = vpop.f32.mrb[0].mxu0
  %v5618 = vadd.f32 %v163, %v5617
  %v5619 = vpop.f32.mrb[0].mxu0
  %5620 = vmatprep.mubr.bf16.mxu0 %v448
  %5621 = vmatmul.mubr.bf16.gmra.mrb[0].mxu0 %v349
  %v5622 = vpop.f32.mrb[0].mxu0
  %v5623 = vadd.f32 %v168, %v5622
  %v5624 = vpop.f32.mrb[0].mxu0
  %v5625 = vpop.f32.mrb[0].mxu0
  %v5626 = vadd.f32 %v173, %v5625
  %v5627 = vpop.f32.mrb[0].mxu0
  %5628 = vmatprep.mubr.bf16.mxu0 %v451
  %5629 = vmatmul.mubr.bf16.gmra.mrb[0].mxu0 %v351
  %v5630 = vpop.f32.mrb[0].mxu0
  %v5631 = vadd.f32 %v178, %v5630
  %v5632 = vpop.f32.mrb[0].mxu0
  %v5633 = vpop.f32.mrb[0].mxu0
  %v5634 = vadd.f32 %v183, %v5633
  %v5635 = vpop.f32.mrb[0].mxu0
  %5636 = vmatprep.mubr.bf16.mxu0 %v454
  %5637 = vmatmul.mubr.bf16.gmra.mrb[0].mxu0 %v353
  %v5638 = vpop.f32.mrb[0].mxu0
  %v5639 = vadd.f32 %v188, %v5638
  %v5640 = vpop.f32.mrb[0].mxu0
  %v5641 = vpop.f32.mrb[0].mxu0
  %v5642 = vadd.f32 %v193, %v5641
  %v5643 = vpop.f32.mrb[0].mxu0
  %5644 = vmatprep.mubr.bf16.mxu0 %v457
  %5645 = vmatmul.mubr.bf16.gmra.mrb[0].mxu0 %v355
  %v5646 = vpop.f32.mrb[0].mxu0
  %v5647 = vadd.f32 %v198, %v5646
  %v5648 = vpop.f32.mrb[0].mxu0
  %v5649 = vpop.f32.mrb[0].mxu0
  %v5650 = vadd.f32 %v203, %v5649
  %v5651 = vpop.f32.mrb[0].mxu0
  %5652 = vmatprep.mubr.bf16.mxu0 %v460
  %5653 = vmatmul.mubr.bf16.gmra.mrb[0].mxu0 %v357
  %v5654 = vpop.f32.mrb[0].mxu0
  %v5655 = vadd.f32 %v208, %v5654
  %v5656 = vpop.f32.mrb[0].mxu0
  %v5657 = vpop.f32.mrb[0].mxu0
  %v5658 = vadd.f32 %v213, %v5657
  %v5659 = vpop.f32.mrb[0].mxu0
  %5660 = vmatprep.mubr.bf16.mxu0 %v463
  %5661 = vmatmul.mubr.bf16.gmra.mrb[0].mxu0 %v359
  %v5662 = vpop.f32.mrb[0].mxu0
  %v5663 = vadd.f32 %v218, %v5662
  %v5664 = vpop.f32.mrb[0].mxu0
  %v5665 = vpop.f32.mrb[0].mxu0
  %v5666 = vadd.f32 %v223, %v5665
  %v5667 = vpop.f32.mrb[0].mxu0
  %5668 = vmatprep.mubr.bf16.mxu0 %v466
  %5669 = vmatmul.mubr.bf16.gmra.mrb[0].mxu0 %v361
  %v5670 = vpop.f32.mrb[0].mxu0
  %v5671 = vadd.f32 %v228, %v5670
  %v5672 = vpop.f32.mrb[0].mxu0
  %v5673 = vpop.f32.mrb[0].mxu0
  %v5674 = vadd.f32 %v233, %v5673
  %v5675 = vpop.f32.mrb[0].mxu0
  %5676 = vmatprep.mubr.bf16.mxu0 %v469
  %5677 = vmatmul.mubr.bf16.gmra.mrb[0].mxu0 %v363
  %v5678 = vpop.f32.mrb[0].mxu0
  %v5679 = vadd.f32 %v238, %v5678
  %v5680 = vpop.f32.mrb[0].mxu0
  %v5681 = vpop.f32.mrb[0].mxu0
  %v5682 = vadd.f32 %v243, %v5681
  %v5683 = vpop.f32.mrb[0].mxu0
  %5684 = vmatprep.mubr.bf16.mxu0 %v472
  %5685 = vmatmul.mubr.bf16.gmra.mrb[0].mxu0 %v365
  %v5686 = vpop.f32.mrb[0].mxu0
  %v5687 = vadd.f32 %v248, %v5686
  %v5688 = vpop.f32.mrb[0].mxu0
  %v5689 = vpop.f32.mrb[0].mxu0
  %v5690 = vadd.f32 %v253, %v5689
  %v5691 = vpop.f32.mrb[0].mxu0
  %5692 = vmatprep.mubr.bf16.mxu0 %v475
  %5693 = vmatmul.mubr.bf16.gmra.mrb[0].mxu0 %v367
  %v5694 = vpop.f32.mrb[0].mxu0
  %v5695 = vadd.f32 %v258, %v5694
  %v5696 = vpop.f32.mrb[0].mxu0
  %v5697 = vpop.f32.mrb[0].mxu0
  %v5698 = vadd.f32 %v263, %v5697
  %v5699 = vpop.f32.mrb[0].mxu0
  %5700 = vmatprep.mubr.bf16.mxu0 %v478
  %5701 = vmatmul.mubr.bf16.gmra.mrb[0].mxu0 %v369
  %v5702 = vpop.f32.mrb[0].mxu0
  %v5703 = vadd.f32 %v268, %v5702
  %v5704 = vpop.f32.mrb[0].mxu0
  %v5705 = vpop.f32.mrb[0].mxu0
  %v5706 = vadd.f32 %v273, %v5705
  %v5707 = vpop.f32.mrb[0].mxu0
  %5708 = vdwg.mxu0
  %v5709 = vmax.f32 %v5615, 0.0
  %v5710 = vmax.f32 %v5618, 0.0
  %v5711 = vmax.f32 %v5623, 0.0
  %v5712 = vmax.f32 %v5626, 0.0
  %v5713 = vmax.f32 %v5631, 0.0
  %v5714 = vmax.f32 %v5634, 0.0
  %v5715 = vmax.f32 %v5639, 0.0
  %v5716 = vmax.f32 %v5642, 0.0
  %v5717 = vmax.f32 %v5647, 0.0
  %v5718 = vmax.f32 %v5650, 0.0
  %v5719 = vmax.f32 %v5655, 0.0
  %v5720 = vmax.f32 %v5658, 0.0
  %v5721 = vmax.f32 %v5663, 0.0
  %v5722 = vmax.f32 %v5666, 0.0
  %v5723 = vmax.f32 %v5671, 0.0
  %v5724 = vmax.f32 %v5674, 0.0
  %v5725 = vmax.f32 %v5679, 0.0
  %v5726 = vmax.f32 %v5682, 0.0
  %v5727 = vmax.f32 %v5687, 0.0
  %v5728 = vmax.f32 %v5690, 0.0
  %v5729 = vmax.f32 %v5695, 0.0
  %v5730 = vmax.f32 %v5698, 0.0
  %v5731 = vmax.f32 %v5703, 0.0
  %v5732 = vmax.f32 %v5706, 0.0
  %s5733 = scalar_lea.vmem %s0, 336
  %v5734 = vld [vmem:[%s5733] sm:$0xf]
  %v5735 = vld [vmem:[%s5733 + $0x4] sm:$0xf]
  %v5736 = vld [vmem:[%s5733 + $0x8] sm:$0xf]
  %v5737 = vld [vmem:[%s5733 + $0xc] sm:$0xf]
  %v5738 = vld [vmem:[%s5733 + $0x10] sm:$0xf]
  %v5739 = vld [vmem:[%s5733 + $0x14] sm:$0xf]
  %v5740 = vld [vmem:[%s5733 + $0x18] sm:$0xf]
  %v5741 = vld [vmem:[%s5733 + $0x1c] sm:$0xf]
  %v5742 = vld [vmem:[%s5733 + $0x20] sm:$0xf]
  %v5743 = vld [vmem:[%s5733 + $0x24] sm:$0xf]
  %v5744 = vld [vmem:[%s5733 + $0x28] sm:$0xf]
  %v5745 = vld [vmem:[%s5733 + $0x2c] sm:$0xf]
  %v5746 = vld [vmem:[%s5733 + $0x30] sm:$0xf]
  %v5747 = vld [vmem:[%s5733 + $0x34] sm:$0xf]
  %v5748 = vld [vmem:[%s5733 + $0x38] sm:$0xf]
  %v5749 = vld [vmem:[%s5733 + $0x3c] sm:$0xf]
  %v5750 = vld [vmem:[%s5733 + $0x40] sm:$0xf]
  %v5751 = vld [vmem:[%s5733 + $0x44] sm:$0xf]
  %v5752 = vld [vmem:[%s5733 + $0x48] sm:$0xf]
  %v5753 = vld [vmem:[%s5733 + $0x4c] sm:$0xf]
  %v5774 = vunpack.c.l.b16 %v5734
  %v5775 = vunpack.c.l.b16 %v5735
  %v5776 = vunpack.c.l.b16 %v5736
  %v5777 = vunpack.c.l.b16 %v5737
  %v5778 = vunpack.c.l.b16 %v5738
  %v5779 = vunpack.c.l.b16 %v5739
  %v5780 = vunpack.c.l.b16 %v5740
  %v5781 = vunpack.c.l.b16 %v5741
  %v5782 = vunpack.c.l.b16 %v5742
  %v5783 = vunpack.c.l.b16 %v5743
  %v5784 = vunpack.c.l.b16 %v5744
  %v5785 = vunpack.c.l.b16 %v5745
  %v5786 = vunpack.c.l.b16 %v5746
  %v5787 = vunpack.c.l.b16 %v5747
  %v5788 = vunpack.c.l.b16 %v5748
  %v5789 = vunpack.c.l.b16 %v5749
  %v5790 = vunpack.c.l.b16 %v5750
  %v5791 = vunpack.c.l.b16 %v5751
  %v5792 = vunpack.c.l.b16 %v5752
  %v5793 = vunpack.c.l.b16 %v5753
  %v5794 = vpack.c.b16 %v5775, %v5774
  %v5795 = vpack.c.b16 %v5777, %v5776
  %v5796 = vpack.c.b16 %v5779, %v5778
  %v5797 = vpack.c.b16 %v5781, %v5780
  %v5798 = vpack.c.b16 %v5783, %v5782
  %v5799 = vpack.c.b16 %v5785, %v5784
  %v5800 = vpack.c.b16 %v5787, %v5786
  %v5801 = vpack.c.b16 %v5789, %v5788
  %v5802 = vpack.c.b16 %v5791, %v5790
  %v5803 = vpack.c.b16 %v5793, %v5792
  %5814 = vmatprep.subr.bf16.mxu0 0
  %5815 = vmatpush1.bf16.msra.mxu0 %v5794
  %5816 = vmatprep.subr.bf16.mxu0 0
  %5817 = vmatpush1.bf16.msra.mxu0 %v5795
  %5818 = vmatprep.subr.bf16.mxu0 0
  %5819 = vmatpush1.bf16.msra.mxu0 %v5796
  %5820 = vmatprep.subr.bf16.mxu0 0
  %5821 = vmatpush1.bf16.msra.mxu0 %v5797
  %5822 = vmatprep.subr.bf16.mxu0 0
  %5823 = vmatpush1.bf16.msra.mxu0 %v5798
  %5824 = vmatprep.subr.bf16.mxu0 0
  %5825 = vmatpush1.bf16.msra.mxu0 %v5799
  %5826 = vmatprep.subr.bf16.mxu0 0
  %5827 = vmatpush1.bf16.msra.mxu0 %v5800
  %5828 = vmatprep.subr.bf16.mxu0 0
  %5829 = vmatpush1.bf16.msra.mxu0 %v5801
  %5830 = vmatprep.subr.bf16.mxu0 0
  %5831 = vmatpush1.bf16.msra.mxu0 %v5802
  %5832 = vmatprep.subr.bf16.mxu0 0
  %5833 = vmatpush1.bf16.msra.mxu0 %v5803
  %5834 = vmatprep.subr.bf16.mxu0 0
  %5835 = vmatpush1.bf16.msra.mxu0 0
  %5836 = vmatprep.subr.bf16.mxu0 0
  %5837 = vmatpush1.bf16.msra.mxu0 0
  %5838 = vmatprep.subr.bf16.mxu0 0
  %5839 = vmatpush1.bf16.msra.mxu0 0
  %5840 = vmatprep.subr.bf16.mxu0 0
  %5841 = vmatpush1.bf16.msra.mxu0 0
  %5842 = vmatprep.subr.bf16.mxu0 0
  %5843 = vmatpush1.bf16.msra.mxu0 0
  %5844 = vmatprep.subr.bf16.mxu0 0
  %5845 = vmatpush1.bf16.msra.mxu0 0
  %5846 = vmatprep.mubr.bf16.mxu0 %v445
  %5847 = vmatmul.mubr.bf16.gmra.mrb[0].mxu0 %v347
  %v5848 = vpop.f32.mrb[0].mxu0
  %v5849 = vadd.f32 %v158, %v5848
  %v5850 = vpop.f32.mrb[0].mxu0
  %v5851 = vpop.f32.mrb[0].mxu0
  %v5852 = vadd.f32 %v163, %v5851
  %v5853 = vpop.f32.mrb[0].mxu0
  %5854 = vmatprep.mubr.bf16.mxu0 %v448
  %5855 = vmatmul.mubr.bf16.gmra.mrb[0].mxu0 %v349
  %v5856 = vpop.f32.mrb[0].mxu0
  %v5857 = vadd.f32 %v168, %v5856
  %v5858 = vpop.f32.mrb[0].mxu0
  %v5859 = vpop.f32.mrb[0].mxu0
  %v5860 = vadd.f32 %v173, %v5859
  %v5861 = vpop.f32.mrb[0].mxu0
  %5862 = vmatprep.mubr.bf16.mxu0 %v451
  %5863 = vmatmul.mubr.bf16.gmra.mrb[0].mxu0 %v351
  %v5864 = vpop.f32.mrb[0].mxu0
  %v5865 = vadd.f32 %v178, %v5864
  %v5866 = vpop.f32.mrb[0].mxu0
  %v5867 = vpop.f32.mrb[0].mxu0
  %v5868 = vadd.f32 %v183, %v5867
  %v5869 = vpop.f32.mrb[0].mxu0
  %5870 = vmatprep.mubr.bf16.mxu0 %v454
  %5871 = vmatmul.mubr.bf16.gmra.mrb[0].mxu0 %v353
  %v5872 = vpop.f32.mrb[0].mxu0
  %v5873 = vadd.f32 %v188, %v5872
  %v5874 = vpop.f32.mrb[0].mxu0
  %v5875 = vpop.f32.mrb[0].mxu0
  %v5876 = vadd.f32 %v193, %v5875
  %v5877 = vpop.f32.mrb[0].mxu0
  %5878 = vmatprep.mubr.bf16.mxu0 %v457
  %5879 = vmatmul.mubr.bf16.gmra.mrb[0].mxu0 %v355
  %v5880 = vpop.f32.mrb[0].mxu0
  %v5881 = vadd.f32 %v198, %v5880
  %v5882 = vpop.f32.mrb[0].mxu0
  %v5883 = vpop.f32.mrb[0].mxu0
  %v5884 = vadd.f32 %v203, %v5883
  %v5885 = vpop.f32.mrb[0].mxu0
  %5886 = vmatprep.mubr.bf16.mxu0 %v460
  %5887 = vmatmul.mubr.bf16.gmra.mrb[0].mxu0 %v357
  %v5888 = vpop.f32.mrb[0].mxu0
  %v5889 = vadd.f32 %v208, %v5888
  %v5890 = vpop.f32.mrb[0].mxu0
  %v5891 = vpop.f32.mrb[0].mxu0
  %v5892 = vadd.f32 %v213, %v5891
  %v5893 = vpop.f32.mrb[0].mxu0
  %5894 = vmatprep.mubr.bf16.mxu0 %v463
  %5895 = vmatmul.mubr.bf16.gmra.mrb[0].mxu0 %v359
  %v5896 = vpop.f32.mrb[0].mxu0
  %v5897 = vadd.f32 %v218, %v5896
  %v5898 = vpop.f32.mrb[0].mxu0
  %v5899 = vpop.f32.mrb[0].mxu0
  %v5900 = vadd.f32 %v223, %v5899
  %v5901 = vpop.f32.mrb[0].mxu0
  %5902 = vmatprep.mubr.bf16.mxu0 %v466
  %5903 = vmatmul.mubr.bf16.gmra.mrb[0].mxu0 %v361
  %v5904 = vpop.f32.mrb[0].mxu0
  %v5905 = vadd.f32 %v228, %v5904
  %v5906 = vpop.f32.mrb[0].mxu0
  %v5907 = vpop.f32.mrb[0].mxu0
  %v5908 = vadd.f32 %v233, %v5907
  %v5909 = vpop.f32.mrb[0].mxu0
  %5910 = vmatprep.mubr.bf16.mxu0 %v469
  %5911 = vmatmul.mubr.bf16.gmra.mrb[0].mxu0 %v363
  %v5912 = vpop.f32.mrb[0].mxu0
  %v5913 = vadd.f32 %v238, %v5912
  %v5914 = vpop.f32.mrb[0].mxu0
  %v5915 = vpop.f32.mrb[0].mxu0
  %v5916 = vadd.f32 %v243, %v5915
  %v5917 = vpop.f32.mrb[0].mxu0
  %5918 = vmatprep.mubr.bf16.mxu0 %v472
  %5919 = vmatmul.mubr.bf16.gmra.mrb[0].mxu0 %v365
  %v5920 = vpop.f32.mrb[0].mxu0
  %v5921 = vadd.f32 %v248, %v5920
  %v5922 = vpop.f32.mrb[0].mxu0
  %v5923 = vpop.f32.mrb[0].mxu0
  %v5924 = vadd.f32 %v253, %v5923
  %v5925 = vpop.f32.mrb[0].mxu0
  %5926 = vmatprep.mubr.bf16.mxu0 %v475
  %5927 = vmatmul.mubr.bf16.gmra.mrb[0].mxu0 %v367
  %v5928 = vpop.f32.mrb[0].mxu0
  %v5929 = vadd.f32 %v258, %v5928
  %v5930 = vpop.f32.mrb[0].mxu0
  %v5931 = vpop.f32.mrb[0].mxu0
  %v5932 = vadd.f32 %v263, %v5931
  %v5933 = vpop.f32.mrb[0].mxu0
  %5934 = vmatprep.mubr.bf16.mxu0 %v478
  %5935 = vmatmul.mubr.bf16.gmra.mrb[0].mxu0 %v369
  %v5936 = vpop.f32.mrb[0].mxu0
  %v5937 = vadd.f32 %v268, %v5936
  %v5938 = vpop.f32.mrb[0].mxu0
  %v5939 = vpop.f32.mrb[0].mxu0
  %v5940 = vadd.f32 %v273, %v5939
  %v5941 = vpop.f32.mrb[0].mxu0
  %5942 = vdwg.mxu0
  %v5943 = vmax.f32 %v5849, 0.0
  %v5944 = vmax.f32 %v5852, 0.0
  %v5945 = vmax.f32 %v5857, 0.0
  %v5946 = vmax.f32 %v5860, 0.0
  %v5947 = vmax.f32 %v5865, 0.0
  %v5948 = vmax.f32 %v5868, 0.0
  %v5949 = vmax.f32 %v5873, 0.0
  %v5950 = vmax.f32 %v5876, 0.0
  %v5951 = vmax.f32 %v5881, 0.0
  %v5952 = vmax.f32 %v5884, 0.0
  %v5953 = vmax.f32 %v5889, 0.0
  %v5954 = vmax.f32 %v5892, 0.0
  %v5955 = vmax.f32 %v5897, 0.0
  %v5956 = vmax.f32 %v5900, 0.0
  %v5957 = vmax.f32 %v5905, 0.0
  %v5958 = vmax.f32 %v5908, 0.0
  %v5959 = vmax.f32 %v5913, 0.0
  %v5960 = vmax.f32 %v5916, 0.0
  %v5961 = vmax.f32 %v5921, 0.0
  %v5962 = vmax.f32 %v5924, 0.0
  %v5963 = vmax.f32 %v5929, 0.0
  %v5964 = vmax.f32 %v5932, 0.0
  %v5965 = vmax.f32 %v5937, 0.0
  %v5966 = vmax.f32 %v5940, 0.0
  %v5967 = vmax.f32 %v5709, %v5943
  %v5968 = vmax.f32 %v5710, %v5944
  %v5969 = vmax.f32 %v5711, %v5945
  %v5970 = vmax.f32 %v5712, %v5946
  %v5971 = vmax.f32 %v5713, %v5947
  %v5972 = vmax.f32 %v5714, %v5948
  %v5973 = vmax.f32 %v5715, %v5949
  %v5974 = vmax.f32 %v5716, %v5950
  %v5975 = vmax.f32 %v5717, %v5951
  %v5976 = vmax.f32 %v5718, %v5952
  %v5977 = vmax.f32 %v5719, %v5953
  %v5978 = vmax.f32 %v5720, %v5954
  %v5979 = vmax.f32 %v5721, %v5955
  %v5980 = vmax.f32 %v5722, %v5956
  %v5981 = vmax.f32 %v5723, %v5957
  %v5982 = vmax.f32 %v5724, %v5958
  %v5983 = vmax.f32 %v5725, %v5959
  %v5984 = vmax.f32 %v5726, %v5960
  %v5985 = vmax.f32 %v5727, %v5961
  %v5986 = vmax.f32 %v5728, %v5962
  %v5987 = vmax.f32 %v5729, %v5963
  %v5988 = vmax.f32 %v5730, %v5964
  %v5989 = vmax.f32 %v5731, %v5965
  %v5990 = vmax.f32 %v5732, %v5966
  %v5991 = vmax.f32 %v5967, %v5968
  %v5992 = vmax.f32 %v5969, %v5970
  %v5993 = vmax.f32 %v5971, %v5972
  %v5994 = vmax.f32 %v5973, %v5974
  %v5995 = vmax.f32 %v5975, %v5976
  %v5996 = vmax.f32 %v5977, %v5978
  %v5997 = vmax.f32 %v5979, %v5980
  %v5998 = vmax.f32 %v5981, %v5982
  %v5999 = vmax.f32 %v5983, %v5984
  %v6000 = vmax.f32 %v5985, %v5986
  %v6001 = vmax.f32 %v5987, %v5988
  %v6002 = vmax.f32 %v5989, %v5990
  %v6003 = vpack.c.bf16 %v5992, %v5991
  %v6004 = vpack.c.bf16 %v5994, %v5993
  %v6005 = vpack.c.bf16 %v5996, %v5995
  %v6006 = vpack.c.bf16 %v5998, %v5997
  %v6007 = vpack.c.bf16 %v6000, %v5999
  %v6008 = vpack.c.bf16 %v6002, %v6001
  %s6009 = scalar_lea.vmem %s0, 352
  %v6010 = vld [vmem:[%s6009] sm:$0xf]
  %v6011 = vld [vmem:[%s6009 + $0x4] sm:$0xf]
  %v6012 = vld [vmem:[%s6009 + $0x8] sm:$0xf]
  %v6013 = vld [vmem:[%s6009 + $0xc] sm:$0xf]
  %v6014 = vld [vmem:[%s6009 + $0x10] sm:$0xf]
  %v6015 = vld [vmem:[%s6009 + $0x14] sm:$0xf]
  %v6016 = vld [vmem:[%s6009 + $0x18] sm:$0xf]
  %v6017 = vld [vmem:[%s6009 + $0x1c] sm:$0xf]
  %v6018 = vld [vmem:[%s6009 + $0x20] sm:$0xf]
  %v6019 = vld [vmem:[%s6009 + $0x24] sm:$0xf]
  %v6020 = vld [vmem:[%s6009 + $0x28] sm:$0xf]
  %v6021 = vld [vmem:[%s6009 + $0x2c] sm:$0xf]
  %v6022 = vld [vmem:[%s6009 + $0x30] sm:$0xf]
  %v6023 = vld [vmem:[%s6009 + $0x34] sm:$0xf]
  %v6024 = vld [vmem:[%s6009 + $0x38] sm:$0xf]
  %v6025 = vld [vmem:[%s6009 + $0x3c] sm:$0xf]
  %v6026 = vld [vmem:[%s6009 + $0x40] sm:$0xf]
  %v6027 = vld [vmem:[%s6009 + $0x44] sm:$0xf]
  %v6028 = vld [vmem:[%s6009 + $0x48] sm:$0xf]
  %v6029 = vld [vmem:[%s6009 + $0x4c] sm:$0xf]
  %v6050 = vunpack.c.l.b16 %v6010
  %v6051 = vunpack.c.l.b16 %v6011
  %v6052 = vunpack.c.l.b16 %v6012
  %v6053 = vunpack.c.l.b16 %v6013
  %v6054 = vunpack.c.l.b16 %v6014
  %v6055 = vunpack.c.l.b16 %v6015
  %v6056 = vunpack.c.l.b16 %v6016
  %v6057 = vunpack.c.l.b16 %v6017
  %v6058 = vunpack.c.l.b16 %v6018
  %v6059 = vunpack.c.l.b16 %v6019
  %v6060 = vunpack.c.l.b16 %v6020
  %v6061 = vunpack.c.l.b16 %v6021
  %v6062 = vunpack.c.l.b16 %v6022
  %v6063 = vunpack.c.l.b16 %v6023
  %v6064 = vunpack.c.l.b16 %v6024
  %v6065 = vunpack.c.l.b16 %v6025
  %v6066 = vunpack.c.l.b16 %v6026
  %v6067 = vunpack.c.l.b16 %v6027
  %v6068 = vunpack.c.l.b16 %v6028
  %v6069 = vunpack.c.l.b16 %v6029
  %v6070 = vpack.c.b16 %v6051, %v6050
  %v6071 = vpack.c.b16 %v6053, %v6052
  %v6072 = vpack.c.b16 %v6055, %v6054
  %v6073 = vpack.c.b16 %v6057, %v6056
  %v6074 = vpack.c.b16 %v6059, %v6058
  %v6075 = vpack.c.b16 %v6061, %v6060
  %v6076 = vpack.c.b16 %v6063, %v6062
  %v6077 = vpack.c.b16 %v6065, %v6064
  %v6078 = vpack.c.b16 %v6067, %v6066
  %v6079 = vpack.c.b16 %v6069, %v6068
  %6090 = vmatprep.subr.bf16.mxu0 0
  %6091 = vmatpush1.bf16.msra.mxu0 %v6070
  %6092 = vmatprep.subr.bf16.mxu0 0
  %6093 = vmatpush1.bf16.msra.mxu0 %v6071
  %6094 = vmatprep.subr.bf16.mxu0 0
  %6095 = vmatpush1.bf16.msra.mxu0 %v6072
  %6096 = vmatprep.subr.bf16.mxu0 0
  %6097 = vmatpush1.bf16.msra.mxu0 %v6073
  %6098 = vmatprep.subr.bf16.mxu0 0
  %6099 = vmatpush1.bf16.msra.mxu0 %v6074
  %6100 = vmatprep.subr.bf16.mxu0 0
  %6101 = vmatpush1.bf16.msra.mxu0 %v6075
  %6102 = vmatprep.subr.bf16.mxu0 0
  %6103 = vmatpush1.bf16.msra.mxu0 %v6076
  %6104 = vmatprep.subr.bf16.mxu0 0
  %6105 = vmatpush1.bf16.msra.mxu0 %v6077
  %6106 = vmatprep.subr.bf16.mxu0 0
  %6107 = vmatpush1.bf16.msra.mxu0 %v6078
  %6108 = vmatprep.subr.bf16.mxu0 0
  %6109 = vmatpush1.bf16.msra.mxu0 %v6079
  %6110 = vmatprep.subr.bf16.mxu0 0
  %6111 = vmatpush1.bf16.msra.mxu0 0
  %6112 = vmatprep.subr.bf16.mxu0 0
  %6113 = vmatpush1.bf16.msra.mxu0 0
  %6114 = vmatprep.subr.bf16.mxu0 0
  %6115 = vmatpush1.bf16.msra.mxu0 0
  %6116 = vmatprep.subr.bf16.mxu0 0
  %6117 = vmatpush1.bf16.msra.mxu0 0
  %6118 = vmatprep.subr.bf16.mxu0 0
  %6119 = vmatpush1.bf16.msra.mxu0 0
  %6120 = vmatprep.subr.bf16.mxu0 0
  %6121 = vmatpush1.bf16.msra.mxu0 0
  %6122 = vmatprep.mubr.bf16.mxu0 %v445
  %6123 = vmatmul.mubr.bf16.gmra.mrb[0].mxu0 %v347
  %v6124 = vpop.f32.mrb[0].mxu0
  %v6125 = vadd.f32 %v158, %v6124
  %v6126 = vpop.f32.mrb[0].mxu0
  %v6127 = vpop.f32.mrb[0].mxu0
  %v6128 = vadd.f32 %v163, %v6127
  %v6129 = vpop.f32.mrb[0].mxu0
  %6130 = vmatprep.mubr.bf16.mxu0 %v448
  %6131 = vmatmul.mubr.bf16.gmra.mrb[0].mxu0 %v349
  %v6132 = vpop.f32.mrb[0].mxu0
  %v6133 = vadd.f32 %v168, %v6132
  %v6134 = vpop.f32.mrb[0].mxu0
  %v6135 = vpop.f32.mrb[0].mxu0
  %v6136 = vadd.f32 %v173, %v6135
  %v6137 = vpop.f32.mrb[0].mxu0
  %6138 = vmatprep.mubr.bf16.mxu0 %v451
  %6139 = vmatmul.mubr.bf16.gmra.mrb[0].mxu0 %v351
  %v6140 = vpop.f32.mrb[0].mxu0
  %v6141 = vadd.f32 %v178, %v6140
  %v6142 = vpop.f32.mrb[0].mxu0
  %v6143 = vpop.f32.mrb[0].mxu0
  %v6144 = vadd.f32 %v183, %v6143
  %v6145 = vpop.f32.mrb[0].mxu0
  %6146 = vmatprep.mubr.bf16.mxu0 %v454
  %6147 = vmatmul.mubr.bf16.gmra.mrb[0].mxu0 %v353
  %v6148 = vpop.f32.mrb[0].mxu0
  %v6149 = vadd.f32 %v188, %v6148
  %v6150 = vpop.f32.mrb[0].mxu0
  %v6151 = vpop.f32.mrb[0].mxu0
  %v6152 = vadd.f32 %v193, %v6151
  %v6153 = vpop.f32.mrb[0].mxu0
  %6154 = vmatprep.mubr.bf16.mxu0 %v457
  %6155 = vmatmul.mubr.bf16.gmra.mrb[0].mxu0 %v355
  %v6156 = vpop.f32.mrb[0].mxu0
  %v6157 = vadd.f32 %v198, %v6156
  %v6158 = vpop.f32.mrb[0].mxu0
  %v6159 = vpop.f32.mrb[0].mxu0
  %v6160 = vadd.f32 %v203, %v6159
  %v6161 = vpop.f32.mrb[0].mxu0
  %6162 = vmatprep.mubr.bf16.mxu0 %v460
  %6163 = vmatmul.mubr.bf16.gmra.mrb[0].mxu0 %v357
  %v6164 = vpop.f32.mrb[0].mxu0
  %v6165 = vadd.f32 %v208, %v6164
  %v6166 = vpop.f32.mrb[0].mxu0
  %v6167 = vpop.f32.mrb[0].mxu0
  %v6168 = vadd.f32 %v213, %v6167
  %v6169 = vpop.f32.mrb[0].mxu0
  %6170 = vmatprep.mubr.bf16.mxu0 %v463
  %6171 = vmatmul.mubr.bf16.gmra.mrb[0].mxu0 %v359
  %v6172 = vpop.f32.mrb[0].mxu0
  %v6173 = vadd.f32 %v218, %v6172
  %v6174 = vpop.f32.mrb[0].mxu0
  %v6175 = vpop.f32.mrb[0].mxu0
  %v6176 = vadd.f32 %v223, %v6175
  %v6177 = vpop.f32.mrb[0].mxu0
  %6178 = vmatprep.mubr.bf16.mxu0 %v466
  %6179 = vmatmul.mubr.bf16.gmra.mrb[0].mxu0 %v361
  %v6180 = vpop.f32.mrb[0].mxu0
  %v6181 = vadd.f32 %v228, %v6180
  %v6182 = vpop.f32.mrb[0].mxu0
  %v6183 = vpop.f32.mrb[0].mxu0
  %v6184 = vadd.f32 %v233, %v6183
  %v6185 = vpop.f32.mrb[0].mxu0
  %6186 = vmatprep.mubr.bf16.mxu0 %v469
  %6187 = vmatmul.mubr.bf16.gmra.mrb[0].mxu0 %v363
  %v6188 = vpop.f32.mrb[0].mxu0
  %v6189 = vadd.f32 %v238, %v6188
  %v6190 = vpop.f32.mrb[0].mxu0
  %v6191 = vpop.f32.mrb[0].mxu0
  %v6192 = vadd.f32 %v243, %v6191
  %v6193 = vpop.f32.mrb[0].mxu0
  %6194 = vmatprep.mubr.bf16.mxu0 %v472
  %6195 = vmatmul.mubr.bf16.gmra.mrb[0].mxu0 %v365
  %v6196 = vpop.f32.mrb[0].mxu0
  %v6197 = vadd.f32 %v248, %v6196
  %v6198 = vpop.f32.mrb[0].mxu0
  %v6199 = vpop.f32.mrb[0].mxu0
  %v6200 = vadd.f32 %v253, %v6199
  %v6201 = vpop.f32.mrb[0].mxu0
  %6202 = vmatprep.mubr.bf16.mxu0 %v475
  %6203 = vmatmul.mubr.bf16.gmra.mrb[0].mxu0 %v367
  %v6204 = vpop.f32.mrb[0].mxu0
  %v6205 = vadd.f32 %v258, %v6204
  %v6206 = vpop.f32.mrb[0].mxu0
  %v6207 = vpop.f32.mrb[0].mxu0
  %v6208 = vadd.f32 %v263, %v6207
  %v6209 = vpop.f32.mrb[0].mxu0
  %6210 = vmatprep.mubr.bf16.mxu0 %v478
  %6211 = vmatmul.mubr.bf16.gmra.mrb[0].mxu0 %v369
  %v6212 = vpop.f32.mrb[0].mxu0
  %v6213 = vadd.f32 %v268, %v6212
  %v6214 = vpop.f32.mrb[0].mxu0
  %v6215 = vpop.f32.mrb[0].mxu0
  %v6216 = vadd.f32 %v273, %v6215
  %v6217 = vpop.f32.mrb[0].mxu0
  %6218 = vdwg.mxu0
  %v6219 = vmax.f32 %v6125, 0.0
  %v6220 = vmax.f32 %v6128, 0.0
  %v6221 = vmax.f32 %v6133, 0.0
  %v6222 = vmax.f32 %v6136, 0.0
  %v6223 = vmax.f32 %v6141, 0.0
  %v6224 = vmax.f32 %v6144, 0.0
  %v6225 = vmax.f32 %v6149, 0.0
  %v6226 = vmax.f32 %v6152, 0.0
  %v6227 = vmax.f32 %v6157, 0.0
  %v6228 = vmax.f32 %v6160, 0.0
  %v6229 = vmax.f32 %v6165, 0.0
  %v6230 = vmax.f32 %v6168, 0.0
  %v6231 = vmax.f32 %v6173, 0.0
  %v6232 = vmax.f32 %v6176, 0.0
  %v6233 = vmax.f32 %v6181, 0.0
  %v6234 = vmax.f32 %v6184, 0.0
  %v6235 = vmax.f32 %v6189, 0.0
  %v6236 = vmax.f32 %v6192, 0.0
  %v6237 = vmax.f32 %v6197, 0.0
  %v6238 = vmax.f32 %v6200, 0.0
  %v6239 = vmax.f32 %v6205, 0.0
  %v6240 = vmax.f32 %v6208, 0.0
  %v6241 = vmax.f32 %v6213, 0.0
  %v6242 = vmax.f32 %v6216, 0.0
  %s6243 = scalar_lea.vmem %s0, 368
  %v6244 = vld [vmem:[%s6243] sm:$0xf]
  %v6245 = vld [vmem:[%s6243 + $0x4] sm:$0xf]
  %v6246 = vld [vmem:[%s6243 + $0x8] sm:$0xf]
  %v6247 = vld [vmem:[%s6243 + $0xc] sm:$0xf]
  %v6248 = vld [vmem:[%s6243 + $0x10] sm:$0xf]
  %v6249 = vld [vmem:[%s6243 + $0x14] sm:$0xf]
  %v6250 = vld [vmem:[%s6243 + $0x18] sm:$0xf]
  %v6251 = vld [vmem:[%s6243 + $0x1c] sm:$0xf]
  %v6252 = vld [vmem:[%s6243 + $0x20] sm:$0xf]
  %v6253 = vld [vmem:[%s6243 + $0x24] sm:$0xf]
  %v6254 = vld [vmem:[%s6243 + $0x28] sm:$0xf]
  %v6255 = vld [vmem:[%s6243 + $0x2c] sm:$0xf]
  %v6256 = vld [vmem:[%s6243 + $0x30] sm:$0xf]
  %v6257 = vld [vmem:[%s6243 + $0x34] sm:$0xf]
  %v6258 = vld [vmem:[%s6243 + $0x38] sm:$0xf]
  %v6259 = vld [vmem:[%s6243 + $0x3c] sm:$0xf]
  %v6260 = vld [vmem:[%s6243 + $0x40] sm:$0xf]
  %v6261 = vld [vmem:[%s6243 + $0x44] sm:$0xf]
  %v6262 = vld [vmem:[%s6243 + $0x48] sm:$0xf]
  %v6263 = vld [vmem:[%s6243 + $0x4c] sm:$0xf]
  %v6284 = vunpack.c.l.b16 %v6244
  %v6285 = vunpack.c.l.b16 %v6245
  %v6286 = vunpack.c.l.b16 %v6246
  %v6287 = vunpack.c.l.b16 %v6247
  %v6288 = vunpack.c.l.b16 %v6248
  %v6289 = vunpack.c.l.b16 %v6249
  %v6290 = vunpack.c.l.b16 %v6250
  %v6291 = vunpack.c.l.b16 %v6251
  %v6292 = vunpack.c.l.b16 %v6252
  %v6293 = vunpack.c.l.b16 %v6253
  %v6294 = vunpack.c.l.b16 %v6254
  %v6295 = vunpack.c.l.b16 %v6255
  %v6296 = vunpack.c.l.b16 %v6256
  %v6297 = vunpack.c.l.b16 %v6257
  %v6298 = vunpack.c.l.b16 %v6258
  %v6299 = vunpack.c.l.b16 %v6259
  %v6300 = vunpack.c.l.b16 %v6260
  %v6301 = vunpack.c.l.b16 %v6261
  %v6302 = vunpack.c.l.b16 %v6262
  %v6303 = vunpack.c.l.b16 %v6263
  %v6304 = vpack.c.b16 %v6285, %v6284
  %v6305 = vpack.c.b16 %v6287, %v6286
  %v6306 = vpack.c.b16 %v6289, %v6288
  %v6307 = vpack.c.b16 %v6291, %v6290
  %v6308 = vpack.c.b16 %v6293, %v6292
  %v6309 = vpack.c.b16 %v6295, %v6294
  %v6310 = vpack.c.b16 %v6297, %v6296
  %v6311 = vpack.c.b16 %v6299, %v6298
  %v6312 = vpack.c.b16 %v6301, %v6300
  %v6313 = vpack.c.b16 %v6303, %v6302
  %6324 = vmatprep.subr.bf16.mxu0 0
  %6325 = vmatpush1.bf16.msra.mxu0 %v6304
  %6326 = vmatprep.subr.bf16.mxu0 0
  %6327 = vmatpush1.bf16.msra.mxu0 %v6305
  %6328 = vmatprep.subr.bf16.mxu0 0
  %6329 = vmatpush1.bf16.msra.mxu0 %v6306
  %6330 = vmatprep.subr.bf16.mxu0 0
  %6331 = vmatpush1.bf16.msra.mxu0 %v6307
  %6332 = vmatprep.subr.bf16.mxu0 0
  %6333 = vmatpush1.bf16.msra.mxu0 %v6308
  %6334 = vmatprep.subr.bf16.mxu0 0
  %6335 = vmatpush1.bf16.msra.mxu0 %v6309
  %6336 = vmatprep.subr.bf16.mxu0 0
  %6337 = vmatpush1.bf16.msra.mxu0 %v6310
  %6338 = vmatprep.subr.bf16.mxu0 0
  %6339 = vmatpush1.bf16.msra.mxu0 %v6311
  %6340 = vmatprep.subr.bf16.mxu0 0
  %6341 = vmatpush1.bf16.msra.mxu0 %v6312
  %6342 = vmatprep.subr.bf16.mxu0 0
  %6343 = vmatpush1.bf16.msra.mxu0 %v6313
  %6344 = vmatprep.subr.bf16.mxu0 0
  %6345 = vmatpush1.bf16.msra.mxu0 0
  %6346 = vmatprep.subr.bf16.mxu0 0
  %6347 = vmatpush1.bf16.msra.mxu0 0
  %6348 = vmatprep.subr.bf16.mxu0 0
  %6349 = vmatpush1.bf16.msra.mxu0 0
  %6350 = vmatprep.subr.bf16.mxu0 0
  %6351 = vmatpush1.bf16.msra.mxu0 0
  %6352 = vmatprep.subr.bf16.mxu0 0
  %6353 = vmatpush1.bf16.msra.mxu0 0
  %6354 = vmatprep.subr.bf16.mxu0 0
  %6355 = vmatpush1.bf16.msra.mxu0 0
  %6356 = vmatprep.mubr.bf16.mxu0 %v445
  %6357 = vmatmul.mubr.bf16.gmra.mrb[0].mxu0 %v347
  %v6358 = vpop.f32.mrb[0].mxu0
  %v6359 = vadd.f32 %v158, %v6358
  %v6360 = vpop.f32.mrb[0].mxu0
  %v6361 = vpop.f32.mrb[0].mxu0
  %v6362 = vadd.f32 %v163, %v6361
  %v6363 = vpop.f32.mrb[0].mxu0
  %6364 = vmatprep.mubr.bf16.mxu0 %v448
  %6365 = vmatmul.mubr.bf16.gmra.mrb[0].mxu0 %v349
  %v6366 = vpop.f32.mrb[0].mxu0
  %v6367 = vadd.f32 %v168, %v6366
  %v6368 = vpop.f32.mrb[0].mxu0
  %v6369 = vpop.f32.mrb[0].mxu0
  %v6370 = vadd.f32 %v173, %v6369
  %v6371 = vpop.f32.mrb[0].mxu0
  %6372 = vmatprep.mubr.bf16.mxu0 %v451
  %6373 = vmatmul.mubr.bf16.gmra.mrb[0].mxu0 %v351
  %v6374 = vpop.f32.mrb[0].mxu0
  %v6375 = vadd.f32 %v178, %v6374
  %v6376 = vpop.f32.mrb[0].mxu0
  %v6377 = vpop.f32.mrb[0].mxu0
  %v6378 = vadd.f32 %v183, %v6377
  %v6379 = vpop.f32.mrb[0].mxu0
  %6380 = vmatprep.mubr.bf16.mxu0 %v454
  %6381 = vmatmul.mubr.bf16.gmra.mrb[0].mxu0 %v353
  %v6382 = vpop.f32.mrb[0].mxu0
  %v6383 = vadd.f32 %v188, %v6382
  %v6384 = vpop.f32.mrb[0].mxu0
  %v6385 = vpop.f32.mrb[0].mxu0
  %v6386 = vadd.f32 %v193, %v6385
  %v6387 = vpop.f32.mrb[0].mxu0
  %6388 = vmatprep.mubr.bf16.mxu0 %v457
  %6389 = vmatmul.mubr.bf16.gmra.mrb[0].mxu0 %v355
  %v6390 = vpop.f32.mrb[0].mxu0
  %v6391 = vadd.f32 %v198, %v6390
  %v6392 = vpop.f32.mrb[0].mxu0
  %v6393 = vpop.f32.mrb[0].mxu0
  %v6394 = vadd.f32 %v203, %v6393
  %v6395 = vpop.f32.mrb[0].mxu0
  %6396 = vmatprep.mubr.bf16.mxu0 %v460
  %6397 = vmatmul.mubr.bf16.gmra.mrb[0].mxu0 %v357
  %v6398 = vpop.f32.mrb[0].mxu0
  %v6399 = vadd.f32 %v208, %v6398
  %v6400 = vpop.f32.mrb[0].mxu0
  %v6401 = vpop.f32.mrb[0].mxu0
  %v6402 = vadd.f32 %v213, %v6401
  %v6403 = vpop.f32.mrb[0].mxu0
  %6404 = vmatprep.mubr.bf16.mxu0 %v463
  %6405 = vmatmul.mubr.bf16.gmra.mrb[0].mxu0 %v359
  %v6406 = vpop.f32.mrb[0].mxu0
  %v6407 = vadd.f32 %v218, %v6406
  %v6408 = vpop.f32.mrb[0].mxu0
  %v6409 = vpop.f32.mrb[0].mxu0
  %v6410 = vadd.f32 %v223, %v6409
  %v6411 = vpop.f32.mrb[0].mxu0
  %6412 = vmatprep.mubr.bf16.mxu0 %v466
  %6413 = vmatmul.mubr.bf16.gmra.mrb[0].mxu0 %v361
  %v6414 = vpop.f32.mrb[0].mxu0
  %v6415 = vadd.f32 %v228, %v6414
  %v6416 = vpop.f32.mrb[0].mxu0
  %v6417 = vpop.f32.mrb[0].mxu0
  %v6418 = vadd.f32 %v233, %v6417
  %v6419 = vpop.f32.mrb[0].mxu0
  %6420 = vmatprep.mubr.bf16.mxu0 %v469
  %6421 = vmatmul.mubr.bf16.gmra.mrb[0].mxu0 %v363
  %v6422 = vpop.f32.mrb[0].mxu0
  %v6423 = vadd.f32 %v238, %v6422
  %v6424 = vpop.f32.mrb[0].mxu0
  %v6425 = vpop.f32.mrb[0].mxu0
  %v6426 = vadd.f32 %v243, %v6425
  %v6427 = vpop.f32.mrb[0].mxu0
  %6428 = vmatprep.mubr.bf16.mxu0 %v472
  %6429 = vmatmul.mubr.bf16.gmra.mrb[0].mxu0 %v365
  %v6430 = vpop.f32.mrb[0].mxu0
  %v6431 = vadd.f32 %v248, %v6430
  %v6432 = vpop.f32.mrb[0].mxu0
  %v6433 = vpop.f32.mrb[0].mxu0
  %v6434 = vadd.f32 %v253, %v6433
  %v6435 = vpop.f32.mrb[0].mxu0
  %6436 = vmatprep.mubr.bf16.mxu0 %v475
  %6437 = vmatmul.mubr.bf16.gmra.mrb[0].mxu0 %v367
  %v6438 = vpop.f32.mrb[0].mxu0
  %v6439 = vadd.f32 %v258, %v6438
  %v6440 = vpop.f32.mrb[0].mxu0
  %v6441 = vpop.f32.mrb[0].mxu0
  %v6442 = vadd.f32 %v263, %v6441
  %v6443 = vpop.f32.mrb[0].mxu0
  %6444 = vmatprep.mubr.bf16.mxu0 %v478
  %6445 = vmatmul.mubr.bf16.gmra.mrb[0].mxu0 %v369
  %v6446 = vpop.f32.mrb[0].mxu0
  %v6447 = vadd.f32 %v268, %v6446
  %v6448 = vpop.f32.mrb[0].mxu0
  %v6449 = vpop.f32.mrb[0].mxu0
  %v6450 = vadd.f32 %v273, %v6449
  %v6451 = vpop.f32.mrb[0].mxu0
  %6452 = vdwg.mxu0
  %v6453 = vmax.f32 %v6359, 0.0
  %v6454 = vmax.f32 %v6362, 0.0
  %v6455 = vmax.f32 %v6367, 0.0
  %v6456 = vmax.f32 %v6370, 0.0
  %v6457 = vmax.f32 %v6375, 0.0
  %v6458 = vmax.f32 %v6378, 0.0
  %v6459 = vmax.f32 %v6383, 0.0
  %v6460 = vmax.f32 %v6386, 0.0
  %v6461 = vmax.f32 %v6391, 0.0
  %v6462 = vmax.f32 %v6394, 0.0
  %v6463 = vmax.f32 %v6399, 0.0
  %v6464 = vmax.f32 %v6402, 0.0
  %v6465 = vmax.f32 %v6407, 0.0
  %v6466 = vmax.f32 %v6410, 0.0
  %v6467 = vmax.f32 %v6415, 0.0
  %v6468 = vmax.f32 %v6418, 0.0
  %v6469 = vmax.f32 %v6423, 0.0
  %v6470 = vmax.f32 %v6426, 0.0
  %v6471 = vmax.f32 %v6431, 0.0
  %v6472 = vmax.f32 %v6434, 0.0
  %v6473 = vmax.f32 %v6439, 0.0
  %v6474 = vmax.f32 %v6442, 0.0
  %v6475 = vmax.f32 %v6447, 0.0
  %v6476 = vmax.f32 %v6450, 0.0
  %v6477 = vmax.f32 %v6219, %v6453
  %v6478 = vmax.f32 %v6220, %v6454
  %v6479 = vmax.f32 %v6221, %v6455
  %v6480 = vmax.f32 %v6222, %v6456
  %v6481 = vmax.f32 %v6223, %v6457
  %v6482 = vmax.f32 %v6224, %v6458
  %v6483 = vmax.f32 %v6225, %v6459
  %v6484 = vmax.f32 %v6226, %v6460
  %v6485 = vmax.f32 %v6227, %v6461
  %v6486 = vmax.f32 %v6228, %v6462
  %v6487 = vmax.f32 %v6229, %v6463
  %v6488 = vmax.f32 %v6230, %v6464
  %v6489 = vmax.f32 %v6231, %v6465
  %v6490 = vmax.f32 %v6232, %v6466
  %v6491 = vmax.f32 %v6233, %v6467
  %v6492 = vmax.f32 %v6234, %v6468
  %v6493 = vmax.f32 %v6235, %v6469
  %v6494 = vmax.f32 %v6236, %v6470
  %v6495 = vmax.f32 %v6237, %v6471
  %v6496 = vmax.f32 %v6238, %v6472
  %v6497 = vmax.f32 %v6239, %v6473
  %v6498 = vmax.f32 %v6240, %v6474
  %v6499 = vmax.f32 %v6241, %v6475
  %v6500 = vmax.f32 %v6242, %v6476
  %v6501 = vmax.f32 %v6477, %v6478
  %v6502 = vmax.f32 %v6479, %v6480
  %v6503 = vmax.f32 %v6481, %v6482
  %v6504 = vmax.f32 %v6483, %v6484
  %v6505 = vmax.f32 %v6485, %v6486
  %v6506 = vmax.f32 %v6487, %v6488
  %v6507 = vmax.f32 %v6489, %v6490
  %v6508 = vmax.f32 %v6491, %v6492
  %v6509 = vmax.f32 %v6493, %v6494
  %v6510 = vmax.f32 %v6495, %v6496
  %v6511 = vmax.f32 %v6497, %v6498
  %v6512 = vmax.f32 %v6499, %v6500
  %v6513 = vpack.c.bf16 %v6502, %v6501
  %v6514 = vpack.c.bf16 %v6504, %v6503
  %v6515 = vpack.c.bf16 %v6506, %v6505
  %v6516 = vpack.c.bf16 %v6508, %v6507
  %v6517 = vpack.c.bf16 %v6510, %v6509
  %v6518 = vpack.c.bf16 %v6512, %v6511
  %6520 = vset.pattern.permute.xlu0 0
  %6521 = vperm.xlu0 %6520, %v119
  %v6522 = vpop.permute.xlu0 %6521
  %6525 = vset.pattern.permute.xlu0 0
  %6526 = vperm.xlu0 %6525, %v120
  %v6527 = vpop.permute.xlu0 %6526
  %6530 = vset.pattern.permute.xlu0 0
  %6531 = vperm.xlu0 %6530, %v121
  %v6532 = vpop.permute.xlu0 %6531
  %6535 = vset.pattern.permute.xlu0 0
  %6536 = vperm.xlu0 %6535, %v122
  %v6537 = vpop.permute.xlu0 %6536
  %6540 = vset.pattern.permute.xlu0 0
  %6541 = vperm.xlu0 %6540, %v123
  %v6542 = vpop.permute.xlu0 %6541
  %6545 = vset.pattern.permute.xlu0 0
  %6546 = vperm.xlu0 %6545, %v124
  %v6547 = vpop.permute.xlu0 %6546
  %6550 = vset.pattern.permute.xlu0 0
  %6551 = vperm.xlu0 %6550, %v125
  %v6552 = vpop.permute.xlu0 %6551
  %6555 = vset.pattern.permute.xlu0 0
  %6556 = vperm.xlu0 %6555, %v126
  %v6557 = vpop.permute.xlu0 %6556
  %6560 = vset.pattern.permute.xlu0 0
  %6561 = vperm.xlu0 %6560, %v127
  %v6562 = vpop.permute.xlu0 %6561
  %6565 = vset.pattern.permute.xlu0 0
  %6566 = vperm.xlu0 %6565, %v128
  %v6567 = vpop.permute.xlu0 %6566
  %6570 = vset.pattern.permute.xlu0 0
  %6571 = vperm.xlu0 %6570, %v129
  %v6572 = vpop.permute.xlu0 %6571
  %6575 = vset.pattern.permute.xlu0 0
  %6576 = vperm.xlu0 %6575, %v130
  %v6577 = vpop.permute.xlu0 %6576
  %6580 = vset.pattern.permute.xlu0 0
  %6581 = vperm.xlu0 %6580, %v131
  %v6582 = vpop.permute.xlu0 %6581
  %6585 = vset.pattern.permute.xlu0 0
  %6586 = vperm.xlu0 %6585, %v132
  %v6587 = vpop.permute.xlu0 %6586
  %6590 = vset.pattern.permute.xlu0 0
  %6591 = vperm.xlu0 %6590, %v133
  %v6592 = vpop.permute.xlu0 %6591
  %6595 = vset.pattern.permute.xlu0 0
  %6596 = vperm.xlu0 %6595, %v134
  %v6597 = vpop.permute.xlu0 %6596
  %v6631 = vunpack.c.l.b16 %v87
  %v6632 = vunpack.c.h.b16 %v87
  %v6633 = vunpack.c.l.b16 %v88
  %v6634 = vunpack.c.h.b16 %v88
  %v6635 = vunpack.c.l.b16 %v89
  %v6636 = vunpack.c.h.b16 %v89
  %v6637 = vunpack.c.l.b16 %v90
  %v6638 = vunpack.c.h.b16 %v90
  %v6639 = vunpack.c.l.b16 %v91
  %v6640 = vunpack.c.h.b16 %v91
  %v6641 = vunpack.c.l.b16 %v92
  %v6642 = vunpack.c.h.b16 %v92
  %v6643 = vunpack.c.l.b16 %v93
  %v6644 = vunpack.c.h.b16 %v93
  %v6645 = vunpack.c.l.b16 %v94
  %v6646 = vunpack.c.h.b16 %v94
  %v6647 = vunpack.c.l.b16 %v95
  %v6648 = vunpack.c.h.b16 %v95
  %v6649 = vunpack.c.l.b16 %v96
  %v6650 = vunpack.c.h.b16 %v96
  %v6651 = vunpack.c.l.b16 %v97
  %v6652 = vunpack.c.h.b16 %v97
  %v6653 = vunpack.c.l.b16 %v98
  %v6654 = vunpack.c.h.b16 %v98
  %v6655 = vunpack.c.l.b16 %v99
  %v6656 = vunpack.c.h.b16 %v99
  %v6657 = vunpack.c.l.b16 %v100
  %v6658 = vunpack.c.h.b16 %v100
  %v6659 = vunpack.c.l.b16 %v101
  %v6660 = vunpack.c.h.b16 %v101
  %v6661 = vunpack.c.l.b16 %v102
  %v6662 = vunpack.c.h.b16 %v102
  %v6663 = vunpack.c.l.b16 %v103
  %v6664 = vunpack.c.h.b16 %v103
  %v6665 = vunpack.c.l.b16 %v104
  %v6666 = vunpack.c.h.b16 %v104
  %v6667 = vunpack.c.l.b16 %v105
  %v6668 = vunpack.c.h.b16 %v105
  %v6669 = vunpack.c.l.b16 %v106
  %v6670 = vunpack.c.h.b16 %v106
  %v6671 = vunpack.c.l.b16 %v107
  %v6672 = vunpack.c.h.b16 %v107
  %v6673 = vunpack.c.l.b16 %v108
  %v6674 = vunpack.c.h.b16 %v108
  %v6675 = vunpack.c.l.b16 %v109
  %v6676 = vunpack.c.h.b16 %v109
  %v6677 = vunpack.c.l.b16 %v110
  %v6678 = vunpack.c.h.b16 %v110
  %v6679 = vunpack.c.l.b16 %v111
  %v6680 = vunpack.c.h.b16 %v111
  %v6681 = vunpack.c.l.b16 %v112
  %v6682 = vunpack.c.h.b16 %v112
  %v6683 = vunpack.c.l.b16 %v113
  %v6684 = vunpack.c.h.b16 %v113
  %v6685 = vunpack.c.l.b16 %v114
  %v6686 = vunpack.c.h.b16 %v114
  %v6687 = vunpack.c.l.b16 %v115
  %v6688 = vunpack.c.h.b16 %v115
  %v6689 = vunpack.c.l.b16 %v116
  %v6690 = vunpack.c.h.b16 %v116
  %v6691 = vunpack.c.l.b16 %v117
  %v6692 = vunpack.c.h.b16 %v117
  %v6693 = vunpack.c.l.b16 %v118
  %v6694 = vunpack.c.h.b16 %v118
  %v6695 = vpack.c.b16 %v6635, %v6631
  %v6696 = vpack.c.b16 %v6636, %v6632
  %v6697 = vpack.c.b16 %v6637, %v6633
  %v6698 = vpack.c.b16 %v6638, %v6634
  %v6699 = vpack.c.b16 %v6643, %v6639
  %v6700 = vpack.c.b16 %v6644, %v6640
  %v6701 = vpack.c.b16 %v6645, %v6641
  %v6702 = vpack.c.b16 %v6646, %v6642
  %v6703 = vpack.c.b16 %v6651, %v6647
  %v6704 = vpack.c.b16 %v6652, %v6648
  %v6705 = vpack.c.b16 %v6653, %v6649
  %v6706 = vpack.c.b16 %v6654, %v6650
  %v6707 = vpack.c.b16 %v6659, %v6655
  %v6708 = vpack.c.b16 %v6660, %v6656
  %v6709 = vpack.c.b16 %v6661, %v6657
  %v6710 = vpack.c.b16 %v6662, %v6658
  %v6711 = vpack.c.b16 %v6667, %v6663
  %v6712 = vpack.c.b16 %v6668, %v6664
  %v6713 = vpack.c.b16 %v6669, %v6665
  %v6714 = vpack.c.b16 %v6670, %v6666
  %v6715 = vpack.c.b16 %v6675, %v6671
  %v6716 = vpack.c.b16 %v6676, %v6672
  %v6717 = vpack.c.b16 %v6677, %v6673
  %v6718 = vpack.c.b16 %v6678, %v6674
  %v6719 = vpack.c.b16 %v6683, %v6679
  %v6720 = vpack.c.b16 %v6684, %v6680
  %v6721 = vpack.c.b16 %v6685, %v6681
  %v6722 = vpack.c.b16 %v6686, %v6682
  %v6723 = vpack.c.b16 %v6691, %v6687
  %v6724 = vpack.c.b16 %v6692, %v6688
  %v6725 = vpack.c.b16 %v6693, %v6689
  %v6726 = vpack.c.b16 %v6694, %v6690
  %vm6751 = vcmask 785408
  %v6753 = vsel %vm6751, %v6698, 0
  %v6756 = vsel %vm6751, %v6702, 0
  %v6759 = vsel %vm6751, %v6706, 0
  %v6762 = vsel %vm6751, %v6710, 0
  %v6765 = vsel %vm6751, %v6714, 0
  %v6768 = vsel %vm6751, %v6718, 0
  %v6771 = vsel %vm6751, %v6722, 0
  %v6774 = vsel %vm6751, %v6726, 0
  %6776 = vmatprep.subr.bf16.mxu0 0
  %6777 = vmatpush1.bf16.msra.mxu0 %v903
  %6778 = vmatprep.subr.bf16.mxu0 0
  %6779 = vmatpush1.bf16.msra.mxu0 %v904
  %6780 = vmatprep.subr.bf16.mxu0 0
  %6781 = vmatpush1.bf16.msra.mxu0 %v905
  %6782 = vmatprep.subr.bf16.mxu0 0
  %6783 = vmatpush1.bf16.msra.mxu0 %v906
  %6784 = vmatprep.subr.bf16.mxu0 0
  %6785 = vmatpush1.bf16.msra.mxu0 %v907
  %6786 = vmatprep.subr.bf16.mxu0 0
  %6787 = vmatpush1.bf16.msra.mxu0 %v908
  %6788 = vmatprep.subr.bf16.mxu0 0
  %6789 = vmatpush1.bf16.msra.mxu0 %v1413
  %6790 = vmatprep.subr.bf16.mxu0 0
  %6791 = vmatpush1.bf16.msra.mxu0 %v1414
  %6792 = vmatprep.subr.bf16.mxu0 0
  %6793 = vmatpush1.bf16.msra.mxu0 %v1415
  %6794 = vmatprep.subr.bf16.mxu0 0
  %6795 = vmatpush1.bf16.msra.mxu0 %v1416
  %6796 = vmatprep.subr.bf16.mxu0 0
  %6797 = vmatpush1.bf16.msra.mxu0 %v1417
  %6798 = vmatprep.subr.bf16.mxu0 0
  %6799 = vmatpush1.bf16.msra.mxu0 %v1418
  %6800 = vmatprep.subr.bf16.mxu0 0
  %6801 = vmatpush1.bf16.msra.mxu0 %v1923
  %6802 = vmatprep.subr.bf16.mxu0 0
  %6803 = vmatpush1.bf16.msra.mxu0 %v1924
  %6804 = vmatprep.subr.bf16.mxu0 0
  %6805 = vmatpush1.bf16.msra.mxu0 %v1925
  %6806 = vmatprep.subr.bf16.mxu0 0
  %6807 = vmatpush1.bf16.msra.mxu0 %v1926
  %6808 = vmatprep.mubr.bf16.mxu0 %v6696
  %6809 = vmatmul.mubr.bf16.gmra.mrb[0].mxu0 %v6695
  %v6810 = vpop.f32.mrb[0].mxu0
  %v6811 = vadd.f32 %v6522, %v6810
  %v6812 = vpop.f32.mrb[0].mxu0
  %v6813 = vpop.f32.mrb[0].mxu0
  %v6814 = vadd.f32 %v6527, %v6813
  %v6815 = vpop.f32.mrb[0].mxu0
  %6816 = vmatprep.mubr.bf16.mxu0 %v6700
  %6817 = vmatmul.mubr.bf16.gmra.mrb[0].mxu0 %v6699
  %v6818 = vpop.f32.mrb[0].mxu0
  %v6819 = vadd.f32 %v6532, %v6818
  %v6820 = vpop.f32.mrb[0].mxu0
  %v6821 = vpop.f32.mrb[0].mxu0
  %v6822 = vadd.f32 %v6537, %v6821
  %v6823 = vpop.f32.mrb[0].mxu0
  %6824 = vmatprep.mubr.bf16.mxu0 %v6704
  %6825 = vmatmul.mubr.bf16.gmra.mrb[0].mxu0 %v6703
  %v6826 = vpop.f32.mrb[0].mxu0
  %v6827 = vadd.f32 %v6542, %v6826
  %v6828 = vpop.f32.mrb[0].mxu0
  %v6829 = vpop.f32.mrb[0].mxu0
  %v6830 = vadd.f32 %v6547, %v6829
  %v6831 = vpop.f32.mrb[0].mxu0
  %6832 = vmatprep.mubr.bf16.mxu0 %v6708
  %6833 = vmatmul.mubr.bf16.gmra.mrb[0].mxu0 %v6707
  %v6834 = vpop.f32.mrb[0].mxu0
  %v6835 = vadd.f32 %v6552, %v6834
  %v6836 = vpop.f32.mrb[0].mxu0
  %v6837 = vpop.f32.mrb[0].mxu0
  %v6838 = vadd.f32 %v6557, %v6837
  %v6839 = vpop.f32.mrb[0].mxu0
  %6840 = vmatprep.mubr.bf16.mxu0 %v6712
  %6841 = vmatmul.mubr.bf16.gmra.mrb[0].mxu0 %v6711
  %v6842 = vpop.f32.mrb[0].mxu0
  %v6843 = vadd.f32 %v6562, %v6842
  %v6844 = vpop.f32.mrb[0].mxu0
  %v6845 = vpop.f32.mrb[0].mxu0
  %v6846 = vadd.f32 %v6567, %v6845
  %v6847 = vpop.f32.mrb[0].mxu0
  %6848 = vmatprep.mubr.bf16.mxu0 %v6716
  %6849 = vmatmul.mubr.bf16.gmra.mrb[0].mxu0 %v6715
  %v6850 = vpop.f32.mrb[0].mxu0
  %v6851 = vadd.f32 %v6572, %v6850
  %v6852 = vpop.f32.mrb[0].mxu0
  %v6853 = vpop.f32.mrb[0].mxu0
  %v6854 = vadd.f32 %v6577, %v6853
  %v6855 = vpop.f32.mrb[0].mxu0
  %6856 = vmatprep.mubr.bf16.mxu0 %v6720
  %6857 = vmatmul.mubr.bf16.gmra.mrb[0].mxu0 %v6719
  %v6858 = vpop.f32.mrb[0].mxu0
  %v6859 = vadd.f32 %v6582, %v6858
  %v6860 = vpop.f32.mrb[0].mxu0
  %v6861 = vpop.f32.mrb[0].mxu0
  %v6862 = vadd.f32 %v6587, %v6861
  %v6863 = vpop.f32.mrb[0].mxu0
  %6864 = vmatprep.mubr.bf16.mxu0 %v6724
  %6865 = vmatmul.mubr.bf16.gmra.mrb[0].mxu0 %v6723
  %v6866 = vpop.f32.mrb[0].mxu0
  %v6867 = vadd.f32 %v6592, %v6866
  %v6868 = vpop.f32.mrb[0].mxu0
  %v6869 = vpop.f32.mrb[0].mxu0
  %v6870 = vadd.f32 %v6597, %v6869
  %v6871 = vpop.f32.mrb[0].mxu0
  %6872 = vdwg.mxu0
  %6873 = vmatprep.subr.bf16.mxu0 0
  %6874 = vmatpush1.bf16.msra.mxu0 %v1927
  %6875 = vmatprep.subr.bf16.mxu0 0
  %6876 = vmatpush1.bf16.msra.mxu0 %v1928
  %6877 = vmatprep.subr.bf16.mxu0 0
  %6878 = vmatpush1.bf16.msra.mxu0 %v2433
  %6879 = vmatprep.subr.bf16.mxu0 0
  %6880 = vmatpush1.bf16.msra.mxu0 %v2434
  %6881 = vmatprep.subr.bf16.mxu0 0
  %6882 = vmatpush1.bf16.msra.mxu0 %v2435
  %6883 = vmatprep.subr.bf16.mxu0 0
  %6884 = vmatpush1.bf16.msra.mxu0 %v2436
  %6885 = vmatprep.subr.bf16.mxu0 0
  %6886 = vmatpush1.bf16.msra.mxu0 %v2437
  %6887 = vmatprep.subr.bf16.mxu0 0
  %6888 = vmatpush1.bf16.msra.mxu0 %v2438
  %6889 = vmatprep.subr.bf16.mxu0 0
  %6890 = vmatpush1.bf16.msra.mxu0 %v2943
  %6891 = vmatprep.subr.bf16.mxu0 0
  %6892 = vmatpush1.bf16.msra.mxu0 %v2944
  %6893 = vmatprep.subr.bf16.mxu0 0
  %6894 = vmatpush1.bf16.msra.mxu0 %v2945
  %6895 = vmatprep.subr.bf16.mxu0 0
  %6896 = vmatpush1.bf16.msra.mxu0 %v2946
  %6897 = vmatprep.subr.bf16.mxu0 0
  %6898 = vmatpush1.bf16.msra.mxu0 %v2947
  %6899 = vmatprep.subr.bf16.mxu0 0
  %6900 = vmatpush1.bf16.msra.mxu0 %v2948
  %6901 = vmatprep.subr.bf16.mxu0 0
  %6902 = vmatpush1.bf16.msra.mxu0 0
  %6903 = vmatprep.subr.bf16.mxu0 0
  %6904 = vmatpush1.bf16.msra.mxu0 0
  %6905 = vmatprep.mubr.bf16.mxu0 %v6753
  %6906 = vmatmul.mubr.bf16.gmra.mrb[0].mxu0 %v6697
  %v6907 = vpop.f32.mrb[0].mxu0
  %v6908 = vadd.f32 %v6811, %v6907
  %v6909 = vpop.f32.mrb[0].mxu0
  %v6910 = vpop.f32.mrb[0].mxu0
  %v6911 = vadd.f32 %v6814, %v6910
  %v6912 = vpop.f32.mrb[0].mxu0
  %6913 = vmatprep.mubr.bf16.mxu0 %v6756
  %6914 = vmatmul.mubr.bf16.gmra.mrb[0].mxu0 %v6701
  %v6915 = vpop.f32.mrb[0].mxu0
  %v6916 = vadd.f32 %v6819, %v6915
  %v6917 = vpop.f32.mrb[0].mxu0
  %v6918 = vpop.f32.mrb[0].mxu0
  %v6919 = vadd.f32 %v6822, %v6918
  %v6920 = vpop.f32.mrb[0].mxu0
  %6921 = vmatprep.mubr.bf16.mxu0 %v6759
  %6922 = vmatmul.mubr.bf16.gmra.mrb[0].mxu0 %v6705
  %v6923 = vpop.f32.mrb[0].mxu0
  %v6924 = vadd.f32 %v6827, %v6923
  %v6925 = vpop.f32.mrb[0].mxu0
  %v6926 = vpop.f32.mrb[0].mxu0
  %v6927 = vadd.f32 %v6830, %v6926
  %v6928 = vpop.f32.mrb[0].mxu0
  %6929 = vmatprep.mubr.bf16.mxu0 %v6762
  %6930 = vmatmul.mubr.bf16.gmra.mrb[0].mxu0 %v6709
  %v6931 = vpop.f32.mrb[0].mxu0
  %v6932 = vadd.f32 %v6835, %v6931
  %v6933 = vpop.f32.mrb[0].mxu0
  %v6934 = vpop.f32.mrb[0].mxu0
  %v6935 = vadd.f32 %v6838, %v6934
  %v6936 = vpop.f32.mrb[0].mxu0
  %6937 = vmatprep.mubr.bf16.mxu0 %v6765
  %6938 = vmatmul.mubr.bf16.gmra.mrb[0].mxu0 %v6713
  %v6939 = vpop.f32.mrb[0].mxu0
  %v6940 = vadd.f32 %v6843, %v6939
  %v6941 = vpop.f32.mrb[0].mxu0
  %v6942 = vpop.f32.mrb[0].mxu0
  %v6943 = vadd.f32 %v6846, %v6942
  %v6944 = vpop.f32.mrb[0].mxu0
  %6945 = vmatprep.mubr.bf16.mxu0 %v6768
  %6946 = vmatmul.mubr.bf16.gmra.mrb[0].mxu0 %v6717
  %v6947 = vpop.f32.mrb[0].mxu0
  %v6948 = vadd.f32 %v6851, %v6947
  %v6949 = vpop.f32.mrb[0].mxu0
  %v6950 = vpop.f32.mrb[0].mxu0
  %v6951 = vadd.f32 %v6854, %v6950
  %v6952 = vpop.f32.mrb[0].mxu0
  %6953 = vmatprep.mubr.bf16.mxu0 %v6771
  %6954 = vmatmul.mubr.bf16.gmra.mrb[0].mxu0 %v6721
  %v6955 = vpop.f32.mrb[0].mxu0
  %v6956 = vadd.f32 %v6859, %v6955
  %v6957 = vpop.f32.mrb[0].mxu0
  %v6958 = vpop.f32.mrb[0].mxu0
  %v6959 = vadd.f32 %v6862, %v6958
  %v6960 = vpop.f32.mrb[0].mxu0
  %6961 = vmatprep.mubr.bf16.mxu0 %v6774
  %6962 = vmatmul.mubr.bf16.gmra.mrb[0].mxu0 %v6725
  %v6963 = vpop.f32.mrb[0].mxu0
  %v6964 = vadd.f32 %v6867, %v6963
  %v6965 = vpop.f32.mrb[0].mxu0
  %v6966 = vpop.f32.mrb[0].mxu0
  %v6967 = vadd.f32 %v6870, %v6966
  %v6968 = vpop.f32.mrb[0].mxu0
  %6969 = vdwg.mxu0
  %v6970 = vmax.f32 %v6908, 0.0
  %v6971 = vmax.f32 %v6911, 0.0
  %v6972 = vmax.f32 %v6916, 0.0
  %v6973 = vmax.f32 %v6919, 0.0
  %v6974 = vmax.f32 %v6924, 0.0
  %v6975 = vmax.f32 %v6927, 0.0
  %v6976 = vmax.f32 %v6932, 0.0
  %v6977 = vmax.f32 %v6935, 0.0
  %v6978 = vmax.f32 %v6940, 0.0
  %v6979 = vmax.f32 %v6943, 0.0
  %v6980 = vmax.f32 %v6948, 0.0
  %v6981 = vmax.f32 %v6951, 0.0
  %v6982 = vmax.f32 %v6956, 0.0
  %v6983 = vmax.f32 %v6959, 0.0
  %v6984 = vmax.f32 %v6964, 0.0
  %v6985 = vmax.f32 %v6967, 0.0
  %6986 = vmatprep.subr.bf16.mxu0 0
  %6987 = vmatpush1.bf16.msra.mxu0 %v1413
  %6988 = vmatprep.subr.bf16.mxu0 0
  %6989 = vmatpush1.bf16.msra.mxu0 %v1414
  %6990 = vmatprep.subr.bf16.mxu0 0
  %6991 = vmatpush1.bf16.msra.mxu0 %v1415
  %6992 = vmatprep.subr.bf16.mxu0 0
  %6993 = vmatpush1.bf16.msra.mxu0 %v1416
  %6994 = vmatprep.subr.bf16.mxu0 0
  %6995 = vmatpush1.bf16.msra.mxu0 %v1417
  %6996 = vmatprep.subr.bf16.mxu0 0
  %6997 = vmatpush1.bf16.msra.mxu0 %v1418
  %6998 = vmatprep.subr.bf16.mxu0 0
  %6999 = vmatpush1.bf16.msra.mxu0 %v1923
  %7000 = vmatprep.subr.bf16.mxu0 0
  %7001 = vmatpush1.bf16.msra.mxu0 %v1924
  %7002 = vmatprep.subr.bf16.mxu0 0
  %7003 = vmatpush1.bf16.msra.mxu0 %v1925
  %7004 = vmatprep.subr.bf16.mxu0 0
  %7005 = vmatpush1.bf16.msra.mxu0 %v1926
  %7006 = vmatprep.subr.bf16.mxu0 0
  %7007 = vmatpush1.bf16.msra.mxu0 %v1927
  %7008 = vmatprep.subr.bf16.mxu0 0
  %7009 = vmatpush1.bf16.msra.mxu0 %v1928
  %7010 = vmatprep.subr.bf16.mxu0 0
  %7011 = vmatpush1.bf16.msra.mxu0 %v2433
  %7012 = vmatprep.subr.bf16.mxu0 0
  %7013 = vmatpush1.bf16.msra.mxu0 %v2434
  %7014 = vmatprep.subr.bf16.mxu0 0
  %7015 = vmatpush1.bf16.msra.mxu0 %v2435
  %7016 = vmatprep.subr.bf16.mxu0 0
  %7017 = vmatpush1.bf16.msra.mxu0 %v2436
  %7018 = vmatprep.mubr.bf16.mxu0 %v6696
  %7019 = vmatmul.mubr.bf16.gmra.mrb[0].mxu0 %v6695
  %v7020 = vpop.f32.mrb[0].mxu0
  %v7021 = vadd.f32 %v6522, %v7020
  %v7022 = vpop.f32.mrb[0].mxu0
  %v7023 = vpop.f32.mrb[0].mxu0
  %v7024 = vadd.f32 %v6527, %v7023
  %v7025 = vpop.f32.mrb[0].mxu0
  %7026 = vmatprep.mubr.bf16.mxu0 %v6700
  %7027 = vmatmul.mubr.bf16.gmra.mrb[0].mxu0 %v6699
  %v7028 = vpop.f32.mrb[0].mxu0
  %v7029 = vadd.f32 %v6532, %v7028
  %v7030 = vpop.f32.mrb[0].mxu0
  %v7031 = vpop.f32.mrb[0].mxu0
  %v7032 = vadd.f32 %v6537, %v7031
  %v7033 = vpop.f32.mrb[0].mxu0
  %7034 = vmatprep.mubr.bf16.mxu0 %v6704
  %7035 = vmatmul.mubr.bf16.gmra.mrb[0].mxu0 %v6703
  %v7036 = vpop.f32.mrb[0].mxu0
  %v7037 = vadd.f32 %v6542, %v7036
  %v7038 = vpop.f32.mrb[0].mxu0
  %v7039 = vpop.f32.mrb[0].mxu0
  %v7040 = vadd.f32 %v6547, %v7039
  %v7041 = vpop.f32.mrb[0].mxu0
  %7042 = vmatprep.mubr.bf16.mxu0 %v6708
  %7043 = vmatmul.mubr.bf16.gmra.mrb[0].mxu0 %v6707
  %v7044 = vpop.f32.mrb[0].mxu0
  %v7045 = vadd.f32 %v6552, %v7044
  %v7046 = vpop.f32.mrb[0].mxu0
  %v7047 = vpop.f32.mrb[0].mxu0
  %v7048 = vadd.f32 %v6557, %v7047
  %v7049 = vpop.f32.mrb[0].mxu0
  %7050 = vmatprep.mubr.bf16.mxu0 %v6712
  %7051 = vmatmul.mubr.bf16.gmra.mrb[0].mxu0 %v6711
  %v7052 = vpop.f32.mrb[0].mxu0
  %v7053 = vadd.f32 %v6562, %v7052
  %v7054 = vpop.f32.mrb[0].mxu0
  %v7055 = vpop.f32.mrb[0].mxu0
  %v7056 = vadd.f32 %v6567, %v7055
  %v7057 = vpop.f32.mrb[0].mxu0
  %7058 = vmatprep.mubr.bf16.mxu0 %v6716
  %7059 = vmatmul.mubr.bf16.gmra.mrb[0].mxu0 %v6715
  %v7060 = vpop.f32.mrb[0].mxu0
  %v7061 = vadd.f32 %v6572, %v7060
  %v7062 = vpop.f32.mrb[0].mxu0
  %v7063 = vpop.f32.mrb[0].mxu0
  %v7064 = vadd.f32 %v6577, %v7063
  %v7065 = vpop.f32.mrb[0].mxu0
  %7066 = vmatprep.mubr.bf16.mxu0 %v6720
  %7067 = vmatmul.mubr.bf16.gmra.mrb[0].mxu0 %v6719
  %v7068 = vpop.f32.mrb[0].mxu0
  %v7069 = vadd.f32 %v6582, %v7068
  %v7070 = vpop.f32.mrb[0].mxu0
  %v7071 = vpop.f32.mrb[0].mxu0
  %v7072 = vadd.f32 %v6587, %v7071
  %v7073 = vpop.f32.mrb[0].mxu0
  %7074 = vmatprep.mubr.bf16.mxu0 %v6724
  %7075 = vmatmul.mubr.bf16.gmra.mrb[0].mxu0 %v6723
  %v7076 = vpop.f32.mrb[0].mxu0
  %v7077 = vadd.f32 %v6592, %v7076
  %v7078 = vpop.f32.mrb[0].mxu0
  %v7079 = vpop.f32.mrb[0].mxu0
  %v7080 = vadd.f32 %v6597, %v7079
  %v7081 = vpop.f32.mrb[0].mxu0
  %7082 = vdwg.mxu0
  %7083 = vmatprep.subr.bf16.mxu0 0
  %7084 = vmatpush1.bf16.msra.mxu0 %v2437
  %7085 = vmatprep.subr.bf16.mxu0 0
  %7086 = vmatpush1.bf16.msra.mxu0 %v2438
  %7087 = vmatprep.subr.bf16.mxu0 0
  %7088 = vmatpush1.bf16.msra.mxu0 %v2943
  %7089 = vmatprep.subr.bf16.mxu0 0
  %7090 = vmatpush1.bf16.msra.mxu0 %v2944
  %7091 = vmatprep.subr.bf16.mxu0 0
  %7092 = vmatpush1.bf16.msra.mxu0 %v2945
  %7093 = vmatprep.subr.bf16.mxu0 0
  %7094 = vmatpush1.bf16.msra.mxu0 %v2946
  %7095 = vmatprep.subr.bf16.mxu0 0
  %7096 = vmatpush1.bf16.msra.mxu0 %v2947
  %7097 = vmatprep.subr.bf16.mxu0 0
  %7098 = vmatpush1.bf16.msra.mxu0 %v2948
  %7099 = vmatprep.subr.bf16.mxu0 0
  %7100 = vmatpush1.bf16.msra.mxu0 %v3453
  %7101 = vmatprep.subr.bf16.mxu0 0
  %7102 = vmatpush1.bf16.msra.mxu0 %v3454
  %7103 = vmatprep.subr.bf16.mxu0 0
  %7104 = vmatpush1.bf16.msra.mxu0 %v3455
  %7105 = vmatprep.subr.bf16.mxu0 0
  %7106 = vmatpush1.bf16.msra.mxu0 %v3456
  %7107 = vmatprep.subr.bf16.mxu0 0
  %7108 = vmatpush1.bf16.msra.mxu0 %v3457
  %7109 = vmatprep.subr.bf16.mxu0 0
  %7110 = vmatpush1.bf16.msra.mxu0 %v3458
  %7111 = vmatprep.subr.bf16.mxu0 0
  %7112 = vmatpush1.bf16.msra.mxu0 0
  %7113 = vmatprep.subr.bf16.mxu0 0
  %7114 = vmatpush1.bf16.msra.mxu0 0
  %7115 = vmatprep.mubr.bf16.mxu0 %v6753
  %7116 = vmatmul.mubr.bf16.gmra.mrb[0].mxu0 %v6697
  %v7117 = vpop.f32.mrb[0].mxu0
  %v7118 = vadd.f32 %v7021, %v7117
  %v7119 = vpop.f32.mrb[0].mxu0
  %v7120 = vpop.f32.mrb[0].mxu0
  %v7121 = vadd.f32 %v7024, %v7120
  %v7122 = vpop.f32.mrb[0].mxu0
  %7123 = vmatprep.mubr.bf16.mxu0 %v6756
  %7124 = vmatmul.mubr.bf16.gmra.mrb[0].mxu0 %v6701
  %v7125 = vpop.f32.mrb[0].mxu0
  %v7126 = vadd.f32 %v7029, %v7125
  %v7127 = vpop.f32.mrb[0].mxu0
  %v7128 = vpop.f32.mrb[0].mxu0
  %v7129 = vadd.f32 %v7032, %v7128
  %v7130 = vpop.f32.mrb[0].mxu0
  %7131 = vmatprep.mubr.bf16.mxu0 %v6759
  %7132 = vmatmul.mubr.bf16.gmra.mrb[0].mxu0 %v6705
  %v7133 = vpop.f32.mrb[0].mxu0
  %v7134 = vadd.f32 %v7037, %v7133
  %v7135 = vpop.f32.mrb[0].mxu0
  %v7136 = vpop.f32.mrb[0].mxu0
  %v7137 = vadd.f32 %v7040, %v7136
  %v7138 = vpop.f32.mrb[0].mxu0
  %7139 = vmatprep.mubr.bf16.mxu0 %v6762
  %7140 = vmatmul.mubr.bf16.gmra.mrb[0].mxu0 %v6709
  %v7141 = vpop.f32.mrb[0].mxu0
  %v7142 = vadd.f32 %v7045, %v7141
  %v7143 = vpop.f32.mrb[0].mxu0
  %v7144 = vpop.f32.mrb[0].mxu0
  %v7145 = vadd.f32 %v7048, %v7144
  %v7146 = vpop.f32.mrb[0].mxu0
  %7147 = vmatprep.mubr.bf16.mxu0 %v6765
  %7148 = vmatmul.mubr.bf16.gmra.mrb[0].mxu0 %v6713
  %v7149 = vpop.f32.mrb[0].mxu0
  %v7150 = vadd.f32 %v7053, %v7149
  %v7151 = vpop.f32.mrb[0].mxu0
  %v7152 = vpop.f32.mrb[0].mxu0
  %v7153 = vadd.f32 %v7056, %v7152
  %v7154 = vpop.f32.mrb[0].mxu0
  %7155 = vmatprep.mubr.bf16.mxu0 %v6768
  %7156 = vmatmul.mubr.bf16.gmra.mrb[0].mxu0 %v6717
  %v7157 = vpop.f32.mrb[0].mxu0
  %v7158 = vadd.f32 %v7061, %v7157
  %v7159 = vpop.f32.mrb[0].mxu0
  %v7160 = vpop.f32.mrb[0].mxu0
  %v7161 = vadd.f32 %v7064, %v7160
  %v7162 = vpop.f32.mrb[0].mxu0
  %7163 = vmatprep.mubr.bf16.mxu0 %v6771
  %7164 = vmatmul.mubr.bf16.gmra.mrb[0].mxu0 %v6721
  %v7165 = vpop.f32.mrb[0].mxu0
  %v7166 = vadd.f32 %v7069, %v7165
  %v7167 = vpop.f32.mrb[0].mxu0
  %v7168 = vpop.f32.mrb[0].mxu0
  %v7169 = vadd.f32 %v7072, %v7168
  %v7170 = vpop.f32.mrb[0].mxu0
  %7171 = vmatprep.mubr.bf16.mxu0 %v6774
  %7172 = vmatmul.mubr.bf16.gmra.mrb[0].mxu0 %v6725
  %v7173 = vpop.f32.mrb[0].mxu0
  %v7174 = vadd.f32 %v7077, %v7173
  %v7175 = vpop.f32.mrb[0].mxu0
  %v7176 = vpop.f32.mrb[0].mxu0
  %v7177 = vadd.f32 %v7080, %v7176
  %v7178 = vpop.f32.mrb[0].mxu0
  %7179 = vdwg.mxu0
  %v7180 = vmax.f32 %v7118, 0.0
  %v7181 = vmax.f32 %v7121, 0.0
  %v7182 = vmax.f32 %v7126, 0.0
  %v7183 = vmax.f32 %v7129, 0.0
  %v7184 = vmax.f32 %v7134, 0.0
  %v7185 = vmax.f32 %v7137, 0.0
  %v7186 = vmax.f32 %v7142, 0.0
  %v7187 = vmax.f32 %v7145, 0.0
  %v7188 = vmax.f32 %v7150, 0.0
  %v7189 = vmax.f32 %v7153, 0.0
  %v7190 = vmax.f32 %v7158, 0.0
  %v7191 = vmax.f32 %v7161, 0.0
  %v7192 = vmax.f32 %v7166, 0.0
  %v7193 = vmax.f32 %v7169, 0.0
  %v7194 = vmax.f32 %v7174, 0.0
  %v7195 = vmax.f32 %v7177, 0.0
  %v7196 = vmax.f32 %v6970, %v7180
  %v7197 = vmax.f32 %v6971, %v7181
  %v7198 = vmax.f32 %v6972, %v7182
  %v7199 = vmax.f32 %v6973, %v7183
  %v7200 = vmax.f32 %v6974, %v7184
  %v7201 = vmax.f32 %v6975, %v7185
  %v7202 = vmax.f32 %v6976, %v7186
  %v7203 = vmax.f32 %v6977, %v7187
  %v7204 = vmax.f32 %v6978, %v7188
  %v7205 = vmax.f32 %v6979, %v7189
  %v7206 = vmax.f32 %v6980, %v7190
  %v7207 = vmax.f32 %v6981, %v7191
  %v7208 = vmax.f32 %v6982, %v7192
  %v7209 = vmax.f32 %v6983, %v7193
  %v7210 = vmax.f32 %v6984, %v7194
  %v7211 = vmax.f32 %v6985, %v7195
  %v7212 = vmax.f32 %v7196, %v7198
  %v7213 = vmax.f32 %v7197, %v7199
  %v7214 = vmax.f32 %v7200, %v7202
  %v7215 = vmax.f32 %v7201, %v7203
  %v7216 = vmax.f32 %v7204, %v7206
  %v7217 = vmax.f32 %v7205, %v7207
  %v7218 = vmax.f32 %v7208, %v7210
  %v7219 = vmax.f32 %v7209, %v7211
  %7220 = vmatprep.subr.bf16.mxu0 0
  %7221 = vmatpush1.bf16.msra.mxu0 %v1923
  %7222 = vmatprep.subr.bf16.mxu0 0
  %7223 = vmatpush1.bf16.msra.mxu0 %v1924
  %7224 = vmatprep.subr.bf16.mxu0 0
  %7225 = vmatpush1.bf16.msra.mxu0 %v1925
  %7226 = vmatprep.subr.bf16.mxu0 0
  %7227 = vmatpush1.bf16.msra.mxu0 %v1926
  %7228 = vmatprep.subr.bf16.mxu0 0
  %7229 = vmatpush1.bf16.msra.mxu0 %v1927
  %7230 = vmatprep.subr.bf16.mxu0 0
  %7231 = vmatpush1.bf16.msra.mxu0 %v1928
  %7232 = vmatprep.subr.bf16.mxu0 0
  %7233 = vmatpush1.bf16.msra.mxu0 %v2433
  %7234 = vmatprep.subr.bf16.mxu0 0
  %7235 = vmatpush1.bf16.msra.mxu0 %v2434
  %7236 = vmatprep.subr.bf16.mxu0 0
  %7237 = vmatpush1.bf16.msra.mxu0 %v2435
  %7238 = vmatprep.subr.bf16.mxu0 0
  %7239 = vmatpush1.bf16.msra.mxu0 %v2436
  %7240 = vmatprep.subr.bf16.mxu0 0
  %7241 = vmatpush1.bf16.msra.mxu0 %v2437
  %7242 = vmatprep.subr.bf16.mxu0 0
  %7243 = vmatpush1.bf16.msra.mxu0 %v2438
  %7244 = vmatprep.subr.bf16.mxu0 0
  %7245 = vmatpush1.bf16.msra.mxu0 %v2943
  %7246 = vmatprep.subr.bf16.mxu0 0
  %7247 = vmatpush1.bf16.msra.mxu0 %v2944
  %7248 = vmatprep.subr.bf16.mxu0 0
  %7249 = vmatpush1.bf16.msra.mxu0 %v2945
  %7250 = vmatprep.subr.bf16.mxu0 0
  %7251 = vmatpush1.bf16.msra.mxu0 %v2946
  %7252 = vmatprep.mubr.bf16.mxu0 %v6696
  %7253 = vmatmul.mubr.bf16.gmra.mrb[0].mxu0 %v6695
  %v7254 = vpop.f32.mrb[0].mxu0
  %v7255 = vadd.f32 %v6522, %v7254
  %v7256 = vpop.f32.mrb[0].mxu0
  %v7257 = vpop.f32.mrb[0].mxu0
  %v7258 = vadd.f32 %v6527, %v7257
  %v7259 = vpop.f32.mrb[0].mxu0
  %7260 = vmatprep.mubr.bf16.mxu0 %v6700
  %7261 = vmatmul.mubr.bf16.gmra.mrb[0].mxu0 %v6699
  %v7262 = vpop.f32.mrb[0].mxu0
  %v7263 = vadd.f32 %v6532, %v7262
  %v7264 = vpop.f32.mrb[0].mxu0
  %v7265 = vpop.f32.mrb[0].mxu0
  %v7266 = vadd.f32 %v6537, %v7265
  %v7267 = vpop.f32.mrb[0].mxu0
  %7268 = vmatprep.mubr.bf16.mxu0 %v6704
  %7269 = vmatmul.mubr.bf16.gmra.mrb[0].mxu0 %v6703
  %v7270 = vpop.f32.mrb[0].mxu0
  %v7271 = vadd.f32 %v6542, %v7270
  %v7272 = vpop.f32.mrb[0].mxu0
  %v7273 = vpop.f32.mrb[0].mxu0
  %v7274 = vadd.f32 %v6547, %v7273
  %v7275 = vpop.f32.mrb[0].mxu0
  %7276 = vmatprep.mubr.bf16.mxu0 %v6708
  %7277 = vmatmul.mubr.bf16.gmra.mrb[0].mxu0 %v6707
  %v7278 = vpop.f32.mrb[0].mxu0
  %v7279 = vadd.f32 %v6552, %v7278
  %v7280 = vpop.f32.mrb[0].mxu0
  %v7281 = vpop.f32.mrb[0].mxu0
  %v7282 = vadd.f32 %v6557, %v7281
  %v7283 = vpop.f32.mrb[0].mxu0
  %7284 = vmatprep.mubr.bf16.mxu0 %v6712
  %7285 = vmatmul.mubr.bf16.gmra.mrb[0].mxu0 %v6711
  %v7286 = vpop.f32.mrb[0].mxu0
  %v7287 = vadd.f32 %v6562, %v7286
  %v7288 = vpop.f32.mrb[0].mxu0
  %v7289 = vpop.f32.mrb[0].mxu0
  %v7290 = vadd.f32 %v6567, %v7289
  %v7291 = vpop.f32.mrb[0].mxu0
  %7292 = vmatprep.mubr.bf16.mxu0 %v6716
  %7293 = vmatmul.mubr.bf16.gmra.mrb[0].mxu0 %v6715
  %v7294 = vpop.f32.mrb[0].mxu0
  %v7295 = vadd.f32 %v6572, %v7294
  %v7296 = vpop.f32.mrb[0].mxu0
  %v7297 = vpop.f32.mrb[0].mxu0
  %v7298 = vadd.f32 %v6577, %v7297
  %v7299 = vpop.f32.mrb[0].mxu0
  %7300 = vmatprep.mubr.bf16.mxu0 %v6720
  %7301 = vmatmul.mubr.bf16.gmra.mrb[0].mxu0 %v6719
  %v7302 = vpop.f32.mrb[0].mxu0
  %v7303 = vadd.f32 %v6582, %v7302
  %v7304 = vpop.f32.mrb[0].mxu0
  %v7305 = vpop.f32.mrb[0].mxu0
  %v7306 = vadd.f32 %v6587, %v7305
  %v7307 = vpop.f32.mrb[0].mxu0
  %7308 = vmatprep.mubr.bf16.mxu0 %v6724
  %7309 = vmatmul.mubr.bf16.gmra.mrb[0].mxu0 %v6723
  %v7310 = vpop.f32.mrb[0].mxu0
  %v7311 = vadd.f32 %v6592, %v7310
  %v7312 = vpop.f32.mrb[0].mxu0
  %v7313 = vpop.f32.mrb[0].mxu0
  %v7314 = vadd.f32 %v6597, %v7313
  %v7315 = vpop.f32.mrb[0].mxu0
  %7316 = vdwg.mxu0
  %7317 = vmatprep.subr.bf16.mxu0 0
  %7318 = vmatpush1.bf16.msra.mxu0 %v2947
  %7319 = vmatprep.subr.bf16.mxu0 0
  %7320 = vmatpush1.bf16.msra.mxu0 %v2948
  %7321 = vmatprep.subr.bf16.mxu0 0
  %7322 = vmatpush1.bf16.msra.mxu0 %v3453
  %7323 = vmatprep.subr.bf16.mxu0 0
  %7324 = vmatpush1.bf16.msra.mxu0 %v3454
  %7325 = vmatprep.subr.bf16.mxu0 0
  %7326 = vmatpush1.bf16.msra.mxu0 %v3455
  %7327 = vmatprep.subr.bf16.mxu0 0
  %7328 = vmatpush1.bf16.msra.mxu0 %v3456
  %7329 = vmatprep.subr.bf16.mxu0 0
  %7330 = vmatpush1.bf16.msra.mxu0 %v3457
  %7331 = vmatprep.subr.bf16.mxu0 0
  %7332 = vmatpush1.bf16.msra.mxu0 %v3458
  %7333 = vmatprep.subr.bf16.mxu0 0
  %7334 = vmatpush1.bf16.msra.mxu0 %v3963
  %7335 = vmatprep.subr.bf16.mxu0 0
  %7336 = vmatpush1.bf16.msra.mxu0 %v3964
  %7337 = vmatprep.subr.bf16.mxu0 0
  %7338 = vmatpush1.bf16.msra.mxu0 %v3965
  %7339 = vmatprep.subr.bf16.mxu0 0
  %7340 = vmatpush1.bf16.msra.mxu0 %v3966
  %7341 = vmatprep.subr.bf16.mxu0 0
  %7342 = vmatpush1.bf16.msra.mxu0 %v3967
  %7343 = vmatprep.subr.bf16.mxu0 0
  %7344 = vmatpush1.bf16.msra.mxu0 %v3968
  %7345 = vmatprep.subr.bf16.mxu0 0
  %7346 = vmatpush1.bf16.msra.mxu0 0
  %7347 = vmatprep.subr.bf16.mxu0 0
  %7348 = vmatpush1.bf16.msra.mxu0 0
  %7349 = vmatprep.mubr.bf16.mxu0 %v6753
  %7350 = vmatmul.mubr.bf16.gmra.mrb[0].mxu0 %v6697
  %v7351 = vpop.f32.mrb[0].mxu0
  %v7352 = vadd.f32 %v7255, %v7351
  %v7353 = vpop.f32.mrb[0].mxu0
  %v7354 = vpop.f32.mrb[0].mxu0
  %v7355 = vadd.f32 %v7258, %v7354
  %v7356 = vpop.f32.mrb[0].mxu0
  %7357 = vmatprep.mubr.bf16.mxu0 %v6756
  %7358 = vmatmul.mubr.bf16.gmra.mrb[0].mxu0 %v6701
  %v7359 = vpop.f32.mrb[0].mxu0
  %v7360 = vadd.f32 %v7263, %v7359
  %v7361 = vpop.f32.mrb[0].mxu0
  %v7362 = vpop.f32.mrb[0].mxu0
  %v7363 = vadd.f32 %v7266, %v7362
  %v7364 = vpop.f32.mrb[0].mxu0
  %7365 = vmatprep.mubr.bf16.mxu0 %v6759
  %7366 = vmatmul.mubr.bf16.gmra.mrb[0].mxu0 %v6705
  %v7367 = vpop.f32.mrb[0].mxu0
  %v7368 = vadd.f32 %v7271, %v7367
  %v7369 = vpop.f32.mrb[0].mxu0
  %v7370 = vpop.f32.mrb[0].mxu0
  %v7371 = vadd.f32 %v7274, %v7370
  %v7372 = vpop.f32.mrb[0].mxu0
  %7373 = vmatprep.mubr.bf16.mxu0 %v6762
  %7374 = vmatmul.mubr.bf16.gmra.mrb[0].mxu0 %v6709
  %v7375 = vpop.f32.mrb[0].mxu0
  %v7376 = vadd.f32 %v7279, %v7375
  %v7377 = vpop.f32.mrb[0].mxu0
  %v7378 = vpop.f32.mrb[0].mxu0
  %v7379 = vadd.f32 %v7282, %v7378
  %v7380 = vpop.f32.mrb[0].mxu0
  %7381 = vmatprep.mubr.bf16.mxu0 %v6765
  %7382 = vmatmul.mubr.bf16.gmra.mrb[0].mxu0 %v6713
  %v7383 = vpop.f32.mrb[0].mxu0
  %v7384 = vadd.f32 %v7287, %v7383
  %v7385 = vpop.f32.mrb[0].mxu0
  %v7386 = vpop.f32.mrb[0].mxu0
  %v7387 = vadd.f32 %v7290, %v7386
  %v7388 = vpop.f32.mrb[0].mxu0
  %7389 = vmatprep.mubr.bf16.mxu0 %v6768
  %7390 = vmatmul.mubr.bf16.gmra.mrb[0].mxu0 %v6717
  %v7391 = vpop.f32.mrb[0].mxu0
  %v7392 = vadd.f32 %v7295, %v7391
  %v7393 = vpop.f32.mrb[0].mxu0
  %v7394 = vpop.f32.mrb[0].mxu0
  %v7395 = vadd.f32 %v7298, %v7394
  %v7396 = vpop.f32.mrb[0].mxu0
  %7397 = vmatprep.mubr.bf16.mxu0 %v6771
  %7398 = vmatmul.mubr.bf16.gmra.mrb[0].mxu0 %v6721
  %v7399 = vpop.f32.mrb[0].mxu0
  %v7400 = vadd.f32 %v7303, %v7399
  %v7401 = vpop.f32.mrb[0].mxu0
  %v7402 = vpop.f32.mrb[0].mxu0
  %v7403 = vadd.f32 %v7306, %v7402
  %v7404 = vpop.f32.mrb[0].mxu0
  %7405 = vmatprep.mubr.bf16.mxu0 %v6774
  %7406 = vmatmul.mubr.bf16.gmra.mrb[0].mxu0 %v6725
  %v7407 = vpop.f32.mrb[0].mxu0
  %v7408 = vadd.f32 %v7311, %v7407
  %v7409 = vpop.f32.mrb[0].mxu0
  %v7410 = vpop.f32.mrb[0].mxu0
  %v7411 = vadd.f32 %v7314, %v7410
  %v7412 = vpop.f32.mrb[0].mxu0
  %7413 = vdwg.mxu0
  %v7414 = vmax.f32 %v7352, 0.0
  %v7415 = vmax.f32 %v7355, 0.0
  %v7416 = vmax.f32 %v7360, 0.0
  %v7417 = vmax.f32 %v7363, 0.0
  %v7418 = vmax.f32 %v7368, 0.0
  %v7419 = vmax.f32 %v7371, 0.0
  %v7420 = vmax.f32 %v7376, 0.0
  %v7421 = vmax.f32 %v7379, 0.0
  %v7422 = vmax.f32 %v7384, 0.0
  %v7423 = vmax.f32 %v7387, 0.0
  %v7424 = vmax.f32 %v7392, 0.0
  %v7425 = vmax.f32 %v7395, 0.0
  %v7426 = vmax.f32 %v7400, 0.0
  %v7427 = vmax.f32 %v7403, 0.0
  %v7428 = vmax.f32 %v7408, 0.0
  %v7429 = vmax.f32 %v7411, 0.0
  %7430 = vmatprep.subr.bf16.mxu0 0
  %7431 = vmatpush1.bf16.msra.mxu0 %v2433
  %7432 = vmatprep.subr.bf16.mxu0 0
  %7433 = vmatpush1.bf16.msra.mxu0 %v2434
  %7434 = vmatprep.subr.bf16.mxu0 0
  %7435 = vmatpush1.bf16.msra.mxu0 %v2435
  %7436 = vmatprep.subr.bf16.mxu0 0
  %7437 = vmatpush1.bf16.msra.mxu0 %v2436
  %7438 = vmatprep.subr.bf16.mxu0 0
  %7439 = vmatpush1.bf16.msra.mxu0 %v2437
  %7440 = vmatprep.subr.bf16.mxu0 0
  %7441 = vmatpush1.bf16.msra.mxu0 %v2438
  %7442 = vmatprep.subr.bf16.mxu0 0
  %7443 = vmatpush1.bf16.msra.mxu0 %v2943
  %7444 = vmatprep.subr.bf16.mxu0 0
  %7445 = vmatpush1.bf16.msra.mxu0 %v2944
  %7446 = vmatprep.subr.bf16.mxu0 0
  %7447 = vmatpush1.bf16.msra.mxu0 %v2945
  %7448 = vmatprep.subr.bf16.mxu0 0
  %7449 = vmatpush1.bf16.msra.mxu0 %v2946
  %7450 = vmatprep.subr.bf16.mxu0 0
  %7451 = vmatpush1.bf16.msra.mxu0 %v2947
  %7452 = vmatprep.subr.bf16.mxu0 0
  %7453 = vmatpush1.bf16.msra.mxu0 %v2948
  %7454 = vmatprep.subr.bf16.mxu0 0
  %7455 = vmatpush1.bf16.msra.mxu0 %v3453
  %7456 = vmatprep.subr.bf16.mxu0 0
  %7457 = vmatpush1.bf16.msra.mxu0 %v3454
  %7458 = vmatprep.subr.bf16.mxu0 0
  %7459 = vmatpush1.bf16.msra.mxu0 %v3455
  %7460 = vmatprep.subr.bf16.mxu0 0
  %7461 = vmatpush1.bf16.msra.mxu0 %v3456
  %7462 = vmatprep.mubr.bf16.mxu0 %v6696
  %7463 = vmatmul.mubr.bf16.gmra.mrb[0].mxu0 %v6695
  %v7464 = vpop.f32.mrb[0].mxu0
  %v7465 = vadd.f32 %v6522, %v7464
  %v7466 = vpop.f32.mrb[0].mxu0
  %v7467 = vpop.f32.mrb[0].mxu0
  %v7468 = vadd.f32 %v6527, %v7467
  %v7469 = vpop.f32.mrb[0].mxu0
  %7470 = vmatprep.mubr.bf16.mxu0 %v6700
  %7471 = vmatmul.mubr.bf16.gmra.mrb[0].mxu0 %v6699
  %v7472 = vpop.f32.mrb[0].mxu0
  %v7473 = vadd.f32 %v6532, %v7472
  %v7474 = vpop.f32.mrb[0].mxu0
  %v7475 = vpop.f32.mrb[0].mxu0
  %v7476 = vadd.f32 %v6537, %v7475
  %v7477 = vpop.f32.mrb[0].mxu0
  %7478 = vmatprep.mubr.bf16.mxu0 %v6704
  %7479 = vmatmul.mubr.bf16.gmra.mrb[0].mxu0 %v6703
  %v7480 = vpop.f32.mrb[0].mxu0
  %v7481 = vadd.f32 %v6542, %v7480
  %v7482 = vpop.f32.mrb[0].mxu0
  %v7483 = vpop.f32.mrb[0].mxu0
  %v7484 = vadd.f32 %v6547, %v7483
  %v7485 = vpop.f32.mrb[0].mxu0
  %7486 = vmatprep.mubr.bf16.mxu0 %v6708
  %7487 = vmatmul.mubr.bf16.gmra.mrb[0].mxu0 %v6707
  %v7488 = vpop.f32.mrb[0].mxu0
  %v7489 = vadd.f32 %v6552, %v7488
  %v7490 = vpop.f32.mrb[0].mxu0
  %v7491 = vpop.f32.mrb[0].mxu0
  %v7492 = vadd.f32 %v6557, %v7491
  %v7493 = vpop.f32.mrb[0].mxu0
  %7494 = vmatprep.mubr.bf16.mxu0 %v6712
  %7495 = vmatmul.mubr.bf16.gmra.mrb[0].mxu0 %v6711
  %v7496 = vpop.f32.mrb[0].mxu0
  %v7497 = vadd.f32 %v6562, %v7496
  %v7498 = vpop.f32.mrb[0].mxu0
  %v7499 = vpop.f32.mrb[0].mxu0
  %v7500 = vadd.f32 %v6567, %v7499
  %v7501 = vpop.f32.mrb[0].mxu0
  %7502 = vmatprep.mubr.bf16.mxu0 %v6716
  %7503 = vmatmul.mubr.bf16.gmra.mrb[0].mxu0 %v6715
  %v7504 = vpop.f32.mrb[0].mxu0
  %v7505 = vadd.f32 %v6572, %v7504
  %v7506 = vpop.f32.mrb[0].mxu0
  %v7507 = vpop.f32.mrb[0].mxu0
  %v7508 = vadd.f32 %v6577, %v7507
  %v7509 = vpop.f32.mrb[0].mxu0
  %7510 = vmatprep.mubr.bf16.mxu0 %v6720
  %7511 = vmatmul.mubr.bf16.gmra.mrb[0].mxu0 %v6719
  %v7512 = vpop.f32.mrb[0].mxu0
  %v7513 = vadd.f32 %v6582, %v7512
  %v7514 = vpop.f32.mrb[0].mxu0
  %v7515 = vpop.f32.mrb[0].mxu0
  %v7516 = vadd.f32 %v6587, %v7515
  %v7517 = vpop.f32.mrb[0].mxu0
  %7518 = vmatprep.mubr.bf16.mxu0 %v6724
  %7519 = vmatmul.mubr.bf16.gmra.mrb[0].mxu0 %v6723
  %v7520 = vpop.f32.mrb[0].mxu0
  %v7521 = vadd.f32 %v6592, %v7520
  %v7522 = vpop.f32.mrb[0].mxu0
  %v7523 = vpop.f32.mrb[0].mxu0
  %v7524 = vadd.f32 %v6597, %v7523
  %v7525 = vpop.f32.mrb[0].mxu0
  %7526 = vdwg.mxu0
  %7527 = vmatprep.subr.bf16.mxu0 0
  %7528 = vmatpush1.bf16.msra.mxu0 %v3457
  %7529 = vmatprep.subr.bf16.mxu0 0
  %7530 = vmatpush1.bf16.msra.mxu0 %v3458
  %7531 = vmatprep.subr.bf16.mxu0 0
  %7532 = vmatpush1.bf16.msra.mxu0 %v3963
  %7533 = vmatprep.subr.bf16.mxu0 0
  %7534 = vmatpush1.bf16.msra.mxu0 %v3964
  %7535 = vmatprep.subr.bf16.mxu0 0
  %7536 = vmatpush1.bf16.msra.mxu0 %v3965
  %7537 = vmatprep.subr.bf16.mxu0 0
  %7538 = vmatpush1.bf16.msra.mxu0 %v3966
  %7539 = vmatprep.subr.bf16.mxu0 0
  %7540 = vmatpush1.bf16.msra.mxu0 %v3967
  %7541 = vmatprep.subr.bf16.mxu0 0
  %7542 = vmatpush1.bf16.msra.mxu0 %v3968
  %7543 = vmatprep.subr.bf16.mxu0 0
  %7544 = vmatpush1.bf16.msra.mxu0 %v4473
  %7545 = vmatprep.subr.bf16.mxu0 0
  %7546 = vmatpush1.bf16.msra.mxu0 %v4474
  %7547 = vmatprep.subr.bf16.mxu0 0
  %7548 = vmatpush1.bf16.msra.mxu0 %v4475
  %7549 = vmatprep.subr.bf16.mxu0 0
  %7550 = vmatpush1.bf16.msra.mxu0 %v4476
  %7551 = vmatprep.subr.bf16.mxu0 0
  %7552 = vmatpush1.bf16.msra.mxu0 %v4477
  %7553 = vmatprep.subr.bf16.mxu0 0
  %7554 = vmatpush1.bf16.msra.mxu0 %v4478
  %7555 = vmatprep.subr.bf16.mxu0 0
  %7556 = vmatpush1.bf16.msra.mxu0 0
  %7557 = vmatprep.subr.bf16.mxu0 0
  %7558 = vmatpush1.bf16.msra.mxu0 0
  %7559 = vmatprep.mubr.bf16.mxu0 %v6753
  %7560 = vmatmul.mubr.bf16.gmra.mrb[0].mxu0 %v6697
  %v7561 = vpop.f32.mrb[0].mxu0
  %v7562 = vadd.f32 %v7465, %v7561
  %v7563 = vpop.f32.mrb[0].mxu0
  %v7564 = vpop.f32.mrb[0].mxu0
  %v7565 = vadd.f32 %v7468, %v7564
  %v7566 = vpop.f32.mrb[0].mxu0
  %7567 = vmatprep.mubr.bf16.mxu0 %v6756
  %7568 = vmatmul.mubr.bf16.gmra.mrb[0].mxu0 %v6701
  %v7569 = vpop.f32.mrb[0].mxu0
  %v7570 = vadd.f32 %v7473, %v7569
  %v7571 = vpop.f32.mrb[0].mxu0
  %v7572 = vpop.f32.mrb[0].mxu0
  %v7573 = vadd.f32 %v7476, %v7572
  %v7574 = vpop.f32.mrb[0].mxu0
  %7575 = vmatprep.mubr.bf16.mxu0 %v6759
  %7576 = vmatmul.mubr.bf16.gmra.mrb[0].mxu0 %v6705
  %v7577 = vpop.f32.mrb[0].mxu0
  %v7578 = vadd.f32 %v7481, %v7577
  %v7579 = vpop.f32.mrb[0].mxu0
  %v7580 = vpop.f32.mrb[0].mxu0
  %v7581 = vadd.f32 %v7484, %v7580
  %v7582 = vpop.f32.mrb[0].mxu0
  %7583 = vmatprep.mubr.bf16.mxu0 %v6762
  %7584 = vmatmul.mubr.bf16.gmra.mrb[0].mxu0 %v6709
  %v7585 = vpop.f32.mrb[0].mxu0
  %v7586 = vadd.f32 %v7489, %v7585
  %v7587 = vpop.f32.mrb[0].mxu0
  %v7588 = vpop.f32.mrb[0].mxu0
  %v7589 = vadd.f32 %v7492, %v7588
  %v7590 = vpop.f32.mrb[0].mxu0
  %7591 = vmatprep.mubr.bf16.mxu0 %v6765
  %7592 = vmatmul.mubr.bf16.gmra.mrb[0].mxu0 %v6713
  %v7593 = vpop.f32.mrb[0].mxu0
  %v7594 = vadd.f32 %v7497, %v7593
  %v7595 = vpop.f32.mrb[0].mxu0
  %v7596 = vpop.f32.mrb[0].mxu0
  %v7597 = vadd.f32 %v7500, %v7596
  %v7598 = vpop.f32.mrb[0].mxu0
  %7599 = vmatprep.mubr.bf16.mxu0 %v6768
  %7600 = vmatmul.mubr.bf16.gmra.mrb[0].mxu0 %v6717
  %v7601 = vpop.f32.mrb[0].mxu0
  %v7602 = vadd.f32 %v7505, %v7601
  %v7603 = vpop.f32.mrb[0].mxu0
  %v7604 = vpop.f32.mrb[0].mxu0
  %v7605 = vadd.f32 %v7508, %v7604
  %v7606 = vpop.f32.mrb[0].mxu0
  %7607 = vmatprep.mubr.bf16.mxu0 %v6771
  %7608 = vmatmul.mubr.bf16.gmra.mrb[0].mxu0 %v6721
  %v7609 = vpop.f32.mrb[0].mxu0
  %v7610 = vadd.f32 %v7513, %v7609
  %v7611 = vpop.f32.mrb[0].mxu0
  %v7612 = vpop.f32.mrb[0].mxu0
  %v7613 = vadd.f32 %v7516, %v7612
  %v7614 = vpop.f32.mrb[0].mxu0
  %7615 = vmatprep.mubr.bf16.mxu0 %v6774
  %7616 = vmatmul.mubr.bf16.gmra.mrb[0].mxu0 %v6725
  %v7617 = vpop.f32.mrb[0].mxu0
  %v7618 = vadd.f32 %v7521, %v7617
  %v7619 = vpop.f32.mrb[0].mxu0
  %v7620 = vpop.f32.mrb[0].mxu0
  %v7621 = vadd.f32 %v7524, %v7620
  %v7622 = vpop.f32.mrb[0].mxu0
  %7623 = vdwg.mxu0
  %v7624 = vmax.f32 %v7562, 0.0
  %v7625 = vmax.f32 %v7565, 0.0
  %v7626 = vmax.f32 %v7570, 0.0
  %v7627 = vmax.f32 %v7573, 0.0
  %v7628 = vmax.f32 %v7578, 0.0
  %v7629 = vmax.f32 %v7581, 0.0
  %v7630 = vmax.f32 %v7586, 0.0
  %v7631 = vmax.f32 %v7589, 0.0
  %v7632 = vmax.f32 %v7594, 0.0
  %v7633 = vmax.f32 %v7597, 0.0
  %v7634 = vmax.f32 %v7602, 0.0
  %v7635 = vmax.f32 %v7605, 0.0
  %v7636 = vmax.f32 %v7610, 0.0
  %v7637 = vmax.f32 %v7613, 0.0
  %v7638 = vmax.f32 %v7618, 0.0
  %v7639 = vmax.f32 %v7621, 0.0
  %v7640 = vmax.f32 %v7414, %v7624
  %v7641 = vmax.f32 %v7415, %v7625
  %v7642 = vmax.f32 %v7416, %v7626
  %v7643 = vmax.f32 %v7417, %v7627
  %v7644 = vmax.f32 %v7418, %v7628
  %v7645 = vmax.f32 %v7419, %v7629
  %v7646 = vmax.f32 %v7420, %v7630
  %v7647 = vmax.f32 %v7421, %v7631
  %v7648 = vmax.f32 %v7422, %v7632
  %v7649 = vmax.f32 %v7423, %v7633
  %v7650 = vmax.f32 %v7424, %v7634
  %v7651 = vmax.f32 %v7425, %v7635
  %v7652 = vmax.f32 %v7426, %v7636
  %v7653 = vmax.f32 %v7427, %v7637
  %v7654 = vmax.f32 %v7428, %v7638
  %v7655 = vmax.f32 %v7429, %v7639
  %v7656 = vmax.f32 %v7640, %v7642
  %v7657 = vmax.f32 %v7641, %v7643
  %v7658 = vmax.f32 %v7644, %v7646
  %v7659 = vmax.f32 %v7645, %v7647
  %v7660 = vmax.f32 %v7648, %v7650
  %v7661 = vmax.f32 %v7649, %v7651
  %v7662 = vmax.f32 %v7652, %v7654
  %v7663 = vmax.f32 %v7653, %v7655
  %7664 = vmatprep.subr.bf16.mxu0 0
  %7665 = vmatpush1.bf16.msra.mxu0 %v2943
  %7666 = vmatprep.subr.bf16.mxu0 0
  %7667 = vmatpush1.bf16.msra.mxu0 %v2944
  %7668 = vmatprep.subr.bf16.mxu0 0
  %7669 = vmatpush1.bf16.msra.mxu0 %v2945
  %7670 = vmatprep.subr.bf16.mxu0 0
  %7671 = vmatpush1.bf16.msra.mxu0 %v2946
  %7672 = vmatprep.subr.bf16.mxu0 0
  %7673 = vmatpush1.bf16.msra.mxu0 %v2947
  %7674 = vmatprep.subr.bf16.mxu0 0
  %7675 = vmatpush1.bf16.msra.mxu0 %v2948
  %7676 = vmatprep.subr.bf16.mxu0 0
  %7677 = vmatpush1.bf16.msra.mxu0 %v3453
  %7678 = vmatprep.subr.bf16.mxu0 0
  %7679 = vmatpush1.bf16.msra.mxu0 %v3454
  %7680 = vmatprep.subr.bf16.mxu0 0
  %7681 = vmatpush1.bf16.msra.mxu0 %v3455
  %7682 = vmatprep.subr.bf16.mxu0 0
  %7683 = vmatpush1.bf16.msra.mxu0 %v3456
  %7684 = vmatprep.subr.bf16.mxu0 0
  %7685 = vmatpush1.bf16.msra.mxu0 %v3457
  %7686 = vmatprep.subr.bf16.mxu0 0
  %7687 = vmatpush1.bf16.msra.mxu0 %v3458
  %7688 = vmatprep.subr.bf16.mxu0 0
  %7689 = vmatpush1.bf16.msra.mxu0 %v3963
  %7690 = vmatprep.subr.bf16.mxu0 0
  %7691 = vmatpush1.bf16.msra.mxu0 %v3964
  %7692 = vmatprep.subr.bf16.mxu0 0
  %7693 = vmatpush1.bf16.msra.mxu0 %v3965
  %7694 = vmatprep.subr.bf16.mxu0 0
  %7695 = vmatpush1.bf16.msra.mxu0 %v3966
  %7696 = vmatprep.mubr.bf16.mxu0 %v6696
  %7697 = vmatmul.mubr.bf16.gmra.mrb[0].mxu0 %v6695
  %v7698 = vpop.f32.mrb[0].mxu0
  %v7699 = vadd.f32 %v6522, %v7698
  %v7700 = vpop.f32.mrb[0].mxu0
  %v7701 = vpop.f32.mrb[0].mxu0
  %v7702 = vadd.f32 %v6527, %v7701
  %v7703 = vpop.f32.mrb[0].mxu0
  %7704 = vmatprep.mubr.bf16.mxu0 %v6700
  %7705 = vmatmul.mubr.bf16.gmra.mrb[0].mxu0 %v6699
  %v7706 = vpop.f32.mrb[0].mxu0
  %v7707 = vadd.f32 %v6532, %v7706
  %v7708 = vpop.f32.mrb[0].mxu0
  %v7709 = vpop.f32.mrb[0].mxu0
  %v7710 = vadd.f32 %v6537, %v7709
  %v7711 = vpop.f32.mrb[0].mxu0
  %7712 = vmatprep.mubr.bf16.mxu0 %v6704
  %7713 = vmatmul.mubr.bf16.gmra.mrb[0].mxu0 %v6703
  %v7714 = vpop.f32.mrb[0].mxu0
  %v7715 = vadd.f32 %v6542, %v7714
  %v7716 = vpop.f32.mrb[0].mxu0
  %v7717 = vpop.f32.mrb[0].mxu0
  %v7718 = vadd.f32 %v6547, %v7717
  %v7719 = vpop.f32.mrb[0].mxu0
  %7720 = vmatprep.mubr.bf16.mxu0 %v6708
  %7721 = vmatmul.mubr.bf16.gmra.mrb[0].mxu0 %v6707
  %v7722 = vpop.f32.mrb[0].mxu0
  %v7723 = vadd.f32 %v6552, %v7722
  %v7724 = vpop.f32.mrb[0].mxu0
  %v7725 = vpop.f32.mrb[0].mxu0
  %v7726 = vadd.f32 %v6557, %v7725
  %v7727 = vpop.f32.mrb[0].mxu0
  %7728 = vmatprep.mubr.bf16.mxu0 %v6712
  %7729 = vmatmul.mubr.bf16.gmra.mrb[0].mxu0 %v6711
  %v7730 = vpop.f32.mrb[0].mxu0
  %v7731 = vadd.f32 %v6562, %v7730
  %v7732 = vpop.f32.mrb[0].mxu0
  %v7733 = vpop.f32.mrb[0].mxu0
  %v7734 = vadd.f32 %v6567, %v7733
  %v7735 = vpop.f32.mrb[0].mxu0
  %7736 = vmatprep.mubr.bf16.mxu0 %v6716
  %7737 = vmatmul.mubr.bf16.gmra.mrb[0].mxu0 %v6715
  %v7738 = vpop.f32.mrb[0].mxu0
  %v7739 = vadd.f32 %v6572, %v7738
  %v7740 = vpop.f32.mrb[0].mxu0
  %v7741 = vpop.f32.mrb[0].mxu0
  %v7742 = vadd.f32 %v6577, %v7741
  %v7743 = vpop.f32.mrb[0].mxu0
  %7744 = vmatprep.mubr.bf16.mxu0 %v6720
  %7745 = vmatmul.mubr.bf16.gmra.mrb[0].mxu0 %v6719
  %v7746 = vpop.f32.mrb[0].mxu0
  %v7747 = vadd.f32 %v6582, %v7746
  %v7748 = vpop.f32.mrb[0].mxu0
  %v7749 = vpop.f32.mrb[0].mxu0
  %v7750 = vadd.f32 %v6587, %v7749
  %v7751 = vpop.f32.mrb[0].mxu0
  %7752 = vmatprep.mubr.bf16.mxu0 %v6724
  %7753 = vmatmul.mubr.bf16.gmra.mrb[0].mxu0 %v6723
  %v7754 = vpop.f32.mrb[0].mxu0
  %v7755 = vadd.f32 %v6592, %v7754
  %v7756 = vpop.f32.mrb[0].mxu0
  %v7757 = vpop.f32.mrb[0].mxu0
  %v7758 = vadd.f32 %v6597, %v7757
  %v7759 = vpop.f32.mrb[0].mxu0
  %7760 = vdwg.mxu0
  %7761 = vmatprep.subr.bf16.mxu0 0
  %7762 = vmatpush1.bf16.msra.mxu0 %v3967
  %7763 = vmatprep.subr.bf16.mxu0 0
  %7764 = vmatpush1.bf16.msra.mxu0 %v3968
  %7765 = vmatprep.subr.bf16.mxu0 0
  %7766 = vmatpush1.bf16.msra.mxu0 %v4473
  %7767 = vmatprep.subr.bf16.mxu0 0
  %7768 = vmatpush1.bf16.msra.mxu0 %v4474
  %7769 = vmatprep.subr.bf16.mxu0 0
  %7770 = vmatpush1.bf16.msra.mxu0 %v4475
  %7771 = vmatprep.subr.bf16.mxu0 0
  %7772 = vmatpush1.bf16.msra.mxu0 %v4476
  %7773 = vmatprep.subr.bf16.mxu0 0
  %7774 = vmatpush1.bf16.msra.mxu0 %v4477
  %7775 = vmatprep.subr.bf16.mxu0 0
  %7776 = vmatpush1.bf16.msra.mxu0 %v4478
  %7777 = vmatprep.subr.bf16.mxu0 0
  %7778 = vmatpush1.bf16.msra.mxu0 %v4983
  %7779 = vmatprep.subr.bf16.mxu0 0
  %7780 = vmatpush1.bf16.msra.mxu0 %v4984
  %7781 = vmatprep.subr.bf16.mxu0 0
  %7782 = vmatpush1.bf16.msra.mxu0 %v4985
  %7783 = vmatprep.subr.bf16.mxu0 0
  %7784 = vmatpush1.bf16.msra.mxu0 %v4986
  %7785 = vmatprep.subr.bf16.mxu0 0
  %7786 = vmatpush1.bf16.msra.mxu0 %v4987
  %7787 = vmatprep.subr.bf16.mxu0 0
  %7788 = vmatpush1.bf16.msra.mxu0 %v4988
  %7789 = vmatprep.subr.bf16.mxu0 0
  %7790 = vmatpush1.bf16.msra.mxu0 0
  %7791 = vmatprep.subr.bf16.mxu0 0
  %7792 = vmatpush1.bf16.msra.mxu0 0
  %7793 = vmatprep.mubr.bf16.mxu0 %v6753
  %7794 = vmatmul.mubr.bf16.gmra.mrb[0].mxu0 %v6697
  %v7795 = vpop.f32.mrb[0].mxu0
  %v7796 = vadd.f32 %v7699, %v7795
  %v7797 = vpop.f32.mrb[0].mxu0
  %v7798 = vpop.f32.mrb[0].mxu0
  %v7799 = vadd.f32 %v7702, %v7798
  %v7800 = vpop.f32.mrb[0].mxu0
  %7801 = vmatprep.mubr.bf16.mxu0 %v6756
  %7802 = vmatmul.mubr.bf16.gmra.mrb[0].mxu0 %v6701
  %v7803 = vpop.f32.mrb[0].mxu0
  %v7804 = vadd.f32 %v7707, %v7803
  %v7805 = vpop.f32.mrb[0].mxu0
  %v7806 = vpop.f32.mrb[0].mxu0
  %v7807 = vadd.f32 %v7710, %v7806
  %v7808 = vpop.f32.mrb[0].mxu0
  %7809 = vmatprep.mubr.bf16.mxu0 %v6759
  %7810 = vmatmul.mubr.bf16.gmra.mrb[0].mxu0 %v6705
  %v7811 = vpop.f32.mrb[0].mxu0
  %v7812 = vadd.f32 %v7715, %v7811
  %v7813 = vpop.f32.mrb[0].mxu0
  %v7814 = vpop.f32.mrb[0].mxu0
  %v7815 = vadd.f32 %v7718, %v7814
  %v7816 = vpop.f32.mrb[0].mxu0
  %7817 = vmatprep.mubr.bf16.mxu0 %v6762
  %7818 = vmatmul.mubr.bf16.gmra.mrb[0].mxu0 %v6709
  %v7819 = vpop.f32.mrb[0].mxu0
  %v7820 = vadd.f32 %v7723, %v7819
  %v7821 = vpop.f32.mrb[0].mxu0
  %v7822 = vpop.f32.mrb[0].mxu0
  %v7823 = vadd.f32 %v7726, %v7822
  %v7824 = vpop.f32.mrb[0].mxu0
  %7825 = vmatprep.mubr.bf16.mxu0 %v6765
  %7826 = vmatmul.mubr.bf16.gmra.mrb[0].mxu0 %v6713
  %v7827 = vpop.f32.mrb[0].mxu0
  %v7828 = vadd.f32 %v7731, %v7827
  %v7829 = vpop.f32.mrb[0].mxu0
  %v7830 = vpop.f32.mrb[0].mxu0
  %v7831 = vadd.f32 %v7734, %v7830
  %v7832 = vpop.f32.mrb[0].mxu0
  %7833 = vmatprep.mubr.bf16.mxu0 %v6768
  %7834 = vmatmul.mubr.bf16.gmra.mrb[0].mxu0 %v6717
  %v7835 = vpop.f32.mrb[0].mxu0
  %v7836 = vadd.f32 %v7739, %v7835
  %v7837 = vpop.f32.mrb[0].mxu0
  %v7838 = vpop.f32.mrb[0].mxu0
  %v7839 = vadd.f32 %v7742, %v7838
  %v7840 = vpop.f32.mrb[0].mxu0
  %7841 = vmatprep.mubr.bf16.mxu0 %v6771
  %7842 = vmatmul.mubr.bf16.gmra.mrb[0].mxu0 %v6721
  %v7843 = vpop.f32.mrb[0].mxu0
  %v7844 = vadd.f32 %v7747, %v7843
  %v7845 = vpop.f32.mrb[0].mxu0
  %v7846 = vpop.f32.mrb[0].mxu0
  %v7847 = vadd.f32 %v7750, %v7846
  %v7848 = vpop.f32.mrb[0].mxu0
  %7849 = vmatprep.mubr.bf16.mxu0 %v6774
  %7850 = vmatmul.mubr.bf16.gmra.mrb[0].mxu0 %v6725
  %v7851 = vpop.f32.mrb[0].mxu0
  %v7852 = vadd.f32 %v7755, %v7851
  %v7853 = vpop.f32.mrb[0].mxu0
  %v7854 = vpop.f32.mrb[0].mxu0
  %v7855 = vadd.f32 %v7758, %v7854
  %v7856 = vpop.f32.mrb[0].mxu0
  %7857 = vdwg.mxu0
  %v7858 = vmax.f32 %v7796, 0.0
  %v7859 = vmax.f32 %v7799, 0.0
  %v7860 = vmax.f32 %v7804, 0.0
  %v7861 = vmax.f32 %v7807, 0.0
  %v7862 = vmax.f32 %v7812, 0.0
  %v7863 = vmax.f32 %v7815, 0.0
  %v7864 = vmax.f32 %v7820, 0.0
  %v7865 = vmax.f32 %v7823, 0.0
  %v7866 = vmax.f32 %v7828, 0.0
  %v7867 = vmax.f32 %v7831, 0.0
  %v7868 = vmax.f32 %v7836, 0.0
  %v7869 = vmax.f32 %v7839, 0.0
  %v7870 = vmax.f32 %v7844, 0.0
  %v7871 = vmax.f32 %v7847, 0.0
  %v7872 = vmax.f32 %v7852, 0.0
  %v7873 = vmax.f32 %v7855, 0.0
  %7874 = vmatprep.subr.bf16.mxu0 0
  %7875 = vmatpush1.bf16.msra.mxu0 %v3453
  %7876 = vmatprep.subr.bf16.mxu0 0
  %7877 = vmatpush1.bf16.msra.mxu0 %v3454
  %7878 = vmatprep.subr.bf16.mxu0 0
  %7879 = vmatpush1.bf16.msra.mxu0 %v3455
  %7880 = vmatprep.subr.bf16.mxu0 0
  %7881 = vmatpush1.bf16.msra.mxu0 %v3456
  %7882 = vmatprep.subr.bf16.mxu0 0
  %7883 = vmatpush1.bf16.msra.mxu0 %v3457
  %7884 = vmatprep.subr.bf16.mxu0 0
  %7885 = vmatpush1.bf16.msra.mxu0 %v3458
  %7886 = vmatprep.subr.bf16.mxu0 0
  %7887 = vmatpush1.bf16.msra.mxu0 %v3963
  %7888 = vmatprep.subr.bf16.mxu0 0
  %7889 = vmatpush1.bf16.msra.mxu0 %v3964
  %7890 = vmatprep.subr.bf16.mxu0 0
  %7891 = vmatpush1.bf16.msra.mxu0 %v3965
  %7892 = vmatprep.subr.bf16.mxu0 0
  %7893 = vmatpush1.bf16.msra.mxu0 %v3966
  %7894 = vmatprep.subr.bf16.mxu0 0
  %7895 = vmatpush1.bf16.msra.mxu0 %v3967
  %7896 = vmatprep.subr.bf16.mxu0 0
  %7897 = vmatpush1.bf16.msra.mxu0 %v3968
  %7898 = vmatprep.subr.bf16.mxu0 0
  %7899 = vmatpush1.bf16.msra.mxu0 %v4473
  %7900 = vmatprep.subr.bf16.mxu0 0
  %7901 = vmatpush1.bf16.msra.mxu0 %v4474
  %7902 = vmatprep.subr.bf16.mxu0 0
  %7903 = vmatpush1.bf16.msra.mxu0 %v4475
  %7904 = vmatprep.subr.bf16.mxu0 0
  %7905 = vmatpush1.bf16.msra.mxu0 %v4476
  %7906 = vmatprep.mubr.bf16.mxu0 %v6696
  %7907 = vmatmul.mubr.bf16.gmra.mrb[0].mxu0 %v6695
  %v7908 = vpop.f32.mrb[0].mxu0
  %v7909 = vadd.f32 %v6522, %v7908
  %v7910 = vpop.f32.mrb[0].mxu0
  %v7911 = vpop.f32.mrb[0].mxu0
  %v7912 = vadd.f32 %v6527, %v7911
  %v7913 = vpop.f32.mrb[0].mxu0
  %7914 = vmatprep.mubr.bf16.mxu0 %v6700
  %7915 = vmatmul.mubr.bf16.gmra.mrb[0].mxu0 %v6699
  %v7916 = vpop.f32.mrb[0].mxu0
  %v7917 = vadd.f32 %v6532, %v7916
  %v7918 = vpop.f32.mrb[0].mxu0
  %v7919 = vpop.f32.mrb[0].mxu0
  %v7920 = vadd.f32 %v6537, %v7919
  %v7921 = vpop.f32.mrb[0].mxu0
  %7922 = vmatprep.mubr.bf16.mxu0 %v6704
  %7923 = vmatmul.mubr.bf16.gmra.mrb[0].mxu0 %v6703
  %v7924 = vpop.f32.mrb[0].mxu0
  %v7925 = vadd.f32 %v6542, %v7924
  %v7926 = vpop.f32.mrb[0].mxu0
  %v7927 = vpop.f32.mrb[0].mxu0
  %v7928 = vadd.f32 %v6547, %v7927
  %v7929 = vpop.f32.mrb[0].mxu0
  %7930 = vmatprep.mubr.bf16.mxu0 %v6708
  %7931 = vmatmul.mubr.bf16.gmra.mrb[0].mxu0 %v6707
  %v7932 = vpop.f32.mrb[0].mxu0
  %v7933 = vadd.f32 %v6552, %v7932
  %v7934 = vpop.f32.mrb[0].mxu0
  %v7935 = vpop.f32.mrb[0].mxu0
  %v7936 = vadd.f32 %v6557, %v7935
  %v7937 = vpop.f32.mrb[0].mxu0
  %7938 = vmatprep.mubr.bf16.mxu0 %v6712
  %7939 = vmatmul.mubr.bf16.gmra.mrb[0].mxu0 %v6711
  %v7940 = vpop.f32.mrb[0].mxu0
  %v7941 = vadd.f32 %v6562, %v7940
  %v7942 = vpop.f32.mrb[0].mxu0
  %v7943 = vpop.f32.mrb[0].mxu0
  %v7944 = vadd.f32 %v6567, %v7943
  %v7945 = vpop.f32.mrb[0].mxu0
  %7946 = vmatprep.mubr.bf16.mxu0 %v6716
  %7947 = vmatmul.mubr.bf16.gmra.mrb[0].mxu0 %v6715
  %v7948 = vpop.f32.mrb[0].mxu0
  %v7949 = vadd.f32 %v6572, %v7948
  %v7950 = vpop.f32.mrb[0].mxu0
  %v7951 = vpop.f32.mrb[0].mxu0
  %v7952 = vadd.f32 %v6577, %v7951
  %v7953 = vpop.f32.mrb[0].mxu0
  %7954 = vmatprep.mubr.bf16.mxu0 %v6720
  %7955 = vmatmul.mubr.bf16.gmra.mrb[0].mxu0 %v6719
  %v7956 = vpop.f32.mrb[0].mxu0
  %v7957 = vadd.f32 %v6582, %v7956
  %v7958 = vpop.f32.mrb[0].mxu0
  %v7959 = vpop.f32.mrb[0].mxu0
  %v7960 = vadd.f32 %v6587, %v7959
  %v7961 = vpop.f32.mrb[0].mxu0
  %7962 = vmatprep.mubr.bf16.mxu0 %v6724
  %7963 = vmatmul.mubr.bf16.gmra.mrb[0].mxu0 %v6723
  %v7964 = vpop.f32.mrb[0].mxu0
  %v7965 = vadd.f32 %v6592, %v7964
  %v7966 = vpop.f32.mrb[0].mxu0
  %v7967 = vpop.f32.mrb[0].mxu0
  %v7968 = vadd.f32 %v6597, %v7967
  %v7969 = vpop.f32.mrb[0].mxu0
  %7970 = vdwg.mxu0
  %7971 = vmatprep.subr.bf16.mxu0 0
  %7972 = vmatpush1.bf16.msra.mxu0 %v4477
  %7973 = vmatprep.subr.bf16.mxu0 0
  %7974 = vmatpush1.bf16.msra.mxu0 %v4478
  %7975 = vmatprep.subr.bf16.mxu0 0
  %7976 = vmatpush1.bf16.msra.mxu0 %v4983
  %7977 = vmatprep.subr.bf16.mxu0 0
  %7978 = vmatpush1.bf16.msra.mxu0 %v4984
  %7979 = vmatprep.subr.bf16.mxu0 0
  %7980 = vmatpush1.bf16.msra.mxu0 %v4985
  %7981 = vmatprep.subr.bf16.mxu0 0
  %7982 = vmatpush1.bf16.msra.mxu0 %v4986
  %7983 = vmatprep.subr.bf16.mxu0 0
  %7984 = vmatpush1.bf16.msra.mxu0 %v4987
  %7985 = vmatprep.subr.bf16.mxu0 0
  %7986 = vmatpush1.bf16.msra.mxu0 %v4988
  %7987 = vmatprep.subr.bf16.mxu0 0
  %7988 = vmatpush1.bf16.msra.mxu0 %v5493
  %7989 = vmatprep.subr.bf16.mxu0 0
  %7990 = vmatpush1.bf16.msra.mxu0 %v5494
  %7991 = vmatprep.subr.bf16.mxu0 0
  %7992 = vmatpush1.bf16.msra.mxu0 %v5495
  %7993 = vmatprep.subr.bf16.mxu0 0
  %7994 = vmatpush1.bf16.msra.mxu0 %v5496
  %7995 = vmatprep.subr.bf16.mxu0 0
  %7996 = vmatpush1.bf16.msra.mxu0 %v5497
  %7997 = vmatprep.subr.bf16.mxu0 0
  %7998 = vmatpush1.bf16.msra.mxu0 %v5498
  %7999 = vmatprep.subr.bf16.mxu0 0
  %8000 = vmatpush1.bf16.msra.mxu0 0
  %8001 = vmatprep.subr.bf16.mxu0 0
  %8002 = vmatpush1.bf16.msra.mxu0 0
  %8003 = vmatprep.mubr.bf16.mxu0 %v6753
  %8004 = vmatmul.mubr.bf16.gmra.mrb[0].mxu0 %v6697
  %v8005 = vpop.f32.mrb[0].mxu0
  %v8006 = vadd.f32 %v7909, %v8005
  %v8007 = vpop.f32.mrb[0].mxu0
  %v8008 = vpop.f32.mrb[0].mxu0
  %v8009 = vadd.f32 %v7912, %v8008
  %v8010 = vpop.f32.mrb[0].mxu0
  %8011 = vmatprep.mubr.bf16.mxu0 %v6756
  %8012 = vmatmul.mubr.bf16.gmra.mrb[0].mxu0 %v6701
  %v8013 = vpop.f32.mrb[0].mxu0
  %v8014 = vadd.f32 %v7917, %v8013
  %v8015 = vpop.f32.mrb[0].mxu0
  %v8016 = vpop.f32.mrb[0].mxu0
  %v8017 = vadd.f32 %v7920, %v8016
  %v8018 = vpop.f32.mrb[0].mxu0
  %8019 = vmatprep.mubr.bf16.mxu0 %v6759
  %8020 = vmatmul.mubr.bf16.gmra.mrb[0].mxu0 %v6705
  %v8021 = vpop.f32.mrb[0].mxu0
  %v8022 = vadd.f32 %v7925, %v8021
  %v8023 = vpop.f32.mrb[0].mxu0
  %v8024 = vpop.f32.mrb[0].mxu0
  %v8025 = vadd.f32 %v7928, %v8024
  %v8026 = vpop.f32.mrb[0].mxu0
  %8027 = vmatprep.mubr.bf16.mxu0 %v6762
  %8028 = vmatmul.mubr.bf16.gmra.mrb[0].mxu0 %v6709
  %v8029 = vpop.f32.mrb[0].mxu0
  %v8030 = vadd.f32 %v7933, %v8029
  %v8031 = vpop.f32.mrb[0].mxu0
  %v8032 = vpop.f32.mrb[0].mxu0
  %v8033 = vadd.f32 %v7936, %v8032
  %v8034 = vpop.f32.mrb[0].mxu0
  %8035 = vmatprep.mubr.bf16.mxu0 %v6765
  %8036 = vmatmul.mubr.bf16.gmra.mrb[0].mxu0 %v6713
  %v8037 = vpop.f32.mrb[0].mxu0
  %v8038 = vadd.f32 %v7941, %v8037
  %v8039 = vpop.f32.mrb[0].mxu0
  %v8040 = vpop.f32.mrb[0].mxu0
  %v8041 = vadd.f32 %v7944, %v8040
  %v8042 = vpop.f32.mrb[0].mxu0
  %8043 = vmatprep.mubr.bf16.mxu0 %v6768
  %8044 = vmatmul.mubr.bf16.gmra.mrb[0].mxu0 %v6717
  %v8045 = vpop.f32.mrb[0].mxu0
  %v8046 = vadd.f32 %v7949, %v8045
  %v8047 = vpop.f32.mrb[0].mxu0
  %v8048 = vpop.f32.mrb[0].mxu0
  %v8049 = vadd.f32 %v7952, %v8048
  %v8050 = vpop.f32.mrb[0].mxu0
  %8051 = vmatprep.mubr.bf16.mxu0 %v6771
  %8052 = vmatmul.mubr.bf16.gmra.mrb[0].mxu0 %v6721
  %v8053 = vpop.f32.mrb[0].mxu0
  %v8054 = vadd.f32 %v7957, %v8053
  %v8055 = vpop.f32.mrb[0].mxu0
  %v8056 = vpop.f32.mrb[0].mxu0
  %v8057 = vadd.f32 %v7960, %v8056
  %v8058 = vpop.f32.mrb[0].mxu0
  %8059 = vmatprep.mubr.bf16.mxu0 %v6774
  %8060 = vmatmul.mubr.bf16.gmra.mrb[0].mxu0 %v6725
  %v8061 = vpop.f32.mrb[0].mxu0
  %v8062 = vadd.f32 %v7965, %v8061
  %v8063 = vpop.f32.mrb[0].mxu0
  %v8064 = vpop.f32.mrb[0].mxu0
  %v8065 = vadd.f32 %v7968, %v8064
  %v8066 = vpop.f32.mrb[0].mxu0
  %8067 = vdwg.mxu0
  %v8068 = vmax.f32 %v8006, 0.0
  %v8069 = vmax.f32 %v8009, 0.0
  %v8070 = vmax.f32 %v8014, 0.0
  %v8071 = vmax.f32 %v8017, 0.0
  %v8072 = vmax.f32 %v8022, 0.0
  %v8073 = vmax.f32 %v8025, 0.0
  %v8074 = vmax.f32 %v8030, 0.0
  %v8075 = vmax.f32 %v8033, 0.0
  %v8076 = vmax.f32 %v8038, 0.0
  %v8077 = vmax.f32 %v8041, 0.0
  %v8078 = vmax.f32 %v8046, 0.0
  %v8079 = vmax.f32 %v8049, 0.0
  %v8080 = vmax.f32 %v8054, 0.0
  %v8081 = vmax.f32 %v8057, 0.0
  %v8082 = vmax.f32 %v8062, 0.0
  %v8083 = vmax.f32 %v8065, 0.0
  %v8084 = vmax.f32 %v7858, %v8068
  %v8085 = vmax.f32 %v7859, %v8069
  %v8086 = vmax.f32 %v7860, %v8070
  %v8087 = vmax.f32 %v7861, %v8071
  %v8088 = vmax.f32 %v7862, %v8072
  %v8089 = vmax.f32 %v7863, %v8073
  %v8090 = vmax.f32 %v7864, %v8074
  %v8091 = vmax.f32 %v7865, %v8075
  %v8092 = vmax.f32 %v7866, %v8076
  %v8093 = vmax.f32 %v7867, %v8077
  %v8094 = vmax.f32 %v7868, %v8078
  %v8095 = vmax.f32 %v7869, %v8079
  %v8096 = vmax.f32 %v7870, %v8080
  %v8097 = vmax.f32 %v7871, %v8081
  %v8098 = vmax.f32 %v7872, %v8082
  %v8099 = vmax.f32 %v7873, %v8083
  %v8100 = vmax.f32 %v8084, %v8086
  %v8101 = vmax.f32 %v8085, %v8087
  %v8102 = vmax.f32 %v8088, %v8090
  %v8103 = vmax.f32 %v8089, %v8091
  %v8104 = vmax.f32 %v8092, %v8094
  %v8105 = vmax.f32 %v8093, %v8095
  %v8106 = vmax.f32 %v8096, %v8098
  %v8107 = vmax.f32 %v8097, %v8099
  %8108 = vmatprep.subr.bf16.mxu0 0
  %8109 = vmatpush1.bf16.msra.mxu0 %v3963
  %8110 = vmatprep.subr.bf16.mxu0 0
  %8111 = vmatpush1.bf16.msra.mxu0 %v3964
  %8112 = vmatprep.subr.bf16.mxu0 0
  %8113 = vmatpush1.bf16.msra.mxu0 %v3965
  %8114 = vmatprep.subr.bf16.mxu0 0
  %8115 = vmatpush1.bf16.msra.mxu0 %v3966
  %8116 = vmatprep.subr.bf16.mxu0 0
  %8117 = vmatpush1.bf16.msra.mxu0 %v3967
  %8118 = vmatprep.subr.bf16.mxu0 0
  %8119 = vmatpush1.bf16.msra.mxu0 %v3968
  %8120 = vmatprep.subr.bf16.mxu0 0
  %8121 = vmatpush1.bf16.msra.mxu0 %v4473
  %8122 = vmatprep.subr.bf16.mxu0 0
  %8123 = vmatpush1.bf16.msra.mxu0 %v4474
  %8124 = vmatprep.subr.bf16.mxu0 0
  %8125 = vmatpush1.bf16.msra.mxu0 %v4475
  %8126 = vmatprep.subr.bf16.mxu0 0
  %8127 = vmatpush1.bf16.msra.mxu0 %v4476
  %8128 = vmatprep.subr.bf16.mxu0 0
  %8129 = vmatpush1.bf16.msra.mxu0 %v4477
  %8130 = vmatprep.subr.bf16.mxu0 0
  %8131 = vmatpush1.bf16.msra.mxu0 %v4478
  %8132 = vmatprep.subr.bf16.mxu0 0
  %8133 = vmatpush1.bf16.msra.mxu0 %v4983
  %8134 = vmatprep.subr.bf16.mxu0 0
  %8135 = vmatpush1.bf16.msra.mxu0 %v4984
  %8136 = vmatprep.subr.bf16.mxu0 0
  %8137 = vmatpush1.bf16.msra.mxu0 %v4985
  %8138 = vmatprep.subr.bf16.mxu0 0
  %8139 = vmatpush1.bf16.msra.mxu0 %v4986
  %8140 = vmatprep.mubr.bf16.mxu0 %v6696
  %8141 = vmatmul.mubr.bf16.gmra.mrb[0].mxu0 %v6695
  %v8142 = vpop.f32.mrb[0].mxu0
  %v8143 = vadd.f32 %v6522, %v8142
  %v8144 = vpop.f32.mrb[0].mxu0
  %v8145 = vpop.f32.mrb[0].mxu0
  %v8146 = vadd.f32 %v6527, %v8145
  %v8147 = vpop.f32.mrb[0].mxu0
  %8148 = vmatprep.mubr.bf16.mxu0 %v6700
  %8149 = vmatmul.mubr.bf16.gmra.mrb[0].mxu0 %v6699
  %v8150 = vpop.f32.mrb[0].mxu0
  %v8151 = vadd.f32 %v6532, %v8150
  %v8152 = vpop.f32.mrb[0].mxu0
  %v8153 = vpop.f32.mrb[0].mxu0
  %v8154 = vadd.f32 %v6537, %v8153
  %v8155 = vpop.f32.mrb[0].mxu0
  %8156 = vmatprep.mubr.bf16.mxu0 %v6704
  %8157 = vmatmul.mubr.bf16.gmra.mrb[0].mxu0 %v6703
  %v8158 = vpop.f32.mrb[0].mxu0
  %v8159 = vadd.f32 %v6542, %v8158
  %v8160 = vpop.f32.mrb[0].mxu0
  %v8161 = vpop.f32.mrb[0].mxu0
  %v8162 = vadd.f32 %v6547, %v8161
  %v8163 = vpop.f32.mrb[0].mxu0
  %8164 = vmatprep.mubr.bf16.mxu0 %v6708
  %8165 = vmatmul.mubr.bf16.gmra.mrb[0].mxu0 %v6707
  %v8166 = vpop.f32.mrb[0].mxu0
  %v8167 = vadd.f32 %v6552, %v8166
  %v8168 = vpop.f32.mrb[0].mxu0
  %v8169 = vpop.f32.mrb[0].mxu0
  %v8170 = vadd.f32 %v6557, %v8169
  %v8171 = vpop.f32.mrb[0].mxu0
  %8172 = vmatprep.mubr.bf16.mxu0 %v6712
  %8173 = vmatmul.mubr.bf16.gmra.mrb[0].mxu0 %v6711
  %v8174 = vpop.f32.mrb[0].mxu0
  %v8175 = vadd.f32 %v6562, %v8174
  %v8176 = vpop.f32.mrb[0].mxu0
  %v8177 = vpop.f32.mrb[0].mxu0
  %v8178 = vadd.f32 %v6567, %v8177
  %v8179 = vpop.f32.mrb[0].mxu0
  %8180 = vmatprep.mubr.bf16.mxu0 %v6716
  %8181 = vmatmul.mubr.bf16.gmra.mrb[0].mxu0 %v6715
  %v8182 = vpop.f32.mrb[0].mxu0
  %v8183 = vadd.f32 %v6572, %v8182
  %v8184 = vpop.f32.mrb[0].mxu0
  %v8185 = vpop.f32.mrb[0].mxu0
  %v8186 = vadd.f32 %v6577, %v8185
  %v8187 = vpop.f32.mrb[0].mxu0
  %8188 = vmatprep.mubr.bf16.mxu0 %v6720
  %8189 = vmatmul.mubr.bf16.gmra.mrb[0].mxu0 %v6719
  %v8190 = vpop.f32.mrb[0].mxu0
  %v8191 = vadd.f32 %v6582, %v8190
  %v8192 = vpop.f32.mrb[0].mxu0
  %v8193 = vpop.f32.mrb[0].mxu0
  %v8194 = vadd.f32 %v6587, %v8193
  %v8195 = vpop.f32.mrb[0].mxu0
  %8196 = vmatprep.mubr.bf16.mxu0 %v6724
  %8197 = vmatmul.mubr.bf16.gmra.mrb[0].mxu0 %v6723
  %v8198 = vpop.f32.mrb[0].mxu0
  %v8199 = vadd.f32 %v6592, %v8198
  %v8200 = vpop.f32.mrb[0].mxu0
  %v8201 = vpop.f32.mrb[0].mxu0
  %v8202 = vadd.f32 %v6597, %v8201
  %v8203 = vpop.f32.mrb[0].mxu0
  %8204 = vdwg.mxu0
  %8205 = vmatprep.subr.bf16.mxu0 0
  %8206 = vmatpush1.bf16.msra.mxu0 %v4987
  %8207 = vmatprep.subr.bf16.mxu0 0
  %8208 = vmatpush1.bf16.msra.mxu0 %v4988
  %8209 = vmatprep.subr.bf16.mxu0 0
  %8210 = vmatpush1.bf16.msra.mxu0 %v5493
  %8211 = vmatprep.subr.bf16.mxu0 0
  %8212 = vmatpush1.bf16.msra.mxu0 %v5494
  %8213 = vmatprep.subr.bf16.mxu0 0
  %8214 = vmatpush1.bf16.msra.mxu0 %v5495
  %8215 = vmatprep.subr.bf16.mxu0 0
  %8216 = vmatpush1.bf16.msra.mxu0 %v5496
  %8217 = vmatprep.subr.bf16.mxu0 0
  %8218 = vmatpush1.bf16.msra.mxu0 %v5497
  %8219 = vmatprep.subr.bf16.mxu0 0
  %8220 = vmatpush1.bf16.msra.mxu0 %v5498
  %8221 = vmatprep.subr.bf16.mxu0 0
  %8222 = vmatpush1.bf16.msra.mxu0 %v6003
  %8223 = vmatprep.subr.bf16.mxu0 0
  %8224 = vmatpush1.bf16.msra.mxu0 %v6004
  %8225 = vmatprep.subr.bf16.mxu0 0
  %8226 = vmatpush1.bf16.msra.mxu0 %v6005
  %8227 = vmatprep.subr.bf16.mxu0 0
  %8228 = vmatpush1.bf16.msra.mxu0 %v6006
  %8229 = vmatprep.subr.bf16.mxu0 0
  %8230 = vmatpush1.bf16.msra.mxu0 %v6007
  %8231 = vmatprep.subr.bf16.mxu0 0
  %8232 = vmatpush1.bf16.msra.mxu0 %v6008
  %8233 = vmatprep.subr.bf16.mxu0 0
  %8234 = vmatpush1.bf16.msra.mxu0 0
  %8235 = vmatprep.subr.bf16.mxu0 0
  %8236 = vmatpush1.bf16.msra.mxu0 0
  %8237 = vmatprep.mubr.bf16.mxu0 %v6753
  %8238 = vmatmul.mubr.bf16.gmra.mrb[0].mxu0 %v6697
  %v8239 = vpop.f32.mrb[0].mxu0
  %v8240 = vadd.f32 %v8143, %v8239
  %v8241 = vpop.f32.mrb[0].mxu0
  %v8242 = vpop.f32.mrb[0].mxu0
  %v8243 = vadd.f32 %v8146, %v8242
  %v8244 = vpop.f32.mrb[0].mxu0
  %8245 = vmatprep.mubr.bf16.mxu0 %v6756
  %8246 = vmatmul.mubr.bf16.gmra.mrb[0].mxu0 %v6701
  %v8247 = vpop.f32.mrb[0].mxu0
  %v8248 = vadd.f32 %v8151, %v8247
  %v8249 = vpop.f32.mrb[0].mxu0
  %v8250 = vpop.f32.mrb[0].mxu0
  %v8251 = vadd.f32 %v8154, %v8250
  %v8252 = vpop.f32.mrb[0].mxu0
  %8253 = vmatprep.mubr.bf16.mxu0 %v6759
  %8254 = vmatmul.mubr.bf16.gmra.mrb[0].mxu0 %v6705
  %v8255 = vpop.f32.mrb[0].mxu0
  %v8256 = vadd.f32 %v8159, %v8255
  %v8257 = vpop.f32.mrb[0].mxu0
  %v8258 = vpop.f32.mrb[0].mxu0
  %v8259 = vadd.f32 %v8162, %v8258
  %v8260 = vpop.f32.mrb[0].mxu0
  %8261 = vmatprep.mubr.bf16.mxu0 %v6762
  %8262 = vmatmul.mubr.bf16.gmra.mrb[0].mxu0 %v6709
  %v8263 = vpop.f32.mrb[0].mxu0
  %v8264 = vadd.f32 %v8167, %v8263
  %v8265 = vpop.f32.mrb[0].mxu0
  %v8266 = vpop.f32.mrb[0].mxu0
  %v8267 = vadd.f32 %v8170, %v8266
  %v8268 = vpop.f32.mrb[0].mxu0
  %8269 = vmatprep.mubr.bf16.mxu0 %v6765
  %8270 = vmatmul.mubr.bf16.gmra.mrb[0].mxu0 %v6713
  %v8271 = vpop.f32.mrb[0].mxu0
  %v8272 = vadd.f32 %v8175, %v8271
  %v8273 = vpop.f32.mrb[0].mxu0
  %v8274 = vpop.f32.mrb[0].mxu0
  %v8275 = vadd.f32 %v8178, %v8274
  %v8276 = vpop.f32.mrb[0].mxu0
  %8277 = vmatprep.mubr.bf16.mxu0 %v6768
  %8278 = vmatmul.mubr.bf16.gmra.mrb[0].mxu0 %v6717
  %v8279 = vpop.f32.mrb[0].mxu0
  %v8280 = vadd.f32 %v8183, %v8279
  %v8281 = vpop.f32.mrb[0].mxu0
  %v8282 = vpop.f32.mrb[0].mxu0
  %v8283 = vadd.f32 %v8186, %v8282
  %v8284 = vpop.f32.mrb[0].mxu0
  %8285 = vmatprep.mubr.bf16.mxu0 %v6771
  %8286 = vmatmul.mubr.bf16.gmra.mrb[0].mxu0 %v6721
  %v8287 = vpop.f32.mrb[0].mxu0
  %v8288 = vadd.f32 %v8191, %v8287
  %v8289 = vpop.f32.mrb[0].mxu0
  %v8290 = vpop.f32.mrb[0].mxu0
  %v8291 = vadd.f32 %v8194, %v8290
  %v8292 = vpop.f32.mrb[0].mxu0
  %8293 = vmatprep.mubr.bf16.mxu0 %v6774
  %8294 = vmatmul.mubr.bf16.gmra.mrb[0].mxu0 %v6725
  %v8295 = vpop.f32.mrb[0].mxu0
  %v8296 = vadd.f32 %v8199, %v8295
  %v8297 = vpop.f32.mrb[0].mxu0
  %v8298 = vpop.f32.mrb[0].mxu0
  %v8299 = vadd.f32 %v8202, %v8298
  %v8300 = vpop.f32.mrb[0].mxu0
  %8301 = vdwg.mxu0
  %v8302 = vmax.f32 %v8240, 0.0
  %v8303 = vmax.f32 %v8243, 0.0
  %v8304 = vmax.f32 %v8248, 0.0
  %v8305 = vmax.f32 %v8251, 0.0
  %v8306 = vmax.f32 %v8256, 0.0
  %v8307 = vmax.f32 %v8259, 0.0
  %v8308 = vmax.f32 %v8264, 0.0
  %v8309 = vmax.f32 %v8267, 0.0
  %v8310 = vmax.f32 %v8272, 0.0
  %v8311 = vmax.f32 %v8275, 0.0
  %v8312 = vmax.f32 %v8280, 0.0
  %v8313 = vmax.f32 %v8283, 0.0
  %v8314 = vmax.f32 %v8288, 0.0
  %v8315 = vmax.f32 %v8291, 0.0
  %v8316 = vmax.f32 %v8296, 0.0
  %v8317 = vmax.f32 %v8299, 0.0
  %8318 = vmatprep.subr.bf16.mxu0 0
  %8319 = vmatpush1.bf16.msra.mxu0 %v4473
  %8320 = vmatprep.subr.bf16.mxu0 0
  %8321 = vmatpush1.bf16.msra.mxu0 %v4474
  %8322 = vmatprep.subr.bf16.mxu0 0
  %8323 = vmatpush1.bf16.msra.mxu0 %v4475
  %8324 = vmatprep.subr.bf16.mxu0 0
  %8325 = vmatpush1.bf16.msra.mxu0 %v4476
  %8326 = vmatprep.subr.bf16.mxu0 0
  %8327 = vmatpush1.bf16.msra.mxu0 %v4477
  %8328 = vmatprep.subr.bf16.mxu0 0
  %8329 = vmatpush1.bf16.msra.mxu0 %v4478
  %8330 = vmatprep.subr.bf16.mxu0 0
  %8331 = vmatpush1.bf16.msra.mxu0 %v4983
  %8332 = vmatprep.subr.bf16.mxu0 0
  %8333 = vmatpush1.bf16.msra.mxu0 %v4984
  %8334 = vmatprep.subr.bf16.mxu0 0
  %8335 = vmatpush1.bf16.msra.mxu0 %v4985
  %8336 = vmatprep.subr.bf16.mxu0 0
  %8337 = vmatpush1.bf16.msra.mxu0 %v4986
  %8338 = vmatprep.subr.bf16.mxu0 0
  %8339 = vmatpush1.bf16.msra.mxu0 %v4987
  %8340 = vmatprep.subr.bf16.mxu0 0
  %8341 = vmatpush1.bf16.msra.mxu0 %v4988
  %8342 = vmatprep.subr.bf16.mxu0 0
  %8343 = vmatpush1.bf16.msra.mxu0 %v5493
  %8344 = vmatprep.subr.bf16.mxu0 0
  %8345 = vmatpush1.bf16.msra.mxu0 %v5494
  %8346 = vmatprep.subr.bf16.mxu0 0
  %8347 = vmatpush1.bf16.msra.mxu0 %v5495
  %8348 = vmatprep.subr.bf16.mxu0 0
  %8349 = vmatpush1.bf16.msra.mxu0 %v5496
  %8350 = vmatprep.mubr.bf16.mxu0 %v6696
  %8351 = vmatmul.mubr.bf16.gmra.mrb[0].mxu0 %v6695
  %v8352 = vpop.f32.mrb[0].mxu0
  %v8353 = vadd.f32 %v6522, %v8352
  %v8354 = vpop.f32.mrb[0].mxu0
  %v8355 = vpop.f32.mrb[0].mxu0
  %v8356 = vadd.f32 %v6527, %v8355
  %v8357 = vpop.f32.mrb[0].mxu0
  %8358 = vmatprep.mubr.bf16.mxu0 %v6700
  %8359 = vmatmul.mubr.bf16.gmra.mrb[0].mxu0 %v6699
  %v8360 = vpop.f32.mrb[0].mxu0
  %v8361 = vadd.f32 %v6532, %v8360
  %v8362 = vpop.f32.mrb[0].mxu0
  %v8363 = vpop.f32.mrb[0].mxu0
  %v8364 = vadd.f32 %v6537, %v8363
  %v8365 = vpop.f32.mrb[0].mxu0
  %8366 = vmatprep.mubr.bf16.mxu0 %v6704
  %8367 = vmatmul.mubr.bf16.gmra.mrb[0].mxu0 %v6703
  %v8368 = vpop.f32.mrb[0].mxu0
  %v8369 = vadd.f32 %v6542, %v8368
  %v8370 = vpop.f32.mrb[0].mxu0
  %v8371 = vpop.f32.mrb[0].mxu0
  %v8372 = vadd.f32 %v6547, %v8371
  %v8373 = vpop.f32.mrb[0].mxu0
  %8374 = vmatprep.mubr.bf16.mxu0 %v6708
  %8375 = vmatmul.mubr.bf16.gmra.mrb[0].mxu0 %v6707
  %v8376 = vpop.f32.mrb[0].mxu0
  %v8377 = vadd.f32 %v6552, %v8376
  %v8378 = vpop.f32.mrb[0].mxu0
  %v8379 = vpop.f32.mrb[0].mxu0
  %v8380 = vadd.f32 %v6557, %v8379
  %v8381 = vpop.f32.mrb[0].mxu0
  %8382 = vmatprep.mubr.bf16.mxu0 %v6712
  %8383 = vmatmul.mubr.bf16.gmra.mrb[0].mxu0 %v6711
  %v8384 = vpop.f32.mrb[0].mxu0
  %v8385 = vadd.f32 %v6562, %v8384
  %v8386 = vpop.f32.mrb[0].mxu0
  %v8387 = vpop.f32.mrb[0].mxu0
  %v8388 = vadd.f32 %v6567, %v8387
  %v8389 = vpop.f32.mrb[0].mxu0
  %8390 = vmatprep.mubr.bf16.mxu0 %v6716
  %8391 = vmatmul.mubr.bf16.gmra.mrb[0].mxu0 %v6715
  %v8392 = vpop.f32.mrb[0].mxu0
  %v8393 = vadd.f32 %v6572, %v8392
  %v8394 = vpop.f32.mrb[0].mxu0
  %v8395 = vpop.f32.mrb[0].mxu0
  %v8396 = vadd.f32 %v6577, %v8395
  %v8397 = vpop.f32.mrb[0].mxu0
  %8398 = vmatprep.mubr.bf16.mxu0 %v6720
  %8399 = vmatmul.mubr.bf16.gmra.mrb[0].mxu0 %v6719
  %v8400 = vpop.f32.mrb[0].mxu0
  %v8401 = vadd.f32 %v6582, %v8400
  %v8402 = vpop.f32.mrb[0].mxu0
  %v8403 = vpop.f32.mrb[0].mxu0
  %v8404 = vadd.f32 %v6587, %v8403
  %v8405 = vpop.f32.mrb[0].mxu0
  %8406 = vmatprep.mubr.bf16.mxu0 %v6724
  %8407 = vmatmul.mubr.bf16.gmra.mrb[0].mxu0 %v6723
  %v8408 = vpop.f32.mrb[0].mxu0
  %v8409 = vadd.f32 %v6592, %v8408
  %v8410 = vpop.f32.mrb[0].mxu0
  %v8411 = vpop.f32.mrb[0].mxu0
  %v8412 = vadd.f32 %v6597, %v8411
  %v8413 = vpop.f32.mrb[0].mxu0
  %8414 = vdwg.mxu0
  %8415 = vmatprep.subr.bf16.mxu0 0
  %8416 = vmatpush1.bf16.msra.mxu0 %v5497
  %8417 = vmatprep.subr.bf16.mxu0 0
  %8418 = vmatpush1.bf16.msra.mxu0 %v5498
  %8419 = vmatprep.subr.bf16.mxu0 0
  %8420 = vmatpush1.bf16.msra.mxu0 %v6003
  %8421 = vmatprep.subr.bf16.mxu0 0
  %8422 = vmatpush1.bf16.msra.mxu0 %v6004
  %8423 = vmatprep.subr.bf16.mxu0 0
  %8424 = vmatpush1.bf16.msra.mxu0 %v6005
  %8425 = vmatprep.subr.bf16.mxu0 0
  %8426 = vmatpush1.bf16.msra.mxu0 %v6006
  %8427 = vmatprep.subr.bf16.mxu0 0
  %8428 = vmatpush1.bf16.msra.mxu0 %v6007
  %8429 = vmatprep.subr.bf16.mxu0 0
  %8430 = vmatpush1.bf16.msra.mxu0 %v6008
  %8431 = vmatprep.subr.bf16.mxu0 0
  %8432 = vmatpush1.bf16.msra.mxu0 %v6513
  %8433 = vmatprep.subr.bf16.mxu0 0
  %8434 = vmatpush1.bf16.msra.mxu0 %v6514
  %8435 = vmatprep.subr.bf16.mxu0 0
  %8436 = vmatpush1.bf16.msra.mxu0 %v6515
  %8437 = vmatprep.subr.bf16.mxu0 0
  %8438 = vmatpush1.bf16.msra.mxu0 %v6516
  %8439 = vmatprep.subr.bf16.mxu0 0
  %8440 = vmatpush1.bf16.msra.mxu0 %v6517
  %8441 = vmatprep.subr.bf16.mxu0 0
  %8442 = vmatpush1.bf16.msra.mxu0 %v6518
  %8443 = vmatprep.subr.bf16.mxu0 0
  %8444 = vmatpush1.bf16.msra.mxu0 0
  %8445 = vmatprep.subr.bf16.mxu0 0
  %8446 = vmatpush1.bf16.msra.mxu0 0
  %8447 = vmatprep.mubr.bf16.mxu0 %v6753
  %8448 = vmatmul.mubr.bf16.gmra.mrb[0].mxu0 %v6697
  %v8449 = vpop.f32.mrb[0].mxu0
  %v8450 = vadd.f32 %v8353, %v8449
  %v8451 = vpop.f32.mrb[0].mxu0
  %v8452 = vpop.f32.mrb[0].mxu0
  %v8453 = vadd.f32 %v8356, %v8452
  %v8454 = vpop.f32.mrb[0].mxu0
  %8455 = vmatprep.mubr.bf16.mxu0 %v6756
  %8456 = vmatmul.mubr.bf16.gmra.mrb[0].mxu0 %v6701
  %v8457 = vpop.f32.mrb[0].mxu0
  %v8458 = vadd.f32 %v8361, %v8457
  %v8459 = vpop.f32.mrb[0].mxu0
  %v8460 = vpop.f32.mrb[0].mxu0
  %v8461 = vadd.f32 %v8364, %v8460
  %v8462 = vpop.f32.mrb[0].mxu0
  %8463 = vmatprep.mubr.bf16.mxu0 %v6759
  %8464 = vmatmul.mubr.bf16.gmra.mrb[0].mxu0 %v6705
  %v8465 = vpop.f32.mrb[0].mxu0
  %v8466 = vadd.f32 %v8369, %v8465
  %v8467 = vpop.f32.mrb[0].mxu0
  %v8468 = vpop.f32.mrb[0].mxu0
  %v8469 = vadd.f32 %v8372, %v8468
  %v8470 = vpop.f32.mrb[0].mxu0
  %8471 = vmatprep.mubr.bf16.mxu0 %v6762
  %8472 = vmatmul.mubr.bf16.gmra.mrb[0].mxu0 %v6709
  %v8473 = vpop.f32.mrb[0].mxu0
  %v8474 = vadd.f32 %v8377, %v8473
  %v8475 = vpop.f32.mrb[0].mxu0
  %v8476 = vpop.f32.mrb[0].mxu0
  %v8477 = vadd.f32 %v8380, %v8476
  %v8478 = vpop.f32.mrb[0].mxu0
  %8479 = vmatprep.mubr.bf16.mxu0 %v6765
  %8480 = vmatmul.mubr.bf16.gmra.mrb[0].mxu0 %v6713
  %v8481 = vpop.f32.mrb[0].mxu0
  %v8482 = vadd.f32 %v8385, %v8481
  %v8483 = vpop.f32.mrb[0].mxu0
  %v8484 = vpop.f32.mrb[0].mxu0
  %v8485 = vadd.f32 %v8388, %v8484
  %v8486 = vpop.f32.mrb[0].mxu0
  %8487 = vmatprep.mubr.bf16.mxu0 %v6768
  %8488 = vmatmul.mubr.bf16.gmra.mrb[0].mxu0 %v6717
  %v8489 = vpop.f32.mrb[0].mxu0
  %v8490 = vadd.f32 %v8393, %v8489
  %v8491 = vpop.f32.mrb[0].mxu0
  %v8492 = vpop.f32.mrb[0].mxu0
  %v8493 = vadd.f32 %v8396, %v8492
  %v8494 = vpop.f32.mrb[0].mxu0
  %8495 = vmatprep.mubr.bf16.mxu0 %v6771
  %8496 = vmatmul.mubr.bf16.gmra.mrb[0].mxu0 %v6721
  %v8497 = vpop.f32.mrb[0].mxu0
  %v8498 = vadd.f32 %v8401, %v8497
  %v8499 = vpop.f32.mrb[0].mxu0
  %v8500 = vpop.f32.mrb[0].mxu0
  %v8501 = vadd.f32 %v8404, %v8500
  %v8502 = vpop.f32.mrb[0].mxu0
  %8503 = vmatprep.mubr.bf16.mxu0 %v6774
  %8504 = vmatmul.mubr.bf16.gmra.mrb[0].mxu0 %v6725
  %v8505 = vpop.f32.mrb[0].mxu0
  %v8506 = vadd.f32 %v8409, %v8505
  %v8507 = vpop.f32.mrb[0].mxu0
  %v8508 = vpop.f32.mrb[0].mxu0
  %v8509 = vadd.f32 %v8412, %v8508
  %v8510 = vpop.f32.mrb[0].mxu0
  %8511 = vdwg.mxu0
  %v8512 = vmax.f32 %v8450, 0.0
  %v8513 = vmax.f32 %v8453, 0.0
  %v8514 = vmax.f32 %v8458, 0.0
  %v8515 = vmax.f32 %v8461, 0.0
  %v8516 = vmax.f32 %v8466, 0.0
  %v8517 = vmax.f32 %v8469, 0.0
  %v8518 = vmax.f32 %v8474, 0.0
  %v8519 = vmax.f32 %v8477, 0.0
  %v8520 = vmax.f32 %v8482, 0.0
  %v8521 = vmax.f32 %v8485, 0.0
  %v8522 = vmax.f32 %v8490, 0.0
  %v8523 = vmax.f32 %v8493, 0.0
  %v8524 = vmax.f32 %v8498, 0.0
  %v8525 = vmax.f32 %v8501, 0.0
  %v8526 = vmax.f32 %v8506, 0.0
  %v8527 = vmax.f32 %v8509, 0.0
  %v8528 = vmax.f32 %v8302, %v8512
  %v8529 = vmax.f32 %v8303, %v8513
  %v8530 = vmax.f32 %v8304, %v8514
  %v8531 = vmax.f32 %v8305, %v8515
  %v8532 = vmax.f32 %v8306, %v8516
  %v8533 = vmax.f32 %v8307, %v8517
  %v8534 = vmax.f32 %v8308, %v8518
  %v8535 = vmax.f32 %v8309, %v8519
  %v8536 = vmax.f32 %v8310, %v8520
  %v8537 = vmax.f32 %v8311, %v8521
  %v8538 = vmax.f32 %v8312, %v8522
  %v8539 = vmax.f32 %v8313, %v8523
  %v8540 = vmax.f32 %v8314, %v8524
  %v8541 = vmax.f32 %v8315, %v8525
  %v8542 = vmax.f32 %v8316, %v8526
  %v8543 = vmax.f32 %v8317, %v8527
  %v8544 = vmax.f32 %v8528, %v8530
  %v8545 = vmax.f32 %v8529, %v8531
  %v8546 = vmax.f32 %v8532, %v8534
  %v8547 = vmax.f32 %v8533, %v8535
  %v8548 = vmax.f32 %v8536, %v8538
  %v8549 = vmax.f32 %v8537, %v8539
  %v8550 = vmax.f32 %v8540, %v8542
  %v8551 = vmax.f32 %v8541, %v8543
  %v8552 = vpack.c.bf16 %v7213, %v7212
  %v8553 = vpack.c.bf16 %v7215, %v7214
  %v8554 = vpack.c.bf16 %v7217, %v7216
  %v8555 = vpack.c.bf16 %v7219, %v7218
  %v8556 = vpack.c.bf16 %v7657, %v7656
  %v8557 = vpack.c.bf16 %v7659, %v7658
  %v8558 = vpack.c.bf16 %v7661, %v7660
  %v8559 = vpack.c.bf16 %v7663, %v7662
  %v8560 = vpack.c.bf16 %v8101, %v8100
  %v8561 = vpack.c.bf16 %v8103, %v8102
  %v8562 = vpack.c.bf16 %v8105, %v8104
  %v8563 = vpack.c.bf16 %v8107, %v8106
  %v8564 = vpack.c.bf16 %v8545, %v8544
  %v8565 = vpack.c.bf16 %v8547, %v8546
  %v8566 = vpack.c.bf16 %v8549, %v8548
  %v8567 = vpack.c.bf16 %v8551, %v8550
  %v8568 = vld [vmem:[%s5] sm:$0xff]
  %v8569 = vld [vmem:[%s5 + $0x8] sm:$0xff]
  %v8570 = vld [vmem:[%s5 + $0x10] sm:$0xff]
  %v8571 = vld [vmem:[%s5 + $0x18] sm:$0xff]
  %v8572 = vld [vmem:[%s5 + $0x20] sm:$0xff]
  %v8573 = vld [vmem:[%s5 + $0x28] sm:$0xff]
  %v8574 = vld [vmem:[%s5 + $0x30] sm:$0xff]
  %v8575 = vld [vmem:[%s5 + $0x38] sm:$0xff]
  %v8576 = vld [vmem:[%s5 + $0x40] sm:$0xff]
  %v8577 = vld [vmem:[%s5 + $0x48] sm:$0xff]
  %v8578 = vld [vmem:[%s5 + $0x50] sm:$0xff]
  %v8579 = vld [vmem:[%s5 + $0x58] sm:$0xff]
  %v8580 = vld [vmem:[%s5 + $0x60] sm:$0xff]
  %v8581 = vld [vmem:[%s5 + $0x68] sm:$0xff]
  %v8582 = vld [vmem:[%s5 + $0x70] sm:$0xff]
  %v8583 = vld [vmem:[%s5 + $0x78] sm:$0xff]
  %v8584 = vld [vmem:[%s6] sm:$0xff]
  %v8585 = vld [vmem:[%s6 + $0x8] sm:$0xff]
  %v8586 = vld [vmem:[%s6 + $0x10] sm:$0xff]
  %v8587 = vld [vmem:[%s6 + $0x18] sm:$0xff]
  %v8588 = vld [vmem:[%s6 + $0x20] sm:$0xff]
  %v8589 = vld [vmem:[%s6 + $0x28] sm:$0xff]
  %v8590 = vld [vmem:[%s6 + $0x30] sm:$0xff]
  %v8591 = vld [vmem:[%s6 + $0x38] sm:$0xff]
  %v8592 = vld [vmem:[%s6 + $0x40] sm:$0xff]
  %v8593 = vld [vmem:[%s6 + $0x48] sm:$0xff]
  %v8594 = vld [vmem:[%s6 + $0x50] sm:$0xff]
  %v8595 = vld [vmem:[%s6 + $0x58] sm:$0xff]
  %v8596 = vld [vmem:[%s6 + $0x60] sm:$0xff]
  %v8597 = vld [vmem:[%s6 + $0x68] sm:$0xff]
  %v8598 = vld [vmem:[%s6 + $0x70] sm:$0xff]
  %v8599 = vld [vmem:[%s6 + $0x78] sm:$0xff]
  %8601 = vset.pattern.permute.xlu0 0
  %8602 = vperm.xlu0 %8601, %v8584
  %v8603 = vpop.permute.xlu0 %8602
  %8606 = vset.pattern.permute.xlu0 0
  %8607 = vperm.xlu0 %8606, %v8585
  %v8608 = vpop.permute.xlu0 %8607
  %8611 = vset.pattern.permute.xlu0 0
  %8612 = vperm.xlu0 %8611, %v8586
  %v8613 = vpop.permute.xlu0 %8612
  %8616 = vset.pattern.permute.xlu0 0
  %8617 = vperm.xlu0 %8616, %v8587
  %v8618 = vpop.permute.xlu0 %8617
  %8621 = vset.pattern.permute.xlu0 0
  %8622 = vperm.xlu0 %8621, %v8588
  %v8623 = vpop.permute.xlu0 %8622
  %8626 = vset.pattern.permute.xlu0 0
  %8627 = vperm.xlu0 %8626, %v8589
  %v8628 = vpop.permute.xlu0 %8627
  %8631 = vset.pattern.permute.xlu0 0
  %8632 = vperm.xlu0 %8631, %v8590
  %v8633 = vpop.permute.xlu0 %8632
  %8636 = vset.pattern.permute.xlu0 0
  %8637 = vperm.xlu0 %8636, %v8591
  %v8638 = vpop.permute.xlu0 %8637
  %8641 = vset.pattern.permute.xlu0 0
  %8642 = vperm.xlu0 %8641, %v8592
  %v8643 = vpop.permute.xlu0 %8642
  %8646 = vset.pattern.permute.xlu0 0
  %8647 = vperm.xlu0 %8646, %v8593
  %v8648 = vpop.permute.xlu0 %8647
  %8651 = vset.pattern.permute.xlu0 0
  %8652 = vperm.xlu0 %8651, %v8594
  %v8653 = vpop.permute.xlu0 %8652
  %8656 = vset.pattern.permute.xlu0 0
  %8657 = vperm.xlu0 %8656, %v8595
  %v8658 = vpop.permute.xlu0 %8657
  %8661 = vset.pattern.permute.xlu0 0
  %8662 = vperm.xlu0 %8661, %v8596
  %v8663 = vpop.permute.xlu0 %8662
  %8666 = vset.pattern.permute.xlu0 0
  %8667 = vperm.xlu0 %8666, %v8597
  %v8668 = vpop.permute.xlu0 %8667
  %8671 = vset.pattern.permute.xlu0 0
  %8672 = vperm.xlu0 %8671, %v8598
  %v8673 = vpop.permute.xlu0 %8672
  %8676 = vset.pattern.permute.xlu0 0
  %8677 = vperm.xlu0 %8676, %v8599
  %v8678 = vpop.permute.xlu0 %8677
  %v8696 = vunpack.c.l.b16 %v8568
  %v8697 = vunpack.c.h.b16 %v8568
  %v8698 = vunpack.c.l.b16 %v8569
  %v8699 = vunpack.c.h.b16 %v8569
  %v8700 = vunpack.c.l.b16 %v8570
  %v8701 = vunpack.c.h.b16 %v8570
  %v8702 = vunpack.c.l.b16 %v8571
  %v8703 = vunpack.c.h.b16 %v8571
  %v8704 = vunpack.c.l.b16 %v8572
  %v8705 = vunpack.c.h.b16 %v8572
  %v8706 = vunpack.c.l.b16 %v8573
  %v8707 = vunpack.c.h.b16 %v8573
  %v8708 = vunpack.c.l.b16 %v8574
  %v8709 = vunpack.c.h.b16 %v8574
  %v8710 = vunpack.c.l.b16 %v8575
  %v8711 = vunpack.c.h.b16 %v8575
  %v8712 = vunpack.c.l.b16 %v8576
  %v8713 = vunpack.c.h.b16 %v8576
  %v8714 = vunpack.c.l.b16 %v8577
  %v8715 = vunpack.c.h.b16 %v8577
  %v8716 = vunpack.c.l.b16 %v8578
  %v8717 = vunpack.c.h.b16 %v8578
  %v8718 = vunpack.c.l.b16 %v8579
  %v8719 = vunpack.c.h.b16 %v8579
  %v8720 = vunpack.c.l.b16 %v8580
  %v8721 = vunpack.c.h.b16 %v8580
  %v8722 = vunpack.c.l.b16 %v8581
  %v8723 = vunpack.c.h.b16 %v8581
  %v8724 = vunpack.c.l.b16 %v8582
  %v8725 = vunpack.c.h.b16 %v8582
  %v8726 = vunpack.c.l.b16 %v8583
  %v8727 = vunpack.c.h.b16 %v8583
  %v8728 = vpack.c.b16 %v8698, %v8696
  %v8729 = vpack.c.b16 %v8699, %v8697
  %v8730 = vpack.c.b16 %v8702, %v8700
  %v8731 = vpack.c.b16 %v8703, %v8701
  %v8732 = vpack.c.b16 %v8706, %v8704
  %v8733 = vpack.c.b16 %v8707, %v8705
  %v8734 = vpack.c.b16 %v8710, %v8708
  %v8735 = vpack.c.b16 %v8711, %v8709
  %v8736 = vpack.c.b16 %v8714, %v8712
  %v8737 = vpack.c.b16 %v8715, %v8713
  %v8738 = vpack.c.b16 %v8718, %v8716
  %v8739 = vpack.c.b16 %v8719, %v8717
  %v8740 = vpack.c.b16 %v8722, %v8720
  %v8741 = vpack.c.b16 %v8723, %v8721
  %v8742 = vpack.c.b16 %v8726, %v8724
  %v8743 = vpack.c.b16 %v8727, %v8725
  %8760 = vmatprep.subr.bf16.mxu0 0
  %8761 = vmatpush1.bf16.msra.mxu0 %v8552
  %8762 = vmatprep.subr.bf16.mxu0 0
  %8763 = vmatpush1.bf16.msra.mxu0 %v8553
  %8764 = vmatprep.subr.bf16.mxu0 0
  %8765 = vmatpush1.bf16.msra.mxu0 %v8554
  %8766 = vmatprep.subr.bf16.mxu0 0
  %8767 = vmatpush1.bf16.msra.mxu0 %v8555
  %8768 = vmatprep.subr.bf16.mxu0 0
  %8769 = vmatpush1.bf16.msra.mxu0 %v8556
  %8770 = vmatprep.subr.bf16.mxu0 0
  %8771 = vmatpush1.bf16.msra.mxu0 %v8557
  %8772 = vmatprep.subr.bf16.mxu0 0
  %8773 = vmatpush1.bf16.msra.mxu0 %v8558
  %8774 = vmatprep.subr.bf16.mxu0 0
  %8775 = vmatpush1.bf16.msra.mxu0 %v8559
  %8776 = vmatprep.subr.bf16.mxu0 0
  %8777 = vmatpush1.bf16.msra.mxu0 %v8560
  %8778 = vmatprep.subr.bf16.mxu0 0
  %8779 = vmatpush1.bf16.msra.mxu0 %v8561
  %8780 = vmatprep.subr.bf16.mxu0 0
  %8781 = vmatpush1.bf16.msra.mxu0 %v8562
  %8782 = vmatprep.subr.bf16.mxu0 0
  %8783 = vmatpush1.bf16.msra.mxu0 %v8563
  %8784 = vmatprep.subr.bf16.mxu0 0
  %8785 = vmatpush1.bf16.msra.mxu0 %v8564
  %8786 = vmatprep.subr.bf16.mxu0 0
  %8787 = vmatpush1.bf16.msra.mxu0 %v8565
  %8788 = vmatprep.subr.bf16.mxu0 0
  %8789 = vmatpush1.bf16.msra.mxu0 %v8566
  %8790 = vmatprep.subr.bf16.mxu0 0
  %8791 = vmatpush1.bf16.msra.mxu0 %v8567
  %8792 = vmatprep.mubr.bf16.mxu0 %v8729
  %8793 = vmatmul.mubr.bf16.gmra.mrb[0].mxu0 %v8728
  %v8794 = vpop.f32.mrb[0].mxu0
  %v8795 = vadd.f32 %v8603, %v8794
  %v8796 = vpop.f32.mrb[0].mxu0
  %v8797 = vpop.f32.mrb[0].mxu0
  %v8798 = vadd.f32 %v8608, %v8797
  %v8799 = vpop.f32.mrb[0].mxu0
  %8800 = vmatprep.mubr.bf16.mxu0 %v8731
  %8801 = vmatmul.mubr.bf16.gmra.mrb[0].mxu0 %v8730
  %v8802 = vpop.f32.mrb[0].mxu0
  %v8803 = vadd.f32 %v8613, %v8802
  %v8804 = vpop.f32.mrb[0].mxu0
  %v8805 = vpop.f32.mrb[0].mxu0
  %v8806 = vadd.f32 %v8618, %v8805
  %v8807 = vpop.f32.mrb[0].mxu0
  %8808 = vmatprep.mubr.bf16.mxu0 %v8733
  %8809 = vmatmul.mubr.bf16.gmra.mrb[0].mxu0 %v8732
  %v8810 = vpop.f32.mrb[0].mxu0
  %v8811 = vadd.f32 %v8623, %v8810
  %v8812 = vpop.f32.mrb[0].mxu0
  %v8813 = vpop.f32.mrb[0].mxu0
  %v8814 = vadd.f32 %v8628, %v8813
  %v8815 = vpop.f32.mrb[0].mxu0
  %8816 = vmatprep.mubr.bf16.mxu0 %v8735
  %8817 = vmatmul.mubr.bf16.gmra.mrb[0].mxu0 %v8734
  %v8818 = vpop.f32.mrb[0].mxu0
  %v8819 = vadd.f32 %v8633, %v8818
  %v8820 = vpop.f32.mrb[0].mxu0
  %v8821 = vpop.f32.mrb[0].mxu0
  %v8822 = vadd.f32 %v8638, %v8821
  %v8823 = vpop.f32.mrb[0].mxu0
  %8824 = vmatprep.mubr.bf16.mxu0 %v8737
  %8825 = vmatmul.mubr.bf16.gmra.mrb[0].mxu0 %v8736
  %v8826 = vpop.f32.mrb[0].mxu0
  %v8827 = vadd.f32 %v8643, %v8826
  %v8828 = vpop.f32.mrb[0].mxu0
  %v8829 = vpop.f32.mrb[0].mxu0
  %v8830 = vadd.f32 %v8648, %v8829
  %v8831 = vpop.f32.mrb[0].mxu0
  %8832 = vmatprep.mubr.bf16.mxu0 %v8739
  %8833 = vmatmul.mubr.bf16.gmra.mrb[0].mxu0 %v8738
  %v8834 = vpop.f32.mrb[0].mxu0
  %v8835 = vadd.f32 %v8653, %v8834
  %v8836 = vpop.f32.mrb[0].mxu0
  %v8837 = vpop.f32.mrb[0].mxu0
  %v8838 = vadd.f32 %v8658, %v8837
  %v8839 = vpop.f32.mrb[0].mxu0
  %8840 = vmatprep.mubr.bf16.mxu0 %v8741
  %8841 = vmatmul.mubr.bf16.gmra.mrb[0].mxu0 %v8740
  %v8842 = vpop.f32.mrb[0].mxu0
  %v8843 = vadd.f32 %v8663, %v8842
  %v8844 = vpop.f32.mrb[0].mxu0
  %v8845 = vpop.f32.mrb[0].mxu0
  %v8846 = vadd.f32 %v8668, %v8845
  %v8847 = vpop.f32.mrb[0].mxu0
  %8848 = vmatprep.mubr.bf16.mxu0 %v8743
  %8849 = vmatmul.mubr.bf16.gmra.mrb[0].mxu0 %v8742
  %v8850 = vpop.f32.mrb[0].mxu0
  %v8851 = vadd.f32 %v8673, %v8850
  %v8852 = vpop.f32.mrb[0].mxu0
  %v8853 = vpop.f32.mrb[0].mxu0
  %v8854 = vadd.f32 %v8678, %v8853
  %v8855 = vpop.f32.mrb[0].mxu0
  %8856 = vdwg.mxu0
  %v8857 = vmax.f32 %v8795, 0.0
  %v8858 = vmax.f32 %v8798, 0.0
  %v8859 = vmax.f32 %v8803, 0.0
  %v8860 = vmax.f32 %v8806, 0.0
  %v8861 = vmax.f32 %v8811, 0.0
  %v8862 = vmax.f32 %v8814, 0.0
  %v8863 = vmax.f32 %v8819, 0.0
  %v8864 = vmax.f32 %v8822, 0.0
  %v8865 = vmax.f32 %v8827, 0.0
  %v8866 = vmax.f32 %v8830, 0.0
  %v8867 = vmax.f32 %v8835, 0.0
  %v8868 = vmax.f32 %v8838, 0.0
  %v8869 = vmax.f32 %v8843, 0.0
  %v8870 = vmax.f32 %v8846, 0.0
  %v8871 = vmax.f32 %v8851, 0.0
  %v8872 = vmax.f32 %v8854, 0.0
  %v8873 = vpack.c.bf16 %v8858, %v8857
  %v8874 = vpack.c.bf16 %v8860, %v8859
  %v8875 = vpack.c.bf16 %v8862, %v8861
  %v8876 = vpack.c.bf16 %v8864, %v8863
  %v8877 = vpack.c.bf16 %v8866, %v8865
  %v8878 = vpack.c.bf16 %v8868, %v8867
  %v8879 = vpack.c.bf16 %v8870, %v8869
  %v8880 = vpack.c.bf16 %v8872, %v8871
  %v8881 = vld [vmem:[%s7] sm:$0xf]
  %v8882 = vld [vmem:[%s7 + $0x4] sm:$0xf]
  %v8883 = vld [vmem:[%s7 + $0x8] sm:$0xf]
  %v8884 = vld [vmem:[%s7 + $0xc] sm:$0xf]
  %v8885 = vld [vmem:[%s7 + $0x10] sm:$0xf]
  %v8886 = vld [vmem:[%s7 + $0x14] sm:$0xf]
  %v8887 = vld [vmem:[%s7 + $0x18] sm:$0xf]
  %v8888 = vld [vmem:[%s7 + $0x1c] sm:$0xf]
  %v8889 = vld [vmem:[%s7 + $0x20] sm:$0xf]
  %v8890 = vld [vmem:[%s7 + $0x24] sm:$0xf]
  %v8891 = vld [vmem:[%s7 + $0x28] sm:$0xf]
  %v8892 = vld [vmem:[%s7 + $0x2c] sm:$0xf]
  %v8893 = vld [vmem:[%s7 + $0x30] sm:$0xf]
  %v8894 = vld [vmem:[%s7 + $0x34] sm:$0xf]
  %v8895 = vld [vmem:[%s7 + $0x38] sm:$0xf]
  %v8896 = vld [vmem:[%s7 + $0x3c] sm:$0xf]
  %v8897 = vld [vmem:[%s8] sm:$0xff]
  %v8898 = vld [vmem:[%s8 + $0x8] sm:$0xff]
  %v8899 = vld [vmem:[%s8 + $0x10] sm:$0xff]
  %v8900 = vld [vmem:[%s8 + $0x18] sm:$0xff]
  %v8901 = vld [vmem:[%s8 + $0x20] sm:$0xff]
  %v8902 = vld [vmem:[%s8 + $0x28] sm:$0xff]
  %v8903 = vld [vmem:[%s8 + $0x30] sm:$0xff]
  %v8904 = vld [vmem:[%s8 + $0x38] sm:$0xff]
  %v8905 = vld [vmem:[%s8 + $0x40] sm:$0xff]
  %v8906 = vld [vmem:[%s8 + $0x48] sm:$0xff]
  %v8907 = vld [vmem:[%s8 + $0x50] sm:$0xff]
  %v8908 = vld [vmem:[%s8 + $0x58] sm:$0xff]
  %v8909 = vld [vmem:[%s8 + $0x60] sm:$0xff]
  %v8910 = vld [vmem:[%s8 + $0x68] sm:$0xff]
  %v8911 = vld [vmem:[%s8 + $0x70] sm:$0xff]
  %v8912 = vld [vmem:[%s8 + $0x78] sm:$0xff]
  %8914 = vset.pattern.permute.xlu0 0
  %8915 = vperm.xlu0 %8914, %v8897
  %v8916 = vpop.permute.xlu0 %8915
  %8919 = vset.pattern.permute.xlu0 0
  %8920 = vperm.xlu0 %8919, %v8898
  %v8921 = vpop.permute.xlu0 %8920
  %8924 = vset.pattern.permute.xlu0 0
  %8925 = vperm.xlu0 %8924, %v8899
  %v8926 = vpop.permute.xlu0 %8925
  %8929 = vset.pattern.permute.xlu0 0
  %8930 = vperm.xlu0 %8929, %v8900
  %v8931 = vpop.permute.xlu0 %8930
  %8934 = vset.pattern.permute.xlu0 0
  %8935 = vperm.xlu0 %8934, %v8901
  %v8936 = vpop.permute.xlu0 %8935
  %8939 = vset.pattern.permute.xlu0 0
  %8940 = vperm.xlu0 %8939, %v8902
  %v8941 = vpop.permute.xlu0 %8940
  %8944 = vset.pattern.permute.xlu0 0
  %8945 = vperm.xlu0 %8944, %v8903
  %v8946 = vpop.permute.xlu0 %8945
  %8949 = vset.pattern.permute.xlu0 0
  %8950 = vperm.xlu0 %8949, %v8904
  %v8951 = vpop.permute.xlu0 %8950
  %8954 = vset.pattern.permute.xlu0 0
  %8955 = vperm.xlu0 %8954, %v8905
  %v8956 = vpop.permute.xlu0 %8955
  %8959 = vset.pattern.permute.xlu0 0
  %8960 = vperm.xlu0 %8959, %v8906
  %v8961 = vpop.permute.xlu0 %8960
  %8964 = vset.pattern.permute.xlu0 0
  %8965 = vperm.xlu0 %8964, %v8907
  %v8966 = vpop.permute.xlu0 %8965
  %8969 = vset.pattern.permute.xlu0 0
  %8970 = vperm.xlu0 %8969, %v8908
  %v8971 = vpop.permute.xlu0 %8970
  %8974 = vset.pattern.permute.xlu0 0
  %8975 = vperm.xlu0 %8974, %v8909
  %v8976 = vpop.permute.xlu0 %8975
  %8979 = vset.pattern.permute.xlu0 0
  %8980 = vperm.xlu0 %8979, %v8910
  %v8981 = vpop.permute.xlu0 %8980
  %8984 = vset.pattern.permute.xlu0 0
  %8985 = vperm.xlu0 %8984, %v8911
  %v8986 = vpop.permute.xlu0 %8985
  %8989 = vset.pattern.permute.xlu0 0
  %8990 = vperm.xlu0 %8989, %v8912
  %v8991 = vpop.permute.xlu0 %8990
  %v9009 = vunpack.c.l.b16 %v8881
  %v9010 = vunpack.c.l.b16 %v8882
  %v9011 = vunpack.c.l.b16 %v8883
  %v9012 = vunpack.c.l.b16 %v8884
  %v9013 = vunpack.c.l.b16 %v8885
  %v9014 = vunpack.c.l.b16 %v8886
  %v9015 = vunpack.c.l.b16 %v8887
  %v9016 = vunpack.c.l.b16 %v8888
  %v9017 = vunpack.c.l.b16 %v8889
  %v9018 = vunpack.c.l.b16 %v8890
  %v9019 = vunpack.c.l.b16 %v8891
  %v9020 = vunpack.c.l.b16 %v8892
  %v9021 = vunpack.c.l.b16 %v8893
  %v9022 = vunpack.c.l.b16 %v8894
  %v9023 = vunpack.c.l.b16 %v8895
  %v9024 = vunpack.c.l.b16 %v8896
  %v9025 = vpack.c.b16 %v9010, %v9009
  %v9026 = vpack.c.b16 %v9012, %v9011
  %v9027 = vpack.c.b16 %v9014, %v9013
  %v9028 = vpack.c.b16 %v9016, %v9015
  %v9029 = vpack.c.b16 %v9018, %v9017
  %v9030 = vpack.c.b16 %v9020, %v9019
  %v9031 = vpack.c.b16 %v9022, %v9021
  %v9032 = vpack.c.b16 %v9024, %v9023
  %9041 = vmatprep.subr.bf16.mxu0 0
  %9042 = vmatpush1.bf16.msra.mxu0 %v8873
  %9043 = vmatprep.subr.bf16.mxu0 0
  %9044 = vmatpush1.bf16.msra.mxu0 %v8874
  %9045 = vmatprep.subr.bf16.mxu0 0
  %9046 = vmatpush1.bf16.msra.mxu0 %v8875
  %9047 = vmatprep.subr.bf16.mxu0 0
  %9048 = vmatpush1.bf16.msra.mxu0 %v8876
  %9049 = vmatprep.subr.bf16.mxu0 0
  %9050 = vmatpush1.bf16.msra.mxu0 %v8877
  %9051 = vmatprep.subr.bf16.mxu0 0
  %9052 = vmatpush1.bf16.msra.mxu0 %v8878
  %9053 = vmatprep.subr.bf16.mxu0 0
  %9054 = vmatpush1.bf16.msra.mxu0 %v8879
  %9055 = vmatprep.subr.bf16.mxu0 0
  %9056 = vmatpush1.bf16.msra.mxu0 %v8880
  %9057 = vmatprep.subr.bf16.mxu0 0
  %9058 = vmatpush1.bf16.msra.mxu0 0
  %9059 = vmatprep.subr.bf16.mxu0 0
  %9060 = vmatpush1.bf16.msra.mxu0 0
  %9061 = vmatprep.subr.bf16.mxu0 0
  %9062 = vmatpush1.bf16.msra.mxu0 0
  %9063 = vmatprep.subr.bf16.mxu0 0
  %9064 = vmatpush1.bf16.msra.mxu0 0
  %9065 = vmatprep.subr.bf16.mxu0 0
  %9066 = vmatpush1.bf16.msra.mxu0 0
  %9067 = vmatprep.subr.bf16.mxu0 0
  %9068 = vmatpush1.bf16.msra.mxu0 0
  %9069 = vmatprep.subr.bf16.mxu0 0
  %9070 = vmatpush1.bf16.msra.mxu0 0
  %9071 = vmatprep.subr.bf16.mxu0 0
  %9072 = vmatpush1.bf16.msra.mxu0 0
  %9073 = vmatprep.mubr.bf16.mxu0 0
  %9074 = vmatmul.mubr.bf16.gmra.mrb[0].mxu0 %v9025
  %v9075 = vpop.f32.mrb[0].mxu0
  %v9076 = vadd.f32 %v8916, %v9075
  %v9077 = vpop.f32.mrb[0].mxu0
  %v9078 = vpop.f32.mrb[0].mxu0
  %v9079 = vadd.f32 %v8921, %v9078
  %v9080 = vpop.f32.mrb[0].mxu0
  %9081 = vmatprep.mubr.bf16.mxu0 0
  %9082 = vmatmul.mubr.bf16.gmra.mrb[0].mxu0 %v9026
  %v9083 = vpop.f32.mrb[0].mxu0
  %v9084 = vadd.f32 %v8926, %v9083
  %v9085 = vpop.f32.mrb[0].mxu0
  %v9086 = vpop.f32.mrb[0].mxu0
  %v9087 = vadd.f32 %v8931, %v9086
  %v9088 = vpop.f32.mrb[0].mxu0
  %9089 = vmatprep.mubr.bf16.mxu0 0
  %9090 = vmatmul.mubr.bf16.gmra.mrb[0].mxu0 %v9027
  %v9091 = vpop.f32.mrb[0].mxu0
  %v9092 = vadd.f32 %v8936, %v9091
  %v9093 = vpop.f32.mrb[0].mxu0
  %v9094 = vpop.f32.mrb[0].mxu0
  %v9095 = vadd.f32 %v8941, %v9094
  %v9096 = vpop.f32.mrb[0].mxu0
  %9097 = vmatprep.mubr.bf16.mxu0 0
  %9098 = vmatmul.mubr.bf16.gmra.mrb[0].mxu0 %v9028
  %v9099 = vpop.f32.mrb[0].mxu0
  %v9100 = vadd.f32 %v8946, %v9099
  %v9101 = vpop.f32.mrb[0].mxu0
  %v9102 = vpop.f32.mrb[0].mxu0
  %v9103 = vadd.f32 %v8951, %v9102
  %v9104 = vpop.f32.mrb[0].mxu0
  %9105 = vmatprep.mubr.bf16.mxu0 0
  %9106 = vmatmul.mubr.bf16.gmra.mrb[0].mxu0 %v9029
  %v9107 = vpop.f32.mrb[0].mxu0
  %v9108 = vadd.f32 %v8956, %v9107
  %v9109 = vpop.f32.mrb[0].mxu0
  %v9110 = vpop.f32.mrb[0].mxu0
  %v9111 = vadd.f32 %v8961, %v9110
  %v9112 = vpop.f32.mrb[0].mxu0
  %9113 = vmatprep.mubr.bf16.mxu0 0
  %9114 = vmatmul.mubr.bf16.gmra.mrb[0].mxu0 %v9030
  %v9115 = vpop.f32.mrb[0].mxu0
  %v9116 = vadd.f32 %v8966, %v9115
  %v9117 = vpop.f32.mrb[0].mxu0
  %v9118 = vpop.f32.mrb[0].mxu0
  %v9119 = vadd.f32 %v8971, %v9118
  %v9120 = vpop.f32.mrb[0].mxu0
  %9121 = vmatprep.mubr.bf16.mxu0 0
  %9122 = vmatmul.mubr.bf16.gmra.mrb[0].mxu0 %v9031
  %v9123 = vpop.f32.mrb[0].mxu0
  %v9124 = vadd.f32 %v8976, %v9123
  %v9125 = vpop.f32.mrb[0].mxu0
  %v9126 = vpop.f32.mrb[0].mxu0
  %v9127 = vadd.f32 %v8981, %v9126
  %v9128 = vpop.f32.mrb[0].mxu0
  %9129 = vmatprep.mubr.bf16.mxu0 0
  %9130 = vmatmul.mubr.bf16.gmra.mrb[0].mxu0 %v9032
  %v9131 = vpop.f32.mrb[0].mxu0
  %v9132 = vadd.f32 %v8986, %v9131
  %v9133 = vpop.f32.mrb[0].mxu0
  %v9134 = vpop.f32.mrb[0].mxu0
  %v9135 = vadd.f32 %v8991, %v9134
  %v9136 = vpop.f32.mrb[0].mxu0
  %9137 = vdwg.mxu0
  %v9138 = vmax.f32 %v9076, 0.0
  %v9139 = vmax.f32 %v9079, 0.0
  %v9140 = vmax.f32 %v9084, 0.0
  %v9141 = vmax.f32 %v9087, 0.0
  %v9142 = vmax.f32 %v9092, 0.0
  %v9143 = vmax.f32 %v9095, 0.0
  %v9144 = vmax.f32 %v9100, 0.0
  %v9145 = vmax.f32 %v9103, 0.0
  %v9146 = vmax.f32 %v9108, 0.0
  %v9147 = vmax.f32 %v9111, 0.0
  %v9148 = vmax.f32 %v9116, 0.0
  %v9149 = vmax.f32 %v9119, 0.0
  %v9150 = vmax.f32 %v9124, 0.0
  %v9151 = vmax.f32 %v9127, 0.0
  %v9152 = vmax.f32 %v9132, 0.0
  %v9153 = vmax.f32 %v9135, 0.0
  %v9154 = vpack.c.bf16 %v9139, %v9138
  %v9155 = vpack.c.bf16 %v9141, %v9140
  %v9156 = vpack.c.bf16 %v9143, %v9142
  %v9157 = vpack.c.bf16 %v9145, %v9144
  %v9158 = vpack.c.bf16 %v9147, %v9146
  %v9159 = vpack.c.bf16 %v9149, %v9148
  %v9160 = vpack.c.bf16 %v9151, %v9150
  %v9161 = vpack.c.bf16 %v9153, %v9152
  %v9162 = vld [vmem:[%s9] sm:$0xf]
  %v9163 = vld [vmem:[%s9 + $0x4] sm:$0xf]
  %v9164 = vld [vmem:[%s9 + $0x8] sm:$0xf]
  %v9165 = vld [vmem:[%s9 + $0xc] sm:$0xf]
  %v9166 = vld [vmem:[%s9 + $0x10] sm:$0xf]
  %v9167 = vld [vmem:[%s9 + $0x14] sm:$0xf]
  %v9168 = vld [vmem:[%s9 + $0x18] sm:$0xf]
  %v9169 = vld [vmem:[%s9 + $0x1c] sm:$0xf]
  %v9170 = vld [vmem:[%s9 + $0x20] sm:$0xf]
  %v9171 = vld [vmem:[%s9 + $0x24] sm:$0xf]
  %v9172 = vld [vmem:[%s9 + $0x28] sm:$0xf]
  %v9173 = vld [vmem:[%s9 + $0x2c] sm:$0xf]
  %v9174 = vld [vmem:[%s9 + $0x30] sm:$0xf]
  %v9175 = vld [vmem:[%s9 + $0x34] sm:$0xf]
  %v9176 = vld [vmem:[%s9 + $0x38] sm:$0xf]
  %v9177 = vld [vmem:[%s9 + $0x3c] sm:$0xf]
  %v9178 = vld [vmem:[%s10] sm:$0xff]
  %v9179 = vld [vmem:[%s10 + $0x8] sm:$0xff]
  %v9180 = vld [vmem:[%s10 + $0x10] sm:$0xff]
  %v9181 = vld [vmem:[%s10 + $0x18] sm:$0xff]
  %v9182 = vld [vmem:[%s10 + $0x20] sm:$0xff]
  %v9183 = vld [vmem:[%s10 + $0x28] sm:$0xff]
  %v9184 = vld [vmem:[%s10 + $0x30] sm:$0xff]
  %v9185 = vld [vmem:[%s10 + $0x38] sm:$0xff]
  %v9186 = vld [vmem:[%s10 + $0x40] sm:$0xff]
  %v9187 = vld [vmem:[%s10 + $0x48] sm:$0xff]
  %v9188 = vld [vmem:[%s10 + $0x50] sm:$0xff]
  %v9189 = vld [vmem:[%s10 + $0x58] sm:$0xff]
  %v9190 = vld [vmem:[%s10 + $0x60] sm:$0xff]
  %v9191 = vld [vmem:[%s10 + $0x68] sm:$0xff]
  %v9192 = vld [vmem:[%s10 + $0x70] sm:$0xff]
  %v9193 = vld [vmem:[%s10 + $0x78] sm:$0xff]
  %9195 = vset.pattern.permute.xlu0 0
  %9196 = vperm.xlu0 %9195, %v9178
  %v9197 = vpop.permute.xlu0 %9196
  %9200 = vset.pattern.permute.xlu0 0
  %9201 = vperm.xlu0 %9200, %v9179
  %v9202 = vpop.permute.xlu0 %9201
  %9205 = vset.pattern.permute.xlu0 0
  %9206 = vperm.xlu0 %9205, %v9180
  %v9207 = vpop.permute.xlu0 %9206
  %9210 = vset.pattern.permute.xlu0 0
  %9211 = vperm.xlu0 %9210, %v9181
  %v9212 = vpop.permute.xlu0 %9211
  %9215 = vset.pattern.permute.xlu0 0
  %9216 = vperm.xlu0 %9215, %v9182
  %v9217 = vpop.permute.xlu0 %9216
  %9220 = vset.pattern.permute.xlu0 0
  %9221 = vperm.xlu0 %9220, %v9183
  %v9222 = vpop.permute.xlu0 %9221
  %9225 = vset.pattern.permute.xlu0 0
  %9226 = vperm.xlu0 %9225, %v9184
  %v9227 = vpop.permute.xlu0 %9226
  %9230 = vset.pattern.permute.xlu0 0
  %9231 = vperm.xlu0 %9230, %v9185
  %v9232 = vpop.permute.xlu0 %9231
  %9235 = vset.pattern.permute.xlu0 0
  %9236 = vperm.xlu0 %9235, %v9186
  %v9237 = vpop.permute.xlu0 %9236
  %9240 = vset.pattern.permute.xlu0 0
  %9241 = vperm.xlu0 %9240, %v9187
  %v9242 = vpop.permute.xlu0 %9241
  %9245 = vset.pattern.permute.xlu0 0
  %9246 = vperm.xlu0 %9245, %v9188
  %v9247 = vpop.permute.xlu0 %9246
  %9250 = vset.pattern.permute.xlu0 0
  %9251 = vperm.xlu0 %9250, %v9189
  %v9252 = vpop.permute.xlu0 %9251
  %9255 = vset.pattern.permute.xlu0 0
  %9256 = vperm.xlu0 %9255, %v9190
  %v9257 = vpop.permute.xlu0 %9256
  %9260 = vset.pattern.permute.xlu0 0
  %9261 = vperm.xlu0 %9260, %v9191
  %v9262 = vpop.permute.xlu0 %9261
  %9265 = vset.pattern.permute.xlu0 0
  %9266 = vperm.xlu0 %9265, %v9192
  %v9267 = vpop.permute.xlu0 %9266
  %9270 = vset.pattern.permute.xlu0 0
  %9271 = vperm.xlu0 %9270, %v9193
  %v9272 = vpop.permute.xlu0 %9271
  %v9290 = vunpack.c.l.b16 %v9162
  %v9291 = vunpack.c.l.b16 %v9163
  %v9292 = vunpack.c.l.b16 %v9164
  %v9293 = vunpack.c.l.b16 %v9165
  %v9294 = vunpack.c.l.b16 %v9166
  %v9295 = vunpack.c.l.b16 %v9167
  %v9296 = vunpack.c.l.b16 %v9168
  %v9297 = vunpack.c.l.b16 %v9169
  %v9298 = vunpack.c.l.b16 %v9170
  %v9299 = vunpack.c.l.b16 %v9171
  %v9300 = vunpack.c.l.b16 %v9172
  %v9301 = vunpack.c.l.b16 %v9173
  %v9302 = vunpack.c.l.b16 %v9174
  %v9303 = vunpack.c.l.b16 %v9175
  %v9304 = vunpack.c.l.b16 %v9176
  %v9305 = vunpack.c.l.b16 %v9177
  %v9306 = vpack.c.b16 %v9291, %v9290
  %v9307 = vpack.c.b16 %v9293, %v9292
  %v9308 = vpack.c.b16 %v9295, %v9294
  %v9309 = vpack.c.b16 %v9297, %v9296
  %v9310 = vpack.c.b16 %v9299, %v9298
  %v9311 = vpack.c.b16 %v9301, %v9300
  %v9312 = vpack.c.b16 %v9303, %v9302
  %v9313 = vpack.c.b16 %v9305, %v9304
  %9322 = vmatprep.subr.bf16.mxu0 0
  %9323 = vmatpush1.bf16.msra.mxu0 %v9154
  %9324 = vmatprep.subr.bf16.mxu0 0
  %9325 = vmatpush1.bf16.msra.mxu0 %v9155
  %9326 = vmatprep.subr.bf16.mxu0 0
  %9327 = vmatpush1.bf16.msra.mxu0 %v9156
  %9328 = vmatprep.subr.bf16.mxu0 0
  %9329 = vmatpush1.bf16.msra.mxu0 %v9157
  %9330 = vmatprep.subr.bf16.mxu0 0
  %9331 = vmatpush1.bf16.msra.mxu0 %v9158
  %9332 = vmatprep.subr.bf16.mxu0 0
  %9333 = vmatpush1.bf16.msra.mxu0 %v9159
  %9334 = vmatprep.subr.bf16.mxu0 0
  %9335 = vmatpush1.bf16.msra.mxu0 %v9160
  %9336 = vmatprep.subr.bf16.mxu0 0
  %9337 = vmatpush1.bf16.msra.mxu0 %v9161
  %9338 = vmatprep.subr.bf16.mxu0 0
  %9339 = vmatpush1.bf16.msra.mxu0 0
  %9340 = vmatprep.subr.bf16.mxu0 0
  %9341 = vmatpush1.bf16.msra.mxu0 0
  %9342 = vmatprep.subr.bf16.mxu0 0
  %9343 = vmatpush1.bf16.msra.mxu0 0
  %9344 = vmatprep.subr.bf16.mxu0 0
  %9345 = vmatpush1.bf16.msra.mxu0 0
  %9346 = vmatprep.subr.bf16.mxu0 0
  %9347 = vmatpush1.bf16.msra.mxu0 0
  %9348 = vmatprep.subr.bf16.mxu0 0
  %9349 = vmatpush1.bf16.msra.mxu0 0
  %9350 = vmatprep.subr.bf16.mxu0 0
  %9351 = vmatpush1.bf16.msra.mxu0 0
  %9352 = vmatprep.subr.bf16.mxu0 0
  %9353 = vmatpush1.bf16.msra.mxu0 0
  %9354 = vmatprep.mubr.bf16.mxu0 0
  %9355 = vmatmul.mubr.bf16.gmra.mrb[0].mxu0 %v9306
  %v9356 = vpop.f32.mrb[0].mxu0
  %v9357 = vadd.f32 %v9197, %v9356
  %v9358 = vpop.f32.mrb[0].mxu0
  %v9359 = vpop.f32.mrb[0].mxu0
  %v9360 = vadd.f32 %v9202, %v9359
  %v9361 = vpop.f32.mrb[0].mxu0
  %9362 = vmatprep.mubr.bf16.mxu0 0
  %9363 = vmatmul.mubr.bf16.gmra.mrb[0].mxu0 %v9307
  %v9364 = vpop.f32.mrb[0].mxu0
  %v9365 = vadd.f32 %v9207, %v9364
  %v9366 = vpop.f32.mrb[0].mxu0
  %v9367 = vpop.f32.mrb[0].mxu0
  %v9368 = vadd.f32 %v9212, %v9367
  %v9369 = vpop.f32.mrb[0].mxu0
  %9370 = vmatprep.mubr.bf16.mxu0 0
  %9371 = vmatmul.mubr.bf16.gmra.mrb[0].mxu0 %v9308
  %v9372 = vpop.f32.mrb[0].mxu0
  %v9373 = vadd.f32 %v9217, %v9372
  %v9374 = vpop.f32.mrb[0].mxu0
  %v9375 = vpop.f32.mrb[0].mxu0
  %v9376 = vadd.f32 %v9222, %v9375
  %v9377 = vpop.f32.mrb[0].mxu0
  %9378 = vmatprep.mubr.bf16.mxu0 0
  %9379 = vmatmul.mubr.bf16.gmra.mrb[0].mxu0 %v9309
  %v9380 = vpop.f32.mrb[0].mxu0
  %v9381 = vadd.f32 %v9227, %v9380
  %v9382 = vpop.f32.mrb[0].mxu0
  %v9383 = vpop.f32.mrb[0].mxu0
  %v9384 = vadd.f32 %v9232, %v9383
  %v9385 = vpop.f32.mrb[0].mxu0
  %9386 = vmatprep.mubr.bf16.mxu0 0
  %9387 = vmatmul.mubr.bf16.gmra.mrb[0].mxu0 %v9310
  %v9388 = vpop.f32.mrb[0].mxu0
  %v9389 = vadd.f32 %v9237, %v9388
  %v9390 = vpop.f32.mrb[0].mxu0
  %v9391 = vpop.f32.mrb[0].mxu0
  %v9392 = vadd.f32 %v9242, %v9391
  %v9393 = vpop.f32.mrb[0].mxu0
  %9394 = vmatprep.mubr.bf16.mxu0 0
  %9395 = vmatmul.mubr.bf16.gmra.mrb[0].mxu0 %v9311
  %v9396 = vpop.f32.mrb[0].mxu0
  %v9397 = vadd.f32 %v9247, %v9396
  %v9398 = vpop.f32.mrb[0].mxu0
  %v9399 = vpop.f32.mrb[0].mxu0
  %v9400 = vadd.f32 %v9252, %v9399
  %v9401 = vpop.f32.mrb[0].mxu0
  %9402 = vmatprep.mubr.bf16.mxu0 0
  %9403 = vmatmul.mubr.bf16.gmra.mrb[0].mxu0 %v9312
  %v9404 = vpop.f32.mrb[0].mxu0
  %v9405 = vadd.f32 %v9257, %v9404
  %v9406 = vpop.f32.mrb[0].mxu0
  %v9407 = vpop.f32.mrb[0].mxu0
  %v9408 = vadd.f32 %v9262, %v9407
  %v9409 = vpop.f32.mrb[0].mxu0
  %9410 = vmatprep.mubr.bf16.mxu0 0
  %9411 = vmatmul.mubr.bf16.gmra.mrb[0].mxu0 %v9313
  %v9412 = vpop.f32.mrb[0].mxu0
  %v9413 = vadd.f32 %v9267, %v9412
  %v9414 = vpop.f32.mrb[0].mxu0
  %v9415 = vpop.f32.mrb[0].mxu0
  %v9416 = vadd.f32 %v9272, %v9415
  %v9417 = vpop.f32.mrb[0].mxu0
  %9418 = vdwg.mxu0
  %9419 = vst [vmem:[%s11] sm:$0xff] %v9357
  %9420 = vst [vmem:[%s11 + $0x8] sm:$0xff] %v9360
  %9421 = vst [vmem:[%s11 + $0x10] sm:$0xff] %v9365
  %9422 = vst [vmem:[%s11 + $0x18] sm:$0xff] %v9368
  %9423 = vst [vmem:[%s11 + $0x20] sm:$0xff] %v9373
  %9424 = vst [vmem:[%s11 + $0x28] sm:$0xff] %v9376
  %9425 = vst [vmem:[%s11 + $0x30] sm:$0xff] %v9381
  %9426 = vst [vmem:[%s11 + $0x38] sm:$0xff] %v9384
  %9427 = vst [vmem:[%s11 + $0x40] sm:$0xff] %v9389
  %9428 = vst [vmem:[%s11 + $0x48] sm:$0xff] %v9392
  %9429 = vst [vmem:[%s11 + $0x50] sm:$0xff] %v9397
  %9430 = vst [vmem:[%s11 + $0x58] sm:$0xff] %v9400
  %9431 = vst [vmem:[%s11 + $0x60] sm:$0xff] %v9405
  %9432 = vst [vmem:[%s11 + $0x68] sm:$0xff] %v9408
  %9433 = vst [vmem:[%s11 + $0x70] sm:$0xff] %v9413
  %9434 = vst [vmem:[%s11 + $0x78] sm:$0xff] %v9416
  // Predicated region
  $region46: #{lenet5_forward.1} parent=0 // pred_check
    _
  $region47: #{lenet5_forward.1} parent=0 // pred_check_branch
    %9436 = sbr.rel (0) target = $region49
  $region48: #{lenet5_forward.1} parent=0 // pred_region
    _
  $region49: #{lenet5_forward.1} parent=0 // pred_fallthru
    _
  // Predicated region
  $region50: #{lenet5_forward.1} parent=0 // pred_check
    _
  $region51: #{lenet5_forward.1} parent=0 // pred_check_branch
    %9438 = sbr.rel (0) target = $region53
  $region52: #{lenet5_forward.1} parent=0 // pred_region
    _
  $region53: #{lenet5_forward.1} parent=0 // pred_fallthru
    _

</llo_original>
